<compile_context>
chip_gen: v6e
topology: v6e:2x2x1
jax: 0.10.0
libtpu: 0.0.40
codegen_flags: <defaults>
</compile_context>

<pallas_src>
from math import sqrt

import numpy as np
import jax
import jax.numpy as jnp
from jax import lax
from jax.experimental import pallas as pl
from jax.experimental.pallas import tpu as pltpu


# ---------------------------------------------------------------------------
# Bicubic upsampling matrices (PyTorch: A=-0.75, align_corners=False,
# border-replicated taps).  Built on host; applied with tiny XLA einsums.
# ---------------------------------------------------------------------------
def _cubic_coeffs(t, A=-0.75):
    def cc1(x):  # |x| <= 1
        return ((A + 2.0) * x - (A + 3.0)) * x * x + 1.0

    def cc2(x):  # 1 < |x| < 2
        return ((A * x - 5.0 * A) * x + 8.0 * A) * x - 4.0 * A

    return np.array([cc2(t + 1.0), cc1(t), cc1(1.0 - t), cc2(2.0 - t)],
                    dtype=np.float64)


def bicubic_matrix(n_in, n_out, scale):
    """W s.t. out[o] = sum_i W[o, i] * in[i] (PyTorch upsample_bicubic2d)."""
    W = np.zeros((n_out, n_in), dtype=np.float64)
    for o in range(n_out):
        src = (o + 0.5) / scale - 0.5
        i0 = int(np.floor(src))
        t = src - i0
        w = _cubic_coeffs(t)
        for k in range(4):
            idx = min(max(i0 - 1 + k, 0), n_in - 1)
            W[o, idx] += w[k]
    return W.astype(np.float32)


# ---------------------------------------------------------------------------
# Fused DRRN kernel (one grid step per image).
# ---------------------------------------------------------------------------
def _make_drrn_kernel(n_resblock):
    def kernel(rr_pad_ref, rr_flat_ref, w_in_ref, w1_ref, w2_ref, w_out_ref,
               out_ref, pin_ref, pmid_ref, add_ref, acc_ref):
        H = pin_ref.shape[0] - 2
        W = pin_ref.shape[1] - 2
        CH = pin_ref.shape[2]          # 128
        HW = H * W
        C_OUT = rr_flat_ref.shape[1]   # 3

        def conv3x3_to_acc(src_ref, w_ref):
            # src_ref: (H+2, W+2, CH) zero-padded, already-ReLU'd activation.
            # w_ref:   (3, 3*CH, CH)  == HWIO reshaped per ky.
            # Deep-K: 3 matmuls of (HW, 3*CH) x (3*CH, CH), accumulated in VMEM.
            for ky in range(3):
                xs = jnp.concatenate(
                    [src_ref[ky:ky + H, kx:kx + W, :].reshape(HW, CH)
                     for kx in range(3)],
                    axis=-1)                                   # (HW, 3*CH)
                d = jnp.dot(xs, w_ref[ky],
                            preferred_element_type=jnp.float32)
                if ky == 0:
                    acc_ref[...] = d
                else:
                    acc_ref[...] += d

        def write_padded(val, dst_ref):
            # Store an (HW, CH) (already ReLU'd) value into the padded interior.
            dst_ref[1:H + 1, 1:W + 1, :] = val.reshape(H, W, CH)

        # Zero the padded buffers (borders must be 0; interiors are rewritten).
        pin_ref[...] = jnp.zeros_like(pin_ref)
        pmid_ref[...] = jnp.zeros_like(pmid_ref)

        # relu(residual), NHWC with channels zero-padded to CH -> pin interior.
        pin_ref[1:H + 1, 1:W + 1, :] = rr_pad_ref[0]

        # inputs = conv_in(relu(residual)); add = relu(inputs)
        conv3x3_to_acc(pin_ref, w_in_ref)
        a0 = jnp.maximum(acc_ref[...], 0.0)
        add_ref[...] = a0
        write_padded(a0, pin_ref)

        # Resblocks: out = conv2(relu(conv1(relu(out)))) + relu(inputs)
        def body(_, carry):
            conv3x3_to_acc(pin_ref, w1_ref)
            write_padded(jnp.maximum(acc_ref[...], 0.0), pmid_ref)
            conv3x3_to_acc(pmid_ref, w2_ref)
            write_padded(jnp.maximum(acc_ref[...] + add_ref[...], 0.0), pin_ref)
            return carry

        lax.fori_loop(0, n_resblock, body, 0)

        # out = conv_out(relu(out)) + relu(residual), emitted NCHW-flat (3, HW)
        conv3x3_to_acc(pin_ref, w_out_ref)
        y_t = jnp.transpose(acc_ref[...])                      # (CH, HW)
        out_ref[0] = y_t[0:C_OUT, :] + rr_flat_ref[0]

    return kernel


def _drrn_pallas(rr_pad, rr_cflat, w_in_r, w1_r, w2_r, w_out_r, n_resblock):
    N, H, W, CH = rr_pad.shape
    HW = H * W
    C_OUT = rr_cflat.shape[1]
    K3 = 3 * CH

    return pl.pallas_call(
        _make_drrn_kernel(n_resblock),
        out_shape=jax.ShapeDtypeStruct((N, C_OUT, HW), jnp.float32),
        grid=(N,),
        in_specs=[
            pl.BlockSpec((1, H, W, CH), lambda n: (n, 0, 0, 0)),   # rr (NHWC, padded C)
            pl.BlockSpec((1, C_OUT, HW), lambda n: (n, 0, 0)),     # rr (NCHW-flat)
            pl.BlockSpec((3, K3, CH), lambda n: (0, 0, 0)),        # w_in (Cin padded)
            pl.BlockSpec((3, K3, CH), lambda n: (0, 0, 0)),        # w1
            pl.BlockSpec((3, K3, CH), lambda n: (0, 0, 0)),        # w2
            pl.BlockSpec((3, K3, CH), lambda n: (0, 0, 0)),        # w_out (Cout padded)
        ],
        out_specs=pl.BlockSpec((1, C_OUT, HW), lambda n: (n, 0, 0)),
        scratch_shapes=[
            pltpu.VMEM((H + 2, W + 2, CH), jnp.float32),   # padded activation A
            pltpu.VMEM((H + 2, W + 2, CH), jnp.float32),   # padded activation B
            pltpu.VMEM((HW, CH), jnp.float32),             # add = relu(inputs)
            pltpu.VMEM((HW, CH), jnp.float32),             # conv accumulator
        ],
        compiler_params=pltpu.CompilerParams(
            dimension_semantics=("parallel",)),            # batch over TCs (v7x)
    )(rr_pad, rr_cflat, w_in_r, w1_r, w2_r, w_out_r)


# ---------------------------------------------------------------------------
# DRRN forward
# ---------------------------------------------------------------------------
def drrn_forward(x_nchw, params, scale, n_resblock):
    N, C, Hin, Win = x_nchw.shape
    H, W = Hin * scale, Win * scale
    CH = params["w1"].shape[2]                    # hidden channels (128)
    hp = lax.Precision.HIGHEST

    # Bicubic residual (tiny: a few KiB) -> plain XLA einsums, fused by XLA.
    Wh = jnp.asarray(bicubic_matrix(Hin, H, scale))
    Ww = jnp.asarray(bicubic_matrix(Win, W, scale))
    R = jnp.einsum("ph,nchw->ncpw", Wh, x_nchw, precision=hp)
    R = jnp.einsum("qw,ncpw->ncpq", Ww, R, precision=hp)        # (N, C, H, W)
    Rr = jnp.maximum(R, 0.0)                     # inplace ReLU aliases residual

    rr_cflat = Rr.reshape(N, C, H * W)                          # final-add layout
    rr_pad = jnp.pad(jnp.transpose(Rr, (0, 2, 3, 1)),           # NHWC, C -> CH
                     ((0, 0), (0, 0), (0, 0), (0, CH - C)))

    # Weights: HWIO -> (ky, kx*Cin + ci, co); in/out channels zero-padded to CH.
    w_in_r = (jnp.zeros((3, 3, CH, CH), jnp.float32)
              .at[:, :, :C, :].set(params["w_in"]).reshape(3, 3 * CH, CH))
    w1_r = params["w1"].reshape(3, 3 * CH, CH)
    w2_r = params["w2"].reshape(3, 3 * CH, CH)
    w_out_r = (jnp.zeros((3, 3, CH, CH), jnp.float32)
               .at[:, :, :, :C].set(params["w_out"]).reshape(3, 3 * CH, CH))

    out_flat = _drrn_pallas(rr_pad, rr_cflat, w_in_r, w1_r, w2_r, w_out_r,
                            n_resblock)
    return out_flat.reshape(N, C, H, W)                         # free reshape


# ---------------------------------------------------------------------------
# Pure-JAX reference (same math, XLA convs at HIGHEST precision)
# ---------------------------------------------------------------------------
def _ref_conv(x_nhwc, w):
    return lax.conv_general_dilated(
        jnp.maximum(x_nhwc, 0.0), w, window_strides=(1, 1), padding="SAME",
        dimension_numbers=("NHWC", "HWIO", "NHWC"),
        precision=lax.Precision.HIGHEST)


def reference_forward(x_nchw, params, scale, n_resblock):
    _, _, Hin, Win = x_nchw.shape
    hp = lax.Precision.HIGHEST
    Wh = jnp.asarray(bicubic_matrix(Hin, Hin * scale, scale))
    Ww = jnp.asarray(bicubic_matrix(Win, Win * scale, scale))
    R = jnp.einsum("ph,nchw->ncpw", Wh, x_nchw, precision=hp)
    R = jnp.einsum("qw,ncpw->ncpq", Ww, R, precision=hp)
    R = jnp.transpose(R, (0, 2, 3, 1))            # NHWC
    Rr = jnp.maximum(R, 0.0)
    inputs = _ref_conv(R, params["w_in"])
    inputs_add = jnp.maximum(inputs, 0.0)
    out = inputs
    for _ in range(n_resblock):
        out = _ref_conv(_ref_conv(out, params["w1"]), params["w2"]) + inputs_add
    out = _ref_conv(out, params["w_out"]) + Rr
    return jnp.transpose(out, (0, 3, 1, 2))


# ---------------------------------------------------------------------------
if __name__ == "__main__":
    SCALE = 2          # args.scale = [2]
    N_RESBLOCKS = 3    # args.n_resblocks (kept small)

    key = jax.random.PRNGKey(0)
    k_in, k1, k2, k_out, kx = jax.random.split(key, 5)

    def init_conv(k, cin, cout):
        # PyTorch init: normal(0, sqrt(2 / (kh*kw*out_channels)))
        std = sqrt(2.0 / (3 * 3 * cout))
        return jax.random.normal(k, (3, 3, cin, cout), dtype=jnp.float32) * std

    params = {
        "w_in": init_conv(k_in, 3, 128),
        "w1": init_conv(k1, 128, 128),
        "w2": init_conv(k2, 128, 128),
        "w_out": init_conv(k_out, 128, 3),
    }

    x = jax.random.normal(kx, (2, 3, 8, 8), dtype=jnp.float32)  # NCHW input

    fwd = jax.jit(drrn_forward, static_argnames=("scale", "n_resblock"))
    out = jax.block_until_ready(fwd(x, params, scale=SCALE,
                                    n_resblock=N_RESBLOCKS))
    assert out.shape == (2, 3, 8 * SCALE, 8 * SCALE), out.shape

    ref = jax.block_until_ready(
        reference_forward(x, params, SCALE, N_RESBLOCKS))
    rel_err = float(jnp.max(jnp.abs(out - ref)) / (jnp.max(jnp.abs(ref)) + 1e-6))
    assert rel_err < 1e-3, f"mismatch vs reference: rel_err={rel_err}"

    print("KERNEL_OK")
</pallas_src>

<mosaic_0001>
module attributes {stable_mosaic.version = 11 : i64} {
  func.func @kernel(%arg0: i32, %arg1: memref<1x16x16x128xf32, #tpu.memory_space<vmem>>, %arg2: memref<1x3x256xf32, #tpu.memory_space<vmem>>, %arg3: memref<3x384x128xf32, #tpu.memory_space<vmem>>, %arg4: memref<3x384x128xf32, #tpu.memory_space<vmem>>, %arg5: memref<3x384x128xf32, #tpu.memory_space<vmem>>, %arg6: memref<3x384x128xf32, #tpu.memory_space<vmem>>, %arg7: memref<1x3x256xf32, #tpu.memory_space<vmem>>, %arg8: memref<18x18x128xf32, #tpu.memory_space<vmem>>, %arg9: memref<18x18x128xf32, #tpu.memory_space<vmem>>, %arg10: memref<256x128xf32, #tpu.memory_space<vmem>>, %arg11: memref<256x128xf32, #tpu.memory_space<vmem>>) attributes {dimension_semantics = [#tpu.dimension_semantics<parallel>], iteration_bounds = array<i64: 2>, scalar_prefetch = 0 : i64, scratch_operands = 4 : i64, tpu.core_type = #tpu.core_type<tc>, window_params = [{transform_indices = @transform_0, window_bounds = array<i64: 1, 16, 16, 128>}, {transform_indices = @transform_1, window_bounds = array<i64: 1, 3, 256>}, {pipeline_mode = #tpu.pipeline_mode<synchronous>, transform_indices = @transform_2, window_bounds = array<i64: 3, 384, 128>}, {pipeline_mode = #tpu.pipeline_mode<synchronous>, transform_indices = @transform_3, window_bounds = array<i64: 3, 384, 128>}, {pipeline_mode = #tpu.pipeline_mode<synchronous>, transform_indices = @transform_4, window_bounds = array<i64: 3, 384, 128>}, {pipeline_mode = #tpu.pipeline_mode<synchronous>, transform_indices = @transform_5, window_bounds = array<i64: 3, 384, 128>}, {transform_indices = @transform_6, window_bounds = array<i64: 1, 3, 256>}]} {
    %cst = arith.constant 0.000000e+00 : f32
    %0 = vector.broadcast %cst : f32 to vector<18x18x128xf32>
    %c0 = arith.constant 0 : index
    %c0_0 = arith.constant 0 : index
    %c0_1 = arith.constant 0 : index
    %1 = vector.load %arg8[%c0, %c0_0, %c0_1] : memref<18x18x128xf32, #tpu.memory_space<vmem>>, vector<18x18x128xf32>
    tpu.vector_store %arg8[%c0, %c0_0, %c0_1], %0 {strides = array<i32>} : memref<18x18x128xf32, #tpu.memory_space<vmem>>, vector<18x18x128xf32>,
    %cst_2 = arith.constant 0.000000e+00 : f32
    %2 = vector.broadcast %cst_2 : f32 to vector<18x18x128xf32>
    %c0_3 = arith.constant 0 : index
    %c0_4 = arith.constant 0 : index
    %c0_5 = arith.constant 0 : index
    %3 = vector.load %arg9[%c0_3, %c0_4, %c0_5] : memref<18x18x128xf32, #tpu.memory_space<vmem>>, vector<18x18x128xf32>
    tpu.vector_store %arg9[%c0_3, %c0_4, %c0_5], %2 {strides = array<i32>} : memref<18x18x128xf32, #tpu.memory_space<vmem>>, vector<18x18x128xf32>,
    %c0_6 = arith.constant 0 : index
    %c0_7 = arith.constant 0 : index
    %c0_8 = arith.constant 0 : index
    %c0_9 = arith.constant 0 : index
    %4 = vector.load %arg1[%c0_6, %c0_7, %c0_8, %c0_9] : memref<1x16x16x128xf32, #tpu.memory_space<vmem>>, vector<1x16x16x128xf32>
    %5 = vector.shape_cast %4 : vector<1x16x16x128xf32> to vector<16x16x128xf32>
    %c1 = arith.constant 1 : index
    %c1_10 = arith.constant 1 : index
    %c0_11 = arith.constant 0 : index
    %6 = vector.load %arg8[%c1, %c1_10, %c0_11] : memref<18x18x128xf32, #tpu.memory_space<vmem>>, vector<16x16x128xf32>
    tpu.vector_store %arg8[%c1, %c1_10, %c0_11], %5 {strides = array<i32>} : memref<18x18x128xf32, #tpu.memory_space<vmem>>, vector<16x16x128xf32>,
    %c0_12 = arith.constant 0 : index
    %c0_13 = arith.constant 0 : index
    %c0_14 = arith.constant 0 : index
    %7 = vector.load %arg8[%c0_12, %c0_13, %c0_14] : memref<18x18x128xf32, #tpu.memory_space<vmem>>, vector<16x16x128xf32>
    %8 = vector.shape_cast %7 : vector<16x16x128xf32> to vector<256x128xf32>
    %c0_15 = arith.constant 0 : index
    %c1_16 = arith.constant 1 : index
    %c0_17 = arith.constant 0 : index
    %9 = vector.load %arg8[%c0_15, %c1_16, %c0_17] : memref<18x18x128xf32, #tpu.memory_space<vmem>>, vector<16x16x128xf32>
    %10 = vector.shape_cast %9 : vector<16x16x128xf32> to vector<256x128xf32>
    %c0_18 = arith.constant 0 : index
    %c2 = arith.constant 2 : index
    %c0_19 = arith.constant 0 : index
    %11 = vector.load %arg8[%c0_18, %c2, %c0_19] : memref<18x18x128xf32, #tpu.memory_space<vmem>>, vector<16x16x128xf32>
    %12 = vector.shape_cast %11 : vector<16x16x128xf32> to vector<256x128xf32>
    %13 = tpu.concatenate %8, %10, %12 in 1 : vector<256x128xf32>, vector<256x128xf32>, vector<256x128xf32> -> vector<256x384xf32>
    %c0_20 = arith.constant 0 : index
    %c0_21 = arith.constant 0 : index
    %c0_22 = arith.constant 0 : index
    %14 = vector.load %arg3[%c0_20, %c0_21, %c0_22] : memref<3x384x128xf32, #tpu.memory_space<vmem>>, vector<1x384x128xf32>
    %15 = vector.shape_cast %14 : vector<1x384x128xf32> to vector<384x128xf32>
    %cst_23 = arith.constant dense<0.000000e+00> : vector<256x128xf32>
    %16 = tpu.matmul %13, %15, %cst_23 {dimension_numbers = #tpu.dot_dimension_numbers<[1], [0], [0], [1], [0, 0, 1, 1], [], []>} : vector<256x384xf32>, vector<384x128xf32>, vector<256x128xf32> -> vector<256x128xf32>
    %c0_24 = arith.constant 0 : index
    %c0_25 = arith.constant 0 : index
    %17 = vector.load %arg11[%c0_24, %c0_25] : memref<256x128xf32, #tpu.memory_space<vmem>>, vector<256x128xf32>
    tpu.vector_store %arg11[%c0_24, %c0_25], %16 {strides = array<i32>} : memref<256x128xf32, #tpu.memory_space<vmem>>, vector<256x128xf32>,
    %c1_26 = arith.constant 1 : index
    %c0_27 = arith.constant 0 : index
    %c0_28 = arith.constant 0 : index
    %18 = vector.load %arg8[%c1_26, %c0_27, %c0_28] : memref<18x18x128xf32, #tpu.memory_space<vmem>>, vector<16x16x128xf32>
    %19 = vector.shape_cast %18 : vector<16x16x128xf32> to vector<256x128xf32>
    %c1_29 = arith.constant 1 : index
    %c1_30 = arith.constant 1 : index
    %c0_31 = arith.constant 0 : index
    %20 = vector.load %arg8[%c1_29, %c1_30, %c0_31] : memref<18x18x128xf32, #tpu.memory_space<vmem>>, vector<16x16x128xf32>
    %21 = vector.shape_cast %20 : vector<16x16x128xf32> to vector<256x128xf32>
    %c1_32 = arith.constant 1 : index
    %c2_33 = arith.constant 2 : index
    %c0_34 = arith.constant 0 : index
    %22 = vector.load %arg8[%c1_32, %c2_33, %c0_34] : memref<18x18x128xf32, #tpu.memory_space<vmem>>, vector<16x16x128xf32>
    %23 = vector.shape_cast %22 : vector<16x16x128xf32> to vector<256x128xf32>
    %24 = tpu.concatenate %19, %21, %23 in 1 : vector<256x128xf32>, vector<256x128xf32>, vector<256x128xf32> -> vector<256x384xf32>
    %c1_35 = arith.constant 1 : index
    %c0_36 = arith.constant 0 : index
    %c0_37 = arith.constant 0 : index
    %25 = vector.load %arg3[%c1_35, %c0_36, %c0_37] : memref<3x384x128xf32, #tpu.memory_space<vmem>>, vector<1x384x128xf32>
    %26 = vector.shape_cast %25 : vector<1x384x128xf32> to vector<384x128xf32>
    %cst_38 = arith.constant dense<0.000000e+00> : vector<256x128xf32>
    %27 = tpu.matmul %24, %26, %cst_38 {dimension_numbers = #tpu.dot_dimension_numbers<[1], [0], [0], [1], [0, 0, 1, 1], [], []>} : vector<256x384xf32>, vector<384x128xf32>, vector<256x128xf32> -> vector<256x128xf32>
    %c0_39 = arith.constant 0 : index
    %c0_40 = arith.constant 0 : index
    %28 = vector.load %arg11[%c0_39, %c0_40] : memref<256x128xf32, #tpu.memory_space<vmem>>, vector<256x128xf32>
    %29 = arith.addf %28, %27 : vector<256x128xf32>
    %c0_41 = arith.constant 0 : index
    %c0_42 = arith.constant 0 : index
    %30 = vector.load %arg11[%c0_41, %c0_42] : memref<256x128xf32, #tpu.memory_space<vmem>>, vector<256x128xf32>
    tpu.vector_store %arg11[%c0_41, %c0_42], %29 {strides = array<i32>} : memref<256x128xf32, #tpu.memory_space<vmem>>, vector<256x128xf32>,
    %c2_43 = arith.constant 2 : index
    %c0_44 = arith.constant 0 : index
    %c0_45 = arith.constant 0 : index
    %31 = vector.load %arg8[%c2_43, %c0_44, %c0_45] : memref<18x18x128xf32, #tpu.memory_space<vmem>>, vector<16x16x128xf32>
    %32 = vector.shape_cast %31 : vector<16x16x128xf32> to vector<256x128xf32>
    %c2_46 = arith.constant 2 : index
    %c1_47 = arith.constant 1 : index
    %c0_48 = arith.constant 0 : index
    %33 = vector.load %arg8[%c2_46, %c1_47, %c0_48] : memref<18x18x128xf32, #tpu.memory_space<vmem>>, vector<16x16x128xf32>
    %34 = vector.shape_cast %33 : vector<16x16x128xf32> to vector<256x128xf32>
    %c2_49 = arith.constant 2 : index
    %c2_50 = arith.constant 2 : index
    %c0_51 = arith.constant 0 : index
    %35 = vector.load %arg8[%c2_49, %c2_50, %c0_51] : memref<18x18x128xf32, #tpu.memory_space<vmem>>, vector<16x16x128xf32>
    %36 = vector.shape_cast %35 : vector<16x16x128xf32> to vector<256x128xf32>
    %37 = tpu.concatenate %32, %34, %36 in 1 : vector<256x128xf32>, vector<256x128xf32>, vector<256x128xf32> -> vector<256x384xf32>
    %c2_52 = arith.constant 2 : index
    %c0_53 = arith.constant 0 : index
    %c0_54 = arith.constant 0 : index
    %38 = vector.load %arg3[%c2_52, %c0_53, %c0_54] : memref<3x384x128xf32, #tpu.memory_space<vmem>>, vector<1x384x128xf32>
    %39 = vector.shape_cast %38 : vector<1x384x128xf32> to vector<384x128xf32>
    %cst_55 = arith.constant dense<0.000000e+00> : vector<256x128xf32>
    %40 = tpu.matmul %37, %39, %cst_55 {dimension_numbers = #tpu.dot_dimension_numbers<[1], [0], [0], [1], [0, 0, 1, 1], [], []>} : vector<256x384xf32>, vector<384x128xf32>, vector<256x128xf32> -> vector<256x128xf32>
    %c0_56 = arith.constant 0 : index
    %c0_57 = arith.constant 0 : index
    %41 = vector.load %arg11[%c0_56, %c0_57] : memref<256x128xf32, #tpu.memory_space<vmem>>, vector<256x128xf32>
    %42 = arith.addf %41, %40 : vector<256x128xf32>
    %c0_58 = arith.constant 0 : index
    %c0_59 = arith.constant 0 : index
    %43 = vector.load %arg11[%c0_58, %c0_59] : memref<256x128xf32, #tpu.memory_space<vmem>>, vector<256x128xf32>
    tpu.vector_store %arg11[%c0_58, %c0_59], %42 {strides = array<i32>} : memref<256x128xf32, #tpu.memory_space<vmem>>, vector<256x128xf32>,
    %c0_60 = arith.constant 0 : index
    %c0_61 = arith.constant 0 : index
    %44 = vector.load %arg11[%c0_60, %c0_61] : memref<256x128xf32, #tpu.memory_space<vmem>>, vector<256x128xf32>
    %cst_62 = arith.constant 0.000000e+00 : f32
    %45 = vector.broadcast %cst_62 : f32 to vector<256x128xf32>
    %46 = arith.maximumf %44, %45 : vector<256x128xf32>
    %c0_63 = arith.constant 0 : index
    %c0_64 = arith.constant 0 : index
    %47 = vector.load %arg10[%c0_63, %c0_64] : memref<256x128xf32, #tpu.memory_space<vmem>>, vector<256x128xf32>
    tpu.vector_store %arg10[%c0_63, %c0_64], %46 {strides = array<i32>} : memref<256x128xf32, #tpu.memory_space<vmem>>, vector<256x128xf32>,
    %48 = vector.shape_cast %46 : vector<256x128xf32> to vector<16x16x128xf32>
    %c1_65 = arith.constant 1 : index
    %c1_66 = arith.constant 1 : index
    %c0_67 = arith.constant 0 : index
    %49 = vector.load %arg8[%c1_65, %c1_66, %c0_67] : memref<18x18x128xf32, #tpu.memory_space<vmem>>, vector<16x16x128xf32>
    tpu.vector_store %arg8[%c1_65, %c1_66, %c0_67], %48 {strides = array<i32>} : memref<18x18x128xf32, #tpu.memory_space<vmem>>, vector<16x16x128xf32>,
    %c0_i32 = arith.constant 0 : i32
    %c3_i32 = arith.constant 3 : i32
    %50 = arith.addi %c0_i32, %c3_i32 : i32
    %c1_i32 = arith.constant 1 : i32
    scf.for %arg12 = %c0_i32 to %50 step %c1_i32  : i32 {
      %c0_125 = arith.constant 0 : index
      %c0_126 = arith.constant 0 : index
      %c0_127 = arith.constant 0 : index
      %97 = vector.load %arg8[%c0_125, %c0_126, %c0_127] : memref<18x18x128xf32, #tpu.memory_space<vmem>>, vector<16x16x128xf32>
      %98 = vector.shape_cast %97 : vector<16x16x128xf32> to vector<256x128xf32>
      %c0_128 = arith.constant 0 : index
      %c1_129 = arith.constant 1 : index
      %c0_130 = arith.constant 0 : index
      %99 = vector.load %arg8[%c0_128, %c1_129, %c0_130] : memref<18x18x128xf32, #tpu.memory_space<vmem>>, vector<16x16x128xf32>
      %100 = vector.shape_cast %99 : vector<16x16x128xf32> to vector<256x128xf32>
      %c0_131 = arith.constant 0 : index
      %c2_132 = arith.constant 2 : index
      %c0_133 = arith.constant 0 : index
      %101 = vector.load %arg8[%c0_131, %c2_132, %c0_133] : memref<18x18x128xf32, #tpu.memory_space<vmem>>, vector<16x16x128xf32>
      %102 = vector.shape_cast %101 : vector<16x16x128xf32> to vector<256x128xf32>
      %103 = tpu.concatenate %98, %100, %102 in 1 : vector<256x128xf32>, vector<256x128xf32>, vector<256x128xf32> -> vector<256x384xf32>
      %c0_134 = arith.constant 0 : index
      %c0_135 = arith.constant 0 : index
      %c0_136 = arith.constant 0 : index
      %104 = vector.load %arg4[%c0_134, %c0_135, %c0_136] : memref<3x384x128xf32, #tpu.memory_space<vmem>>, vector<1x384x128xf32>
      %105 = vector.shape_cast %104 : vector<1x384x128xf32> to vector<384x128xf32>
      %cst_137 = arith.constant dense<0.000000e+00> : vector<256x128xf32>
      %106 = tpu.matmul %103, %105, %cst_137 {dimension_numbers = #tpu.dot_dimension_numbers<[1], [0], [0], [1], [0, 0, 1, 1], [], []>} : vector<256x384xf32>, vector<384x128xf32>, vector<256x128xf32> -> vector<256x128xf32>
      %c0_138 = arith.constant 0 : index
      %c0_139 = arith.constant 0 : index
      %107 = vector.load %arg11[%c0_138, %c0_139] : memref<256x128xf32, #tpu.memory_space<vmem>>, vector<256x128xf32>
      tpu.vector_store %arg11[%c0_138, %c0_139], %106 {strides = array<i32>} : memref<256x128xf32, #tpu.memory_space<vmem>>, vector<256x128xf32>,
      %c1_140 = arith.constant 1 : index
      %c0_141 = arith.constant 0 : index
      %c0_142 = arith.constant 0 : index
      %108 = vector.load %arg8[%c1_140, %c0_141, %c0_142] : memref<18x18x128xf32, #tpu.memory_space<vmem>>, vector<16x16x128xf32>
      %109 = vector.shape_cast %108 : vector<16x16x128xf32> to vector<256x128xf32>
      %c1_143 = arith.constant 1 : index
      %c1_144 = arith.constant 1 : index
      %c0_145 = arith.constant 0 : index
      %110 = vector.load %arg8[%c1_143, %c1_144, %c0_145] : memref<18x18x128xf32, #tpu.memory_space<vmem>>, vector<16x16x128xf32>
      %111 = vector.shape_cast %110 : vector<16x16x128xf32> to vector<256x128xf32>
      %c1_146 = arith.constant 1 : index
      %c2_147 = arith.constant 2 : index
      %c0_148 = arith.constant 0 : index
      %112 = vector.load %arg8[%c1_146, %c2_147, %c0_148] : memref<18x18x128xf32, #tpu.memory_space<vmem>>, vector<16x16x128xf32>
      %113 = vector.shape_cast %112 : vector<16x16x128xf32> to vector<256x128xf32>
      %114 = tpu.concatenate %109, %111, %113 in 1 : vector<256x128xf32>, vector<256x128xf32>, vector<256x128xf32> -> vector<256x384xf32>
      %c1_149 = arith.constant 1 : index
      %c0_150 = arith.constant 0 : index
      %c0_151 = arith.constant 0 : index
      %115 = vector.load %arg4[%c1_149, %c0_150, %c0_151] : memref<3x384x128xf32, #tpu.memory_space<vmem>>, vector<1x384x128xf32>
      %116 = vector.shape_cast %115 : vector<1x384x128xf32> to vector<384x128xf32>
      %cst_152 = arith.constant dense<0.000000e+00> : vector<256x128xf32>
      %117 = tpu.matmul %114, %116, %cst_152 {dimension_numbers = #tpu.dot_dimension_numbers<[1], [0], [0], [1], [0, 0, 1, 1], [], []>} : vector<256x384xf32>, vector<384x128xf32>, vector<256x128xf32> -> vector<256x128xf32>
      %c0_153 = arith.constant 0 : index
      %c0_154 = arith.constant 0 : index
      %118 = vector.load %arg11[%c0_153, %c0_154] : memref<256x128xf32, #tpu.memory_space<vmem>>, vector<256x128xf32>
      %119 = arith.addf %118, %117 : vector<256x128xf32>
      %c0_155 = arith.constant 0 : index
      %c0_156 = arith.constant 0 : index
      %120 = vector.load %arg11[%c0_155, %c0_156] : memref<256x128xf32, #tpu.memory_space<vmem>>, vector<256x128xf32>
      tpu.vector_store %arg11[%c0_155, %c0_156], %119 {strides = array<i32>} : memref<256x128xf32, #tpu.memory_space<vmem>>, vector<256x128xf32>,
      %c2_157 = arith.constant 2 : index
      %c0_158 = arith.constant 0 : index
      %c0_159 = arith.constant 0 : index
      %121 = vector.load %arg8[%c2_157, %c0_158, %c0_159] : memref<18x18x128xf32, #tpu.memory_space<vmem>>, vector<16x16x128xf32>
      %122 = vector.shape_cast %121 : vector<16x16x128xf32> to vector<256x128xf32>
      %c2_160 = arith.constant 2 : index
      %c1_161 = arith.constant 1 : index
      %c0_162 = arith.constant 0 : index
      %123 = vector.load %arg8[%c2_160, %c1_161, %c0_162] : memref<18x18x128xf32, #tpu.memory_space<vmem>>, vector<16x16x128xf32>
      %124 = vector.shape_cast %123 : vector<16x16x128xf32> to vector<256x128xf32>
      %c2_163 = arith.constant 2 : index
      %c2_164 = arith.constant 2 : index
      %c0_165 = arith.constant 0 : index
      %125 = vector.load %arg8[%c2_163, %c2_164, %c0_165] : memref<18x18x128xf32, #tpu.memory_space<vmem>>, vector<16x16x128xf32>
      %126 = vector.shape_cast %125 : vector<16x16x128xf32> to vector<256x128xf32>
      %127 = tpu.concatenate %122, %124, %126 in 1 : vector<256x128xf32>, vector<256x128xf32>, vector<256x128xf32> -> vector<256x384xf32>
      %c2_166 = arith.constant 2 : index
      %c0_167 = arith.constant 0 : index
      %c0_168 = arith.constant 0 : index
      %128 = vector.load %arg4[%c2_166, %c0_167, %c0_168] : memref<3x384x128xf32, #tpu.memory_space<vmem>>, vector<1x384x128xf32>
      %129 = vector.shape_cast %128 : vector<1x384x128xf32> to vector<384x128xf32>
      %cst_169 = arith.constant dense<0.000000e+00> : vector<256x128xf32>
      %130 = tpu.matmul %127, %129, %cst_169 {dimension_numbers = #tpu.dot_dimension_numbers<[1], [0], [0], [1], [0, 0, 1, 1], [], []>} : vector<256x384xf32>, vector<384x128xf32>, vector<256x128xf32> -> vector<256x128xf32>
      %c0_170 = arith.constant 0 : index
      %c0_171 = arith.constant 0 : index
      %131 = vector.load %arg11[%c0_170, %c0_171] : memref<256x128xf32, #tpu.memory_space<vmem>>, vector<256x128xf32>
      %132 = arith.addf %131, %130 : vector<256x128xf32>
      %c0_172 = arith.constant 0 : index
      %c0_173 = arith.constant 0 : index
      %133 = vector.load %arg11[%c0_172, %c0_173] : memref<256x128xf32, #tpu.memory_space<vmem>>, vector<256x128xf32>
      tpu.vector_store %arg11[%c0_172, %c0_173], %132 {strides = array<i32>} : memref<256x128xf32, #tpu.memory_space<vmem>>, vector<256x128xf32>,
      %c0_174 = arith.constant 0 : index
      %c0_175 = arith.constant 0 : index
      %134 = vector.load %arg11[%c0_174, %c0_175] : memref<256x128xf32, #tpu.memory_space<vmem>>, vector<256x128xf32>
      %cst_176 = arith.constant 0.000000e+00 : f32
      %135 = vector.broadcast %cst_176 : f32 to vector<256x128xf32>
      %136 = arith.maximumf %134, %135 : vector<256x128xf32>
      %137 = vector.shape_cast %136 : vector<256x128xf32> to vector<16x16x128xf32>
      %c1_177 = arith.constant 1 : index
      %c1_178 = arith.constant 1 : index
      %c0_179 = arith.constant 0 : index
      %138 = vector.load %arg9[%c1_177, %c1_178, %c0_179] : memref<18x18x128xf32, #tpu.memory_space<vmem>>, vector<16x16x128xf32>
      tpu.vector_store %arg9[%c1_177, %c1_178, %c0_179], %137 {strides = array<i32>} : memref<18x18x128xf32, #tpu.memory_space<vmem>>, vector<16x16x128xf32>,
      %c0_180 = arith.constant 0 : index
      %c0_181 = arith.constant 0 : index
      %c0_182 = arith.constant 0 : index
      %139 = vector.load %arg9[%c0_180, %c0_181, %c0_182] : memref<18x18x128xf32, #tpu.memory_space<vmem>>, vector<16x16x128xf32>
      %140 = vector.shape_cast %139 : vector<16x16x128xf32> to vector<256x128xf32>
      %c0_183 = arith.constant 0 : index
      %c1_184 = arith.constant 1 : index
      %c0_185 = arith.constant 0 : index
      %141 = vector.load %arg9[%c0_183, %c1_184, %c0_185] : memref<18x18x128xf32, #tpu.memory_space<vmem>>, vector<16x16x128xf32>
      %142 = vector.shape_cast %141 : vector<16x16x128xf32> to vector<256x128xf32>
      %c0_186 = arith.constant 0 : index
      %c2_187 = arith.constant 2 : index
      %c0_188 = arith.constant 0 : index
      %143 = vector.load %arg9[%c0_186, %c2_187, %c0_188] : memref<18x18x128xf32, #tpu.memory_space<vmem>>, vector<16x16x128xf32>
      %144 = vector.shape_cast %143 : vector<16x16x128xf32> to vector<256x128xf32>
      %145 = tpu.concatenate %140, %142, %144 in 1 : vector<256x128xf32>, vector<256x128xf32>, vector<256x128xf32> -> vector<256x384xf32>
      %c0_189 = arith.constant 0 : index
      %c0_190 = arith.constant 0 : index
      %c0_191 = arith.constant 0 : index
      %146 = vector.load %arg5[%c0_189, %c0_190, %c0_191] : memref<3x384x128xf32, #tpu.memory_space<vmem>>, vector<1x384x128xf32>
      %147 = vector.shape_cast %146 : vector<1x384x128xf32> to vector<384x128xf32>
      %cst_192 = arith.constant dense<0.000000e+00> : vector<256x128xf32>
      %148 = tpu.matmul %145, %147, %cst_192 {dimension_numbers = #tpu.dot_dimension_numbers<[1], [0], [0], [1], [0, 0, 1, 1], [], []>} : vector<256x384xf32>, vector<384x128xf32>, vector<256x128xf32> -> vector<256x128xf32>
      %c0_193 = arith.constant 0 : index
      %c0_194 = arith.constant 0 : index
      %149 = vector.load %arg11[%c0_193, %c0_194] : memref<256x128xf32, #tpu.memory_space<vmem>>, vector<256x128xf32>
      tpu.vector_store %arg11[%c0_193, %c0_194], %148 {strides = array<i32>} : memref<256x128xf32, #tpu.memory_space<vmem>>, vector<256x128xf32>,
      %c1_195 = arith.constant 1 : index
      %c0_196 = arith.constant 0 : index
      %c0_197 = arith.constant 0 : index
      %150 = vector.load %arg9[%c1_195, %c0_196, %c0_197] : memref<18x18x128xf32, #tpu.memory_space<vmem>>, vector<16x16x128xf32>
      %151 = vector.shape_cast %150 : vector<16x16x128xf32> to vector<256x128xf32>
      %c1_198 = arith.constant 1 : index
      %c1_199 = arith.constant 1 : index
      %c0_200 = arith.constant 0 : index
      %152 = vector.load %arg9[%c1_198, %c1_199, %c0_200] : memref<18x18x128xf32, #tpu.memory_space<vmem>>, vector<16x16x128xf32>
      %153 = vector.shape_cast %152 : vector<16x16x128xf32> to vector<256x128xf32>
      %c1_201 = arith.constant 1 : index
      %c2_202 = arith.constant 2 : index
      %c0_203 = arith.constant 0 : index
      %154 = vector.load %arg9[%c1_201, %c2_202, %c0_203] : memref<18x18x128xf32, #tpu.memory_space<vmem>>, vector<16x16x128xf32>
      %155 = vector.shape_cast %154 : vector<16x16x128xf32> to vector<256x128xf32>
      %156 = tpu.concatenate %151, %153, %155 in 1 : vector<256x128xf32>, vector<256x128xf32>, vector<256x128xf32> -> vector<256x384xf32>
      %c1_204 = arith.constant 1 : index
      %c0_205 = arith.constant 0 : index
      %c0_206 = arith.constant 0 : index
      %157 = vector.load %arg5[%c1_204, %c0_205, %c0_206] : memref<3x384x128xf32, #tpu.memory_space<vmem>>, vector<1x384x128xf32>
      %158 = vector.shape_cast %157 : vector<1x384x128xf32> to vector<384x128xf32>
      %cst_207 = arith.constant dense<0.000000e+00> : vector<256x128xf32>
      %159 = tpu.matmul %156, %158, %cst_207 {dimension_numbers = #tpu.dot_dimension_numbers<[1], [0], [0], [1], [0, 0, 1, 1], [], []>} : vector<256x384xf32>, vector<384x128xf32>, vector<256x128xf32> -> vector<256x128xf32>
      %c0_208 = arith.constant 0 : index
      %c0_209 = arith.constant 0 : index
      %160 = vector.load %arg11[%c0_208, %c0_209] : memref<256x128xf32, #tpu.memory_space<vmem>>, vector<256x128xf32>
      %161 = arith.addf %160, %159 : vector<256x128xf32>
      %c0_210 = arith.constant 0 : index
      %c0_211 = arith.constant 0 : index
      %162 = vector.load %arg11[%c0_210, %c0_211] : memref<256x128xf32, #tpu.memory_space<vmem>>, vector<256x128xf32>
      tpu.vector_store %arg11[%c0_210, %c0_211], %161 {strides = array<i32>} : memref<256x128xf32, #tpu.memory_space<vmem>>, vector<256x128xf32>,
      %c2_212 = arith.constant 2 : index
      %c0_213 = arith.constant 0 : index
      %c0_214 = arith.constant 0 : index
      %163 = vector.load %arg9[%c2_212, %c0_213, %c0_214] : memref<18x18x128xf32, #tpu.memory_space<vmem>>, vector<16x16x128xf32>
      %164 = vector.shape_cast %163 : vector<16x16x128xf32> to vector<256x128xf32>
      %c2_215 = arith.constant 2 : index
      %c1_216 = arith.constant 1 : index
      %c0_217 = arith.constant 0 : index
      %165 = vector.load %arg9[%c2_215, %c1_216, %c0_217] : memref<18x18x128xf32, #tpu.memory_space<vmem>>, vector<16x16x128xf32>
      %166 = vector.shape_cast %165 : vector<16x16x128xf32> to vector<256x128xf32>
      %c2_218 = arith.constant 2 : index
      %c2_219 = arith.constant 2 : index
      %c0_220 = arith.constant 0 : index
      %167 = vector.load %arg9[%c2_218, %c2_219, %c0_220] : memref<18x18x128xf32, #tpu.memory_space<vmem>>, vector<16x16x128xf32>
      %168 = vector.shape_cast %167 : vector<16x16x128xf32> to vector<256x128xf32>
      %169 = tpu.concatenate %164, %166, %168 in 1 : vector<256x128xf32>, vector<256x128xf32>, vector<256x128xf32> -> vector<256x384xf32>
      %c2_221 = arith.constant 2 : index
      %c0_222 = arith.constant 0 : index
      %c0_223 = arith.constant 0 : index
      %170 = vector.load %arg5[%c2_221, %c0_222, %c0_223] : memref<3x384x128xf32, #tpu.memory_space<vmem>>, vector<1x384x128xf32>
      %171 = vector.shape_cast %170 : vector<1x384x128xf32> to vector<384x128xf32>
      %cst_224 = arith.constant dense<0.000000e+00> : vector<256x128xf32>
      %172 = tpu.matmul %169, %171, %cst_224 {dimension_numbers = #tpu.dot_dimension_numbers<[1], [0], [0], [1], [0, 0, 1, 1], [], []>} : vector<256x384xf32>, vector<384x128xf32>, vector<256x128xf32> -> vector<256x128xf32>
      %c0_225 = arith.constant 0 : index
      %c0_226 = arith.constant 0 : index
      %173 = vector.load %arg11[%c0_225, %c0_226] : memref<256x128xf32, #tpu.memory_space<vmem>>, vector<256x128xf32>
      %174 = arith.addf %173, %172 : vector<256x128xf32>
      %c0_227 = arith.constant 0 : index
      %c0_228 = arith.constant 0 : index
      %175 = vector.load %arg11[%c0_227, %c0_228] : memref<256x128xf32, #tpu.memory_space<vmem>>, vector<256x128xf32>
      tpu.vector_store %arg11[%c0_227, %c0_228], %174 {strides = array<i32>} : memref<256x128xf32, #tpu.memory_space<vmem>>, vector<256x128xf32>,
      %c0_229 = arith.constant 0 : index
      %c0_230 = arith.constant 0 : index
      %176 = vector.load %arg11[%c0_229, %c0_230] : memref<256x128xf32, #tpu.memory_space<vmem>>, vector<256x128xf32>
      %c0_231 = arith.constant 0 : index
      %c0_232 = arith.constant 0 : index
      %177 = vector.load %arg10[%c0_231, %c0_232] : memref<256x128xf32, #tpu.memory_space<vmem>>, vector<256x128xf32>
      %178 = arith.addf %176, %177 : vector<256x128xf32>
      %cst_233 = arith.constant 0.000000e+00 : f32
      %179 = vector.broadcast %cst_233 : f32 to vector<256x128xf32>
      %180 = arith.maximumf %178, %179 : vector<256x128xf32>
      %181 = vector.shape_cast %180 : vector<256x128xf32> to vector<16x16x128xf32>
      %c1_234 = arith.constant 1 : index
      %c1_235 = arith.constant 1 : index
      %c0_236 = arith.constant 0 : index
      %182 = vector.load %arg8[%c1_234, %c1_235, %c0_236] : memref<18x18x128xf32, #tpu.memory_space<vmem>>, vector<16x16x128xf32>
      tpu.vector_store %arg8[%c1_234, %c1_235, %c0_236], %181 {strides = array<i32>} : memref<18x18x128xf32, #tpu.memory_space<vmem>>, vector<16x16x128xf32>,
    }
    %c0_68 = arith.constant 0 : index
    %c0_69 = arith.constant 0 : index
    %c0_70 = arith.constant 0 : index
    %51 = vector.load %arg8[%c0_68, %c0_69, %c0_70] : memref<18x18x128xf32, #tpu.memory_space<vmem>>, vector<16x16x128xf32>
    %52 = vector.shape_cast %51 : vector<16x16x128xf32> to vector<256x128xf32>
    %c0_71 = arith.constant 0 : index
    %c1_72 = arith.constant 1 : index
    %c0_73 = arith.constant 0 : index
    %53 = vector.load %arg8[%c0_71, %c1_72, %c0_73] : memref<18x18x128xf32, #tpu.memory_space<vmem>>, vector<16x16x128xf32>
    %54 = vector.shape_cast %53 : vector<16x16x128xf32> to vector<256x128xf32>
    %c0_74 = arith.constant 0 : index
    %c2_75 = arith.constant 2 : index
    %c0_76 = arith.constant 0 : index
    %55 = vector.load %arg8[%c0_74, %c2_75, %c0_76] : memref<18x18x128xf32, #tpu.memory_space<vmem>>, vector<16x16x128xf32>
    %56 = vector.shape_cast %55 : vector<16x16x128xf32> to vector<256x128xf32>
    %57 = tpu.concatenate %52, %54, %56 in 1 : vector<256x128xf32>, vector<256x128xf32>, vector<256x128xf32> -> vector<256x384xf32>
    %c0_77 = arith.constant 0 : index
    %c0_78 = arith.constant 0 : index
    %c0_79 = arith.constant 0 : index
    %58 = vector.load %arg6[%c0_77, %c0_78, %c0_79] : memref<3x384x128xf32, #tpu.memory_space<vmem>>, vector<1x384x128xf32>
    %59 = vector.shape_cast %58 : vector<1x384x128xf32> to vector<384x128xf32>
    %cst_80 = arith.constant dense<0.000000e+00> : vector<256x128xf32>
    %60 = tpu.matmul %57, %59, %cst_80 {dimension_numbers = #tpu.dot_dimension_numbers<[1], [0], [0], [1], [0, 0, 1, 1], [], []>} : vector<256x384xf32>, vector<384x128xf32>, vector<256x128xf32> -> vector<256x128xf32>
    %c0_81 = arith.constant 0 : index
    %c0_82 = arith.constant 0 : index
    %61 = vector.load %arg11[%c0_81, %c0_82] : memref<256x128xf32, #tpu.memory_space<vmem>>, vector<256x128xf32>
    tpu.vector_store %arg11[%c0_81, %c0_82], %60 {strides = array<i32>} : memref<256x128xf32, #tpu.memory_space<vmem>>, vector<256x128xf32>,
    %c1_83 = arith.constant 1 : index
    %c0_84 = arith.constant 0 : index
    %c0_85 = arith.constant 0 : index
    %62 = vector.load %arg8[%c1_83, %c0_84, %c0_85] : memref<18x18x128xf32, #tpu.memory_space<vmem>>, vector<16x16x128xf32>
    %63 = vector.shape_cast %62 : vector<16x16x128xf32> to vector<256x128xf32>
    %c1_86 = arith.constant 1 : index
    %c1_87 = arith.constant 1 : index
    %c0_88 = arith.constant 0 : index
    %64 = vector.load %arg8[%c1_86, %c1_87, %c0_88] : memref<18x18x128xf32, #tpu.memory_space<vmem>>, vector<16x16x128xf32>
    %65 = vector.shape_cast %64 : vector<16x16x128xf32> to vector<256x128xf32>
    %c1_89 = arith.constant 1 : index
    %c2_90 = arith.constant 2 : index
    %c0_91 = arith.constant 0 : index
    %66 = vector.load %arg8[%c1_89, %c2_90, %c0_91] : memref<18x18x128xf32, #tpu.memory_space<vmem>>, vector<16x16x128xf32>
    %67 = vector.shape_cast %66 : vector<16x16x128xf32> to vector<256x128xf32>
    %68 = tpu.concatenate %63, %65, %67 in 1 : vector<256x128xf32>, vector<256x128xf32>, vector<256x128xf32> -> vector<256x384xf32>
    %c1_92 = arith.constant 1 : index
    %c0_93 = arith.constant 0 : index
    %c0_94 = arith.constant 0 : index
    %69 = vector.load %arg6[%c1_92, %c0_93, %c0_94] : memref<3x384x128xf32, #tpu.memory_space<vmem>>, vector<1x384x128xf32>
    %70 = vector.shape_cast %69 : vector<1x384x128xf32> to vector<384x128xf32>
    %cst_95 = arith.constant dense<0.000000e+00> : vector<256x128xf32>
    %71 = tpu.matmul %68, %70, %cst_95 {dimension_numbers = #tpu.dot_dimension_numbers<[1], [0], [0], [1], [0, 0, 1, 1], [], []>} : vector<256x384xf32>, vector<384x128xf32>, vector<256x128xf32> -> vector<256x128xf32>
    %c0_96 = arith.constant 0 : index
    %c0_97 = arith.constant 0 : index
    %72 = vector.load %arg11[%c0_96, %c0_97] : memref<256x128xf32, #tpu.memory_space<vmem>>, vector<256x128xf32>
    %73 = arith.addf %72, %71 : vector<256x128xf32>
    %c0_98 = arith.constant 0 : index
    %c0_99 = arith.constant 0 : index
    %74 = vector.load %arg11[%c0_98, %c0_99] : memref<256x128xf32, #tpu.memory_space<vmem>>, vector<256x128xf32>
    tpu.vector_store %arg11[%c0_98, %c0_99], %73 {strides = array<i32>} : memref<256x128xf32, #tpu.memory_space<vmem>>, vector<256x128xf32>,
    %c2_100 = arith.constant 2 : index
    %c0_101 = arith.constant 0 : index
    %c0_102 = arith.constant 0 : index
    %75 = vector.load %arg8[%c2_100, %c0_101, %c0_102] : memref<18x18x128xf32, #tpu.memory_space<vmem>>, vector<16x16x128xf32>
    %76 = vector.shape_cast %75 : vector<16x16x128xf32> to vector<256x128xf32>
    %c2_103 = arith.constant 2 : index
    %c1_104 = arith.constant 1 : index
    %c0_105 = arith.constant 0 : index
    %77 = vector.load %arg8[%c2_103, %c1_104, %c0_105] : memref<18x18x128xf32, #tpu.memory_space<vmem>>, vector<16x16x128xf32>
    %78 = vector.shape_cast %77 : vector<16x16x128xf32> to vector<256x128xf32>
    %c2_106 = arith.constant 2 : index
    %c2_107 = arith.constant 2 : index
    %c0_108 = arith.constant 0 : index
    %79 = vector.load %arg8[%c2_106, %c2_107, %c0_108] : memref<18x18x128xf32, #tpu.memory_space<vmem>>, vector<16x16x128xf32>
    %80 = vector.shape_cast %79 : vector<16x16x128xf32> to vector<256x128xf32>
    %81 = tpu.concatenate %76, %78, %80 in 1 : vector<256x128xf32>, vector<256x128xf32>, vector<256x128xf32> -> vector<256x384xf32>
    %c2_109 = arith.constant 2 : index
    %c0_110 = arith.constant 0 : index
    %c0_111 = arith.constant 0 : index
    %82 = vector.load %arg6[%c2_109, %c0_110, %c0_111] : memref<3x384x128xf32, #tpu.memory_space<vmem>>, vector<1x384x128xf32>
    %83 = vector.shape_cast %82 : vector<1x384x128xf32> to vector<384x128xf32>
    %cst_112 = arith.constant dense<0.000000e+00> : vector<256x128xf32>
    %84 = tpu.matmul %81, %83, %cst_112 {dimension_numbers = #tpu.dot_dimension_numbers<[1], [0], [0], [1], [0, 0, 1, 1], [], []>} : vector<256x384xf32>, vector<384x128xf32>, vector<256x128xf32> -> vector<256x128xf32>
    %c0_113 = arith.constant 0 : index
    %c0_114 = arith.constant 0 : index
    %85 = vector.load %arg11[%c0_113, %c0_114] : memref<256x128xf32, #tpu.memory_space<vmem>>, vector<256x128xf32>
    %86 = arith.addf %85, %84 : vector<256x128xf32>
    %c0_115 = arith.constant 0 : index
    %c0_116 = arith.constant 0 : index
    %87 = vector.load %arg11[%c0_115, %c0_116] : memref<256x128xf32, #tpu.memory_space<vmem>>, vector<256x128xf32>
    tpu.vector_store %arg11[%c0_115, %c0_116], %86 {strides = array<i32>} : memref<256x128xf32, #tpu.memory_space<vmem>>, vector<256x128xf32>,
    %c0_117 = arith.constant 0 : index
    %c0_118 = arith.constant 0 : index
    %88 = vector.load %arg11[%c0_117, %c0_118] : memref<256x128xf32, #tpu.memory_space<vmem>>, vector<256x128xf32>
    %89 = tpu.transpose %88, [1, 0] : vector<256x128xf32> -> vector<128x256xf32>
    %90 = vector.extract_strided_slice %89 {offsets = [0, 0], sizes = [3, 256], strides = [1, 1]} : vector<128x256xf32> to vector<3x256xf32>
    %c0_119 = arith.constant 0 : index
    %c0_120 = arith.constant 0 : index
    %c0_121 = arith.constant 0 : index
    %91 = vector.load %arg2[%c0_119, %c0_120, %c0_121] : memref<1x3x256xf32, #tpu.memory_space<vmem>>, vector<1x3x256xf32>
    %92 = vector.shape_cast %91 : vector<1x3x256xf32> to vector<3x256xf32>
    %93 = arith.addf %90, %92 : vector<3x256xf32>
    %c0_122 = arith.constant 0 : index
    %c0_123 = arith.constant 0 : index
    %c0_124 = arith.constant 0 : index
    %94 = vector.load %arg7[%c0_122, %c0_123, %c0_124] : memref<1x3x256xf32, #tpu.memory_space<vmem>>, vector<1x3x256xf32>
    %95 = vector.shape_cast %94 : vector<1x3x256xf32> to vector<3x256xf32>
    %96 = vector.shape_cast %93 : vector<3x256xf32> to vector<1x3x256xf32>
    tpu.vector_store %arg7[%c0_122, %c0_123, %c0_124], %96 {strides = array<i32>} : memref<1x3x256xf32, #tpu.memory_space<vmem>>, vector<1x3x256xf32>,
    return
  }
  func.func @transform_0(%arg0: i32) -> (i32, i32, i32, i32) {
    %c0_i32 = arith.constant 0 : i32
    %c0_i32_0 = arith.constant 0 : i32
    %c0_i32_1 = arith.constant 0 : i32
    %c0_i32_2 = arith.constant 0 : i32
    return %arg0, %c0_i32, %c0_i32_0, %c0_i32_1 : i32, i32, i32, i32
  }
  func.func @transform_1(%arg0: i32) -> (i32, i32, i32) {
    %c0_i32 = arith.constant 0 : i32
    %c0_i32_0 = arith.constant 0 : i32
    %c0_i32_1 = arith.constant 0 : i32
    return %arg0, %c0_i32, %c0_i32_0 : i32, i32, i32
  }
  func.func @transform_2(%arg0: i32) -> (i32, i32, i32) {
    %c0_i32 = arith.constant 0 : i32
    %c0_i32_0 = arith.constant 0 : i32
    %c0_i32_1 = arith.constant 0 : i32
    %c0_i32_2 = arith.constant 0 : i32
    return %c0_i32, %c0_i32_0, %c0_i32_1 : i32, i32, i32
  }
  func.func @transform_3(%arg0: i32) -> (i32, i32, i32) {
    %c0_i32 = arith.constant 0 : i32
    %c0_i32_0 = arith.constant 0 : i32
    %c0_i32_1 = arith.constant 0 : i32
    %c0_i32_2 = arith.constant 0 : i32
    return %c0_i32, %c0_i32_0, %c0_i32_1 : i32, i32, i32
  }
  func.func @transform_4(%arg0: i32) -> (i32, i32, i32) {
    %c0_i32 = arith.constant 0 : i32
    %c0_i32_0 = arith.constant 0 : i32
    %c0_i32_1 = arith.constant 0 : i32
    %c0_i32_2 = arith.constant 0 : i32
    return %c0_i32, %c0_i32_0, %c0_i32_1 : i32, i32, i32
  }
  func.func @transform_5(%arg0: i32) -> (i32, i32, i32) {
    %c0_i32 = arith.constant 0 : i32
    %c0_i32_0 = arith.constant 0 : i32
    %c0_i32_1 = arith.constant 0 : i32
    %c0_i32_2 = arith.constant 0 : i32
    return %c0_i32, %c0_i32_0, %c0_i32_1 : i32, i32, i32
  }
  func.func @transform_6(%arg0: i32) -> (i32, i32, i32) {
    %c0_i32 = arith.constant 0 : i32
    %c0_i32_0 = arith.constant 0 : i32
    %c0_i32_1 = arith.constant 0 : i32
    return %arg0, %c0_i32, %c0_i32_0 : i32, i32, i32
  }
}

</mosaic_0001>

<llo_original>
// kernel: drrn_forward.1
$region0: #{drrn_forward.1}
  #allocation0 [shape = 'u32[]', space=smem, size = 0x4, offset = 0x4, fixed_abs, tag = 'smem constant byte address 0x4 - core index']
  #allocation1 [shape = 'u32[144,128]{1,0:T(1,128)}', space=vmem, size = 0x12000, scoped, tag = 'internal scratch']
  #allocation2 [shape = 'f32[18,18,128]{2,1,0:T(8,128)}', space=vmem, size = 0x36000, scoped, tag = 'scratch operand']
  #allocation3 [shape = 'f32[18,18,128]{2,1,0:T(8,128)}', space=vmem, size = 0x36000, scoped, tag = 'scratch operand']
  #allocation4 [shape = 'f32[256,128]{1,0:T(8,128)}', space=vmem, size = 0x20000, scoped, tag = 'scratch operand']
  #allocation5 [shape = 'f32[256,128]{1,0:T(8,128)}', space=vmem, size = 0x20000, scoped, tag = 'scratch operand']
  %s0 = inlined_call_operand.vmem [shape: f32[2,16,16,128], index: 0, kind: input, shape index: {}]
  %s1 = inlined_call_operand.vmem [shape: f32[2,3,256], index: 1, kind: input, shape index: {}]
  %s2 = inlined_call_operand.vmem [shape: f32[3,384,128], index: 2, kind: input, shape index: {}]
  %s3 = inlined_call_operand.vmem [shape: f32[3,384,128], index: 3, kind: input, shape index: {}]
  %s4 = inlined_call_operand.vmem [shape: f32[3,384,128], index: 4, kind: input, shape index: {}]
  %s5 = inlined_call_operand.vmem [shape: f32[3,384,128], index: 5, kind: input, shape index: {}]
  %s6 = inlined_call_operand.vmem [shape: f32[2,3,256], index: 6, kind: output, shape index: {}]
  %s7 = sld [smem:[#allocation0]]
  $region64: #{drrn_forward.1} parent=0
    _
  %s9 = ssub.s32 1, %s7
  %s10 = scalar_select 0, %s9, %s7
  loop: start=0, step=1, limit=4
  $region2: #{drrn_forward.1} parent=0 // loop_pre_header
    _
  $region3: #{drrn_forward.1} parent=0 // loop_header
    %s12 = sphi 0, %s16
    %p13 = scmp.ge.s32.totalorder %s12, 4
    %s22 = sphi 0, %s24
    %s25 = sphi 0, %s22
    %s26 = sphi 0, %s25
    %s42 = sphi 0, %s26
    %s48 = sphi 0, %s50
    %s51 = sphi 0, %s48
    %s52 = sphi 0, %s51
    %s68 = sphi 0, %s52
    %s72 = sphi 0, %s72
    %s74 = sphi 0, %s72
    %s75 = sphi 0, %s74
    %s89 = sphi 0, %s75
    %s93 = sphi 0, %s93
    %s95 = sphi 0, %s93
    %s96 = sphi 0, %s95
    %s110 = sphi 0, %s96
    %s114 = sphi 0, %s114
    %s116 = sphi 0, %s114
    %s117 = sphi 0, %s116
    %s131 = sphi 0, %s117
    %s135 = sphi 0, %s135
    %s137 = sphi 0, %s135
    %s138 = sphi 0, %s137
    %s152 = sphi 0, %s138
    %s158 = sphi 0, %s160
    %s161 = sphi 0, %s158
    %s162 = sphi 0, %s161
    %s178 = sphi 0, %s162
  $region4: #{drrn_forward.1} parent=0 // loop_header_branch
    %15 = sbr.rel (%p13) target = $region8
  $region5: #{drrn_forward.1} parent=0 // loop_body
    %s17 = ssub.s32 %s12, 1
    %s18 = ssub.s32 %s12, 2
    %s19 = sadd.s32 %s12, 1
    %s20 = ssub.s32 %s12, %s19
    %p21 = scmp.eq.s32.totalorder %s20, 0
    %s23 = sadd.s32 %s22, 1
    %s24 = scalar_select %p21, %s22, %s23
    %p27 = pneg %p21
    %p28 = scmp.eq.s32.totalorder %s12, 1
    %p29 = por %p27, %p28
    %p30 = scmp.ne.s32.totalorder %s22, %s25
    %p31 = scmp.eq.s32.totalorder %s12, 0
    %p32 = por %p30, %p31
    %p33 = scmp.ne.s32.totalorder %s22, %s25
    %p34 = scmp.eq.s32.totalorder %s17, 1
    %p35 = por %p33, %p34
    %p36 = scmp.ne.s32.totalorder %s25, %s26
    %p37 = scmp.eq.s32.totalorder %s17, 0
    %p38 = por %p36, %p37
    %p39 = scmp.ne.s32.totalorder %s25, %s26
    %p40 = scmp.eq.s32.totalorder %s18, 1
    %p41 = por %p39, %p40
    %p43 = scmp.ne.s32.totalorder %s26, %s42
    %p44 = scmp.eq.s32.totalorder %s18, 0
    %p45 = por %p43, %p44
    %s46 = ssub.s32 %s12, %s19
    %p47 = scmp.eq.s32.totalorder %s46, 0
    %s49 = sadd.s32 %s48, 1
    %s50 = scalar_select %p47, %s48, %s49
    %p53 = pneg %p47
    %p54 = scmp.eq.s32.totalorder %s12, 1
    %p55 = por %p53, %p54
    %p56 = scmp.ne.s32.totalorder %s48, %s51
    %p57 = scmp.eq.s32.totalorder %s12, 0
    %p58 = por %p56, %p57
    %p59 = scmp.ne.s32.totalorder %s48, %s51
    %p60 = scmp.eq.s32.totalorder %s17, 1
    %p61 = por %p59, %p60
    %p62 = scmp.ne.s32.totalorder %s51, %s52
    %p63 = scmp.eq.s32.totalorder %s17, 0
    %p64 = por %p62, %p63
    %p65 = scmp.ne.s32.totalorder %s51, %s52
    %p66 = scmp.eq.s32.totalorder %s18, 1
    %p67 = por %p65, %p66
    %p69 = scmp.ne.s32.totalorder %s52, %s68
    %p70 = scmp.eq.s32.totalorder %s18, 0
    %p71 = por %p69, %p70
    %s73 = sadd.s32 %s72, 1
    %p76 = scmp.eq.s32.totalorder %s12, 1
    %p77 = scmp.ne.s32.totalorder %s72, %s74
    %p78 = scmp.eq.s32.totalorder %s12, 0
    %p79 = por %p77, %p78
    %p80 = scmp.ne.s32.totalorder %s72, %s74
    %p81 = scmp.eq.s32.totalorder %s17, 1
    %p82 = por %p80, %p81
    %p83 = scmp.ne.s32.totalorder %s74, %s75
    %p84 = scmp.eq.s32.totalorder %s17, 0
    %p85 = por %p83, %p84
    %p86 = scmp.ne.s32.totalorder %s74, %s75
    %p87 = scmp.eq.s32.totalorder %s18, 1
    %p88 = por %p86, %p87
    %p90 = scmp.ne.s32.totalorder %s75, %s89
    %p91 = scmp.eq.s32.totalorder %s18, 0
    %p92 = por %p90, %p91
    %s94 = sadd.s32 %s93, 1
    %p97 = scmp.eq.s32.totalorder %s12, 1
    %p98 = scmp.ne.s32.totalorder %s93, %s95
    %p99 = scmp.eq.s32.totalorder %s12, 0
    %p100 = por %p98, %p99
    %p101 = scmp.ne.s32.totalorder %s93, %s95
    %p102 = scmp.eq.s32.totalorder %s17, 1
    %p103 = por %p101, %p102
    %p104 = scmp.ne.s32.totalorder %s95, %s96
    %p105 = scmp.eq.s32.totalorder %s17, 0
    %p106 = por %p104, %p105
    %p107 = scmp.ne.s32.totalorder %s95, %s96
    %p108 = scmp.eq.s32.totalorder %s18, 1
    %p109 = por %p107, %p108
    %p111 = scmp.ne.s32.totalorder %s96, %s110
    %p112 = scmp.eq.s32.totalorder %s18, 0
    %p113 = por %p111, %p112
    %s115 = sadd.s32 %s114, 1
    %p118 = scmp.eq.s32.totalorder %s12, 1
    %p119 = scmp.ne.s32.totalorder %s114, %s116
    %p120 = scmp.eq.s32.totalorder %s12, 0
    %p121 = por %p119, %p120
    %p122 = scmp.ne.s32.totalorder %s114, %s116
    %p123 = scmp.eq.s32.totalorder %s17, 1
    %p124 = por %p122, %p123
    %p125 = scmp.ne.s32.totalorder %s116, %s117
    %p126 = scmp.eq.s32.totalorder %s17, 0
    %p127 = por %p125, %p126
    %p128 = scmp.ne.s32.totalorder %s116, %s117
    %p129 = scmp.eq.s32.totalorder %s18, 1
    %p130 = por %p128, %p129
    %p132 = scmp.ne.s32.totalorder %s117, %s131
    %p133 = scmp.eq.s32.totalorder %s18, 0
    %p134 = por %p132, %p133
    %s136 = sadd.s32 %s135, 1
    %p139 = scmp.eq.s32.totalorder %s12, 1
    %p140 = scmp.ne.s32.totalorder %s135, %s137
    %p141 = scmp.eq.s32.totalorder %s12, 0
    %p142 = por %p140, %p141
    %p143 = scmp.ne.s32.totalorder %s135, %s137
    %p144 = scmp.eq.s32.totalorder %s17, 1
    %p145 = por %p143, %p144
    %p146 = scmp.ne.s32.totalorder %s137, %s138
    %p147 = scmp.eq.s32.totalorder %s17, 0
    %p148 = por %p146, %p147
    %p149 = scmp.ne.s32.totalorder %s137, %s138
    %p150 = scmp.eq.s32.totalorder %s18, 1
    %p151 = por %p149, %p150
    %p153 = scmp.ne.s32.totalorder %s138, %s152
    %p154 = scmp.eq.s32.totalorder %s18, 0
    %p155 = por %p153, %p154
    %s156 = ssub.s32 %s12, %s19
    %p157 = scmp.eq.s32.totalorder %s156, 0
    %s159 = sadd.s32 %s158, 1
    %s160 = scalar_select %p157, %s158, %s159
    %p163 = pneg %p157
    %p164 = scmp.eq.s32.totalorder %s12, 1
    %p165 = por %p163, %p164
    %p166 = scmp.ne.s32.totalorder %s158, %s161
    %p167 = scmp.eq.s32.totalorder %s12, 0
    %p168 = por %p166, %p167
    %p169 = scmp.ne.s32.totalorder %s158, %s161
    %p170 = scmp.eq.s32.totalorder %s17, 1
    %p171 = por %p169, %p170
    %p172 = scmp.ne.s32.totalorder %s161, %s162
    %p173 = scmp.eq.s32.totalorder %s17, 0
    %p174 = por %p172, %p173
    %p175 = scmp.ne.s32.totalorder %s161, %s162
    %p176 = scmp.eq.s32.totalorder %s18, 1
    %p177 = por %p175, %p176
    %p179 = scmp.ne.s32.totalorder %s162, %s178
    %p180 = scmp.eq.s32.totalorder %s18, 0
    %p181 = por %p179, %p180
    %p182 = scmp.le.s32.totalorder 1, %s12
    %p183 = scmp.lt.s32.totalorder %s12, 3
    %p184 = pnand %p182, %p183
    %p185 = pneg %p184
    // Predicated region
    $region9: #{drrn_forward.1} parent=5 // pred_check
      _
    $region10: #{drrn_forward.1} parent=5 // pred_check_branch
      %187 = sbr.rel (%p184) target = $region12
    $region11: #{drrn_forward.1} parent=5 // pred_region
      %s188 = ssub.s32 %s12, 1
      // Predicated region
      $region13: #{drrn_forward.1} parent=11 // pred_check
        %p189 = pneg %p85
      $region14: #{drrn_forward.1} parent=11 // pred_check_branch
        %191 = sbr.rel (%p189) target = $region16
      $region15: #{drrn_forward.1} parent=11 // pred_region
        _
      $region16: #{drrn_forward.1} parent=11 // pred_fallthru
        _
      // Predicated region
      $region17: #{drrn_forward.1} parent=11 // pred_check
        %p192 = pneg %p106
      $region18: #{drrn_forward.1} parent=11 // pred_check_branch
        %194 = sbr.rel (%p192) target = $region20
      $region19: #{drrn_forward.1} parent=11 // pred_region
        _
      $region20: #{drrn_forward.1} parent=11 // pred_fallthru
        _
      // Predicated region
      $region21: #{drrn_forward.1} parent=11 // pred_check
        %p195 = pneg %p127
      $region22: #{drrn_forward.1} parent=11 // pred_check_branch
        %197 = sbr.rel (%p195) target = $region24
      $region23: #{drrn_forward.1} parent=11 // pred_region
        _
      $region24: #{drrn_forward.1} parent=11 // pred_fallthru
        _
      // Predicated region
      $region25: #{drrn_forward.1} parent=11 // pred_check
        %p198 = pneg %p148
      $region26: #{drrn_forward.1} parent=11 // pred_check_branch
        %200 = sbr.rel (%p198) target = $region28
      $region27: #{drrn_forward.1} parent=11 // pred_region
        _
      $region28: #{drrn_forward.1} parent=11 // pred_fallthru
        _
    $region12: #{drrn_forward.1} parent=5 // pred_fallthru
      _
    %p201 = scmp.lt.s32.totalorder %s12, 2
    // Predicated region
    $region29: #{drrn_forward.1} parent=5 // pred_check
      %p202 = pneg %p201
    $region30: #{drrn_forward.1} parent=5 // pred_check_branch
      %204 = sbr.rel (%p202) target = $region32
    $region31: #{drrn_forward.1} parent=5 // pred_region
      // Predicated region
      $region33: #{drrn_forward.1} parent=31 // pred_check
        %p205 = pneg %p32
      $region34: #{drrn_forward.1} parent=31 // pred_check_branch
        %207 = sbr.rel (%p205) target = $region36
      $region35: #{drrn_forward.1} parent=31 // pred_region
        %p208 = scmp.lt.s32.totalorder %s12, 1
        %s209 = scalar_select %p208, %s12, 1
        %s210 = smul.addr %s209, 32
        %s211 = smul.addr %s210, 8
        %s212 = scalar_lea.vmem %s0, %s211
      $region36: #{drrn_forward.1} parent=31 // pred_fallthru
        _
      // Predicated region
      $region37: #{drrn_forward.1} parent=31 // pred_check
        %p213 = pneg %p58
      $region38: #{drrn_forward.1} parent=31 // pred_check_branch
        %215 = sbr.rel (%p213) target = $region40
      $region39: #{drrn_forward.1} parent=31 // pred_region
        %p216 = scmp.lt.s32.totalorder %s12, 1
        %s217 = scalar_select %p216, %s12, 1
        %s218 = smul.addr %s217, 2
        %s219 = smul.addr %s218, 4
        %s220 = scalar_lea.vmem %s1, %s219
      $region40: #{drrn_forward.1} parent=31 // pred_fallthru
        _
    $region32: #{drrn_forward.1} parent=5 // pred_fallthru
      _
    %p221 = scmp.le.s32.totalorder 1, %s12
    %p222 = scmp.lt.s32.totalorder %s12, 3
    %p223 = pnand %p221, %p222
    %p224 = pneg %p223
    // Predicated region
    $region41: #{drrn_forward.1} parent=5 // pred_check
      _
    $region42: #{drrn_forward.1} parent=5 // pred_check_branch
      %226 = sbr.rel (%p223) target = $region44
    $region43: #{drrn_forward.1} parent=5 // pred_region
      %s227 = ssub.s32 %s12, 1
      %p228 = scmp.lt.s32.totalorder %s17, 1
      %s229 = scalar_select %p228, %s17, 1
      %s230 = smul.addr %s229, 32
      %s231 = smul.addr %s230, 8
      %s232 = scalar_lea.vmem %s0, %s231
      %p233 = pneg %p38
      %p234 = pneg %p35
      %p235 = scmp.lt.s32.totalorder %s17, 1
      %s236 = scalar_select %p235, %s17, 1
      %s237 = smul.addr %s236, 2
      %s238 = smul.addr %s237, 4
      %s239 = scalar_lea.vmem %s1, %s238
      %p240 = pneg %p64
      %p241 = pneg %p61
      %p242 = pneg %p85
      %p243 = pneg %p82
      %p244 = pneg %p106
      %p245 = pneg %p103
      %p246 = pneg %p127
      %p247 = pneg %p124
      %p248 = pneg %p148
      %p249 = pneg %p145
      %p250 = pneg %p174
      %p251 = pneg %p171
      %p252 = scmp.lt.s32.totalorder %s17, 1
      %s253 = scalar_select %p252, %s17, 1
      %s254 = smul.addr %s253, 2
      %s255 = smul.addr %s254, 4
      %s256 = scalar_lea.vmem %s6, %s255
      %p257 = scmp.lt.s32.totalorder %s17, 1
      %s258 = scalar_select %p257, %s17, 1
      %s259 = smul.addr %s258, 32
      %s260 = smul.addr %s259, 8
      %s261 = scalar_lea.vmem %s0, %s260
      %p262 = scmp.lt.s32.totalorder %s17, 1
      %s263 = scalar_select %p262, %s17, 1
      %s264 = smul.addr %s263, 2
      %s265 = smul.addr %s264, 4
      %s266 = scalar_lea.vmem %s1, %s265
      %p267 = scmp.lt.s32.totalorder %s17, 1
      %s268 = scalar_select %p267, %s17, 1
      %s269 = smul.addr %s268, 2
      %s270 = smul.addr %s269, 4
      %s271 = scalar_lea.vmem %s6, %s270
      %272 = vst [vmem:[#allocation2] sm:$0xff] 0.0
      %273 = vst [vmem:[#allocation2 + $0x8] sm:$0xff] 0.0
      %274 = vst [vmem:[#allocation2 + $0x10] sm:$0x3] 0.0
      %275 = vst [vmem:[#allocation2 + $0x18] sm:$0xff] 0.0
      %276 = vst [vmem:[#allocation2 + $0x20] sm:$0xff] 0.0
      %277 = vst [vmem:[#allocation2 + $0x28] sm:$0x3] 0.0
      %278 = vst [vmem:[#allocation2 + $0x30] sm:$0xff] 0.0
      %279 = vst [vmem:[#allocation2 + $0x38] sm:$0xff] 0.0
      %280 = vst [vmem:[#allocation2 + $0x40] sm:$0x3] 0.0
      %281 = vst [vmem:[#allocation2 + $0x48] sm:$0xff] 0.0
      %282 = vst [vmem:[#allocation2 + $0x50] sm:$0xff] 0.0
      %283 = vst [vmem:[#allocation2 + $0x58] sm:$0x3] 0.0
      %284 = vst [vmem:[#allocation2 + $0x60] sm:$0xff] 0.0
      %285 = vst [vmem:[#allocation2 + $0x68] sm:$0xff] 0.0
      %286 = vst [vmem:[#allocation2 + $0x70] sm:$0x3] 0.0
      %287 = vst [vmem:[#allocation2 + $0x78] sm:$0xff] 0.0
      %288 = vst [vmem:[#allocation2 + $0x80] sm:$0xff] 0.0
      %289 = vst [vmem:[#allocation2 + $0x88] sm:$0x3] 0.0
      %290 = vst [vmem:[#allocation2 + $0x90] sm:$0xff] 0.0
      %291 = vst [vmem:[#allocation2 + $0x98] sm:$0xff] 0.0
      %292 = vst [vmem:[#allocation2 + $0xa0] sm:$0x3] 0.0
      %293 = vst [vmem:[#allocation2 + $0xa8] sm:$0xff] 0.0
      %294 = vst [vmem:[#allocation2 + $0xb0] sm:$0xff] 0.0
      %295 = vst [vmem:[#allocation2 + $0xb8] sm:$0x3] 0.0
      %296 = vst [vmem:[#allocation2 + $0xc0] sm:$0xff] 0.0
      %297 = vst [vmem:[#allocation2 + $0xc8] sm:$0xff] 0.0
      %298 = vst [vmem:[#allocation2 + $0xd0] sm:$0x3] 0.0
      %299 = vst [vmem:[#allocation2 + $0xd8] sm:$0xff] 0.0
      %300 = vst [vmem:[#allocation2 + $0xe0] sm:$0xff] 0.0
      %301 = vst [vmem:[#allocation2 + $0xe8] sm:$0x3] 0.0
      %302 = vst [vmem:[#allocation2 + $0xf0] sm:$0xff] 0.0
      %303 = vst [vmem:[#allocation2 + $0xf8] sm:$0xff] 0.0
      %304 = vst [vmem:[#allocation2 + $0x100] sm:$0x3] 0.0
      %305 = vst [vmem:[#allocation2 + $0x108] sm:$0xff] 0.0
      %306 = vst [vmem:[#allocation2 + $0x110] sm:$0xff] 0.0
      %307 = vst [vmem:[#allocation2 + $0x118] sm:$0x3] 0.0
      %308 = vst [vmem:[#allocation2 + $0x120] sm:$0xff] 0.0
      %309 = vst [vmem:[#allocation2 + $0x128] sm:$0xff] 0.0
      %310 = vst [vmem:[#allocation2 + $0x130] sm:$0x3] 0.0
      %311 = vst [vmem:[#allocation2 + $0x138] sm:$0xff] 0.0
      %312 = vst [vmem:[#allocation2 + $0x140] sm:$0xff] 0.0
      %313 = vst [vmem:[#allocation2 + $0x148] sm:$0x3] 0.0
      %314 = vst [vmem:[#allocation2 + $0x150] sm:$0xff] 0.0
      %315 = vst [vmem:[#allocation2 + $0x158] sm:$0xff] 0.0
      %316 = vst [vmem:[#allocation2 + $0x160] sm:$0x3] 0.0
      %317 = vst [vmem:[#allocation2 + $0x168] sm:$0xff] 0.0
      %318 = vst [vmem:[#allocation2 + $0x170] sm:$0xff] 0.0
      %319 = vst [vmem:[#allocation2 + $0x178] sm:$0x3] 0.0
      %320 = vst [vmem:[#allocation2 + $0x180] sm:$0xff] 0.0
      %321 = vst [vmem:[#allocation2 + $0x188] sm:$0xff] 0.0
      %322 = vst [vmem:[#allocation2 + $0x190] sm:$0x3] 0.0
      %323 = vst [vmem:[#allocation2 + $0x198] sm:$0xff] 0.0
      %324 = vst [vmem:[#allocation2 + $0x1a0] sm:$0xff] 0.0
      %325 = vst [vmem:[#allocation2 + $0x1a8] sm:$0x3] 0.0
      %326 = vst [vmem:[#allocation3] sm:$0xff] 0.0
      %327 = vst [vmem:[#allocation3 + $0x8] sm:$0xff] 0.0
      %328 = vst [vmem:[#allocation3 + $0x10] sm:$0x3] 0.0
      %329 = vst [vmem:[#allocation3 + $0x18] sm:$0xff] 0.0
      %330 = vst [vmem:[#allocation3 + $0x20] sm:$0xff] 0.0
      %331 = vst [vmem:[#allocation3 + $0x28] sm:$0x3] 0.0
      %332 = vst [vmem:[#allocation3 + $0x30] sm:$0xff] 0.0
      %333 = vst [vmem:[#allocation3 + $0x38] sm:$0xff] 0.0
      %334 = vst [vmem:[#allocation3 + $0x40] sm:$0x3] 0.0
      %335 = vst [vmem:[#allocation3 + $0x48] sm:$0xff] 0.0
      %336 = vst [vmem:[#allocation3 + $0x50] sm:$0xff] 0.0
      %337 = vst [vmem:[#allocation3 + $0x58] sm:$0x3] 0.0
      %338 = vst [vmem:[#allocation3 + $0x60] sm:$0xff] 0.0
      %339 = vst [vmem:[#allocation3 + $0x68] sm:$0xff] 0.0
      %340 = vst [vmem:[#allocation3 + $0x70] sm:$0x3] 0.0
      %341 = vst [vmem:[#allocation3 + $0x78] sm:$0xff] 0.0
      %342 = vst [vmem:[#allocation3 + $0x80] sm:$0xff] 0.0
      %343 = vst [vmem:[#allocation3 + $0x88] sm:$0x3] 0.0
      %344 = vst [vmem:[#allocation3 + $0x90] sm:$0xff] 0.0
      %345 = vst [vmem:[#allocation3 + $0x98] sm:$0xff] 0.0
      %346 = vst [vmem:[#allocation3 + $0xa0] sm:$0x3] 0.0
      %347 = vst [vmem:[#allocation3 + $0xa8] sm:$0xff] 0.0
      %348 = vst [vmem:[#allocation3 + $0xb0] sm:$0xff] 0.0
      %349 = vst [vmem:[#allocation3 + $0xb8] sm:$0x3] 0.0
      %350 = vst [vmem:[#allocation3 + $0xc0] sm:$0xff] 0.0
      %351 = vst [vmem:[#allocation3 + $0xc8] sm:$0xff] 0.0
      %352 = vst [vmem:[#allocation3 + $0xd0] sm:$0x3] 0.0
      %353 = vst [vmem:[#allocation3 + $0xd8] sm:$0xff] 0.0
      %354 = vst [vmem:[#allocation3 + $0xe0] sm:$0xff] 0.0
      %355 = vst [vmem:[#allocation3 + $0xe8] sm:$0x3] 0.0
      %356 = vst [vmem:[#allocation3 + $0xf0] sm:$0xff] 0.0
      %357 = vst [vmem:[#allocation3 + $0xf8] sm:$0xff] 0.0
      %358 = vst [vmem:[#allocation3 + $0x100] sm:$0x3] 0.0
      %359 = vst [vmem:[#allocation3 + $0x108] sm:$0xff] 0.0
      %360 = vst [vmem:[#allocation3 + $0x110] sm:$0xff] 0.0
      %361 = vst [vmem:[#allocation3 + $0x118] sm:$0x3] 0.0
      %362 = vst [vmem:[#allocation3 + $0x120] sm:$0xff] 0.0
      %363 = vst [vmem:[#allocation3 + $0x128] sm:$0xff] 0.0
      %364 = vst [vmem:[#allocation3 + $0x130] sm:$0x3] 0.0
      %365 = vst [vmem:[#allocation3 + $0x138] sm:$0xff] 0.0
      %366 = vst [vmem:[#allocation3 + $0x140] sm:$0xff] 0.0
      %367 = vst [vmem:[#allocation3 + $0x148] sm:$0x3] 0.0
      %368 = vst [vmem:[#allocation3 + $0x150] sm:$0xff] 0.0
      %369 = vst [vmem:[#allocation3 + $0x158] sm:$0xff] 0.0
      %370 = vst [vmem:[#allocation3 + $0x160] sm:$0x3] 0.0
      %371 = vst [vmem:[#allocation3 + $0x168] sm:$0xff] 0.0
      %372 = vst [vmem:[#allocation3 + $0x170] sm:$0xff] 0.0
      %373 = vst [vmem:[#allocation3 + $0x178] sm:$0x3] 0.0
      %374 = vst [vmem:[#allocation3 + $0x180] sm:$0xff] 0.0
      %375 = vst [vmem:[#allocation3 + $0x188] sm:$0xff] 0.0
      %376 = vst [vmem:[#allocation3 + $0x190] sm:$0x3] 0.0
      %377 = vst [vmem:[#allocation3 + $0x198] sm:$0xff] 0.0
      %378 = vst [vmem:[#allocation3 + $0x1a0] sm:$0xff] 0.0
      %379 = vst [vmem:[#allocation3 + $0x1a8] sm:$0x3] 0.0
      %v380 = vld [vmem:[%s261] sm:$0xff]
      %v381 = vld [vmem:[%s261 + $0x8] sm:$0xff]
      %v382 = vld [vmem:[%s261 + $0x10] sm:$0xff]
      %v383 = vld [vmem:[%s261 + $0x18] sm:$0xff]
      %v384 = vld [vmem:[%s261 + $0x20] sm:$0xff]
      %v385 = vld [vmem:[%s261 + $0x28] sm:$0xff]
      %v386 = vld [vmem:[%s261 + $0x30] sm:$0xff]
      %v387 = vld [vmem:[%s261 + $0x38] sm:$0xff]
      %v388 = vld [vmem:[%s261 + $0x40] sm:$0xff]
      %v389 = vld [vmem:[%s261 + $0x48] sm:$0xff]
      %v390 = vld [vmem:[%s261 + $0x50] sm:$0xff]
      %v391 = vld [vmem:[%s261 + $0x58] sm:$0xff]
      %v392 = vld [vmem:[%s261 + $0x60] sm:$0xff]
      %v393 = vld [vmem:[%s261 + $0x68] sm:$0xff]
      %v394 = vld [vmem:[%s261 + $0x70] sm:$0xff]
      %v395 = vld [vmem:[%s261 + $0x78] sm:$0xff]
      %v396 = vld [vmem:[%s261 + $0x80] sm:$0xff]
      %v397 = vld [vmem:[%s261 + $0x88] sm:$0xff]
      %v398 = vld [vmem:[%s261 + $0x90] sm:$0xff]
      %v399 = vld [vmem:[%s261 + $0x98] sm:$0xff]
      %v400 = vld [vmem:[%s261 + $0xa0] sm:$0xff]
      %v401 = vld [vmem:[%s261 + $0xa8] sm:$0xff]
      %v402 = vld [vmem:[%s261 + $0xb0] sm:$0xff]
      %v403 = vld [vmem:[%s261 + $0xb8] sm:$0xff]
      %v404 = vld [vmem:[%s261 + $0xc0] sm:$0xff]
      %v405 = vld [vmem:[%s261 + $0xc8] sm:$0xff]
      %v406 = vld [vmem:[%s261 + $0xd0] sm:$0xff]
      %v407 = vld [vmem:[%s261 + $0xd8] sm:$0xff]
      %v408 = vld [vmem:[%s261 + $0xe0] sm:$0xff]
      %v409 = vld [vmem:[%s261 + $0xe8] sm:$0xff]
      %v410 = vld [vmem:[%s261 + $0xf0] sm:$0xff]
      %v411 = vld [vmem:[%s261 + $0xf8] sm:$0xff]
      %s412 = scalar_lea.vmem [#allocation2], 24
      %413 = vst [vmem:[%s412 + $0x1] sm:$0xff] %v380
      %414 = vst [vmem:[%s412 + $0x9] sm:$0xff] %v381
      %415 = vst [vmem:[%s412 + $0x19] sm:$0xff] %v382
      %416 = vst [vmem:[%s412 + $0x21] sm:$0xff] %v383
      %417 = vst [vmem:[%s412 + $0x31] sm:$0xff] %v384
      %418 = vst [vmem:[%s412 + $0x39] sm:$0xff] %v385
      %419 = vst [vmem:[%s412 + $0x49] sm:$0xff] %v386
      %420 = vst [vmem:[%s412 + $0x51] sm:$0xff] %v387
      %421 = vst [vmem:[%s412 + $0x61] sm:$0xff] %v388
      %422 = vst [vmem:[%s412 + $0x69] sm:$0xff] %v389
      %423 = vst [vmem:[%s412 + $0x79] sm:$0xff] %v390
      %424 = vst [vmem:[%s412 + $0x81] sm:$0xff] %v391
      %425 = vst [vmem:[%s412 + $0x91] sm:$0xff] %v392
      %426 = vst [vmem:[%s412 + $0x99] sm:$0xff] %v393
      %427 = vst [vmem:[%s412 + $0xa9] sm:$0xff] %v394
      %428 = vst [vmem:[%s412 + $0xb1] sm:$0xff] %v395
      %429 = vst [vmem:[%s412 + $0xc1] sm:$0xff] %v396
      %430 = vst [vmem:[%s412 + $0xc9] sm:$0xff] %v397
      %431 = vst [vmem:[%s412 + $0xd9] sm:$0xff] %v398
      %432 = vst [vmem:[%s412 + $0xe1] sm:$0xff] %v399
      %433 = vst [vmem:[%s412 + $0xf1] sm:$0xff] %v400
      %434 = vst [vmem:[%s412 + $0xf9] sm:$0xff] %v401
      %435 = vst [vmem:[%s412 + $0x109] sm:$0xff] %v402
      %436 = vst [vmem:[%s412 + $0x111] sm:$0xff] %v403
      %437 = vst [vmem:[%s412 + $0x121] sm:$0xff] %v404
      %438 = vst [vmem:[%s412 + $0x129] sm:$0xff] %v405
      %439 = vst [vmem:[%s412 + $0x139] sm:$0xff] %v406
      %440 = vst [vmem:[%s412 + $0x141] sm:$0xff] %v407
      %441 = vst [vmem:[%s412 + $0x151] sm:$0xff] %v408
      %442 = vst [vmem:[%s412 + $0x159] sm:$0xff] %v409
      %443 = vst [vmem:[%s412 + $0x169] sm:$0xff] %v410
      %444 = vst [vmem:[%s412 + $0x171] sm:$0xff] %v411
      %v445 = vld [vmem:[#allocation2] sm:$0xff]
      %v446 = vld [vmem:[#allocation2 + $0x8] sm:$0xff]
      %v447 = vld [vmem:[#allocation2 + $0x18] sm:$0xff]
      %v448 = vld [vmem:[#allocation2 + $0x20] sm:$0xff]
      %v449 = vld [vmem:[#allocation2 + $0x30] sm:$0xff]
      %v450 = vld [vmem:[#allocation2 + $0x38] sm:$0xff]
      %v451 = vld [vmem:[#allocation2 + $0x48] sm:$0xff]
      %v452 = vld [vmem:[#allocation2 + $0x50] sm:$0xff]
      %v453 = vld [vmem:[#allocation2 + $0x60] sm:$0xff]
      %v454 = vld [vmem:[#allocation2 + $0x68] sm:$0xff]
      %v455 = vld [vmem:[#allocation2 + $0x78] sm:$0xff]
      %v456 = vld [vmem:[#allocation2 + $0x80] sm:$0xff]
      %v457 = vld [vmem:[#allocation2 + $0x90] sm:$0xff]
      %v458 = vld [vmem:[#allocation2 + $0x98] sm:$0xff]
      %v459 = vld [vmem:[#allocation2 + $0xa8] sm:$0xff]
      %v460 = vld [vmem:[#allocation2 + $0xb0] sm:$0xff]
      %v461 = vld [vmem:[#allocation2 + $0xc0] sm:$0xff]
      %v462 = vld [vmem:[#allocation2 + $0xc8] sm:$0xff]
      %v463 = vld [vmem:[#allocation2 + $0xd8] sm:$0xff]
      %v464 = vld [vmem:[#allocation2 + $0xe0] sm:$0xff]
      %v465 = vld [vmem:[#allocation2 + $0xf0] sm:$0xff]
      %v466 = vld [vmem:[#allocation2 + $0xf8] sm:$0xff]
      %v467 = vld [vmem:[#allocation2 + $0x108] sm:$0xff]
      %v468 = vld [vmem:[#allocation2 + $0x110] sm:$0xff]
      %v469 = vld [vmem:[#allocation2 + $0x120] sm:$0xff]
      %v470 = vld [vmem:[#allocation2 + $0x128] sm:$0xff]
      %v471 = vld [vmem:[#allocation2 + $0x138] sm:$0xff]
      %v472 = vld [vmem:[#allocation2 + $0x140] sm:$0xff]
      %v473 = vld [vmem:[#allocation2 + $0x150] sm:$0xff]
      %v474 = vld [vmem:[#allocation2 + $0x158] sm:$0xff]
      %v475 = vld [vmem:[#allocation2 + $0x168] sm:$0xff]
      %v476 = vld [vmem:[#allocation2 + $0x170] sm:$0xff]
      %v477 = vld [vmem:[#allocation2 + $0x1] sm:$0xff]
      %v478 = vld [vmem:[#allocation2 + $0x9] sm:$0xff]
      %v479 = vld [vmem:[#allocation2 + $0x19] sm:$0xff]
      %v480 = vld [vmem:[#allocation2 + $0x21] sm:$0xff]
      %v481 = vld [vmem:[#allocation2 + $0x31] sm:$0xff]
      %v482 = vld [vmem:[#allocation2 + $0x39] sm:$0xff]
      %v483 = vld [vmem:[#allocation2 + $0x49] sm:$0xff]
      %v484 = vld [vmem:[#allocation2 + $0x51] sm:$0xff]
      %v485 = vld [vmem:[#allocation2 + $0x61] sm:$0xff]
      %v486 = vld [vmem:[#allocation2 + $0x69] sm:$0xff]
      %v487 = vld [vmem:[#allocation2 + $0x79] sm:$0xff]
      %v488 = vld [vmem:[#allocation2 + $0x81] sm:$0xff]
      %v489 = vld [vmem:[#allocation2 + $0x91] sm:$0xff]
      %v490 = vld [vmem:[#allocation2 + $0x99] sm:$0xff]
      %v491 = vld [vmem:[#allocation2 + $0xa9] sm:$0xff]
      %v492 = vld [vmem:[#allocation2 + $0xb1] sm:$0xff]
      %v493 = vld [vmem:[#allocation2 + $0xc1] sm:$0xff]
      %v494 = vld [vmem:[#allocation2 + $0xc9] sm:$0xff]
      %v495 = vld [vmem:[#allocation2 + $0xd9] sm:$0xff]
      %v496 = vld [vmem:[#allocation2 + $0xe1] sm:$0xff]
      %v497 = vld [vmem:[#allocation2 + $0xf1] sm:$0xff]
      %v498 = vld [vmem:[#allocation2 + $0xf9] sm:$0xff]
      %v499 = vld [vmem:[#allocation2 + $0x109] sm:$0xff]
      %v500 = vld [vmem:[#allocation2 + $0x111] sm:$0xff]
      %v501 = vld [vmem:[#allocation2 + $0x121] sm:$0xff]
      %v502 = vld [vmem:[#allocation2 + $0x129] sm:$0xff]
      %v503 = vld [vmem:[#allocation2 + $0x139] sm:$0xff]
      %v504 = vld [vmem:[#allocation2 + $0x141] sm:$0xff]
      %v505 = vld [vmem:[#allocation2 + $0x151] sm:$0xff]
      %v506 = vld [vmem:[#allocation2 + $0x159] sm:$0xff]
      %v507 = vld [vmem:[#allocation2 + $0x169] sm:$0xff]
      %v508 = vld [vmem:[#allocation2 + $0x171] sm:$0xff]
      %v509 = vld [vmem:[#allocation2 + $0x2] sm:$0xff]
      %v510 = vld [vmem:[#allocation2 + $0xa] sm:$0xff]
      %v511 = vld [vmem:[#allocation2 + $0x1a] sm:$0xff]
      %v512 = vld [vmem:[#allocation2 + $0x22] sm:$0xff]
      %v513 = vld [vmem:[#allocation2 + $0x32] sm:$0xff]
      %v514 = vld [vmem:[#allocation2 + $0x3a] sm:$0xff]
      %v515 = vld [vmem:[#allocation2 + $0x4a] sm:$0xff]
      %v516 = vld [vmem:[#allocation2 + $0x52] sm:$0xff]
      %v517 = vld [vmem:[#allocation2 + $0x62] sm:$0xff]
      %v518 = vld [vmem:[#allocation2 + $0x6a] sm:$0xff]
      %v519 = vld [vmem:[#allocation2 + $0x7a] sm:$0xff]
      %v520 = vld [vmem:[#allocation2 + $0x82] sm:$0xff]
      %v521 = vld [vmem:[#allocation2 + $0x92] sm:$0xff]
      %v522 = vld [vmem:[#allocation2 + $0x9a] sm:$0xff]
      %v523 = vld [vmem:[#allocation2 + $0xaa] sm:$0xff]
      %v524 = vld [vmem:[#allocation2 + $0xb2] sm:$0xff]
      %v525 = vld [vmem:[#allocation2 + $0xc2] sm:$0xff]
      %v526 = vld [vmem:[#allocation2 + $0xca] sm:$0xff]
      %v527 = vld [vmem:[#allocation2 + $0xda] sm:$0xff]
      %v528 = vld [vmem:[#allocation2 + $0xe2] sm:$0xff]
      %v529 = vld [vmem:[#allocation2 + $0xf2] sm:$0xff]
      %v530 = vld [vmem:[#allocation2 + $0xfa] sm:$0xff]
      %v531 = vld [vmem:[#allocation2 + $0x10a] sm:$0xff]
      %v532 = vld [vmem:[#allocation2 + $0x112] sm:$0xff]
      %v533 = vld [vmem:[#allocation2 + $0x122] sm:$0xff]
      %v534 = vld [vmem:[#allocation2 + $0x12a] sm:$0xff]
      %v535 = vld [vmem:[#allocation2 + $0x13a] sm:$0xff]
      %v536 = vld [vmem:[#allocation2 + $0x142] sm:$0xff]
      %v537 = vld [vmem:[#allocation2 + $0x152] sm:$0xff]
      %v538 = vld [vmem:[#allocation2 + $0x15a] sm:$0xff]
      %v539 = vld [vmem:[#allocation2 + $0x16a] sm:$0xff]
      %v540 = vld [vmem:[#allocation2 + $0x172] sm:$0xff]
      %v541 = vld [vmem:[%s2] sm:$0xff]
      %v542 = vld [vmem:[%s2 + $0x8] sm:$0xff]
      %v543 = vld [vmem:[%s2 + $0x10] sm:$0xff]
      %v544 = vld [vmem:[%s2 + $0x18] sm:$0xff]
      %v545 = vld [vmem:[%s2 + $0x20] sm:$0xff]
      %v546 = vld [vmem:[%s2 + $0x28] sm:$0xff]
      %v547 = vld [vmem:[%s2 + $0x30] sm:$0xff]
      %v548 = vld [vmem:[%s2 + $0x38] sm:$0xff]
      %v549 = vld [vmem:[%s2 + $0x40] sm:$0xff]
      %v550 = vld [vmem:[%s2 + $0x48] sm:$0xff]
      %v551 = vld [vmem:[%s2 + $0x50] sm:$0xff]
      %v552 = vld [vmem:[%s2 + $0x58] sm:$0xff]
      %v553 = vld [vmem:[%s2 + $0x60] sm:$0xff]
      %v554 = vld [vmem:[%s2 + $0x68] sm:$0xff]
      %v555 = vld [vmem:[%s2 + $0x70] sm:$0xff]
      %v556 = vld [vmem:[%s2 + $0x78] sm:$0xff]
      %v557 = vld [vmem:[%s2 + $0x80] sm:$0xff]
      %v558 = vld [vmem:[%s2 + $0x88] sm:$0xff]
      %v559 = vld [vmem:[%s2 + $0x90] sm:$0xff]
      %v560 = vld [vmem:[%s2 + $0x98] sm:$0xff]
      %v561 = vld [vmem:[%s2 + $0xa0] sm:$0xff]
      %v562 = vld [vmem:[%s2 + $0xa8] sm:$0xff]
      %v563 = vld [vmem:[%s2 + $0xb0] sm:$0xff]
      %v564 = vld [vmem:[%s2 + $0xb8] sm:$0xff]
      %v565 = vld [vmem:[%s2 + $0xc0] sm:$0xff]
      %v566 = vld [vmem:[%s2 + $0xc8] sm:$0xff]
      %v567 = vld [vmem:[%s2 + $0xd0] sm:$0xff]
      %v568 = vld [vmem:[%s2 + $0xd8] sm:$0xff]
      %v569 = vld [vmem:[%s2 + $0xe0] sm:$0xff]
      %v570 = vld [vmem:[%s2 + $0xe8] sm:$0xff]
      %v571 = vld [vmem:[%s2 + $0xf0] sm:$0xff]
      %v572 = vld [vmem:[%s2 + $0xf8] sm:$0xff]
      %v573 = vld [vmem:[%s2 + $0x100] sm:$0xff]
      %v574 = vld [vmem:[%s2 + $0x108] sm:$0xff]
      %v575 = vld [vmem:[%s2 + $0x110] sm:$0xff]
      %v576 = vld [vmem:[%s2 + $0x118] sm:$0xff]
      %v577 = vld [vmem:[%s2 + $0x120] sm:$0xff]
      %v578 = vld [vmem:[%s2 + $0x128] sm:$0xff]
      %v579 = vld [vmem:[%s2 + $0x130] sm:$0xff]
      %v580 = vld [vmem:[%s2 + $0x138] sm:$0xff]
      %v581 = vld [vmem:[%s2 + $0x140] sm:$0xff]
      %v582 = vld [vmem:[%s2 + $0x148] sm:$0xff]
      %v583 = vld [vmem:[%s2 + $0x150] sm:$0xff]
      %v584 = vld [vmem:[%s2 + $0x158] sm:$0xff]
      %v585 = vld [vmem:[%s2 + $0x160] sm:$0xff]
      %v586 = vld [vmem:[%s2 + $0x168] sm:$0xff]
      %v587 = vld [vmem:[%s2 + $0x170] sm:$0xff]
      %v588 = vld [vmem:[%s2 + $0x178] sm:$0xff]
      %589 = vmatprep.subr.mxu0 0.0
      %590 = vmatpush1.msra.mxu0 %v556
      %591 = vmatprep.subr.mxu0 0.0
      %592 = vmatpush1.msra.mxu0 %v555
      %593 = vmatprep.subr.mxu0 0.0
      %594 = vmatpush1.msra.mxu0 %v554
      %595 = vmatprep.subr.mxu0 0.0
      %596 = vmatpush1.msra.mxu0 %v553
      %597 = vmatprep.subr.mxu0 0.0
      %598 = vmatpush1.msra.mxu0 %v552
      %599 = vmatprep.subr.mxu0 0.0
      %600 = vmatpush1.msra.mxu0 %v551
      %601 = vmatprep.subr.mxu0 0.0
      %602 = vmatpush1.msra.mxu0 %v550
      %603 = vmatprep.subr.mxu0 0.0
      %604 = vmatpush1.msra.mxu0 %v549
      %605 = vmatprep.subr.mxu0 0.0
      %606 = vmatpush1.msra.mxu0 %v548
      %607 = vmatprep.subr.mxu0 0.0
      %608 = vmatpush1.msra.mxu0 %v547
      %609 = vmatprep.subr.mxu0 0.0
      %610 = vmatpush1.msra.mxu0 %v546
      %611 = vmatprep.subr.mxu0 0.0
      %612 = vmatpush1.msra.mxu0 %v545
      %613 = vmatprep.subr.mxu0 0.0
      %614 = vmatpush1.msra.mxu0 %v544
      %615 = vmatprep.subr.mxu0 0.0
      %616 = vmatpush1.msra.mxu0 %v543
      %617 = vmatprep.subr.mxu0 0.0
      %618 = vmatpush1.msra.mxu0 %v542
      %619 = vmatprep.subr.mxu0 0.0
      %620 = vmatpush1.msra.mxu0 %v541
      %621 = vmatprep.subr.mxu0 0.0
      %622 = vmatpush2.msra.mxu0 %v572
      %623 = vmatprep.subr.mxu0 0.0
      %624 = vmatpush2.msra.mxu0 %v571
      %625 = vmatprep.subr.mxu0 0.0
      %626 = vmatpush2.msra.mxu0 %v570
      %627 = vmatprep.subr.mxu0 0.0
      %628 = vmatpush2.msra.mxu0 %v569
      %629 = vmatprep.subr.mxu0 0.0
      %630 = vmatpush2.msra.mxu0 %v568
      %631 = vmatprep.subr.mxu0 0.0
      %632 = vmatpush2.msra.mxu0 %v567
      %633 = vmatprep.subr.mxu0 0.0
      %634 = vmatpush2.msra.mxu0 %v566
      %635 = vmatprep.subr.mxu0 0.0
      %636 = vmatpush2.msra.mxu0 %v565
      %637 = vmatprep.subr.mxu0 0.0
      %638 = vmatpush2.msra.mxu0 %v564
      %639 = vmatprep.subr.mxu0 0.0
      %640 = vmatpush2.msra.mxu0 %v563
      %641 = vmatprep.subr.mxu0 0.0
      %642 = vmatpush2.msra.mxu0 %v562
      %643 = vmatprep.subr.mxu0 0.0
      %644 = vmatpush2.msra.mxu0 %v561
      %645 = vmatprep.subr.mxu0 0.0
      %646 = vmatpush2.msra.mxu0 %v560
      %647 = vmatprep.subr.mxu0 0.0
      %648 = vmatpush2.msra.mxu0 %v559
      %649 = vmatprep.subr.mxu0 0.0
      %650 = vmatpush2.msra.mxu0 %v558
      %651 = vmatprep.subr.mxu0 0.0
      %652 = vmatpush2.msra.mxu0 %v557
      %653 = vmatprep.mubr.f32.mxu0 %v477
      %654 = vmatmul.mubr.f32.gmra.mxu0 %v445
      %v655 = vpop.f32.mrf.mxu0
      %v656 = vadd.f32 0.0, %v655
      %v657 = vpop.f32.mrf.mxu0
      %658 = vmatprep.mubr.f32.mxu0 %v478
      %659 = vmatmul.mubr.f32.gmra.mxu0 %v446
      %v660 = vpop.f32.mrf.mxu0
      %v661 = vadd.f32 0.0, %v660
      %v662 = vpop.f32.mrf.mxu0
      %663 = vmatprep.mubr.f32.mxu0 %v479
      %664 = vmatmul.mubr.f32.gmra.mxu0 %v447
      %v665 = vpop.f32.mrf.mxu0
      %v666 = vadd.f32 0.0, %v665
      %v667 = vpop.f32.mrf.mxu0
      %668 = vmatprep.mubr.f32.mxu0 %v480
      %669 = vmatmul.mubr.f32.gmra.mxu0 %v448
      %v670 = vpop.f32.mrf.mxu0
      %v671 = vadd.f32 0.0, %v670
      %v672 = vpop.f32.mrf.mxu0
      %673 = vmatprep.mubr.f32.mxu0 %v481
      %674 = vmatmul.mubr.f32.gmra.mxu0 %v449
      %v675 = vpop.f32.mrf.mxu0
      %v676 = vadd.f32 0.0, %v675
      %v677 = vpop.f32.mrf.mxu0
      %678 = vmatprep.mubr.f32.mxu0 %v482
      %679 = vmatmul.mubr.f32.gmra.mxu0 %v450
      %v680 = vpop.f32.mrf.mxu0
      %v681 = vadd.f32 0.0, %v680
      %v682 = vpop.f32.mrf.mxu0
      %683 = vmatprep.mubr.f32.mxu0 %v483
      %684 = vmatmul.mubr.f32.gmra.mxu0 %v451
      %v685 = vpop.f32.mrf.mxu0
      %v686 = vadd.f32 0.0, %v685
      %v687 = vpop.f32.mrf.mxu0
      %688 = vmatprep.mubr.f32.mxu0 %v484
      %689 = vmatmul.mubr.f32.gmra.mxu0 %v452
      %v690 = vpop.f32.mrf.mxu0
      %v691 = vadd.f32 0.0, %v690
      %v692 = vpop.f32.mrf.mxu0
      %693 = vmatprep.mubr.f32.mxu0 %v485
      %694 = vmatmul.mubr.f32.gmra.mxu0 %v453
      %v695 = vpop.f32.mrf.mxu0
      %v696 = vadd.f32 0.0, %v695
      %v697 = vpop.f32.mrf.mxu0
      %698 = vmatprep.mubr.f32.mxu0 %v486
      %699 = vmatmul.mubr.f32.gmra.mxu0 %v454
      %v700 = vpop.f32.mrf.mxu0
      %v701 = vadd.f32 0.0, %v700
      %v702 = vpop.f32.mrf.mxu0
      %703 = vmatprep.mubr.f32.mxu0 %v487
      %704 = vmatmul.mubr.f32.gmra.mxu0 %v455
      %v705 = vpop.f32.mrf.mxu0
      %v706 = vadd.f32 0.0, %v705
      %v707 = vpop.f32.mrf.mxu0
      %708 = vmatprep.mubr.f32.mxu0 %v488
      %709 = vmatmul.mubr.f32.gmra.mxu0 %v456
      %v710 = vpop.f32.mrf.mxu0
      %v711 = vadd.f32 0.0, %v710
      %v712 = vpop.f32.mrf.mxu0
      %713 = vmatprep.mubr.f32.mxu0 %v489
      %714 = vmatmul.mubr.f32.gmra.mxu0 %v457
      %v715 = vpop.f32.mrf.mxu0
      %v716 = vadd.f32 0.0, %v715
      %v717 = vpop.f32.mrf.mxu0
      %718 = vmatprep.mubr.f32.mxu0 %v490
      %719 = vmatmul.mubr.f32.gmra.mxu0 %v458
      %v720 = vpop.f32.mrf.mxu0
      %v721 = vadd.f32 0.0, %v720
      %v722 = vpop.f32.mrf.mxu0
      %723 = vmatprep.mubr.f32.mxu0 %v491
      %724 = vmatmul.mubr.f32.gmra.mxu0 %v459
      %v725 = vpop.f32.mrf.mxu0
      %v726 = vadd.f32 0.0, %v725
      %v727 = vpop.f32.mrf.mxu0
      %728 = vmatprep.mubr.f32.mxu0 %v492
      %729 = vmatmul.mubr.f32.gmra.mxu0 %v460
      %v730 = vpop.f32.mrf.mxu0
      %v731 = vadd.f32 0.0, %v730
      %v732 = vpop.f32.mrf.mxu0
      %733 = vmatprep.mubr.f32.mxu0 %v493
      %734 = vmatmul.mubr.f32.gmra.mxu0 %v461
      %v735 = vpop.f32.mrf.mxu0
      %v736 = vadd.f32 0.0, %v735
      %v737 = vpop.f32.mrf.mxu0
      %738 = vmatprep.mubr.f32.mxu0 %v494
      %739 = vmatmul.mubr.f32.gmra.mxu0 %v462
      %v740 = vpop.f32.mrf.mxu0
      %v741 = vadd.f32 0.0, %v740
      %v742 = vpop.f32.mrf.mxu0
      %743 = vmatprep.mubr.f32.mxu0 %v495
      %744 = vmatmul.mubr.f32.gmra.mxu0 %v463
      %v745 = vpop.f32.mrf.mxu0
      %v746 = vadd.f32 0.0, %v745
      %v747 = vpop.f32.mrf.mxu0
      %748 = vmatprep.mubr.f32.mxu0 %v496
      %749 = vmatmul.mubr.f32.gmra.mxu0 %v464
      %v750 = vpop.f32.mrf.mxu0
      %v751 = vadd.f32 0.0, %v750
      %v752 = vpop.f32.mrf.mxu0
      %753 = vmatprep.mubr.f32.mxu0 %v497
      %754 = vmatmul.mubr.f32.gmra.mxu0 %v465
      %v755 = vpop.f32.mrf.mxu0
      %v756 = vadd.f32 0.0, %v755
      %v757 = vpop.f32.mrf.mxu0
      %758 = vmatprep.mubr.f32.mxu0 %v498
      %759 = vmatmul.mubr.f32.gmra.mxu0 %v466
      %v760 = vpop.f32.mrf.mxu0
      %v761 = vadd.f32 0.0, %v760
      %v762 = vpop.f32.mrf.mxu0
      %763 = vmatprep.mubr.f32.mxu0 %v499
      %764 = vmatmul.mubr.f32.gmra.mxu0 %v467
      %v765 = vpop.f32.mrf.mxu0
      %v766 = vadd.f32 0.0, %v765
      %v767 = vpop.f32.mrf.mxu0
      %768 = vmatprep.mubr.f32.mxu0 %v500
      %769 = vmatmul.mubr.f32.gmra.mxu0 %v468
      %v770 = vpop.f32.mrf.mxu0
      %v771 = vadd.f32 0.0, %v770
      %v772 = vpop.f32.mrf.mxu0
      %773 = vmatprep.mubr.f32.mxu0 %v501
      %774 = vmatmul.mubr.f32.gmra.mxu0 %v469
      %v775 = vpop.f32.mrf.mxu0
      %v776 = vadd.f32 0.0, %v775
      %v777 = vpop.f32.mrf.mxu0
      %778 = vmatprep.mubr.f32.mxu0 %v502
      %779 = vmatmul.mubr.f32.gmra.mxu0 %v470
      %v780 = vpop.f32.mrf.mxu0
      %v781 = vadd.f32 0.0, %v780
      %v782 = vpop.f32.mrf.mxu0
      %783 = vmatprep.mubr.f32.mxu0 %v503
      %784 = vmatmul.mubr.f32.gmra.mxu0 %v471
      %v785 = vpop.f32.mrf.mxu0
      %v786 = vadd.f32 0.0, %v785
      %v787 = vpop.f32.mrf.mxu0
      %788 = vmatprep.mubr.f32.mxu0 %v504
      %789 = vmatmul.mubr.f32.gmra.mxu0 %v472
      %v790 = vpop.f32.mrf.mxu0
      %v791 = vadd.f32 0.0, %v790
      %v792 = vpop.f32.mrf.mxu0
      %793 = vmatprep.mubr.f32.mxu0 %v505
      %794 = vmatmul.mubr.f32.gmra.mxu0 %v473
      %v795 = vpop.f32.mrf.mxu0
      %v796 = vadd.f32 0.0, %v795
      %v797 = vpop.f32.mrf.mxu0
      %798 = vmatprep.mubr.f32.mxu0 %v506
      %799 = vmatmul.mubr.f32.gmra.mxu0 %v474
      %v800 = vpop.f32.mrf.mxu0
      %v801 = vadd.f32 0.0, %v800
      %v802 = vpop.f32.mrf.mxu0
      %803 = vmatprep.mubr.f32.mxu0 %v507
      %804 = vmatmul.mubr.f32.gmra.mxu0 %v475
      %v805 = vpop.f32.mrf.mxu0
      %v806 = vadd.f32 0.0, %v805
      %v807 = vpop.f32.mrf.mxu0
      %808 = vmatprep.mubr.f32.mxu0 %v508
      %809 = vmatmul.mubr.f32.gmra.mxu0 %v476
      %v810 = vpop.f32.mrf.mxu0
      %v811 = vadd.f32 0.0, %v810
      %v812 = vpop.f32.mrf.mxu0
      %813 = vdwg.mxu0
      %814 = vmatprep.subr.mxu0 0.0
      %815 = vmatpush1.msra.mxu0 %v588
      %816 = vmatprep.subr.mxu0 0.0
      %817 = vmatpush1.msra.mxu0 %v587
      %818 = vmatprep.subr.mxu0 0.0
      %819 = vmatpush1.msra.mxu0 %v586
      %820 = vmatprep.subr.mxu0 0.0
      %821 = vmatpush1.msra.mxu0 %v585
      %822 = vmatprep.subr.mxu0 0.0
      %823 = vmatpush1.msra.mxu0 %v584
      %824 = vmatprep.subr.mxu0 0.0
      %825 = vmatpush1.msra.mxu0 %v583
      %826 = vmatprep.subr.mxu0 0.0
      %827 = vmatpush1.msra.mxu0 %v582
      %828 = vmatprep.subr.mxu0 0.0
      %829 = vmatpush1.msra.mxu0 %v581
      %830 = vmatprep.subr.mxu0 0.0
      %831 = vmatpush1.msra.mxu0 %v580
      %832 = vmatprep.subr.mxu0 0.0
      %833 = vmatpush1.msra.mxu0 %v579
      %834 = vmatprep.subr.mxu0 0.0
      %835 = vmatpush1.msra.mxu0 %v578
      %836 = vmatprep.subr.mxu0 0.0
      %837 = vmatpush1.msra.mxu0 %v577
      %838 = vmatprep.subr.mxu0 0.0
      %839 = vmatpush1.msra.mxu0 %v576
      %840 = vmatprep.subr.mxu0 0.0
      %841 = vmatpush1.msra.mxu0 %v575
      %842 = vmatprep.subr.mxu0 0.0
      %843 = vmatpush1.msra.mxu0 %v574
      %844 = vmatprep.subr.mxu0 0.0
      %845 = vmatpush1.msra.mxu0 %v573
      %846 = vmatprep.subr.mxu0 0.0
      %847 = vmatpush2.msra.mxu0 0.0
      %848 = vmatprep.subr.mxu0 0.0
      %849 = vmatpush2.msra.mxu0 0.0
      %850 = vmatprep.subr.mxu0 0.0
      %851 = vmatpush2.msra.mxu0 0.0
      %852 = vmatprep.subr.mxu0 0.0
      %853 = vmatpush2.msra.mxu0 0.0
      %854 = vmatprep.subr.mxu0 0.0
      %855 = vmatpush2.msra.mxu0 0.0
      %856 = vmatprep.subr.mxu0 0.0
      %857 = vmatpush2.msra.mxu0 0.0
      %858 = vmatprep.subr.mxu0 0.0
      %859 = vmatpush2.msra.mxu0 0.0
      %860 = vmatprep.subr.mxu0 0.0
      %861 = vmatpush2.msra.mxu0 0.0
      %862 = vmatprep.subr.mxu0 0.0
      %863 = vmatpush2.msra.mxu0 0.0
      %864 = vmatprep.subr.mxu0 0.0
      %865 = vmatpush2.msra.mxu0 0.0
      %866 = vmatprep.subr.mxu0 0.0
      %867 = vmatpush2.msra.mxu0 0.0
      %868 = vmatprep.subr.mxu0 0.0
      %869 = vmatpush2.msra.mxu0 0.0
      %870 = vmatprep.subr.mxu0 0.0
      %871 = vmatpush2.msra.mxu0 0.0
      %872 = vmatprep.subr.mxu0 0.0
      %873 = vmatpush2.msra.mxu0 0.0
      %874 = vmatprep.subr.mxu0 0.0
      %875 = vmatpush2.msra.mxu0 0.0
      %876 = vmatprep.subr.mxu0 0.0
      %877 = vmatpush2.msra.mxu0 0.0
      %878 = vmatprep.mubr.f32.mxu0 0.0
      %879 = vmatmul.mubr.f32.gmra.mxu0 %v509
      %v880 = vpop.f32.mrf.mxu0
      %v881 = vadd.f32 %v656, %v880
      %v882 = vpop.f32.mrf.mxu0
      %883 = vmatprep.mubr.f32.mxu0 0.0
      %884 = vmatmul.mubr.f32.gmra.mxu0 %v510
      %v885 = vpop.f32.mrf.mxu0
      %v886 = vadd.f32 %v661, %v885
      %v887 = vpop.f32.mrf.mxu0
      %888 = vmatprep.mubr.f32.mxu0 0.0
      %889 = vmatmul.mubr.f32.gmra.mxu0 %v511
      %v890 = vpop.f32.mrf.mxu0
      %v891 = vadd.f32 %v666, %v890
      %v892 = vpop.f32.mrf.mxu0
      %893 = vmatprep.mubr.f32.mxu0 0.0
      %894 = vmatmul.mubr.f32.gmra.mxu0 %v512
      %v895 = vpop.f32.mrf.mxu0
      %v896 = vadd.f32 %v671, %v895
      %v897 = vpop.f32.mrf.mxu0
      %898 = vmatprep.mubr.f32.mxu0 0.0
      %899 = vmatmul.mubr.f32.gmra.mxu0 %v513
      %v900 = vpop.f32.mrf.mxu0
      %v901 = vadd.f32 %v676, %v900
      %v902 = vpop.f32.mrf.mxu0
      %903 = vmatprep.mubr.f32.mxu0 0.0
      %904 = vmatmul.mubr.f32.gmra.mxu0 %v514
      %v905 = vpop.f32.mrf.mxu0
      %v906 = vadd.f32 %v681, %v905
      %v907 = vpop.f32.mrf.mxu0
      %908 = vmatprep.mubr.f32.mxu0 0.0
      %909 = vmatmul.mubr.f32.gmra.mxu0 %v515
      %v910 = vpop.f32.mrf.mxu0
      %v911 = vadd.f32 %v686, %v910
      %v912 = vpop.f32.mrf.mxu0
      %913 = vmatprep.mubr.f32.mxu0 0.0
      %914 = vmatmul.mubr.f32.gmra.mxu0 %v516
      %v915 = vpop.f32.mrf.mxu0
      %v916 = vadd.f32 %v691, %v915
      %v917 = vpop.f32.mrf.mxu0
      %918 = vmatprep.mubr.f32.mxu0 0.0
      %919 = vmatmul.mubr.f32.gmra.mxu0 %v517
      %v920 = vpop.f32.mrf.mxu0
      %v921 = vadd.f32 %v696, %v920
      %v922 = vpop.f32.mrf.mxu0
      %923 = vmatprep.mubr.f32.mxu0 0.0
      %924 = vmatmul.mubr.f32.gmra.mxu0 %v518
      %v925 = vpop.f32.mrf.mxu0
      %v926 = vadd.f32 %v701, %v925
      %v927 = vpop.f32.mrf.mxu0
      %928 = vmatprep.mubr.f32.mxu0 0.0
      %929 = vmatmul.mubr.f32.gmra.mxu0 %v519
      %v930 = vpop.f32.mrf.mxu0
      %v931 = vadd.f32 %v706, %v930
      %v932 = vpop.f32.mrf.mxu0
      %933 = vmatprep.mubr.f32.mxu0 0.0
      %934 = vmatmul.mubr.f32.gmra.mxu0 %v520
      %v935 = vpop.f32.mrf.mxu0
      %v936 = vadd.f32 %v711, %v935
      %v937 = vpop.f32.mrf.mxu0
      %938 = vmatprep.mubr.f32.mxu0 0.0
      %939 = vmatmul.mubr.f32.gmra.mxu0 %v521
      %v940 = vpop.f32.mrf.mxu0
      %v941 = vadd.f32 %v716, %v940
      %v942 = vpop.f32.mrf.mxu0
      %943 = vmatprep.mubr.f32.mxu0 0.0
      %944 = vmatmul.mubr.f32.gmra.mxu0 %v522
      %v945 = vpop.f32.mrf.mxu0
      %v946 = vadd.f32 %v721, %v945
      %v947 = vpop.f32.mrf.mxu0
      %948 = vmatprep.mubr.f32.mxu0 0.0
      %949 = vmatmul.mubr.f32.gmra.mxu0 %v523
      %v950 = vpop.f32.mrf.mxu0
      %v951 = vadd.f32 %v726, %v950
      %v952 = vpop.f32.mrf.mxu0
      %953 = vmatprep.mubr.f32.mxu0 0.0
      %954 = vmatmul.mubr.f32.gmra.mxu0 %v524
      %v955 = vpop.f32.mrf.mxu0
      %v956 = vadd.f32 %v731, %v955
      %v957 = vpop.f32.mrf.mxu0
      %958 = vmatprep.mubr.f32.mxu0 0.0
      %959 = vmatmul.mubr.f32.gmra.mxu0 %v525
      %v960 = vpop.f32.mrf.mxu0
      %v961 = vadd.f32 %v736, %v960
      %v962 = vpop.f32.mrf.mxu0
      %963 = vmatprep.mubr.f32.mxu0 0.0
      %964 = vmatmul.mubr.f32.gmra.mxu0 %v526
      %v965 = vpop.f32.mrf.mxu0
      %v966 = vadd.f32 %v741, %v965
      %v967 = vpop.f32.mrf.mxu0
      %968 = vmatprep.mubr.f32.mxu0 0.0
      %969 = vmatmul.mubr.f32.gmra.mxu0 %v527
      %v970 = vpop.f32.mrf.mxu0
      %v971 = vadd.f32 %v746, %v970
      %v972 = vpop.f32.mrf.mxu0
      %973 = vmatprep.mubr.f32.mxu0 0.0
      %974 = vmatmul.mubr.f32.gmra.mxu0 %v528
      %v975 = vpop.f32.mrf.mxu0
      %v976 = vadd.f32 %v751, %v975
      %v977 = vpop.f32.mrf.mxu0
      %978 = vmatprep.mubr.f32.mxu0 0.0
      %979 = vmatmul.mubr.f32.gmra.mxu0 %v529
      %v980 = vpop.f32.mrf.mxu0
      %v981 = vadd.f32 %v756, %v980
      %v982 = vpop.f32.mrf.mxu0
      %983 = vmatprep.mubr.f32.mxu0 0.0
      %984 = vmatmul.mubr.f32.gmra.mxu0 %v530
      %v985 = vpop.f32.mrf.mxu0
      %v986 = vadd.f32 %v761, %v985
      %v987 = vpop.f32.mrf.mxu0
      %988 = vmatprep.mubr.f32.mxu0 0.0
      %989 = vmatmul.mubr.f32.gmra.mxu0 %v531
      %v990 = vpop.f32.mrf.mxu0
      %v991 = vadd.f32 %v766, %v990
      %v992 = vpop.f32.mrf.mxu0
      %993 = vmatprep.mubr.f32.mxu0 0.0
      %994 = vmatmul.mubr.f32.gmra.mxu0 %v532
      %v995 = vpop.f32.mrf.mxu0
      %v996 = vadd.f32 %v771, %v995
      %v997 = vpop.f32.mrf.mxu0
      %998 = vmatprep.mubr.f32.mxu0 0.0
      %999 = vmatmul.mubr.f32.gmra.mxu0 %v533
      %v1000 = vpop.f32.mrf.mxu0
      %v1001 = vadd.f32 %v776, %v1000
      %v1002 = vpop.f32.mrf.mxu0
      %1003 = vmatprep.mubr.f32.mxu0 0.0
      %1004 = vmatmul.mubr.f32.gmra.mxu0 %v534
      %v1005 = vpop.f32.mrf.mxu0
      %v1006 = vadd.f32 %v781, %v1005
      %v1007 = vpop.f32.mrf.mxu0
      %1008 = vmatprep.mubr.f32.mxu0 0.0
      %1009 = vmatmul.mubr.f32.gmra.mxu0 %v535
      %v1010 = vpop.f32.mrf.mxu0
      %v1011 = vadd.f32 %v786, %v1010
      %v1012 = vpop.f32.mrf.mxu0
      %1013 = vmatprep.mubr.f32.mxu0 0.0
      %1014 = vmatmul.mubr.f32.gmra.mxu0 %v536
      %v1015 = vpop.f32.mrf.mxu0
      %v1016 = vadd.f32 %v791, %v1015
      %v1017 = vpop.f32.mrf.mxu0
      %1018 = vmatprep.mubr.f32.mxu0 0.0
      %1019 = vmatmul.mubr.f32.gmra.mxu0 %v537
      %v1020 = vpop.f32.mrf.mxu0
      %v1021 = vadd.f32 %v796, %v1020
      %v1022 = vpop.f32.mrf.mxu0
      %1023 = vmatprep.mubr.f32.mxu0 0.0
      %1024 = vmatmul.mubr.f32.gmra.mxu0 %v538
      %v1025 = vpop.f32.mrf.mxu0
      %v1026 = vadd.f32 %v801, %v1025
      %v1027 = vpop.f32.mrf.mxu0
      %1028 = vmatprep.mubr.f32.mxu0 0.0
      %1029 = vmatmul.mubr.f32.gmra.mxu0 %v539
      %v1030 = vpop.f32.mrf.mxu0
      %v1031 = vadd.f32 %v806, %v1030
      %v1032 = vpop.f32.mrf.mxu0
      %1033 = vmatprep.mubr.f32.mxu0 0.0
      %1034 = vmatmul.mubr.f32.gmra.mxu0 %v540
      %v1035 = vpop.f32.mrf.mxu0
      %v1036 = vadd.f32 %v811, %v1035
      %v1037 = vpop.f32.mrf.mxu0
      %1038 = vdwg.mxu0
      %1039 = vst [vmem:[#allocation5] sm:$0xff] %v881
      %1040 = vst [vmem:[#allocation5 + $0x8] sm:$0xff] %v886
      %1041 = vst [vmem:[#allocation5 + $0x10] sm:$0xff] %v891
      %1042 = vst [vmem:[#allocation5 + $0x18] sm:$0xff] %v896
      %1043 = vst [vmem:[#allocation5 + $0x20] sm:$0xff] %v901
      %1044 = vst [vmem:[#allocation5 + $0x28] sm:$0xff] %v906
      %1045 = vst [vmem:[#allocation5 + $0x30] sm:$0xff] %v911
      %1046 = vst [vmem:[#allocation5 + $0x38] sm:$0xff] %v916
      %1047 = vst [vmem:[#allocation5 + $0x40] sm:$0xff] %v921
      %1048 = vst [vmem:[#allocation5 + $0x48] sm:$0xff] %v926
      %1049 = vst [vmem:[#allocation5 + $0x50] sm:$0xff] %v931
      %1050 = vst [vmem:[#allocation5 + $0x58] sm:$0xff] %v936
      %1051 = vst [vmem:[#allocation5 + $0x60] sm:$0xff] %v941
      %1052 = vst [vmem:[#allocation5 + $0x68] sm:$0xff] %v946
      %1053 = vst [vmem:[#allocation5 + $0x70] sm:$0xff] %v951
      %1054 = vst [vmem:[#allocation5 + $0x78] sm:$0xff] %v956
      %1055 = vst [vmem:[#allocation5 + $0x80] sm:$0xff] %v961
      %1056 = vst [vmem:[#allocation5 + $0x88] sm:$0xff] %v966
      %1057 = vst [vmem:[#allocation5 + $0x90] sm:$0xff] %v971
      %1058 = vst [vmem:[#allocation5 + $0x98] sm:$0xff] %v976
      %1059 = vst [vmem:[#allocation5 + $0xa0] sm:$0xff] %v981
      %1060 = vst [vmem:[#allocation5 + $0xa8] sm:$0xff] %v986
      %1061 = vst [vmem:[#allocation5 + $0xb0] sm:$0xff] %v991
      %1062 = vst [vmem:[#allocation5 + $0xb8] sm:$0xff] %v996
      %1063 = vst [vmem:[#allocation5 + $0xc0] sm:$0xff] %v1001
      %1064 = vst [vmem:[#allocation5 + $0xc8] sm:$0xff] %v1006
      %1065 = vst [vmem:[#allocation5 + $0xd0] sm:$0xff] %v1011
      %1066 = vst [vmem:[#allocation5 + $0xd8] sm:$0xff] %v1016
      %1067 = vst [vmem:[#allocation5 + $0xe0] sm:$0xff] %v1021
      %1068 = vst [vmem:[#allocation5 + $0xe8] sm:$0xff] %v1026
      %1069 = vst [vmem:[#allocation5 + $0xf0] sm:$0xff] %v1031
      %1070 = vst [vmem:[#allocation5 + $0xf8] sm:$0xff] %v1036
      %v1071 = vld [vmem:[%s412] sm:$0xff]
      %v1072 = vld [vmem:[%s412 + $0x8] sm:$0xff]
      %v1073 = vld [vmem:[%s412 + $0x18] sm:$0xff]
      %v1074 = vld [vmem:[%s412 + $0x20] sm:$0xff]
      %v1075 = vld [vmem:[%s412 + $0x30] sm:$0xff]
      %v1076 = vld [vmem:[%s412 + $0x38] sm:$0xff]
      %v1077 = vld [vmem:[%s412 + $0x48] sm:$0xff]
      %v1078 = vld [vmem:[%s412 + $0x50] sm:$0xff]
      %v1079 = vld [vmem:[%s412 + $0x60] sm:$0xff]
      %v1080 = vld [vmem:[%s412 + $0x68] sm:$0xff]
      %v1081 = vld [vmem:[%s412 + $0x78] sm:$0xff]
      %v1082 = vld [vmem:[%s412 + $0x80] sm:$0xff]
      %v1083 = vld [vmem:[%s412 + $0x90] sm:$0xff]
      %v1084 = vld [vmem:[%s412 + $0x98] sm:$0xff]
      %v1085 = vld [vmem:[%s412 + $0xa8] sm:$0xff]
      %v1086 = vld [vmem:[%s412 + $0xb0] sm:$0xff]
      %v1087 = vld [vmem:[%s412 + $0xc0] sm:$0xff]
      %v1088 = vld [vmem:[%s412 + $0xc8] sm:$0xff]
      %v1089 = vld [vmem:[%s412 + $0xd8] sm:$0xff]
      %v1090 = vld [vmem:[%s412 + $0xe0] sm:$0xff]
      %v1091 = vld [vmem:[%s412 + $0xf0] sm:$0xff]
      %v1092 = vld [vmem:[%s412 + $0xf8] sm:$0xff]
      %v1093 = vld [vmem:[%s412 + $0x108] sm:$0xff]
      %v1094 = vld [vmem:[%s412 + $0x110] sm:$0xff]
      %v1095 = vld [vmem:[%s412 + $0x120] sm:$0xff]
      %v1096 = vld [vmem:[%s412 + $0x128] sm:$0xff]
      %v1097 = vld [vmem:[%s412 + $0x138] sm:$0xff]
      %v1098 = vld [vmem:[%s412 + $0x140] sm:$0xff]
      %v1099 = vld [vmem:[%s412 + $0x150] sm:$0xff]
      %v1100 = vld [vmem:[%s412 + $0x158] sm:$0xff]
      %v1101 = vld [vmem:[%s412 + $0x168] sm:$0xff]
      %v1102 = vld [vmem:[%s412 + $0x170] sm:$0xff]
      %v1103 = vld [vmem:[%s412 + $0x1] sm:$0xff]
      %v1104 = vld [vmem:[%s412 + $0x9] sm:$0xff]
      %v1105 = vld [vmem:[%s412 + $0x19] sm:$0xff]
      %v1106 = vld [vmem:[%s412 + $0x21] sm:$0xff]
      %v1107 = vld [vmem:[%s412 + $0x31] sm:$0xff]
      %v1108 = vld [vmem:[%s412 + $0x39] sm:$0xff]
      %v1109 = vld [vmem:[%s412 + $0x49] sm:$0xff]
      %v1110 = vld [vmem:[%s412 + $0x51] sm:$0xff]
      %v1111 = vld [vmem:[%s412 + $0x61] sm:$0xff]
      %v1112 = vld [vmem:[%s412 + $0x69] sm:$0xff]
      %v1113 = vld [vmem:[%s412 + $0x79] sm:$0xff]
      %v1114 = vld [vmem:[%s412 + $0x81] sm:$0xff]
      %v1115 = vld [vmem:[%s412 + $0x91] sm:$0xff]
      %v1116 = vld [vmem:[%s412 + $0x99] sm:$0xff]
      %v1117 = vld [vmem:[%s412 + $0xa9] sm:$0xff]
      %v1118 = vld [vmem:[%s412 + $0xb1] sm:$0xff]
      %v1119 = vld [vmem:[%s412 + $0xc1] sm:$0xff]
      %v1120 = vld [vmem:[%s412 + $0xc9] sm:$0xff]
      %v1121 = vld [vmem:[%s412 + $0xd9] sm:$0xff]
      %v1122 = vld [vmem:[%s412 + $0xe1] sm:$0xff]
      %v1123 = vld [vmem:[%s412 + $0xf1] sm:$0xff]
      %v1124 = vld [vmem:[%s412 + $0xf9] sm:$0xff]
      %v1125 = vld [vmem:[%s412 + $0x109] sm:$0xff]
      %v1126 = vld [vmem:[%s412 + $0x111] sm:$0xff]
      %v1127 = vld [vmem:[%s412 + $0x121] sm:$0xff]
      %v1128 = vld [vmem:[%s412 + $0x129] sm:$0xff]
      %v1129 = vld [vmem:[%s412 + $0x139] sm:$0xff]
      %v1130 = vld [vmem:[%s412 + $0x141] sm:$0xff]
      %v1131 = vld [vmem:[%s412 + $0x151] sm:$0xff]
      %v1132 = vld [vmem:[%s412 + $0x159] sm:$0xff]
      %v1133 = vld [vmem:[%s412 + $0x169] sm:$0xff]
      %v1134 = vld [vmem:[%s412 + $0x171] sm:$0xff]
      %v1135 = vld [vmem:[%s412 + $0x2] sm:$0xff]
      %v1136 = vld [vmem:[%s412 + $0xa] sm:$0xff]
      %v1137 = vld [vmem:[%s412 + $0x1a] sm:$0xff]
      %v1138 = vld [vmem:[%s412 + $0x22] sm:$0xff]
      %v1139 = vld [vmem:[%s412 + $0x32] sm:$0xff]
      %v1140 = vld [vmem:[%s412 + $0x3a] sm:$0xff]
      %v1141 = vld [vmem:[%s412 + $0x4a] sm:$0xff]
      %v1142 = vld [vmem:[%s412 + $0x52] sm:$0xff]
      %v1143 = vld [vmem:[%s412 + $0x62] sm:$0xff]
      %v1144 = vld [vmem:[%s412 + $0x6a] sm:$0xff]
      %v1145 = vld [vmem:[%s412 + $0x7a] sm:$0xff]
      %v1146 = vld [vmem:[%s412 + $0x82] sm:$0xff]
      %v1147 = vld [vmem:[%s412 + $0x92] sm:$0xff]
      %v1148 = vld [vmem:[%s412 + $0x9a] sm:$0xff]
      %v1149 = vld [vmem:[%s412 + $0xaa] sm:$0xff]
      %v1150 = vld [vmem:[%s412 + $0xb2] sm:$0xff]
      %v1151 = vld [vmem:[%s412 + $0xc2] sm:$0xff]
      %v1152 = vld [vmem:[%s412 + $0xca] sm:$0xff]
      %v1153 = vld [vmem:[%s412 + $0xda] sm:$0xff]
      %v1154 = vld [vmem:[%s412 + $0xe2] sm:$0xff]
      %v1155 = vld [vmem:[%s412 + $0xf2] sm:$0xff]
      %v1156 = vld [vmem:[%s412 + $0xfa] sm:$0xff]
      %v1157 = vld [vmem:[%s412 + $0x10a] sm:$0xff]
      %v1158 = vld [vmem:[%s412 + $0x112] sm:$0xff]
      %v1159 = vld [vmem:[%s412 + $0x122] sm:$0xff]
      %v1160 = vld [vmem:[%s412 + $0x12a] sm:$0xff]
      %v1161 = vld [vmem:[%s412 + $0x13a] sm:$0xff]
      %v1162 = vld [vmem:[%s412 + $0x142] sm:$0xff]
      %v1163 = vld [vmem:[%s412 + $0x152] sm:$0xff]
      %v1164 = vld [vmem:[%s412 + $0x15a] sm:$0xff]
      %v1165 = vld [vmem:[%s412 + $0x16a] sm:$0xff]
      %v1166 = vld [vmem:[%s412 + $0x172] sm:$0xff]
      %s1167 = scalar_lea.vmem %s2, 384
      %v1168 = vld [vmem:[%s1167] sm:$0xff]
      %v1169 = vld [vmem:[%s1167 + $0x8] sm:$0xff]
      %v1170 = vld [vmem:[%s1167 + $0x10] sm:$0xff]
      %v1171 = vld [vmem:[%s1167 + $0x18] sm:$0xff]
      %v1172 = vld [vmem:[%s1167 + $0x20] sm:$0xff]
      %v1173 = vld [vmem:[%s1167 + $0x28] sm:$0xff]
      %v1174 = vld [vmem:[%s1167 + $0x30] sm:$0xff]
      %v1175 = vld [vmem:[%s1167 + $0x38] sm:$0xff]
      %v1176 = vld [vmem:[%s1167 + $0x40] sm:$0xff]
      %v1177 = vld [vmem:[%s1167 + $0x48] sm:$0xff]
      %v1178 = vld [vmem:[%s1167 + $0x50] sm:$0xff]
      %v1179 = vld [vmem:[%s1167 + $0x58] sm:$0xff]
      %v1180 = vld [vmem:[%s1167 + $0x60] sm:$0xff]
      %v1181 = vld [vmem:[%s1167 + $0x68] sm:$0xff]
      %v1182 = vld [vmem:[%s1167 + $0x70] sm:$0xff]
      %v1183 = vld [vmem:[%s1167 + $0x78] sm:$0xff]
      %v1184 = vld [vmem:[%s1167 + $0x80] sm:$0xff]
      %v1185 = vld [vmem:[%s1167 + $0x88] sm:$0xff]
      %v1186 = vld [vmem:[%s1167 + $0x90] sm:$0xff]
      %v1187 = vld [vmem:[%s1167 + $0x98] sm:$0xff]
      %v1188 = vld [vmem:[%s1167 + $0xa0] sm:$0xff]
      %v1189 = vld [vmem:[%s1167 + $0xa8] sm:$0xff]
      %v1190 = vld [vmem:[%s1167 + $0xb0] sm:$0xff]
      %v1191 = vld [vmem:[%s1167 + $0xb8] sm:$0xff]
      %v1192 = vld [vmem:[%s1167 + $0xc0] sm:$0xff]
      %v1193 = vld [vmem:[%s1167 + $0xc8] sm:$0xff]
      %v1194 = vld [vmem:[%s1167 + $0xd0] sm:$0xff]
      %v1195 = vld [vmem:[%s1167 + $0xd8] sm:$0xff]
      %v1196 = vld [vmem:[%s1167 + $0xe0] sm:$0xff]
      %v1197 = vld [vmem:[%s1167 + $0xe8] sm:$0xff]
      %v1198 = vld [vmem:[%s1167 + $0xf0] sm:$0xff]
      %v1199 = vld [vmem:[%s1167 + $0xf8] sm:$0xff]
      %v1200 = vld [vmem:[%s1167 + $0x100] sm:$0xff]
      %v1201 = vld [vmem:[%s1167 + $0x108] sm:$0xff]
      %v1202 = vld [vmem:[%s1167 + $0x110] sm:$0xff]
      %v1203 = vld [vmem:[%s1167 + $0x118] sm:$0xff]
      %v1204 = vld [vmem:[%s1167 + $0x120] sm:$0xff]
      %v1205 = vld [vmem:[%s1167 + $0x128] sm:$0xff]
      %v1206 = vld [vmem:[%s1167 + $0x130] sm:$0xff]
      %v1207 = vld [vmem:[%s1167 + $0x138] sm:$0xff]
      %v1208 = vld [vmem:[%s1167 + $0x140] sm:$0xff]
      %v1209 = vld [vmem:[%s1167 + $0x148] sm:$0xff]
      %v1210 = vld [vmem:[%s1167 + $0x150] sm:$0xff]
      %v1211 = vld [vmem:[%s1167 + $0x158] sm:$0xff]
      %v1212 = vld [vmem:[%s1167 + $0x160] sm:$0xff]
      %v1213 = vld [vmem:[%s1167 + $0x168] sm:$0xff]
      %v1214 = vld [vmem:[%s1167 + $0x170] sm:$0xff]
      %v1215 = vld [vmem:[%s1167 + $0x178] sm:$0xff]
      %1216 = vmatprep.subr.mxu0 0.0
      %1217 = vmatpush1.msra.mxu0 %v1183
      %1218 = vmatprep.subr.mxu0 0.0
      %1219 = vmatpush1.msra.mxu0 %v1182
      %1220 = vmatprep.subr.mxu0 0.0
      %1221 = vmatpush1.msra.mxu0 %v1181
      %1222 = vmatprep.subr.mxu0 0.0
      %1223 = vmatpush1.msra.mxu0 %v1180
      %1224 = vmatprep.subr.mxu0 0.0
      %1225 = vmatpush1.msra.mxu0 %v1179
      %1226 = vmatprep.subr.mxu0 0.0
      %1227 = vmatpush1.msra.mxu0 %v1178
      %1228 = vmatprep.subr.mxu0 0.0
      %1229 = vmatpush1.msra.mxu0 %v1177
      %1230 = vmatprep.subr.mxu0 0.0
      %1231 = vmatpush1.msra.mxu0 %v1176
      %1232 = vmatprep.subr.mxu0 0.0
      %1233 = vmatpush1.msra.mxu0 %v1175
      %1234 = vmatprep.subr.mxu0 0.0
      %1235 = vmatpush1.msra.mxu0 %v1174
      %1236 = vmatprep.subr.mxu0 0.0
      %1237 = vmatpush1.msra.mxu0 %v1173
      %1238 = vmatprep.subr.mxu0 0.0
      %1239 = vmatpush1.msra.mxu0 %v1172
      %1240 = vmatprep.subr.mxu0 0.0
      %1241 = vmatpush1.msra.mxu0 %v1171
      %1242 = vmatprep.subr.mxu0 0.0
      %1243 = vmatpush1.msra.mxu0 %v1170
      %1244 = vmatprep.subr.mxu0 0.0
      %1245 = vmatpush1.msra.mxu0 %v1169
      %1246 = vmatprep.subr.mxu0 0.0
      %1247 = vmatpush1.msra.mxu0 %v1168
      %1248 = vmatprep.subr.mxu0 0.0
      %1249 = vmatpush2.msra.mxu0 %v1199
      %1250 = vmatprep.subr.mxu0 0.0
      %1251 = vmatpush2.msra.mxu0 %v1198
      %1252 = vmatprep.subr.mxu0 0.0
      %1253 = vmatpush2.msra.mxu0 %v1197
      %1254 = vmatprep.subr.mxu0 0.0
      %1255 = vmatpush2.msra.mxu0 %v1196
      %1256 = vmatprep.subr.mxu0 0.0
      %1257 = vmatpush2.msra.mxu0 %v1195
      %1258 = vmatprep.subr.mxu0 0.0
      %1259 = vmatpush2.msra.mxu0 %v1194
      %1260 = vmatprep.subr.mxu0 0.0
      %1261 = vmatpush2.msra.mxu0 %v1193
      %1262 = vmatprep.subr.mxu0 0.0
      %1263 = vmatpush2.msra.mxu0 %v1192
      %1264 = vmatprep.subr.mxu0 0.0
      %1265 = vmatpush2.msra.mxu0 %v1191
      %1266 = vmatprep.subr.mxu0 0.0
      %1267 = vmatpush2.msra.mxu0 %v1190
      %1268 = vmatprep.subr.mxu0 0.0
      %1269 = vmatpush2.msra.mxu0 %v1189
      %1270 = vmatprep.subr.mxu0 0.0
      %1271 = vmatpush2.msra.mxu0 %v1188
      %1272 = vmatprep.subr.mxu0 0.0
      %1273 = vmatpush2.msra.mxu0 %v1187
      %1274 = vmatprep.subr.mxu0 0.0
      %1275 = vmatpush2.msra.mxu0 %v1186
      %1276 = vmatprep.subr.mxu0 0.0
      %1277 = vmatpush2.msra.mxu0 %v1185
      %1278 = vmatprep.subr.mxu0 0.0
      %1279 = vmatpush2.msra.mxu0 %v1184
      %1280 = vmatprep.mubr.f32.mxu0 %v1103
      %1281 = vmatmul.mubr.f32.gmra.mxu0 %v1071
      %v1282 = vpop.f32.mrf.mxu0
      %v1283 = vadd.f32 0.0, %v1282
      %v1284 = vpop.f32.mrf.mxu0
      %1285 = vmatprep.mubr.f32.mxu0 %v1104
      %1286 = vmatmul.mubr.f32.gmra.mxu0 %v1072
      %v1287 = vpop.f32.mrf.mxu0
      %v1288 = vadd.f32 0.0, %v1287
      %v1289 = vpop.f32.mrf.mxu0
      %1290 = vmatprep.mubr.f32.mxu0 %v1105
      %1291 = vmatmul.mubr.f32.gmra.mxu0 %v1073
      %v1292 = vpop.f32.mrf.mxu0
      %v1293 = vadd.f32 0.0, %v1292
      %v1294 = vpop.f32.mrf.mxu0
      %1295 = vmatprep.mubr.f32.mxu0 %v1106
      %1296 = vmatmul.mubr.f32.gmra.mxu0 %v1074
      %v1297 = vpop.f32.mrf.mxu0
      %v1298 = vadd.f32 0.0, %v1297
      %v1299 = vpop.f32.mrf.mxu0
      %1300 = vmatprep.mubr.f32.mxu0 %v1107
      %1301 = vmatmul.mubr.f32.gmra.mxu0 %v1075
      %v1302 = vpop.f32.mrf.mxu0
      %v1303 = vadd.f32 0.0, %v1302
      %v1304 = vpop.f32.mrf.mxu0
      %1305 = vmatprep.mubr.f32.mxu0 %v1108
      %1306 = vmatmul.mubr.f32.gmra.mxu0 %v1076
      %v1307 = vpop.f32.mrf.mxu0
      %v1308 = vadd.f32 0.0, %v1307
      %v1309 = vpop.f32.mrf.mxu0
      %1310 = vmatprep.mubr.f32.mxu0 %v1109
      %1311 = vmatmul.mubr.f32.gmra.mxu0 %v1077
      %v1312 = vpop.f32.mrf.mxu0
      %v1313 = vadd.f32 0.0, %v1312
      %v1314 = vpop.f32.mrf.mxu0
      %1315 = vmatprep.mubr.f32.mxu0 %v1110
      %1316 = vmatmul.mubr.f32.gmra.mxu0 %v1078
      %v1317 = vpop.f32.mrf.mxu0
      %v1318 = vadd.f32 0.0, %v1317
      %v1319 = vpop.f32.mrf.mxu0
      %1320 = vmatprep.mubr.f32.mxu0 %v1111
      %1321 = vmatmul.mubr.f32.gmra.mxu0 %v1079
      %v1322 = vpop.f32.mrf.mxu0
      %v1323 = vadd.f32 0.0, %v1322
      %v1324 = vpop.f32.mrf.mxu0
      %1325 = vmatprep.mubr.f32.mxu0 %v1112
      %1326 = vmatmul.mubr.f32.gmra.mxu0 %v1080
      %v1327 = vpop.f32.mrf.mxu0
      %v1328 = vadd.f32 0.0, %v1327
      %v1329 = vpop.f32.mrf.mxu0
      %1330 = vmatprep.mubr.f32.mxu0 %v1113
      %1331 = vmatmul.mubr.f32.gmra.mxu0 %v1081
      %v1332 = vpop.f32.mrf.mxu0
      %v1333 = vadd.f32 0.0, %v1332
      %v1334 = vpop.f32.mrf.mxu0
      %1335 = vmatprep.mubr.f32.mxu0 %v1114
      %1336 = vmatmul.mubr.f32.gmra.mxu0 %v1082
      %v1337 = vpop.f32.mrf.mxu0
      %v1338 = vadd.f32 0.0, %v1337
      %v1339 = vpop.f32.mrf.mxu0
      %1340 = vmatprep.mubr.f32.mxu0 %v1115
      %1341 = vmatmul.mubr.f32.gmra.mxu0 %v1083
      %v1342 = vpop.f32.mrf.mxu0
      %v1343 = vadd.f32 0.0, %v1342
      %v1344 = vpop.f32.mrf.mxu0
      %1345 = vmatprep.mubr.f32.mxu0 %v1116
      %1346 = vmatmul.mubr.f32.gmra.mxu0 %v1084
      %v1347 = vpop.f32.mrf.mxu0
      %v1348 = vadd.f32 0.0, %v1347
      %v1349 = vpop.f32.mrf.mxu0
      %1350 = vmatprep.mubr.f32.mxu0 %v1117
      %1351 = vmatmul.mubr.f32.gmra.mxu0 %v1085
      %v1352 = vpop.f32.mrf.mxu0
      %v1353 = vadd.f32 0.0, %v1352
      %v1354 = vpop.f32.mrf.mxu0
      %1355 = vmatprep.mubr.f32.mxu0 %v1118
      %1356 = vmatmul.mubr.f32.gmra.mxu0 %v1086
      %v1357 = vpop.f32.mrf.mxu0
      %v1358 = vadd.f32 0.0, %v1357
      %v1359 = vpop.f32.mrf.mxu0
      %1360 = vmatprep.mubr.f32.mxu0 %v1119
      %1361 = vmatmul.mubr.f32.gmra.mxu0 %v1087
      %v1362 = vpop.f32.mrf.mxu0
      %v1363 = vadd.f32 0.0, %v1362
      %v1364 = vpop.f32.mrf.mxu0
      %1365 = vmatprep.mubr.f32.mxu0 %v1120
      %1366 = vmatmul.mubr.f32.gmra.mxu0 %v1088
      %v1367 = vpop.f32.mrf.mxu0
      %v1368 = vadd.f32 0.0, %v1367
      %v1369 = vpop.f32.mrf.mxu0
      %1370 = vmatprep.mubr.f32.mxu0 %v1121
      %1371 = vmatmul.mubr.f32.gmra.mxu0 %v1089
      %v1372 = vpop.f32.mrf.mxu0
      %v1373 = vadd.f32 0.0, %v1372
      %v1374 = vpop.f32.mrf.mxu0
      %1375 = vmatprep.mubr.f32.mxu0 %v1122
      %1376 = vmatmul.mubr.f32.gmra.mxu0 %v1090
      %v1377 = vpop.f32.mrf.mxu0
      %v1378 = vadd.f32 0.0, %v1377
      %v1379 = vpop.f32.mrf.mxu0
      %1380 = vmatprep.mubr.f32.mxu0 %v1123
      %1381 = vmatmul.mubr.f32.gmra.mxu0 %v1091
      %v1382 = vpop.f32.mrf.mxu0
      %v1383 = vadd.f32 0.0, %v1382
      %v1384 = vpop.f32.mrf.mxu0
      %1385 = vmatprep.mubr.f32.mxu0 %v1124
      %1386 = vmatmul.mubr.f32.gmra.mxu0 %v1092
      %v1387 = vpop.f32.mrf.mxu0
      %v1388 = vadd.f32 0.0, %v1387
      %v1389 = vpop.f32.mrf.mxu0
      %1390 = vmatprep.mubr.f32.mxu0 %v1125
      %1391 = vmatmul.mubr.f32.gmra.mxu0 %v1093
      %v1392 = vpop.f32.mrf.mxu0
      %v1393 = vadd.f32 0.0, %v1392
      %v1394 = vpop.f32.mrf.mxu0
      %1395 = vmatprep.mubr.f32.mxu0 %v1126
      %1396 = vmatmul.mubr.f32.gmra.mxu0 %v1094
      %v1397 = vpop.f32.mrf.mxu0
      %v1398 = vadd.f32 0.0, %v1397
      %v1399 = vpop.f32.mrf.mxu0
      %1400 = vmatprep.mubr.f32.mxu0 %v1127
      %1401 = vmatmul.mubr.f32.gmra.mxu0 %v1095
      %v1402 = vpop.f32.mrf.mxu0
      %v1403 = vadd.f32 0.0, %v1402
      %v1404 = vpop.f32.mrf.mxu0
      %1405 = vmatprep.mubr.f32.mxu0 %v1128
      %1406 = vmatmul.mubr.f32.gmra.mxu0 %v1096
      %v1407 = vpop.f32.mrf.mxu0
      %v1408 = vadd.f32 0.0, %v1407
      %v1409 = vpop.f32.mrf.mxu0
      %1410 = vmatprep.mubr.f32.mxu0 %v1129
      %1411 = vmatmul.mubr.f32.gmra.mxu0 %v1097
      %v1412 = vpop.f32.mrf.mxu0
      %v1413 = vadd.f32 0.0, %v1412
      %v1414 = vpop.f32.mrf.mxu0
      %1415 = vmatprep.mubr.f32.mxu0 %v1130
      %1416 = vmatmul.mubr.f32.gmra.mxu0 %v1098
      %v1417 = vpop.f32.mrf.mxu0
      %v1418 = vadd.f32 0.0, %v1417
      %v1419 = vpop.f32.mrf.mxu0
      %1420 = vmatprep.mubr.f32.mxu0 %v1131
      %1421 = vmatmul.mubr.f32.gmra.mxu0 %v1099
      %v1422 = vpop.f32.mrf.mxu0
      %v1423 = vadd.f32 0.0, %v1422
      %v1424 = vpop.f32.mrf.mxu0
      %1425 = vmatprep.mubr.f32.mxu0 %v1132
      %1426 = vmatmul.mubr.f32.gmra.mxu0 %v1100
      %v1427 = vpop.f32.mrf.mxu0
      %v1428 = vadd.f32 0.0, %v1427
      %v1429 = vpop.f32.mrf.mxu0
      %1430 = vmatprep.mubr.f32.mxu0 %v1133
      %1431 = vmatmul.mubr.f32.gmra.mxu0 %v1101
      %v1432 = vpop.f32.mrf.mxu0
      %v1433 = vadd.f32 0.0, %v1432
      %v1434 = vpop.f32.mrf.mxu0
      %1435 = vmatprep.mubr.f32.mxu0 %v1134
      %1436 = vmatmul.mubr.f32.gmra.mxu0 %v1102
      %v1437 = vpop.f32.mrf.mxu0
      %v1438 = vadd.f32 0.0, %v1437
      %v1439 = vpop.f32.mrf.mxu0
      %1440 = vdwg.mxu0
      %1441 = vmatprep.subr.mxu0 0.0
      %1442 = vmatpush1.msra.mxu0 %v1215
      %1443 = vmatprep.subr.mxu0 0.0
      %1444 = vmatpush1.msra.mxu0 %v1214
      %1445 = vmatprep.subr.mxu0 0.0
      %1446 = vmatpush1.msra.mxu0 %v1213
      %1447 = vmatprep.subr.mxu0 0.0
      %1448 = vmatpush1.msra.mxu0 %v1212
      %1449 = vmatprep.subr.mxu0 0.0
      %1450 = vmatpush1.msra.mxu0 %v1211
      %1451 = vmatprep.subr.mxu0 0.0
      %1452 = vmatpush1.msra.mxu0 %v1210
      %1453 = vmatprep.subr.mxu0 0.0
      %1454 = vmatpush1.msra.mxu0 %v1209
      %1455 = vmatprep.subr.mxu0 0.0
      %1456 = vmatpush1.msra.mxu0 %v1208
      %1457 = vmatprep.subr.mxu0 0.0
      %1458 = vmatpush1.msra.mxu0 %v1207
      %1459 = vmatprep.subr.mxu0 0.0
      %1460 = vmatpush1.msra.mxu0 %v1206
      %1461 = vmatprep.subr.mxu0 0.0
      %1462 = vmatpush1.msra.mxu0 %v1205
      %1463 = vmatprep.subr.mxu0 0.0
      %1464 = vmatpush1.msra.mxu0 %v1204
      %1465 = vmatprep.subr.mxu0 0.0
      %1466 = vmatpush1.msra.mxu0 %v1203
      %1467 = vmatprep.subr.mxu0 0.0
      %1468 = vmatpush1.msra.mxu0 %v1202
      %1469 = vmatprep.subr.mxu0 0.0
      %1470 = vmatpush1.msra.mxu0 %v1201
      %1471 = vmatprep.subr.mxu0 0.0
      %1472 = vmatpush1.msra.mxu0 %v1200
      %1473 = vmatprep.subr.mxu0 0.0
      %1474 = vmatpush2.msra.mxu0 0.0
      %1475 = vmatprep.subr.mxu0 0.0
      %1476 = vmatpush2.msra.mxu0 0.0
      %1477 = vmatprep.subr.mxu0 0.0
      %1478 = vmatpush2.msra.mxu0 0.0
      %1479 = vmatprep.subr.mxu0 0.0
      %1480 = vmatpush2.msra.mxu0 0.0
      %1481 = vmatprep.subr.mxu0 0.0
      %1482 = vmatpush2.msra.mxu0 0.0
      %1483 = vmatprep.subr.mxu0 0.0
      %1484 = vmatpush2.msra.mxu0 0.0
      %1485 = vmatprep.subr.mxu0 0.0
      %1486 = vmatpush2.msra.mxu0 0.0
      %1487 = vmatprep.subr.mxu0 0.0
      %1488 = vmatpush2.msra.mxu0 0.0
      %1489 = vmatprep.subr.mxu0 0.0
      %1490 = vmatpush2.msra.mxu0 0.0
      %1491 = vmatprep.subr.mxu0 0.0
      %1492 = vmatpush2.msra.mxu0 0.0
      %1493 = vmatprep.subr.mxu0 0.0
      %1494 = vmatpush2.msra.mxu0 0.0
      %1495 = vmatprep.subr.mxu0 0.0
      %1496 = vmatpush2.msra.mxu0 0.0
      %1497 = vmatprep.subr.mxu0 0.0
      %1498 = vmatpush2.msra.mxu0 0.0
      %1499 = vmatprep.subr.mxu0 0.0
      %1500 = vmatpush2.msra.mxu0 0.0
      %1501 = vmatprep.subr.mxu0 0.0
      %1502 = vmatpush2.msra.mxu0 0.0
      %1503 = vmatprep.subr.mxu0 0.0
      %1504 = vmatpush2.msra.mxu0 0.0
      %1505 = vmatprep.mubr.f32.mxu0 0.0
      %1506 = vmatmul.mubr.f32.gmra.mxu0 %v1135
      %v1507 = vpop.f32.mrf.mxu0
      %v1508 = vadd.f32 %v1283, %v1507
      %v1509 = vpop.f32.mrf.mxu0
      %1510 = vmatprep.mubr.f32.mxu0 0.0
      %1511 = vmatmul.mubr.f32.gmra.mxu0 %v1136
      %v1512 = vpop.f32.mrf.mxu0
      %v1513 = vadd.f32 %v1288, %v1512
      %v1514 = vpop.f32.mrf.mxu0
      %1515 = vmatprep.mubr.f32.mxu0 0.0
      %1516 = vmatmul.mubr.f32.gmra.mxu0 %v1137
      %v1517 = vpop.f32.mrf.mxu0
      %v1518 = vadd.f32 %v1293, %v1517
      %v1519 = vpop.f32.mrf.mxu0
      %1520 = vmatprep.mubr.f32.mxu0 0.0
      %1521 = vmatmul.mubr.f32.gmra.mxu0 %v1138
      %v1522 = vpop.f32.mrf.mxu0
      %v1523 = vadd.f32 %v1298, %v1522
      %v1524 = vpop.f32.mrf.mxu0
      %1525 = vmatprep.mubr.f32.mxu0 0.0
      %1526 = vmatmul.mubr.f32.gmra.mxu0 %v1139
      %v1527 = vpop.f32.mrf.mxu0
      %v1528 = vadd.f32 %v1303, %v1527
      %v1529 = vpop.f32.mrf.mxu0
      %1530 = vmatprep.mubr.f32.mxu0 0.0
      %1531 = vmatmul.mubr.f32.gmra.mxu0 %v1140
      %v1532 = vpop.f32.mrf.mxu0
      %v1533 = vadd.f32 %v1308, %v1532
      %v1534 = vpop.f32.mrf.mxu0
      %1535 = vmatprep.mubr.f32.mxu0 0.0
      %1536 = vmatmul.mubr.f32.gmra.mxu0 %v1141
      %v1537 = vpop.f32.mrf.mxu0
      %v1538 = vadd.f32 %v1313, %v1537
      %v1539 = vpop.f32.mrf.mxu0
      %1540 = vmatprep.mubr.f32.mxu0 0.0
      %1541 = vmatmul.mubr.f32.gmra.mxu0 %v1142
      %v1542 = vpop.f32.mrf.mxu0
      %v1543 = vadd.f32 %v1318, %v1542
      %v1544 = vpop.f32.mrf.mxu0
      %1545 = vmatprep.mubr.f32.mxu0 0.0
      %1546 = vmatmul.mubr.f32.gmra.mxu0 %v1143
      %v1547 = vpop.f32.mrf.mxu0
      %v1548 = vadd.f32 %v1323, %v1547
      %v1549 = vpop.f32.mrf.mxu0
      %1550 = vmatprep.mubr.f32.mxu0 0.0
      %1551 = vmatmul.mubr.f32.gmra.mxu0 %v1144
      %v1552 = vpop.f32.mrf.mxu0
      %v1553 = vadd.f32 %v1328, %v1552
      %v1554 = vpop.f32.mrf.mxu0
      %1555 = vmatprep.mubr.f32.mxu0 0.0
      %1556 = vmatmul.mubr.f32.gmra.mxu0 %v1145
      %v1557 = vpop.f32.mrf.mxu0
      %v1558 = vadd.f32 %v1333, %v1557
      %v1559 = vpop.f32.mrf.mxu0
      %1560 = vmatprep.mubr.f32.mxu0 0.0
      %1561 = vmatmul.mubr.f32.gmra.mxu0 %v1146
      %v1562 = vpop.f32.mrf.mxu0
      %v1563 = vadd.f32 %v1338, %v1562
      %v1564 = vpop.f32.mrf.mxu0
      %1565 = vmatprep.mubr.f32.mxu0 0.0
      %1566 = vmatmul.mubr.f32.gmra.mxu0 %v1147
      %v1567 = vpop.f32.mrf.mxu0
      %v1568 = vadd.f32 %v1343, %v1567
      %v1569 = vpop.f32.mrf.mxu0
      %1570 = vmatprep.mubr.f32.mxu0 0.0
      %1571 = vmatmul.mubr.f32.gmra.mxu0 %v1148
      %v1572 = vpop.f32.mrf.mxu0
      %v1573 = vadd.f32 %v1348, %v1572
      %v1574 = vpop.f32.mrf.mxu0
      %1575 = vmatprep.mubr.f32.mxu0 0.0
      %1576 = vmatmul.mubr.f32.gmra.mxu0 %v1149
      %v1577 = vpop.f32.mrf.mxu0
      %v1578 = vadd.f32 %v1353, %v1577
      %v1579 = vpop.f32.mrf.mxu0
      %1580 = vmatprep.mubr.f32.mxu0 0.0
      %1581 = vmatmul.mubr.f32.gmra.mxu0 %v1150
      %v1582 = vpop.f32.mrf.mxu0
      %v1583 = vadd.f32 %v1358, %v1582
      %v1584 = vpop.f32.mrf.mxu0
      %1585 = vmatprep.mubr.f32.mxu0 0.0
      %1586 = vmatmul.mubr.f32.gmra.mxu0 %v1151
      %v1587 = vpop.f32.mrf.mxu0
      %v1588 = vadd.f32 %v1363, %v1587
      %v1589 = vpop.f32.mrf.mxu0
      %1590 = vmatprep.mubr.f32.mxu0 0.0
      %1591 = vmatmul.mubr.f32.gmra.mxu0 %v1152
      %v1592 = vpop.f32.mrf.mxu0
      %v1593 = vadd.f32 %v1368, %v1592
      %v1594 = vpop.f32.mrf.mxu0
      %1595 = vmatprep.mubr.f32.mxu0 0.0
      %1596 = vmatmul.mubr.f32.gmra.mxu0 %v1153
      %v1597 = vpop.f32.mrf.mxu0
      %v1598 = vadd.f32 %v1373, %v1597
      %v1599 = vpop.f32.mrf.mxu0
      %1600 = vmatprep.mubr.f32.mxu0 0.0
      %1601 = vmatmul.mubr.f32.gmra.mxu0 %v1154
      %v1602 = vpop.f32.mrf.mxu0
      %v1603 = vadd.f32 %v1378, %v1602
      %v1604 = vpop.f32.mrf.mxu0
      %1605 = vmatprep.mubr.f32.mxu0 0.0
      %1606 = vmatmul.mubr.f32.gmra.mxu0 %v1155
      %v1607 = vpop.f32.mrf.mxu0
      %v1608 = vadd.f32 %v1383, %v1607
      %v1609 = vpop.f32.mrf.mxu0
      %1610 = vmatprep.mubr.f32.mxu0 0.0
      %1611 = vmatmul.mubr.f32.gmra.mxu0 %v1156
      %v1612 = vpop.f32.mrf.mxu0
      %v1613 = vadd.f32 %v1388, %v1612
      %v1614 = vpop.f32.mrf.mxu0
      %1615 = vmatprep.mubr.f32.mxu0 0.0
      %1616 = vmatmul.mubr.f32.gmra.mxu0 %v1157
      %v1617 = vpop.f32.mrf.mxu0
      %v1618 = vadd.f32 %v1393, %v1617
      %v1619 = vpop.f32.mrf.mxu0
      %1620 = vmatprep.mubr.f32.mxu0 0.0
      %1621 = vmatmul.mubr.f32.gmra.mxu0 %v1158
      %v1622 = vpop.f32.mrf.mxu0
      %v1623 = vadd.f32 %v1398, %v1622
      %v1624 = vpop.f32.mrf.mxu0
      %1625 = vmatprep.mubr.f32.mxu0 0.0
      %1626 = vmatmul.mubr.f32.gmra.mxu0 %v1159
      %v1627 = vpop.f32.mrf.mxu0
      %v1628 = vadd.f32 %v1403, %v1627
      %v1629 = vpop.f32.mrf.mxu0
      %1630 = vmatprep.mubr.f32.mxu0 0.0
      %1631 = vmatmul.mubr.f32.gmra.mxu0 %v1160
      %v1632 = vpop.f32.mrf.mxu0
      %v1633 = vadd.f32 %v1408, %v1632
      %v1634 = vpop.f32.mrf.mxu0
      %1635 = vmatprep.mubr.f32.mxu0 0.0
      %1636 = vmatmul.mubr.f32.gmra.mxu0 %v1161
      %v1637 = vpop.f32.mrf.mxu0
      %v1638 = vadd.f32 %v1413, %v1637
      %v1639 = vpop.f32.mrf.mxu0
      %1640 = vmatprep.mubr.f32.mxu0 0.0
      %1641 = vmatmul.mubr.f32.gmra.mxu0 %v1162
      %v1642 = vpop.f32.mrf.mxu0
      %v1643 = vadd.f32 %v1418, %v1642
      %v1644 = vpop.f32.mrf.mxu0
      %1645 = vmatprep.mubr.f32.mxu0 0.0
      %1646 = vmatmul.mubr.f32.gmra.mxu0 %v1163
      %v1647 = vpop.f32.mrf.mxu0
      %v1648 = vadd.f32 %v1423, %v1647
      %v1649 = vpop.f32.mrf.mxu0
      %1650 = vmatprep.mubr.f32.mxu0 0.0
      %1651 = vmatmul.mubr.f32.gmra.mxu0 %v1164
      %v1652 = vpop.f32.mrf.mxu0
      %v1653 = vadd.f32 %v1428, %v1652
      %v1654 = vpop.f32.mrf.mxu0
      %1655 = vmatprep.mubr.f32.mxu0 0.0
      %1656 = vmatmul.mubr.f32.gmra.mxu0 %v1165
      %v1657 = vpop.f32.mrf.mxu0
      %v1658 = vadd.f32 %v1433, %v1657
      %v1659 = vpop.f32.mrf.mxu0
      %1660 = vmatprep.mubr.f32.mxu0 0.0
      %1661 = vmatmul.mubr.f32.gmra.mxu0 %v1166
      %v1662 = vpop.f32.mrf.mxu0
      %v1663 = vadd.f32 %v1438, %v1662
      %v1664 = vpop.f32.mrf.mxu0
      %1665 = vdwg.mxu0
      %v1666 = vld [vmem:[#allocation5] sm:$0xff]
      %v1667 = vld [vmem:[#allocation5 + $0x8] sm:$0xff]
      %v1668 = vld [vmem:[#allocation5 + $0x10] sm:$0xff]
      %v1669 = vld [vmem:[#allocation5 + $0x18] sm:$0xff]
      %v1670 = vld [vmem:[#allocation5 + $0x20] sm:$0xff]
      %v1671 = vld [vmem:[#allocation5 + $0x28] sm:$0xff]
      %v1672 = vld [vmem:[#allocation5 + $0x30] sm:$0xff]
      %v1673 = vld [vmem:[#allocation5 + $0x38] sm:$0xff]
      %v1674 = vld [vmem:[#allocation5 + $0x40] sm:$0xff]
      %v1675 = vld [vmem:[#allocation5 + $0x48] sm:$0xff]
      %v1676 = vld [vmem:[#allocation5 + $0x50] sm:$0xff]
      %v1677 = vld [vmem:[#allocation5 + $0x58] sm:$0xff]
      %v1678 = vld [vmem:[#allocation5 + $0x60] sm:$0xff]
      %v1679 = vld [vmem:[#allocation5 + $0x68] sm:$0xff]
      %v1680 = vld [vmem:[#allocation5 + $0x70] sm:$0xff]
      %v1681 = vld [vmem:[#allocation5 + $0x78] sm:$0xff]
      %v1682 = vld [vmem:[#allocation5 + $0x80] sm:$0xff]
      %v1683 = vld [vmem:[#allocation5 + $0x88] sm:$0xff]
      %v1684 = vld [vmem:[#allocation5 + $0x90] sm:$0xff]
      %v1685 = vld [vmem:[#allocation5 + $0x98] sm:$0xff]
      %v1686 = vld [vmem:[#allocation5 + $0xa0] sm:$0xff]
      %v1687 = vld [vmem:[#allocation5 + $0xa8] sm:$0xff]
      %v1688 = vld [vmem:[#allocation5 + $0xb0] sm:$0xff]
      %v1689 = vld [vmem:[#allocation5 + $0xb8] sm:$0xff]
      %v1690 = vld [vmem:[#allocation5 + $0xc0] sm:$0xff]
      %v1691 = vld [vmem:[#allocation5 + $0xc8] sm:$0xff]
      %v1692 = vld [vmem:[#allocation5 + $0xd0] sm:$0xff]
      %v1693 = vld [vmem:[#allocation5 + $0xd8] sm:$0xff]
      %v1694 = vld [vmem:[#allocation5 + $0xe0] sm:$0xff]
      %v1695 = vld [vmem:[#allocation5 + $0xe8] sm:$0xff]
      %v1696 = vld [vmem:[#allocation5 + $0xf0] sm:$0xff]
      %v1697 = vld [vmem:[#allocation5 + $0xf8] sm:$0xff]
      %v1698 = vadd.f32 %v1666, %v1508
      %v1699 = vadd.f32 %v1667, %v1513
      %v1700 = vadd.f32 %v1668, %v1518
      %v1701 = vadd.f32 %v1669, %v1523
      %v1702 = vadd.f32 %v1670, %v1528
      %v1703 = vadd.f32 %v1671, %v1533
      %v1704 = vadd.f32 %v1672, %v1538
      %v1705 = vadd.f32 %v1673, %v1543
      %v1706 = vadd.f32 %v1674, %v1548
      %v1707 = vadd.f32 %v1675, %v1553
      %v1708 = vadd.f32 %v1676, %v1558
      %v1709 = vadd.f32 %v1677, %v1563
      %v1710 = vadd.f32 %v1678, %v1568
      %v1711 = vadd.f32 %v1679, %v1573
      %v1712 = vadd.f32 %v1680, %v1578
      %v1713 = vadd.f32 %v1681, %v1583
      %v1714 = vadd.f32 %v1682, %v1588
      %v1715 = vadd.f32 %v1683, %v1593
      %v1716 = vadd.f32 %v1684, %v1598
      %v1717 = vadd.f32 %v1685, %v1603
      %v1718 = vadd.f32 %v1686, %v1608
      %v1719 = vadd.f32 %v1687, %v1613
      %v1720 = vadd.f32 %v1688, %v1618
      %v1721 = vadd.f32 %v1689, %v1623
      %v1722 = vadd.f32 %v1690, %v1628
      %v1723 = vadd.f32 %v1691, %v1633
      %v1724 = vadd.f32 %v1692, %v1638
      %v1725 = vadd.f32 %v1693, %v1643
      %v1726 = vadd.f32 %v1694, %v1648
      %v1727 = vadd.f32 %v1695, %v1653
      %v1728 = vadd.f32 %v1696, %v1658
      %v1729 = vadd.f32 %v1697, %v1663
      %1730 = vst [vmem:[#allocation5] sm:$0xff] %v1698
      %1731 = vst [vmem:[#allocation5 + $0x8] sm:$0xff] %v1699
      %1732 = vst [vmem:[#allocation5 + $0x10] sm:$0xff] %v1700
      %1733 = vst [vmem:[#allocation5 + $0x18] sm:$0xff] %v1701
      %1734 = vst [vmem:[#allocation5 + $0x20] sm:$0xff] %v1702
      %1735 = vst [vmem:[#allocation5 + $0x28] sm:$0xff] %v1703
      %1736 = vst [vmem:[#allocation5 + $0x30] sm:$0xff] %v1704
      %1737 = vst [vmem:[#allocation5 + $0x38] sm:$0xff] %v1705
      %1738 = vst [vmem:[#allocation5 + $0x40] sm:$0xff] %v1706
      %1739 = vst [vmem:[#allocation5 + $0x48] sm:$0xff] %v1707
      %1740 = vst [vmem:[#allocation5 + $0x50] sm:$0xff] %v1708
      %1741 = vst [vmem:[#allocation5 + $0x58] sm:$0xff] %v1709
      %1742 = vst [vmem:[#allocation5 + $0x60] sm:$0xff] %v1710
      %1743 = vst [vmem:[#allocation5 + $0x68] sm:$0xff] %v1711
      %1744 = vst [vmem:[#allocation5 + $0x70] sm:$0xff] %v1712
      %1745 = vst [vmem:[#allocation5 + $0x78] sm:$0xff] %v1713
      %1746 = vst [vmem:[#allocation5 + $0x80] sm:$0xff] %v1714
      %1747 = vst [vmem:[#allocation5 + $0x88] sm:$0xff] %v1715
      %1748 = vst [vmem:[#allocation5 + $0x90] sm:$0xff] %v1716
      %1749 = vst [vmem:[#allocation5 + $0x98] sm:$0xff] %v1717
      %1750 = vst [vmem:[#allocation5 + $0xa0] sm:$0xff] %v1718
      %1751 = vst [vmem:[#allocation5 + $0xa8] sm:$0xff] %v1719
      %1752 = vst [vmem:[#allocation5 + $0xb0] sm:$0xff] %v1720
      %1753 = vst [vmem:[#allocation5 + $0xb8] sm:$0xff] %v1721
      %1754 = vst [vmem:[#allocation5 + $0xc0] sm:$0xff] %v1722
      %1755 = vst [vmem:[#allocation5 + $0xc8] sm:$0xff] %v1723
      %1756 = vst [vmem:[#allocation5 + $0xd0] sm:$0xff] %v1724
      %1757 = vst [vmem:[#allocation5 + $0xd8] sm:$0xff] %v1725
      %1758 = vst [vmem:[#allocation5 + $0xe0] sm:$0xff] %v1726
      %1759 = vst [vmem:[#allocation5 + $0xe8] sm:$0xff] %v1727
      %1760 = vst [vmem:[#allocation5 + $0xf0] sm:$0xff] %v1728
      %1761 = vst [vmem:[#allocation5 + $0xf8] sm:$0xff] %v1729
      %s1762 = scalar_lea.vmem [#allocation2], 48
      %v1763 = vld [vmem:[%s1762] sm:$0xff]
      %v1764 = vld [vmem:[%s1762 + $0x8] sm:$0xff]
      %v1765 = vld [vmem:[%s1762 + $0x18] sm:$0xff]
      %v1766 = vld [vmem:[%s1762 + $0x20] sm:$0xff]
      %v1767 = vld [vmem:[%s1762 + $0x30] sm:$0xff]
      %v1768 = vld [vmem:[%s1762 + $0x38] sm:$0xff]
      %v1769 = vld [vmem:[%s1762 + $0x48] sm:$0xff]
      %v1770 = vld [vmem:[%s1762 + $0x50] sm:$0xff]
      %v1771 = vld [vmem:[%s1762 + $0x60] sm:$0xff]
      %v1772 = vld [vmem:[%s1762 + $0x68] sm:$0xff]
      %v1773 = vld [vmem:[%s1762 + $0x78] sm:$0xff]
      %v1774 = vld [vmem:[%s1762 + $0x80] sm:$0xff]
      %v1775 = vld [vmem:[%s1762 + $0x90] sm:$0xff]
      %v1776 = vld [vmem:[%s1762 + $0x98] sm:$0xff]
      %v1777 = vld [vmem:[%s1762 + $0xa8] sm:$0xff]
      %v1778 = vld [vmem:[%s1762 + $0xb0] sm:$0xff]
      %v1779 = vld [vmem:[%s1762 + $0xc0] sm:$0xff]
      %v1780 = vld [vmem:[%s1762 + $0xc8] sm:$0xff]
      %v1781 = vld [vmem:[%s1762 + $0xd8] sm:$0xff]
      %v1782 = vld [vmem:[%s1762 + $0xe0] sm:$0xff]
      %v1783 = vld [vmem:[%s1762 + $0xf0] sm:$0xff]
      %v1784 = vld [vmem:[%s1762 + $0xf8] sm:$0xff]
      %v1785 = vld [vmem:[%s1762 + $0x108] sm:$0xff]
      %v1786 = vld [vmem:[%s1762 + $0x110] sm:$0xff]
      %v1787 = vld [vmem:[%s1762 + $0x120] sm:$0xff]
      %v1788 = vld [vmem:[%s1762 + $0x128] sm:$0xff]
      %v1789 = vld [vmem:[%s1762 + $0x138] sm:$0xff]
      %v1790 = vld [vmem:[%s1762 + $0x140] sm:$0xff]
      %v1791 = vld [vmem:[%s1762 + $0x150] sm:$0xff]
      %v1792 = vld [vmem:[%s1762 + $0x158] sm:$0xff]
      %v1793 = vld [vmem:[%s1762 + $0x168] sm:$0xff]
      %v1794 = vld [vmem:[%s1762 + $0x170] sm:$0xff]
      %v1795 = vld [vmem:[%s1762 + $0x1] sm:$0xff]
      %v1796 = vld [vmem:[%s1762 + $0x9] sm:$0xff]
      %v1797 = vld [vmem:[%s1762 + $0x19] sm:$0xff]
      %v1798 = vld [vmem:[%s1762 + $0x21] sm:$0xff]
      %v1799 = vld [vmem:[%s1762 + $0x31] sm:$0xff]
      %v1800 = vld [vmem:[%s1762 + $0x39] sm:$0xff]
      %v1801 = vld [vmem:[%s1762 + $0x49] sm:$0xff]
      %v1802 = vld [vmem:[%s1762 + $0x51] sm:$0xff]
      %v1803 = vld [vmem:[%s1762 + $0x61] sm:$0xff]
      %v1804 = vld [vmem:[%s1762 + $0x69] sm:$0xff]
      %v1805 = vld [vmem:[%s1762 + $0x79] sm:$0xff]
      %v1806 = vld [vmem:[%s1762 + $0x81] sm:$0xff]
      %v1807 = vld [vmem:[%s1762 + $0x91] sm:$0xff]
      %v1808 = vld [vmem:[%s1762 + $0x99] sm:$0xff]
      %v1809 = vld [vmem:[%s1762 + $0xa9] sm:$0xff]
      %v1810 = vld [vmem:[%s1762 + $0xb1] sm:$0xff]
      %v1811 = vld [vmem:[%s1762 + $0xc1] sm:$0xff]
      %v1812 = vld [vmem:[%s1762 + $0xc9] sm:$0xff]
      %v1813 = vld [vmem:[%s1762 + $0xd9] sm:$0xff]
      %v1814 = vld [vmem:[%s1762 + $0xe1] sm:$0xff]
      %v1815 = vld [vmem:[%s1762 + $0xf1] sm:$0xff]
      %v1816 = vld [vmem:[%s1762 + $0xf9] sm:$0xff]
      %v1817 = vld [vmem:[%s1762 + $0x109] sm:$0xff]
      %v1818 = vld [vmem:[%s1762 + $0x111] sm:$0xff]
      %v1819 = vld [vmem:[%s1762 + $0x121] sm:$0xff]
      %v1820 = vld [vmem:[%s1762 + $0x129] sm:$0xff]
      %v1821 = vld [vmem:[%s1762 + $0x139] sm:$0xff]
      %v1822 = vld [vmem:[%s1762 + $0x141] sm:$0xff]
      %v1823 = vld [vmem:[%s1762 + $0x151] sm:$0xff]
      %v1824 = vld [vmem:[%s1762 + $0x159] sm:$0xff]
      %v1825 = vld [vmem:[%s1762 + $0x169] sm:$0xff]
      %v1826 = vld [vmem:[%s1762 + $0x171] sm:$0xff]
      %v1827 = vld [vmem:[%s1762 + $0x2] sm:$0xff]
      %v1828 = vld [vmem:[%s1762 + $0xa] sm:$0xff]
      %v1829 = vld [vmem:[%s1762 + $0x1a] sm:$0xff]
      %v1830 = vld [vmem:[%s1762 + $0x22] sm:$0xff]
      %v1831 = vld [vmem:[%s1762 + $0x32] sm:$0xff]
      %v1832 = vld [vmem:[%s1762 + $0x3a] sm:$0xff]
      %v1833 = vld [vmem:[%s1762 + $0x4a] sm:$0xff]
      %v1834 = vld [vmem:[%s1762 + $0x52] sm:$0xff]
      %v1835 = vld [vmem:[%s1762 + $0x62] sm:$0xff]
      %v1836 = vld [vmem:[%s1762 + $0x6a] sm:$0xff]
      %v1837 = vld [vmem:[%s1762 + $0x7a] sm:$0xff]
      %v1838 = vld [vmem:[%s1762 + $0x82] sm:$0xff]
      %v1839 = vld [vmem:[%s1762 + $0x92] sm:$0xff]
      %v1840 = vld [vmem:[%s1762 + $0x9a] sm:$0xff]
      %v1841 = vld [vmem:[%s1762 + $0xaa] sm:$0xff]
      %v1842 = vld [vmem:[%s1762 + $0xb2] sm:$0xff]
      %v1843 = vld [vmem:[%s1762 + $0xc2] sm:$0xff]
      %v1844 = vld [vmem:[%s1762 + $0xca] sm:$0xff]
      %v1845 = vld [vmem:[%s1762 + $0xda] sm:$0xff]
      %v1846 = vld [vmem:[%s1762 + $0xe2] sm:$0xff]
      %v1847 = vld [vmem:[%s1762 + $0xf2] sm:$0xff]
      %v1848 = vld [vmem:[%s1762 + $0xfa] sm:$0xff]
      %v1849 = vld [vmem:[%s1762 + $0x10a] sm:$0xff]
      %v1850 = vld [vmem:[%s1762 + $0x112] sm:$0xff]
      %v1851 = vld [vmem:[%s1762 + $0x122] sm:$0xff]
      %v1852 = vld [vmem:[%s1762 + $0x12a] sm:$0xff]
      %v1853 = vld [vmem:[%s1762 + $0x13a] sm:$0xff]
      %v1854 = vld [vmem:[%s1762 + $0x142] sm:$0xff]
      %v1855 = vld [vmem:[%s1762 + $0x152] sm:$0xff]
      %v1856 = vld [vmem:[%s1762 + $0x15a] sm:$0xff]
      %v1857 = vld [vmem:[%s1762 + $0x16a] sm:$0xff]
      %v1858 = vld [vmem:[%s1762 + $0x172] sm:$0xff]
      %s1859 = scalar_lea.vmem %s2, 768
      %v1860 = vld [vmem:[%s1859] sm:$0xff]
      %v1861 = vld [vmem:[%s1859 + $0x8] sm:$0xff]
      %v1862 = vld [vmem:[%s1859 + $0x10] sm:$0xff]
      %v1863 = vld [vmem:[%s1859 + $0x18] sm:$0xff]
      %v1864 = vld [vmem:[%s1859 + $0x20] sm:$0xff]
      %v1865 = vld [vmem:[%s1859 + $0x28] sm:$0xff]
      %v1866 = vld [vmem:[%s1859 + $0x30] sm:$0xff]
      %v1867 = vld [vmem:[%s1859 + $0x38] sm:$0xff]
      %v1868 = vld [vmem:[%s1859 + $0x40] sm:$0xff]
      %v1869 = vld [vmem:[%s1859 + $0x48] sm:$0xff]
      %v1870 = vld [vmem:[%s1859 + $0x50] sm:$0xff]
      %v1871 = vld [vmem:[%s1859 + $0x58] sm:$0xff]
      %v1872 = vld [vmem:[%s1859 + $0x60] sm:$0xff]
      %v1873 = vld [vmem:[%s1859 + $0x68] sm:$0xff]
      %v1874 = vld [vmem:[%s1859 + $0x70] sm:$0xff]
      %v1875 = vld [vmem:[%s1859 + $0x78] sm:$0xff]
      %v1876 = vld [vmem:[%s1859 + $0x80] sm:$0xff]
      %v1877 = vld [vmem:[%s1859 + $0x88] sm:$0xff]
      %v1878 = vld [vmem:[%s1859 + $0x90] sm:$0xff]
      %v1879 = vld [vmem:[%s1859 + $0x98] sm:$0xff]
      %v1880 = vld [vmem:[%s1859 + $0xa0] sm:$0xff]
      %v1881 = vld [vmem:[%s1859 + $0xa8] sm:$0xff]
      %v1882 = vld [vmem:[%s1859 + $0xb0] sm:$0xff]
      %v1883 = vld [vmem:[%s1859 + $0xb8] sm:$0xff]
      %v1884 = vld [vmem:[%s1859 + $0xc0] sm:$0xff]
      %v1885 = vld [vmem:[%s1859 + $0xc8] sm:$0xff]
      %v1886 = vld [vmem:[%s1859 + $0xd0] sm:$0xff]
      %v1887 = vld [vmem:[%s1859 + $0xd8] sm:$0xff]
      %v1888 = vld [vmem:[%s1859 + $0xe0] sm:$0xff]
      %v1889 = vld [vmem:[%s1859 + $0xe8] sm:$0xff]
      %v1890 = vld [vmem:[%s1859 + $0xf0] sm:$0xff]
      %v1891 = vld [vmem:[%s1859 + $0xf8] sm:$0xff]
      %v1892 = vld [vmem:[%s1859 + $0x100] sm:$0xff]
      %v1893 = vld [vmem:[%s1859 + $0x108] sm:$0xff]
      %v1894 = vld [vmem:[%s1859 + $0x110] sm:$0xff]
      %v1895 = vld [vmem:[%s1859 + $0x118] sm:$0xff]
      %v1896 = vld [vmem:[%s1859 + $0x120] sm:$0xff]
      %v1897 = vld [vmem:[%s1859 + $0x128] sm:$0xff]
      %v1898 = vld [vmem:[%s1859 + $0x130] sm:$0xff]
      %v1899 = vld [vmem:[%s1859 + $0x138] sm:$0xff]
      %v1900 = vld [vmem:[%s1859 + $0x140] sm:$0xff]
      %v1901 = vld [vmem:[%s1859 + $0x148] sm:$0xff]
      %v1902 = vld [vmem:[%s1859 + $0x150] sm:$0xff]
      %v1903 = vld [vmem:[%s1859 + $0x158] sm:$0xff]
      %v1904 = vld [vmem:[%s1859 + $0x160] sm:$0xff]
      %v1905 = vld [vmem:[%s1859 + $0x168] sm:$0xff]
      %v1906 = vld [vmem:[%s1859 + $0x170] sm:$0xff]
      %v1907 = vld [vmem:[%s1859 + $0x178] sm:$0xff]
      %1908 = vmatprep.subr.mxu0 0.0
      %1909 = vmatpush1.msra.mxu0 %v1875
      %1910 = vmatprep.subr.mxu0 0.0
      %1911 = vmatpush1.msra.mxu0 %v1874
      %1912 = vmatprep.subr.mxu0 0.0
      %1913 = vmatpush1.msra.mxu0 %v1873
      %1914 = vmatprep.subr.mxu0 0.0
      %1915 = vmatpush1.msra.mxu0 %v1872
      %1916 = vmatprep.subr.mxu0 0.0
      %1917 = vmatpush1.msra.mxu0 %v1871
      %1918 = vmatprep.subr.mxu0 0.0
      %1919 = vmatpush1.msra.mxu0 %v1870
      %1920 = vmatprep.subr.mxu0 0.0
      %1921 = vmatpush1.msra.mxu0 %v1869
      %1922 = vmatprep.subr.mxu0 0.0
      %1923 = vmatpush1.msra.mxu0 %v1868
      %1924 = vmatprep.subr.mxu0 0.0
      %1925 = vmatpush1.msra.mxu0 %v1867
      %1926 = vmatprep.subr.mxu0 0.0
      %1927 = vmatpush1.msra.mxu0 %v1866
      %1928 = vmatprep.subr.mxu0 0.0
      %1929 = vmatpush1.msra.mxu0 %v1865
      %1930 = vmatprep.subr.mxu0 0.0
      %1931 = vmatpush1.msra.mxu0 %v1864
      %1932 = vmatprep.subr.mxu0 0.0
      %1933 = vmatpush1.msra.mxu0 %v1863
      %1934 = vmatprep.subr.mxu0 0.0
      %1935 = vmatpush1.msra.mxu0 %v1862
      %1936 = vmatprep.subr.mxu0 0.0
      %1937 = vmatpush1.msra.mxu0 %v1861
      %1938 = vmatprep.subr.mxu0 0.0
      %1939 = vmatpush1.msra.mxu0 %v1860
      %1940 = vmatprep.subr.mxu0 0.0
      %1941 = vmatpush2.msra.mxu0 %v1891
      %1942 = vmatprep.subr.mxu0 0.0
      %1943 = vmatpush2.msra.mxu0 %v1890
      %1944 = vmatprep.subr.mxu0 0.0
      %1945 = vmatpush2.msra.mxu0 %v1889
      %1946 = vmatprep.subr.mxu0 0.0
      %1947 = vmatpush2.msra.mxu0 %v1888
      %1948 = vmatprep.subr.mxu0 0.0
      %1949 = vmatpush2.msra.mxu0 %v1887
      %1950 = vmatprep.subr.mxu0 0.0
      %1951 = vmatpush2.msra.mxu0 %v1886
      %1952 = vmatprep.subr.mxu0 0.0
      %1953 = vmatpush2.msra.mxu0 %v1885
      %1954 = vmatprep.subr.mxu0 0.0
      %1955 = vmatpush2.msra.mxu0 %v1884
      %1956 = vmatprep.subr.mxu0 0.0
      %1957 = vmatpush2.msra.mxu0 %v1883
      %1958 = vmatprep.subr.mxu0 0.0
      %1959 = vmatpush2.msra.mxu0 %v1882
      %1960 = vmatprep.subr.mxu0 0.0
      %1961 = vmatpush2.msra.mxu0 %v1881
      %1962 = vmatprep.subr.mxu0 0.0
      %1963 = vmatpush2.msra.mxu0 %v1880
      %1964 = vmatprep.subr.mxu0 0.0
      %1965 = vmatpush2.msra.mxu0 %v1879
      %1966 = vmatprep.subr.mxu0 0.0
      %1967 = vmatpush2.msra.mxu0 %v1878
      %1968 = vmatprep.subr.mxu0 0.0
      %1969 = vmatpush2.msra.mxu0 %v1877
      %1970 = vmatprep.subr.mxu0 0.0
      %1971 = vmatpush2.msra.mxu0 %v1876
      %1972 = vmatprep.mubr.f32.mxu0 %v1795
      %1973 = vmatmul.mubr.f32.gmra.mxu0 %v1763
      %v1974 = vpop.f32.mrf.mxu0
      %v1975 = vadd.f32 0.0, %v1974
      %v1976 = vpop.f32.mrf.mxu0
      %1977 = vmatprep.mubr.f32.mxu0 %v1796
      %1978 = vmatmul.mubr.f32.gmra.mxu0 %v1764
      %v1979 = vpop.f32.mrf.mxu0
      %v1980 = vadd.f32 0.0, %v1979
      %v1981 = vpop.f32.mrf.mxu0
      %1982 = vmatprep.mubr.f32.mxu0 %v1797
      %1983 = vmatmul.mubr.f32.gmra.mxu0 %v1765
      %v1984 = vpop.f32.mrf.mxu0
      %v1985 = vadd.f32 0.0, %v1984
      %v1986 = vpop.f32.mrf.mxu0
      %1987 = vmatprep.mubr.f32.mxu0 %v1798
      %1988 = vmatmul.mubr.f32.gmra.mxu0 %v1766
      %v1989 = vpop.f32.mrf.mxu0
      %v1990 = vadd.f32 0.0, %v1989
      %v1991 = vpop.f32.mrf.mxu0
      %1992 = vmatprep.mubr.f32.mxu0 %v1799
      %1993 = vmatmul.mubr.f32.gmra.mxu0 %v1767
      %v1994 = vpop.f32.mrf.mxu0
      %v1995 = vadd.f32 0.0, %v1994
      %v1996 = vpop.f32.mrf.mxu0
      %1997 = vmatprep.mubr.f32.mxu0 %v1800
      %1998 = vmatmul.mubr.f32.gmra.mxu0 %v1768
      %v1999 = vpop.f32.mrf.mxu0
      %v2000 = vadd.f32 0.0, %v1999
      %v2001 = vpop.f32.mrf.mxu0
      %2002 = vmatprep.mubr.f32.mxu0 %v1801
      %2003 = vmatmul.mubr.f32.gmra.mxu0 %v1769
      %v2004 = vpop.f32.mrf.mxu0
      %v2005 = vadd.f32 0.0, %v2004
      %v2006 = vpop.f32.mrf.mxu0
      %2007 = vmatprep.mubr.f32.mxu0 %v1802
      %2008 = vmatmul.mubr.f32.gmra.mxu0 %v1770
      %v2009 = vpop.f32.mrf.mxu0
      %v2010 = vadd.f32 0.0, %v2009
      %v2011 = vpop.f32.mrf.mxu0
      %2012 = vmatprep.mubr.f32.mxu0 %v1803
      %2013 = vmatmul.mubr.f32.gmra.mxu0 %v1771
      %v2014 = vpop.f32.mrf.mxu0
      %v2015 = vadd.f32 0.0, %v2014
      %v2016 = vpop.f32.mrf.mxu0
      %2017 = vmatprep.mubr.f32.mxu0 %v1804
      %2018 = vmatmul.mubr.f32.gmra.mxu0 %v1772
      %v2019 = vpop.f32.mrf.mxu0
      %v2020 = vadd.f32 0.0, %v2019
      %v2021 = vpop.f32.mrf.mxu0
      %2022 = vmatprep.mubr.f32.mxu0 %v1805
      %2023 = vmatmul.mubr.f32.gmra.mxu0 %v1773
      %v2024 = vpop.f32.mrf.mxu0
      %v2025 = vadd.f32 0.0, %v2024
      %v2026 = vpop.f32.mrf.mxu0
      %2027 = vmatprep.mubr.f32.mxu0 %v1806
      %2028 = vmatmul.mubr.f32.gmra.mxu0 %v1774
      %v2029 = vpop.f32.mrf.mxu0
      %v2030 = vadd.f32 0.0, %v2029
      %v2031 = vpop.f32.mrf.mxu0
      %2032 = vmatprep.mubr.f32.mxu0 %v1807
      %2033 = vmatmul.mubr.f32.gmra.mxu0 %v1775
      %v2034 = vpop.f32.mrf.mxu0
      %v2035 = vadd.f32 0.0, %v2034
      %v2036 = vpop.f32.mrf.mxu0
      %2037 = vmatprep.mubr.f32.mxu0 %v1808
      %2038 = vmatmul.mubr.f32.gmra.mxu0 %v1776
      %v2039 = vpop.f32.mrf.mxu0
      %v2040 = vadd.f32 0.0, %v2039
      %v2041 = vpop.f32.mrf.mxu0
      %2042 = vmatprep.mubr.f32.mxu0 %v1809
      %2043 = vmatmul.mubr.f32.gmra.mxu0 %v1777
      %v2044 = vpop.f32.mrf.mxu0
      %v2045 = vadd.f32 0.0, %v2044
      %v2046 = vpop.f32.mrf.mxu0
      %2047 = vmatprep.mubr.f32.mxu0 %v1810
      %2048 = vmatmul.mubr.f32.gmra.mxu0 %v1778
      %v2049 = vpop.f32.mrf.mxu0
      %v2050 = vadd.f32 0.0, %v2049
      %v2051 = vpop.f32.mrf.mxu0
      %2052 = vmatprep.mubr.f32.mxu0 %v1811
      %2053 = vmatmul.mubr.f32.gmra.mxu0 %v1779
      %v2054 = vpop.f32.mrf.mxu0
      %v2055 = vadd.f32 0.0, %v2054
      %v2056 = vpop.f32.mrf.mxu0
      %2057 = vmatprep.mubr.f32.mxu0 %v1812
      %2058 = vmatmul.mubr.f32.gmra.mxu0 %v1780
      %v2059 = vpop.f32.mrf.mxu0
      %v2060 = vadd.f32 0.0, %v2059
      %v2061 = vpop.f32.mrf.mxu0
      %2062 = vmatprep.mubr.f32.mxu0 %v1813
      %2063 = vmatmul.mubr.f32.gmra.mxu0 %v1781
      %v2064 = vpop.f32.mrf.mxu0
      %v2065 = vadd.f32 0.0, %v2064
      %v2066 = vpop.f32.mrf.mxu0
      %2067 = vmatprep.mubr.f32.mxu0 %v1814
      %2068 = vmatmul.mubr.f32.gmra.mxu0 %v1782
      %v2069 = vpop.f32.mrf.mxu0
      %v2070 = vadd.f32 0.0, %v2069
      %v2071 = vpop.f32.mrf.mxu0
      %2072 = vmatprep.mubr.f32.mxu0 %v1815
      %2073 = vmatmul.mubr.f32.gmra.mxu0 %v1783
      %v2074 = vpop.f32.mrf.mxu0
      %v2075 = vadd.f32 0.0, %v2074
      %v2076 = vpop.f32.mrf.mxu0
      %2077 = vmatprep.mubr.f32.mxu0 %v1816
      %2078 = vmatmul.mubr.f32.gmra.mxu0 %v1784
      %v2079 = vpop.f32.mrf.mxu0
      %v2080 = vadd.f32 0.0, %v2079
      %v2081 = vpop.f32.mrf.mxu0
      %2082 = vmatprep.mubr.f32.mxu0 %v1817
      %2083 = vmatmul.mubr.f32.gmra.mxu0 %v1785
      %v2084 = vpop.f32.mrf.mxu0
      %v2085 = vadd.f32 0.0, %v2084
      %v2086 = vpop.f32.mrf.mxu0
      %2087 = vmatprep.mubr.f32.mxu0 %v1818
      %2088 = vmatmul.mubr.f32.gmra.mxu0 %v1786
      %v2089 = vpop.f32.mrf.mxu0
      %v2090 = vadd.f32 0.0, %v2089
      %v2091 = vpop.f32.mrf.mxu0
      %2092 = vmatprep.mubr.f32.mxu0 %v1819
      %2093 = vmatmul.mubr.f32.gmra.mxu0 %v1787
      %v2094 = vpop.f32.mrf.mxu0
      %v2095 = vadd.f32 0.0, %v2094
      %v2096 = vpop.f32.mrf.mxu0
      %2097 = vmatprep.mubr.f32.mxu0 %v1820
      %2098 = vmatmul.mubr.f32.gmra.mxu0 %v1788
      %v2099 = vpop.f32.mrf.mxu0
      %v2100 = vadd.f32 0.0, %v2099
      %v2101 = vpop.f32.mrf.mxu0
      %2102 = vmatprep.mubr.f32.mxu0 %v1821
      %2103 = vmatmul.mubr.f32.gmra.mxu0 %v1789
      %v2104 = vpop.f32.mrf.mxu0
      %v2105 = vadd.f32 0.0, %v2104
      %v2106 = vpop.f32.mrf.mxu0
      %2107 = vmatprep.mubr.f32.mxu0 %v1822
      %2108 = vmatmul.mubr.f32.gmra.mxu0 %v1790
      %v2109 = vpop.f32.mrf.mxu0
      %v2110 = vadd.f32 0.0, %v2109
      %v2111 = vpop.f32.mrf.mxu0
      %2112 = vmatprep.mubr.f32.mxu0 %v1823
      %2113 = vmatmul.mubr.f32.gmra.mxu0 %v1791
      %v2114 = vpop.f32.mrf.mxu0
      %v2115 = vadd.f32 0.0, %v2114
      %v2116 = vpop.f32.mrf.mxu0
      %2117 = vmatprep.mubr.f32.mxu0 %v1824
      %2118 = vmatmul.mubr.f32.gmra.mxu0 %v1792
      %v2119 = vpop.f32.mrf.mxu0
      %v2120 = vadd.f32 0.0, %v2119
      %v2121 = vpop.f32.mrf.mxu0
      %2122 = vmatprep.mubr.f32.mxu0 %v1825
      %2123 = vmatmul.mubr.f32.gmra.mxu0 %v1793
      %v2124 = vpop.f32.mrf.mxu0
      %v2125 = vadd.f32 0.0, %v2124
      %v2126 = vpop.f32.mrf.mxu0
      %2127 = vmatprep.mubr.f32.mxu0 %v1826
      %2128 = vmatmul.mubr.f32.gmra.mxu0 %v1794
      %v2129 = vpop.f32.mrf.mxu0
      %v2130 = vadd.f32 0.0, %v2129
      %v2131 = vpop.f32.mrf.mxu0
      %2132 = vdwg.mxu0
      %2133 = vmatprep.subr.mxu0 0.0
      %2134 = vmatpush1.msra.mxu0 %v1907
      %2135 = vmatprep.subr.mxu0 0.0
      %2136 = vmatpush1.msra.mxu0 %v1906
      %2137 = vmatprep.subr.mxu0 0.0
      %2138 = vmatpush1.msra.mxu0 %v1905
      %2139 = vmatprep.subr.mxu0 0.0
      %2140 = vmatpush1.msra.mxu0 %v1904
      %2141 = vmatprep.subr.mxu0 0.0
      %2142 = vmatpush1.msra.mxu0 %v1903
      %2143 = vmatprep.subr.mxu0 0.0
      %2144 = vmatpush1.msra.mxu0 %v1902
      %2145 = vmatprep.subr.mxu0 0.0
      %2146 = vmatpush1.msra.mxu0 %v1901
      %2147 = vmatprep.subr.mxu0 0.0
      %2148 = vmatpush1.msra.mxu0 %v1900
      %2149 = vmatprep.subr.mxu0 0.0
      %2150 = vmatpush1.msra.mxu0 %v1899
      %2151 = vmatprep.subr.mxu0 0.0
      %2152 = vmatpush1.msra.mxu0 %v1898
      %2153 = vmatprep.subr.mxu0 0.0
      %2154 = vmatpush1.msra.mxu0 %v1897
      %2155 = vmatprep.subr.mxu0 0.0
      %2156 = vmatpush1.msra.mxu0 %v1896
      %2157 = vmatprep.subr.mxu0 0.0
      %2158 = vmatpush1.msra.mxu0 %v1895
      %2159 = vmatprep.subr.mxu0 0.0
      %2160 = vmatpush1.msra.mxu0 %v1894
      %2161 = vmatprep.subr.mxu0 0.0
      %2162 = vmatpush1.msra.mxu0 %v1893
      %2163 = vmatprep.subr.mxu0 0.0
      %2164 = vmatpush1.msra.mxu0 %v1892
      %2165 = vmatprep.subr.mxu0 0.0
      %2166 = vmatpush2.msra.mxu0 0.0
      %2167 = vmatprep.subr.mxu0 0.0
      %2168 = vmatpush2.msra.mxu0 0.0
      %2169 = vmatprep.subr.mxu0 0.0
      %2170 = vmatpush2.msra.mxu0 0.0
      %2171 = vmatprep.subr.mxu0 0.0
      %2172 = vmatpush2.msra.mxu0 0.0
      %2173 = vmatprep.subr.mxu0 0.0
      %2174 = vmatpush2.msra.mxu0 0.0
      %2175 = vmatprep.subr.mxu0 0.0
      %2176 = vmatpush2.msra.mxu0 0.0
      %2177 = vmatprep.subr.mxu0 0.0
      %2178 = vmatpush2.msra.mxu0 0.0
      %2179 = vmatprep.subr.mxu0 0.0
      %2180 = vmatpush2.msra.mxu0 0.0
      %2181 = vmatprep.subr.mxu0 0.0
      %2182 = vmatpush2.msra.mxu0 0.0
      %2183 = vmatprep.subr.mxu0 0.0
      %2184 = vmatpush2.msra.mxu0 0.0
      %2185 = vmatprep.subr.mxu0 0.0
      %2186 = vmatpush2.msra.mxu0 0.0
      %2187 = vmatprep.subr.mxu0 0.0
      %2188 = vmatpush2.msra.mxu0 0.0
      %2189 = vmatprep.subr.mxu0 0.0
      %2190 = vmatpush2.msra.mxu0 0.0
      %2191 = vmatprep.subr.mxu0 0.0
      %2192 = vmatpush2.msra.mxu0 0.0
      %2193 = vmatprep.subr.mxu0 0.0
      %2194 = vmatpush2.msra.mxu0 0.0
      %2195 = vmatprep.subr.mxu0 0.0
      %2196 = vmatpush2.msra.mxu0 0.0
      %2197 = vmatprep.mubr.f32.mxu0 0.0
      %2198 = vmatmul.mubr.f32.gmra.mxu0 %v1827
      %v2199 = vpop.f32.mrf.mxu0
      %v2200 = vadd.f32 %v1975, %v2199
      %v2201 = vpop.f32.mrf.mxu0
      %2202 = vmatprep.mubr.f32.mxu0 0.0
      %2203 = vmatmul.mubr.f32.gmra.mxu0 %v1828
      %v2204 = vpop.f32.mrf.mxu0
      %v2205 = vadd.f32 %v1980, %v2204
      %v2206 = vpop.f32.mrf.mxu0
      %2207 = vmatprep.mubr.f32.mxu0 0.0
      %2208 = vmatmul.mubr.f32.gmra.mxu0 %v1829
      %v2209 = vpop.f32.mrf.mxu0
      %v2210 = vadd.f32 %v1985, %v2209
      %v2211 = vpop.f32.mrf.mxu0
      %2212 = vmatprep.mubr.f32.mxu0 0.0
      %2213 = vmatmul.mubr.f32.gmra.mxu0 %v1830
      %v2214 = vpop.f32.mrf.mxu0
      %v2215 = vadd.f32 %v1990, %v2214
      %v2216 = vpop.f32.mrf.mxu0
      %2217 = vmatprep.mubr.f32.mxu0 0.0
      %2218 = vmatmul.mubr.f32.gmra.mxu0 %v1831
      %v2219 = vpop.f32.mrf.mxu0
      %v2220 = vadd.f32 %v1995, %v2219
      %v2221 = vpop.f32.mrf.mxu0
      %2222 = vmatprep.mubr.f32.mxu0 0.0
      %2223 = vmatmul.mubr.f32.gmra.mxu0 %v1832
      %v2224 = vpop.f32.mrf.mxu0
      %v2225 = vadd.f32 %v2000, %v2224
      %v2226 = vpop.f32.mrf.mxu0
      %2227 = vmatprep.mubr.f32.mxu0 0.0
      %2228 = vmatmul.mubr.f32.gmra.mxu0 %v1833
      %v2229 = vpop.f32.mrf.mxu0
      %v2230 = vadd.f32 %v2005, %v2229
      %v2231 = vpop.f32.mrf.mxu0
      %2232 = vmatprep.mubr.f32.mxu0 0.0
      %2233 = vmatmul.mubr.f32.gmra.mxu0 %v1834
      %v2234 = vpop.f32.mrf.mxu0
      %v2235 = vadd.f32 %v2010, %v2234
      %v2236 = vpop.f32.mrf.mxu0
      %2237 = vmatprep.mubr.f32.mxu0 0.0
      %2238 = vmatmul.mubr.f32.gmra.mxu0 %v1835
      %v2239 = vpop.f32.mrf.mxu0
      %v2240 = vadd.f32 %v2015, %v2239
      %v2241 = vpop.f32.mrf.mxu0
      %2242 = vmatprep.mubr.f32.mxu0 0.0
      %2243 = vmatmul.mubr.f32.gmra.mxu0 %v1836
      %v2244 = vpop.f32.mrf.mxu0
      %v2245 = vadd.f32 %v2020, %v2244
      %v2246 = vpop.f32.mrf.mxu0
      %2247 = vmatprep.mubr.f32.mxu0 0.0
      %2248 = vmatmul.mubr.f32.gmra.mxu0 %v1837
      %v2249 = vpop.f32.mrf.mxu0
      %v2250 = vadd.f32 %v2025, %v2249
      %v2251 = vpop.f32.mrf.mxu0
      %2252 = vmatprep.mubr.f32.mxu0 0.0
      %2253 = vmatmul.mubr.f32.gmra.mxu0 %v1838
      %v2254 = vpop.f32.mrf.mxu0
      %v2255 = vadd.f32 %v2030, %v2254
      %v2256 = vpop.f32.mrf.mxu0
      %2257 = vmatprep.mubr.f32.mxu0 0.0
      %2258 = vmatmul.mubr.f32.gmra.mxu0 %v1839
      %v2259 = vpop.f32.mrf.mxu0
      %v2260 = vadd.f32 %v2035, %v2259
      %v2261 = vpop.f32.mrf.mxu0
      %2262 = vmatprep.mubr.f32.mxu0 0.0
      %2263 = vmatmul.mubr.f32.gmra.mxu0 %v1840
      %v2264 = vpop.f32.mrf.mxu0
      %v2265 = vadd.f32 %v2040, %v2264
      %v2266 = vpop.f32.mrf.mxu0
      %2267 = vmatprep.mubr.f32.mxu0 0.0
      %2268 = vmatmul.mubr.f32.gmra.mxu0 %v1841
      %v2269 = vpop.f32.mrf.mxu0
      %v2270 = vadd.f32 %v2045, %v2269
      %v2271 = vpop.f32.mrf.mxu0
      %2272 = vmatprep.mubr.f32.mxu0 0.0
      %2273 = vmatmul.mubr.f32.gmra.mxu0 %v1842
      %v2274 = vpop.f32.mrf.mxu0
      %v2275 = vadd.f32 %v2050, %v2274
      %v2276 = vpop.f32.mrf.mxu0
      %2277 = vmatprep.mubr.f32.mxu0 0.0
      %2278 = vmatmul.mubr.f32.gmra.mxu0 %v1843
      %v2279 = vpop.f32.mrf.mxu0
      %v2280 = vadd.f32 %v2055, %v2279
      %v2281 = vpop.f32.mrf.mxu0
      %2282 = vmatprep.mubr.f32.mxu0 0.0
      %2283 = vmatmul.mubr.f32.gmra.mxu0 %v1844
      %v2284 = vpop.f32.mrf.mxu0
      %v2285 = vadd.f32 %v2060, %v2284
      %v2286 = vpop.f32.mrf.mxu0
      %2287 = vmatprep.mubr.f32.mxu0 0.0
      %2288 = vmatmul.mubr.f32.gmra.mxu0 %v1845
      %v2289 = vpop.f32.mrf.mxu0
      %v2290 = vadd.f32 %v2065, %v2289
      %v2291 = vpop.f32.mrf.mxu0
      %2292 = vmatprep.mubr.f32.mxu0 0.0
      %2293 = vmatmul.mubr.f32.gmra.mxu0 %v1846
      %v2294 = vpop.f32.mrf.mxu0
      %v2295 = vadd.f32 %v2070, %v2294
      %v2296 = vpop.f32.mrf.mxu0
      %2297 = vmatprep.mubr.f32.mxu0 0.0
      %2298 = vmatmul.mubr.f32.gmra.mxu0 %v1847
      %v2299 = vpop.f32.mrf.mxu0
      %v2300 = vadd.f32 %v2075, %v2299
      %v2301 = vpop.f32.mrf.mxu0
      %2302 = vmatprep.mubr.f32.mxu0 0.0
      %2303 = vmatmul.mubr.f32.gmra.mxu0 %v1848
      %v2304 = vpop.f32.mrf.mxu0
      %v2305 = vadd.f32 %v2080, %v2304
      %v2306 = vpop.f32.mrf.mxu0
      %2307 = vmatprep.mubr.f32.mxu0 0.0
      %2308 = vmatmul.mubr.f32.gmra.mxu0 %v1849
      %v2309 = vpop.f32.mrf.mxu0
      %v2310 = vadd.f32 %v2085, %v2309
      %v2311 = vpop.f32.mrf.mxu0
      %2312 = vmatprep.mubr.f32.mxu0 0.0
      %2313 = vmatmul.mubr.f32.gmra.mxu0 %v1850
      %v2314 = vpop.f32.mrf.mxu0
      %v2315 = vadd.f32 %v2090, %v2314
      %v2316 = vpop.f32.mrf.mxu0
      %2317 = vmatprep.mubr.f32.mxu0 0.0
      %2318 = vmatmul.mubr.f32.gmra.mxu0 %v1851
      %v2319 = vpop.f32.mrf.mxu0
      %v2320 = vadd.f32 %v2095, %v2319
      %v2321 = vpop.f32.mrf.mxu0
      %2322 = vmatprep.mubr.f32.mxu0 0.0
      %2323 = vmatmul.mubr.f32.gmra.mxu0 %v1852
      %v2324 = vpop.f32.mrf.mxu0
      %v2325 = vadd.f32 %v2100, %v2324
      %v2326 = vpop.f32.mrf.mxu0
      %2327 = vmatprep.mubr.f32.mxu0 0.0
      %2328 = vmatmul.mubr.f32.gmra.mxu0 %v1853
      %v2329 = vpop.f32.mrf.mxu0
      %v2330 = vadd.f32 %v2105, %v2329
      %v2331 = vpop.f32.mrf.mxu0
      %2332 = vmatprep.mubr.f32.mxu0 0.0
      %2333 = vmatmul.mubr.f32.gmra.mxu0 %v1854
      %v2334 = vpop.f32.mrf.mxu0
      %v2335 = vadd.f32 %v2110, %v2334
      %v2336 = vpop.f32.mrf.mxu0
      %2337 = vmatprep.mubr.f32.mxu0 0.0
      %2338 = vmatmul.mubr.f32.gmra.mxu0 %v1855
      %v2339 = vpop.f32.mrf.mxu0
      %v2340 = vadd.f32 %v2115, %v2339
      %v2341 = vpop.f32.mrf.mxu0
      %2342 = vmatprep.mubr.f32.mxu0 0.0
      %2343 = vmatmul.mubr.f32.gmra.mxu0 %v1856
      %v2344 = vpop.f32.mrf.mxu0
      %v2345 = vadd.f32 %v2120, %v2344
      %v2346 = vpop.f32.mrf.mxu0
      %2347 = vmatprep.mubr.f32.mxu0 0.0
      %2348 = vmatmul.mubr.f32.gmra.mxu0 %v1857
      %v2349 = vpop.f32.mrf.mxu0
      %v2350 = vadd.f32 %v2125, %v2349
      %v2351 = vpop.f32.mrf.mxu0
      %2352 = vmatprep.mubr.f32.mxu0 0.0
      %2353 = vmatmul.mubr.f32.gmra.mxu0 %v1858
      %v2354 = vpop.f32.mrf.mxu0
      %v2355 = vadd.f32 %v2130, %v2354
      %v2356 = vpop.f32.mrf.mxu0
      %2357 = vdwg.mxu0
      %v2358 = vld [vmem:[#allocation5] sm:$0xff]
      %v2359 = vld [vmem:[#allocation5 + $0x8] sm:$0xff]
      %v2360 = vld [vmem:[#allocation5 + $0x10] sm:$0xff]
      %v2361 = vld [vmem:[#allocation5 + $0x18] sm:$0xff]
      %v2362 = vld [vmem:[#allocation5 + $0x20] sm:$0xff]
      %v2363 = vld [vmem:[#allocation5 + $0x28] sm:$0xff]
      %v2364 = vld [vmem:[#allocation5 + $0x30] sm:$0xff]
      %v2365 = vld [vmem:[#allocation5 + $0x38] sm:$0xff]
      %v2366 = vld [vmem:[#allocation5 + $0x40] sm:$0xff]
      %v2367 = vld [vmem:[#allocation5 + $0x48] sm:$0xff]
      %v2368 = vld [vmem:[#allocation5 + $0x50] sm:$0xff]
      %v2369 = vld [vmem:[#allocation5 + $0x58] sm:$0xff]
      %v2370 = vld [vmem:[#allocation5 + $0x60] sm:$0xff]
      %v2371 = vld [vmem:[#allocation5 + $0x68] sm:$0xff]
      %v2372 = vld [vmem:[#allocation5 + $0x70] sm:$0xff]
      %v2373 = vld [vmem:[#allocation5 + $0x78] sm:$0xff]
      %v2374 = vld [vmem:[#allocation5 + $0x80] sm:$0xff]
      %v2375 = vld [vmem:[#allocation5 + $0x88] sm:$0xff]
      %v2376 = vld [vmem:[#allocation5 + $0x90] sm:$0xff]
      %v2377 = vld [vmem:[#allocation5 + $0x98] sm:$0xff]
      %v2378 = vld [vmem:[#allocation5 + $0xa0] sm:$0xff]
      %v2379 = vld [vmem:[#allocation5 + $0xa8] sm:$0xff]
      %v2380 = vld [vmem:[#allocation5 + $0xb0] sm:$0xff]
      %v2381 = vld [vmem:[#allocation5 + $0xb8] sm:$0xff]
      %v2382 = vld [vmem:[#allocation5 + $0xc0] sm:$0xff]
      %v2383 = vld [vmem:[#allocation5 + $0xc8] sm:$0xff]
      %v2384 = vld [vmem:[#allocation5 + $0xd0] sm:$0xff]
      %v2385 = vld [vmem:[#allocation5 + $0xd8] sm:$0xff]
      %v2386 = vld [vmem:[#allocation5 + $0xe0] sm:$0xff]
      %v2387 = vld [vmem:[#allocation5 + $0xe8] sm:$0xff]
      %v2388 = vld [vmem:[#allocation5 + $0xf0] sm:$0xff]
      %v2389 = vld [vmem:[#allocation5 + $0xf8] sm:$0xff]
      %v2390 = vadd.f32 %v2358, %v2200
      %v2391 = vadd.f32 %v2359, %v2205
      %v2392 = vadd.f32 %v2360, %v2210
      %v2393 = vadd.f32 %v2361, %v2215
      %v2394 = vadd.f32 %v2362, %v2220
      %v2395 = vadd.f32 %v2363, %v2225
      %v2396 = vadd.f32 %v2364, %v2230
      %v2397 = vadd.f32 %v2365, %v2235
      %v2398 = vadd.f32 %v2366, %v2240
      %v2399 = vadd.f32 %v2367, %v2245
      %v2400 = vadd.f32 %v2368, %v2250
      %v2401 = vadd.f32 %v2369, %v2255
      %v2402 = vadd.f32 %v2370, %v2260
      %v2403 = vadd.f32 %v2371, %v2265
      %v2404 = vadd.f32 %v2372, %v2270
      %v2405 = vadd.f32 %v2373, %v2275
      %v2406 = vadd.f32 %v2374, %v2280
      %v2407 = vadd.f32 %v2375, %v2285
      %v2408 = vadd.f32 %v2376, %v2290
      %v2409 = vadd.f32 %v2377, %v2295
      %v2410 = vadd.f32 %v2378, %v2300
      %v2411 = vadd.f32 %v2379, %v2305
      %v2412 = vadd.f32 %v2380, %v2310
      %v2413 = vadd.f32 %v2381, %v2315
      %v2414 = vadd.f32 %v2382, %v2320
      %v2415 = vadd.f32 %v2383, %v2325
      %v2416 = vadd.f32 %v2384, %v2330
      %v2417 = vadd.f32 %v2385, %v2335
      %v2418 = vadd.f32 %v2386, %v2340
      %v2419 = vadd.f32 %v2387, %v2345
      %v2420 = vadd.f32 %v2388, %v2350
      %v2421 = vadd.f32 %v2389, %v2355
      %2422 = vst [vmem:[#allocation5] sm:$0xff] %v2390
      %2423 = vst [vmem:[#allocation5 + $0x8] sm:$0xff] %v2391
      %2424 = vst [vmem:[#allocation5 + $0x10] sm:$0xff] %v2392
      %2425 = vst [vmem:[#allocation5 + $0x18] sm:$0xff] %v2393
      %2426 = vst [vmem:[#allocation5 + $0x20] sm:$0xff] %v2394
      %2427 = vst [vmem:[#allocation5 + $0x28] sm:$0xff] %v2395
      %2428 = vst [vmem:[#allocation5 + $0x30] sm:$0xff] %v2396
      %2429 = vst [vmem:[#allocation5 + $0x38] sm:$0xff] %v2397
      %2430 = vst [vmem:[#allocation5 + $0x40] sm:$0xff] %v2398
      %2431 = vst [vmem:[#allocation5 + $0x48] sm:$0xff] %v2399
      %2432 = vst [vmem:[#allocation5 + $0x50] sm:$0xff] %v2400
      %2433 = vst [vmem:[#allocation5 + $0x58] sm:$0xff] %v2401
      %2434 = vst [vmem:[#allocation5 + $0x60] sm:$0xff] %v2402
      %2435 = vst [vmem:[#allocation5 + $0x68] sm:$0xff] %v2403
      %2436 = vst [vmem:[#allocation5 + $0x70] sm:$0xff] %v2404
      %2437 = vst [vmem:[#allocation5 + $0x78] sm:$0xff] %v2405
      %2438 = vst [vmem:[#allocation5 + $0x80] sm:$0xff] %v2406
      %2439 = vst [vmem:[#allocation5 + $0x88] sm:$0xff] %v2407
      %2440 = vst [vmem:[#allocation5 + $0x90] sm:$0xff] %v2408
      %2441 = vst [vmem:[#allocation5 + $0x98] sm:$0xff] %v2409
      %2442 = vst [vmem:[#allocation5 + $0xa0] sm:$0xff] %v2410
      %2443 = vst [vmem:[#allocation5 + $0xa8] sm:$0xff] %v2411
      %2444 = vst [vmem:[#allocation5 + $0xb0] sm:$0xff] %v2412
      %2445 = vst [vmem:[#allocation5 + $0xb8] sm:$0xff] %v2413
      %2446 = vst [vmem:[#allocation5 + $0xc0] sm:$0xff] %v2414
      %2447 = vst [vmem:[#allocation5 + $0xc8] sm:$0xff] %v2415
      %2448 = vst [vmem:[#allocation5 + $0xd0] sm:$0xff] %v2416
      %2449 = vst [vmem:[#allocation5 + $0xd8] sm:$0xff] %v2417
      %2450 = vst [vmem:[#allocation5 + $0xe0] sm:$0xff] %v2418
      %2451 = vst [vmem:[#allocation5 + $0xe8] sm:$0xff] %v2419
      %2452 = vst [vmem:[#allocation5 + $0xf0] sm:$0xff] %v2420
      %2453 = vst [vmem:[#allocation5 + $0xf8] sm:$0xff] %v2421
      %v2454 = vld [vmem:[#allocation5] sm:$0xff]
      %v2455 = vld [vmem:[#allocation5 + $0x8] sm:$0xff]
      %v2456 = vld [vmem:[#allocation5 + $0x10] sm:$0xff]
      %v2457 = vld [vmem:[#allocation5 + $0x18] sm:$0xff]
      %v2458 = vld [vmem:[#allocation5 + $0x20] sm:$0xff]
      %v2459 = vld [vmem:[#allocation5 + $0x28] sm:$0xff]
      %v2460 = vld [vmem:[#allocation5 + $0x30] sm:$0xff]
      %v2461 = vld [vmem:[#allocation5 + $0x38] sm:$0xff]
      %v2462 = vld [vmem:[#allocation5 + $0x40] sm:$0xff]
      %v2463 = vld [vmem:[#allocation5 + $0x48] sm:$0xff]
      %v2464 = vld [vmem:[#allocation5 + $0x50] sm:$0xff]
      %v2465 = vld [vmem:[#allocation5 + $0x58] sm:$0xff]
      %v2466 = vld [vmem:[#allocation5 + $0x60] sm:$0xff]
      %v2467 = vld [vmem:[#allocation5 + $0x68] sm:$0xff]
      %v2468 = vld [vmem:[#allocation5 + $0x70] sm:$0xff]
      %v2469 = vld [vmem:[#allocation5 + $0x78] sm:$0xff]
      %v2470 = vld [vmem:[#allocation5 + $0x80] sm:$0xff]
      %v2471 = vld [vmem:[#allocation5 + $0x88] sm:$0xff]
      %v2472 = vld [vmem:[#allocation5 + $0x90] sm:$0xff]
      %v2473 = vld [vmem:[#allocation5 + $0x98] sm:$0xff]
      %v2474 = vld [vmem:[#allocation5 + $0xa0] sm:$0xff]
      %v2475 = vld [vmem:[#allocation5 + $0xa8] sm:$0xff]
      %v2476 = vld [vmem:[#allocation5 + $0xb0] sm:$0xff]
      %v2477 = vld [vmem:[#allocation5 + $0xb8] sm:$0xff]
      %v2478 = vld [vmem:[#allocation5 + $0xc0] sm:$0xff]
      %v2479 = vld [vmem:[#allocation5 + $0xc8] sm:$0xff]
      %v2480 = vld [vmem:[#allocation5 + $0xd0] sm:$0xff]
      %v2481 = vld [vmem:[#allocation5 + $0xd8] sm:$0xff]
      %v2482 = vld [vmem:[#allocation5 + $0xe0] sm:$0xff]
      %v2483 = vld [vmem:[#allocation5 + $0xe8] sm:$0xff]
      %v2484 = vld [vmem:[#allocation5 + $0xf0] sm:$0xff]
      %v2485 = vld [vmem:[#allocation5 + $0xf8] sm:$0xff]
      %v2486 = vmax.f32 %v2454, 0.0
      %v2487 = vmax.f32 %v2455, 0.0
      %v2488 = vmax.f32 %v2456, 0.0
      %v2489 = vmax.f32 %v2457, 0.0
      %v2490 = vmax.f32 %v2458, 0.0
      %v2491 = vmax.f32 %v2459, 0.0
      %v2492 = vmax.f32 %v2460, 0.0
      %v2493 = vmax.f32 %v2461, 0.0
      %v2494 = vmax.f32 %v2462, 0.0
      %v2495 = vmax.f32 %v2463, 0.0
      %v2496 = vmax.f32 %v2464, 0.0
      %v2497 = vmax.f32 %v2465, 0.0
      %v2498 = vmax.f32 %v2466, 0.0
      %v2499 = vmax.f32 %v2467, 0.0
      %v2500 = vmax.f32 %v2468, 0.0
      %v2501 = vmax.f32 %v2469, 0.0
      %v2502 = vmax.f32 %v2470, 0.0
      %v2503 = vmax.f32 %v2471, 0.0
      %v2504 = vmax.f32 %v2472, 0.0
      %v2505 = vmax.f32 %v2473, 0.0
      %v2506 = vmax.f32 %v2474, 0.0
      %v2507 = vmax.f32 %v2475, 0.0
      %v2508 = vmax.f32 %v2476, 0.0
      %v2509 = vmax.f32 %v2477, 0.0
      %v2510 = vmax.f32 %v2478, 0.0
      %v2511 = vmax.f32 %v2479, 0.0
      %v2512 = vmax.f32 %v2480, 0.0
      %v2513 = vmax.f32 %v2481, 0.0
      %v2514 = vmax.f32 %v2482, 0.0
      %v2515 = vmax.f32 %v2483, 0.0
      %v2516 = vmax.f32 %v2484, 0.0
      %v2517 = vmax.f32 %v2485, 0.0
      %2518 = vst [vmem:[#allocation4] sm:$0xff] %v2486
      %2519 = vst [vmem:[#allocation4 + $0x8] sm:$0xff] %v2487
      %2520 = vst [vmem:[#allocation4 + $0x10] sm:$0xff] %v2488
      %2521 = vst [vmem:[#allocation4 + $0x18] sm:$0xff] %v2489
      %2522 = vst [vmem:[#allocation4 + $0x20] sm:$0xff] %v2490
      %2523 = vst [vmem:[#allocation4 + $0x28] sm:$0xff] %v2491
      %2524 = vst [vmem:[#allocation4 + $0x30] sm:$0xff] %v2492
      %2525 = vst [vmem:[#allocation4 + $0x38] sm:$0xff] %v2493
      %2526 = vst [vmem:[#allocation4 + $0x40] sm:$0xff] %v2494
      %2527 = vst [vmem:[#allocation4 + $0x48] sm:$0xff] %v2495
      %2528 = vst [vmem:[#allocation4 + $0x50] sm:$0xff] %v2496
      %2529 = vst [vmem:[#allocation4 + $0x58] sm:$0xff] %v2497
      %2530 = vst [vmem:[#allocation4 + $0x60] sm:$0xff] %v2498
      %2531 = vst [vmem:[#allocation4 + $0x68] sm:$0xff] %v2499
      %2532 = vst [vmem:[#allocation4 + $0x70] sm:$0xff] %v2500
      %2533 = vst [vmem:[#allocation4 + $0x78] sm:$0xff] %v2501
      %2534 = vst [vmem:[#allocation4 + $0x80] sm:$0xff] %v2502
      %2535 = vst [vmem:[#allocation4 + $0x88] sm:$0xff] %v2503
      %2536 = vst [vmem:[#allocation4 + $0x90] sm:$0xff] %v2504
      %2537 = vst [vmem:[#allocation4 + $0x98] sm:$0xff] %v2505
      %2538 = vst [vmem:[#allocation4 + $0xa0] sm:$0xff] %v2506
      %2539 = vst [vmem:[#allocation4 + $0xa8] sm:$0xff] %v2507
      %2540 = vst [vmem:[#allocation4 + $0xb0] sm:$0xff] %v2508
      %2541 = vst [vmem:[#allocation4 + $0xb8] sm:$0xff] %v2509
      %2542 = vst [vmem:[#allocation4 + $0xc0] sm:$0xff] %v2510
      %2543 = vst [vmem:[#allocation4 + $0xc8] sm:$0xff] %v2511
      %2544 = vst [vmem:[#allocation4 + $0xd0] sm:$0xff] %v2512
      %2545 = vst [vmem:[#allocation4 + $0xd8] sm:$0xff] %v2513
      %2546 = vst [vmem:[#allocation4 + $0xe0] sm:$0xff] %v2514
      %2547 = vst [vmem:[#allocation4 + $0xe8] sm:$0xff] %v2515
      %2548 = vst [vmem:[#allocation4 + $0xf0] sm:$0xff] %v2516
      %2549 = vst [vmem:[#allocation4 + $0xf8] sm:$0xff] %v2517
      %2550 = vst [vmem:[%s412 + $0x1] sm:$0xff] %v2486
      %2551 = vst [vmem:[%s412 + $0x9] sm:$0xff] %v2487
      %2552 = vst [vmem:[%s412 + $0x19] sm:$0xff] %v2488
      %2553 = vst [vmem:[%s412 + $0x21] sm:$0xff] %v2489
      %2554 = vst [vmem:[%s412 + $0x31] sm:$0xff] %v2490
      %2555 = vst [vmem:[%s412 + $0x39] sm:$0xff] %v2491
      %2556 = vst [vmem:[%s412 + $0x49] sm:$0xff] %v2492
      %2557 = vst [vmem:[%s412 + $0x51] sm:$0xff] %v2493
      %2558 = vst [vmem:[%s412 + $0x61] sm:$0xff] %v2494
      %2559 = vst [vmem:[%s412 + $0x69] sm:$0xff] %v2495
      %2560 = vst [vmem:[%s412 + $0x79] sm:$0xff] %v2496
      %2561 = vst [vmem:[%s412 + $0x81] sm:$0xff] %v2497
      %2562 = vst [vmem:[%s412 + $0x91] sm:$0xff] %v2498
      %2563 = vst [vmem:[%s412 + $0x99] sm:$0xff] %v2499
      %2564 = vst [vmem:[%s412 + $0xa9] sm:$0xff] %v2500
      %2565 = vst [vmem:[%s412 + $0xb1] sm:$0xff] %v2501
      %2566 = vst [vmem:[%s412 + $0xc1] sm:$0xff] %v2502
      %2567 = vst [vmem:[%s412 + $0xc9] sm:$0xff] %v2503
      %2568 = vst [vmem:[%s412 + $0xd9] sm:$0xff] %v2504
      %2569 = vst [vmem:[%s412 + $0xe1] sm:$0xff] %v2505
      %2570 = vst [vmem:[%s412 + $0xf1] sm:$0xff] %v2506
      %2571 = vst [vmem:[%s412 + $0xf9] sm:$0xff] %v2507
      %2572 = vst [vmem:[%s412 + $0x109] sm:$0xff] %v2508
      %2573 = vst [vmem:[%s412 + $0x111] sm:$0xff] %v2509
      %2574 = vst [vmem:[%s412 + $0x121] sm:$0xff] %v2510
      %2575 = vst [vmem:[%s412 + $0x129] sm:$0xff] %v2511
      %2576 = vst [vmem:[%s412 + $0x139] sm:$0xff] %v2512
      %2577 = vst [vmem:[%s412 + $0x141] sm:$0xff] %v2513
      %2578 = vst [vmem:[%s412 + $0x151] sm:$0xff] %v2514
      %2579 = vst [vmem:[%s412 + $0x159] sm:$0xff] %v2515
      %2580 = vst [vmem:[%s412 + $0x169] sm:$0xff] %v2516
      %2581 = vst [vmem:[%s412 + $0x171] sm:$0xff] %v2517
      loop: start=0, step=1, limit=3
      $region45: #{drrn_forward.1} parent=43 // loop_pre_header
        _
      $region46: #{drrn_forward.1} parent=43 // loop_header
        %s2583 = sphi 0, %s2587
        %p2584 = scmp.ge.s32.totalorder %s2583, 3
      $region47: #{drrn_forward.1} parent=43 // loop_header_branch
        %2586 = sbr.rel (%p2584) target = $region51
      $region48: #{drrn_forward.1} parent=43 // loop_body
        %v2588 = vld [vmem:[#allocation2] sm:$0xff]
        %v2589 = vld [vmem:[#allocation2 + $0x8] sm:$0xff]
        %v2590 = vld [vmem:[#allocation2 + $0x18] sm:$0xff]
        %v2591 = vld [vmem:[#allocation2 + $0x20] sm:$0xff]
        %v2592 = vld [vmem:[#allocation2 + $0x30] sm:$0xff]
        %v2593 = vld [vmem:[#allocation2 + $0x38] sm:$0xff]
        %v2594 = vld [vmem:[#allocation2 + $0x48] sm:$0xff]
        %v2595 = vld [vmem:[#allocation2 + $0x50] sm:$0xff]
        %v2596 = vld [vmem:[#allocation2 + $0x60] sm:$0xff]
        %v2597 = vld [vmem:[#allocation2 + $0x68] sm:$0xff]
        %v2598 = vld [vmem:[#allocation2 + $0x78] sm:$0xff]
        %v2599 = vld [vmem:[#allocation2 + $0x80] sm:$0xff]
        %v2600 = vld [vmem:[#allocation2 + $0x90] sm:$0xff]
        %v2601 = vld [vmem:[#allocation2 + $0x98] sm:$0xff]
        %v2602 = vld [vmem:[#allocation2 + $0xa8] sm:$0xff]
        %v2603 = vld [vmem:[#allocation2 + $0xb0] sm:$0xff]
        %v2604 = vld [vmem:[#allocation2 + $0xc0] sm:$0xff]
        %v2605 = vld [vmem:[#allocation2 + $0xc8] sm:$0xff]
        %v2606 = vld [vmem:[#allocation2 + $0xd8] sm:$0xff]
        %v2607 = vld [vmem:[#allocation2 + $0xe0] sm:$0xff]
        %v2608 = vld [vmem:[#allocation2 + $0xf0] sm:$0xff]
        %v2609 = vld [vmem:[#allocation2 + $0xf8] sm:$0xff]
        %v2610 = vld [vmem:[#allocation2 + $0x108] sm:$0xff]
        %v2611 = vld [vmem:[#allocation2 + $0x110] sm:$0xff]
        %v2612 = vld [vmem:[#allocation2 + $0x120] sm:$0xff]
        %v2613 = vld [vmem:[#allocation2 + $0x128] sm:$0xff]
        %v2614 = vld [vmem:[#allocation2 + $0x138] sm:$0xff]
        %v2615 = vld [vmem:[#allocation2 + $0x140] sm:$0xff]
        %v2616 = vld [vmem:[#allocation2 + $0x150] sm:$0xff]
        %v2617 = vld [vmem:[#allocation2 + $0x158] sm:$0xff]
        %v2618 = vld [vmem:[#allocation2 + $0x168] sm:$0xff]
        %v2619 = vld [vmem:[#allocation2 + $0x170] sm:$0xff]
        %v2620 = vld [vmem:[#allocation2 + $0x1] sm:$0xff]
        %v2621 = vld [vmem:[#allocation2 + $0x9] sm:$0xff]
        %v2622 = vld [vmem:[#allocation2 + $0x19] sm:$0xff]
        %v2623 = vld [vmem:[#allocation2 + $0x21] sm:$0xff]
        %v2624 = vld [vmem:[#allocation2 + $0x31] sm:$0xff]
        %v2625 = vld [vmem:[#allocation2 + $0x39] sm:$0xff]
        %v2626 = vld [vmem:[#allocation2 + $0x49] sm:$0xff]
        %v2627 = vld [vmem:[#allocation2 + $0x51] sm:$0xff]
        %v2628 = vld [vmem:[#allocation2 + $0x61] sm:$0xff]
        %v2629 = vld [vmem:[#allocation2 + $0x69] sm:$0xff]
        %v2630 = vld [vmem:[#allocation2 + $0x79] sm:$0xff]
        %v2631 = vld [vmem:[#allocation2 + $0x81] sm:$0xff]
        %v2632 = vld [vmem:[#allocation2 + $0x91] sm:$0xff]
        %v2633 = vld [vmem:[#allocation2 + $0x99] sm:$0xff]
        %v2634 = vld [vmem:[#allocation2 + $0xa9] sm:$0xff]
        %v2635 = vld [vmem:[#allocation2 + $0xb1] sm:$0xff]
        %v2636 = vld [vmem:[#allocation2 + $0xc1] sm:$0xff]
        %v2637 = vld [vmem:[#allocation2 + $0xc9] sm:$0xff]
        %v2638 = vld [vmem:[#allocation2 + $0xd9] sm:$0xff]
        %v2639 = vld [vmem:[#allocation2 + $0xe1] sm:$0xff]
        %v2640 = vld [vmem:[#allocation2 + $0xf1] sm:$0xff]
        %v2641 = vld [vmem:[#allocation2 + $0xf9] sm:$0xff]
        %v2642 = vld [vmem:[#allocation2 + $0x109] sm:$0xff]
        %v2643 = vld [vmem:[#allocation2 + $0x111] sm:$0xff]
        %v2644 = vld [vmem:[#allocation2 + $0x121] sm:$0xff]
        %v2645 = vld [vmem:[#allocation2 + $0x129] sm:$0xff]
        %v2646 = vld [vmem:[#allocation2 + $0x139] sm:$0xff]
        %v2647 = vld [vmem:[#allocation2 + $0x141] sm:$0xff]
        %v2648 = vld [vmem:[#allocation2 + $0x151] sm:$0xff]
        %v2649 = vld [vmem:[#allocation2 + $0x159] sm:$0xff]
        %v2650 = vld [vmem:[#allocation2 + $0x169] sm:$0xff]
        %v2651 = vld [vmem:[#allocation2 + $0x171] sm:$0xff]
        %v2652 = vld [vmem:[#allocation2 + $0x2] sm:$0xff]
        %v2653 = vld [vmem:[#allocation2 + $0xa] sm:$0xff]
        %v2654 = vld [vmem:[#allocation2 + $0x1a] sm:$0xff]
        %v2655 = vld [vmem:[#allocation2 + $0x22] sm:$0xff]
        %v2656 = vld [vmem:[#allocation2 + $0x32] sm:$0xff]
        %v2657 = vld [vmem:[#allocation2 + $0x3a] sm:$0xff]
        %v2658 = vld [vmem:[#allocation2 + $0x4a] sm:$0xff]
        %v2659 = vld [vmem:[#allocation2 + $0x52] sm:$0xff]
        %v2660 = vld [vmem:[#allocation2 + $0x62] sm:$0xff]
        %v2661 = vld [vmem:[#allocation2 + $0x6a] sm:$0xff]
        %v2662 = vld [vmem:[#allocation2 + $0x7a] sm:$0xff]
        %v2663 = vld [vmem:[#allocation2 + $0x82] sm:$0xff]
        %v2664 = vld [vmem:[#allocation2 + $0x92] sm:$0xff]
        %v2665 = vld [vmem:[#allocation2 + $0x9a] sm:$0xff]
        %v2666 = vld [vmem:[#allocation2 + $0xaa] sm:$0xff]
        %v2667 = vld [vmem:[#allocation2 + $0xb2] sm:$0xff]
        %v2668 = vld [vmem:[#allocation2 + $0xc2] sm:$0xff]
        %v2669 = vld [vmem:[#allocation2 + $0xca] sm:$0xff]
        %v2670 = vld [vmem:[#allocation2 + $0xda] sm:$0xff]
        %v2671 = vld [vmem:[#allocation2 + $0xe2] sm:$0xff]
        %v2672 = vld [vmem:[#allocation2 + $0xf2] sm:$0xff]
        %v2673 = vld [vmem:[#allocation2 + $0xfa] sm:$0xff]
        %v2674 = vld [vmem:[#allocation2 + $0x10a] sm:$0xff]
        %v2675 = vld [vmem:[#allocation2 + $0x112] sm:$0xff]
        %v2676 = vld [vmem:[#allocation2 + $0x122] sm:$0xff]
        %v2677 = vld [vmem:[#allocation2 + $0x12a] sm:$0xff]
        %v2678 = vld [vmem:[#allocation2 + $0x13a] sm:$0xff]
        %v2679 = vld [vmem:[#allocation2 + $0x142] sm:$0xff]
        %v2680 = vld [vmem:[#allocation2 + $0x152] sm:$0xff]
        %v2681 = vld [vmem:[#allocation2 + $0x15a] sm:$0xff]
        %v2682 = vld [vmem:[#allocation2 + $0x16a] sm:$0xff]
        %v2683 = vld [vmem:[#allocation2 + $0x172] sm:$0xff]
        %v2684 = vld [vmem:[%s3] sm:$0xff]
        %v2685 = vld [vmem:[%s3 + $0x8] sm:$0xff]
        %v2686 = vld [vmem:[%s3 + $0x10] sm:$0xff]
        %v2687 = vld [vmem:[%s3 + $0x18] sm:$0xff]
        %v2688 = vld [vmem:[%s3 + $0x20] sm:$0xff]
        %v2689 = vld [vmem:[%s3 + $0x28] sm:$0xff]
        %v2690 = vld [vmem:[%s3 + $0x30] sm:$0xff]
        %v2691 = vld [vmem:[%s3 + $0x38] sm:$0xff]
        %v2692 = vld [vmem:[%s3 + $0x40] sm:$0xff]
        %v2693 = vld [vmem:[%s3 + $0x48] sm:$0xff]
        %v2694 = vld [vmem:[%s3 + $0x50] sm:$0xff]
        %v2695 = vld [vmem:[%s3 + $0x58] sm:$0xff]
        %v2696 = vld [vmem:[%s3 + $0x60] sm:$0xff]
        %v2697 = vld [vmem:[%s3 + $0x68] sm:$0xff]
        %v2698 = vld [vmem:[%s3 + $0x70] sm:$0xff]
        %v2699 = vld [vmem:[%s3 + $0x78] sm:$0xff]
        %v2700 = vld [vmem:[%s3 + $0x80] sm:$0xff]
        %v2701 = vld [vmem:[%s3 + $0x88] sm:$0xff]
        %v2702 = vld [vmem:[%s3 + $0x90] sm:$0xff]
        %v2703 = vld [vmem:[%s3 + $0x98] sm:$0xff]
        %v2704 = vld [vmem:[%s3 + $0xa0] sm:$0xff]
        %v2705 = vld [vmem:[%s3 + $0xa8] sm:$0xff]
        %v2706 = vld [vmem:[%s3 + $0xb0] sm:$0xff]
        %v2707 = vld [vmem:[%s3 + $0xb8] sm:$0xff]
        %v2708 = vld [vmem:[%s3 + $0xc0] sm:$0xff]
        %v2709 = vld [vmem:[%s3 + $0xc8] sm:$0xff]
        %v2710 = vld [vmem:[%s3 + $0xd0] sm:$0xff]
        %v2711 = vld [vmem:[%s3 + $0xd8] sm:$0xff]
        %v2712 = vld [vmem:[%s3 + $0xe0] sm:$0xff]
        %v2713 = vld [vmem:[%s3 + $0xe8] sm:$0xff]
        %v2714 = vld [vmem:[%s3 + $0xf0] sm:$0xff]
        %v2715 = vld [vmem:[%s3 + $0xf8] sm:$0xff]
        %v2716 = vld [vmem:[%s3 + $0x100] sm:$0xff]
        %v2717 = vld [vmem:[%s3 + $0x108] sm:$0xff]
        %v2718 = vld [vmem:[%s3 + $0x110] sm:$0xff]
        %v2719 = vld [vmem:[%s3 + $0x118] sm:$0xff]
        %v2720 = vld [vmem:[%s3 + $0x120] sm:$0xff]
        %v2721 = vld [vmem:[%s3 + $0x128] sm:$0xff]
        %v2722 = vld [vmem:[%s3 + $0x130] sm:$0xff]
        %v2723 = vld [vmem:[%s3 + $0x138] sm:$0xff]
        %v2724 = vld [vmem:[%s3 + $0x140] sm:$0xff]
        %v2725 = vld [vmem:[%s3 + $0x148] sm:$0xff]
        %v2726 = vld [vmem:[%s3 + $0x150] sm:$0xff]
        %v2727 = vld [vmem:[%s3 + $0x158] sm:$0xff]
        %v2728 = vld [vmem:[%s3 + $0x160] sm:$0xff]
        %v2729 = vld [vmem:[%s3 + $0x168] sm:$0xff]
        %v2730 = vld [vmem:[%s3 + $0x170] sm:$0xff]
        %v2731 = vld [vmem:[%s3 + $0x178] sm:$0xff]
        %2732 = vmatprep.subr.mxu0 0.0
        %2733 = vmatpush1.msra.mxu0 %v2699
        %2734 = vmatprep.subr.mxu0 0.0
        %2735 = vmatpush1.msra.mxu0 %v2698
        %2736 = vmatprep.subr.mxu0 0.0
        %2737 = vmatpush1.msra.mxu0 %v2697
        %2738 = vmatprep.subr.mxu0 0.0
        %2739 = vmatpush1.msra.mxu0 %v2696
        %2740 = vmatprep.subr.mxu0 0.0
        %2741 = vmatpush1.msra.mxu0 %v2695
        %2742 = vmatprep.subr.mxu0 0.0
        %2743 = vmatpush1.msra.mxu0 %v2694
        %2744 = vmatprep.subr.mxu0 0.0
        %2745 = vmatpush1.msra.mxu0 %v2693
        %2746 = vmatprep.subr.mxu0 0.0
        %2747 = vmatpush1.msra.mxu0 %v2692
        %2748 = vmatprep.subr.mxu0 0.0
        %2749 = vmatpush1.msra.mxu0 %v2691
        %2750 = vmatprep.subr.mxu0 0.0
        %2751 = vmatpush1.msra.mxu0 %v2690
        %2752 = vmatprep.subr.mxu0 0.0
        %2753 = vmatpush1.msra.mxu0 %v2689
        %2754 = vmatprep.subr.mxu0 0.0
        %2755 = vmatpush1.msra.mxu0 %v2688
        %2756 = vmatprep.subr.mxu0 0.0
        %2757 = vmatpush1.msra.mxu0 %v2687
        %2758 = vmatprep.subr.mxu0 0.0
        %2759 = vmatpush1.msra.mxu0 %v2686
        %2760 = vmatprep.subr.mxu0 0.0
        %2761 = vmatpush1.msra.mxu0 %v2685
        %2762 = vmatprep.subr.mxu0 0.0
        %2763 = vmatpush1.msra.mxu0 %v2684
        %2764 = vmatprep.subr.mxu0 0.0
        %2765 = vmatpush2.msra.mxu0 %v2715
        %2766 = vmatprep.subr.mxu0 0.0
        %2767 = vmatpush2.msra.mxu0 %v2714
        %2768 = vmatprep.subr.mxu0 0.0
        %2769 = vmatpush2.msra.mxu0 %v2713
        %2770 = vmatprep.subr.mxu0 0.0
        %2771 = vmatpush2.msra.mxu0 %v2712
        %2772 = vmatprep.subr.mxu0 0.0
        %2773 = vmatpush2.msra.mxu0 %v2711
        %2774 = vmatprep.subr.mxu0 0.0
        %2775 = vmatpush2.msra.mxu0 %v2710
        %2776 = vmatprep.subr.mxu0 0.0
        %2777 = vmatpush2.msra.mxu0 %v2709
        %2778 = vmatprep.subr.mxu0 0.0
        %2779 = vmatpush2.msra.mxu0 %v2708
        %2780 = vmatprep.subr.mxu0 0.0
        %2781 = vmatpush2.msra.mxu0 %v2707
        %2782 = vmatprep.subr.mxu0 0.0
        %2783 = vmatpush2.msra.mxu0 %v2706
        %2784 = vmatprep.subr.mxu0 0.0
        %2785 = vmatpush2.msra.mxu0 %v2705
        %2786 = vmatprep.subr.mxu0 0.0
        %2787 = vmatpush2.msra.mxu0 %v2704
        %2788 = vmatprep.subr.mxu0 0.0
        %2789 = vmatpush2.msra.mxu0 %v2703
        %2790 = vmatprep.subr.mxu0 0.0
        %2791 = vmatpush2.msra.mxu0 %v2702
        %2792 = vmatprep.subr.mxu0 0.0
        %2793 = vmatpush2.msra.mxu0 %v2701
        %2794 = vmatprep.subr.mxu0 0.0
        %2795 = vmatpush2.msra.mxu0 %v2700
        %2796 = vmatprep.mubr.f32.mxu0 %v2620
        %2797 = vmatmul.mubr.f32.gmra.mxu0 %v2588
        %v2798 = vpop.f32.mrf.mxu0
        %v2799 = vadd.f32 0.0, %v2798
        %v2800 = vpop.f32.mrf.mxu0
        %2801 = vmatprep.mubr.f32.mxu0 %v2621
        %2802 = vmatmul.mubr.f32.gmra.mxu0 %v2589
        %v2803 = vpop.f32.mrf.mxu0
        %v2804 = vadd.f32 0.0, %v2803
        %v2805 = vpop.f32.mrf.mxu0
        %2806 = vmatprep.mubr.f32.mxu0 %v2622
        %2807 = vmatmul.mubr.f32.gmra.mxu0 %v2590
        %v2808 = vpop.f32.mrf.mxu0
        %v2809 = vadd.f32 0.0, %v2808
        %v2810 = vpop.f32.mrf.mxu0
        %2811 = vmatprep.mubr.f32.mxu0 %v2623
        %2812 = vmatmul.mubr.f32.gmra.mxu0 %v2591
        %v2813 = vpop.f32.mrf.mxu0
        %v2814 = vadd.f32 0.0, %v2813
        %v2815 = vpop.f32.mrf.mxu0
        %2816 = vmatprep.mubr.f32.mxu0 %v2624
        %2817 = vmatmul.mubr.f32.gmra.mxu0 %v2592
        %v2818 = vpop.f32.mrf.mxu0
        %v2819 = vadd.f32 0.0, %v2818
        %v2820 = vpop.f32.mrf.mxu0
        %2821 = vmatprep.mubr.f32.mxu0 %v2625
        %2822 = vmatmul.mubr.f32.gmra.mxu0 %v2593
        %v2823 = vpop.f32.mrf.mxu0
        %v2824 = vadd.f32 0.0, %v2823
        %v2825 = vpop.f32.mrf.mxu0
        %2826 = vmatprep.mubr.f32.mxu0 %v2626
        %2827 = vmatmul.mubr.f32.gmra.mxu0 %v2594
        %v2828 = vpop.f32.mrf.mxu0
        %v2829 = vadd.f32 0.0, %v2828
        %v2830 = vpop.f32.mrf.mxu0
        %2831 = vmatprep.mubr.f32.mxu0 %v2627
        %2832 = vmatmul.mubr.f32.gmra.mxu0 %v2595
        %v2833 = vpop.f32.mrf.mxu0
        %v2834 = vadd.f32 0.0, %v2833
        %v2835 = vpop.f32.mrf.mxu0
        %2836 = vmatprep.mubr.f32.mxu0 %v2628
        %2837 = vmatmul.mubr.f32.gmra.mxu0 %v2596
        %v2838 = vpop.f32.mrf.mxu0
        %v2839 = vadd.f32 0.0, %v2838
        %v2840 = vpop.f32.mrf.mxu0
        %2841 = vmatprep.mubr.f32.mxu0 %v2629
        %2842 = vmatmul.mubr.f32.gmra.mxu0 %v2597
        %v2843 = vpop.f32.mrf.mxu0
        %v2844 = vadd.f32 0.0, %v2843
        %v2845 = vpop.f32.mrf.mxu0
        %2846 = vmatprep.mubr.f32.mxu0 %v2630
        %2847 = vmatmul.mubr.f32.gmra.mxu0 %v2598
        %v2848 = vpop.f32.mrf.mxu0
        %v2849 = vadd.f32 0.0, %v2848
        %v2850 = vpop.f32.mrf.mxu0
        %2851 = vmatprep.mubr.f32.mxu0 %v2631
        %2852 = vmatmul.mubr.f32.gmra.mxu0 %v2599
        %v2853 = vpop.f32.mrf.mxu0
        %v2854 = vadd.f32 0.0, %v2853
        %v2855 = vpop.f32.mrf.mxu0
        %2856 = vmatprep.mubr.f32.mxu0 %v2632
        %2857 = vmatmul.mubr.f32.gmra.mxu0 %v2600
        %v2858 = vpop.f32.mrf.mxu0
        %v2859 = vadd.f32 0.0, %v2858
        %v2860 = vpop.f32.mrf.mxu0
        %2861 = vmatprep.mubr.f32.mxu0 %v2633
        %2862 = vmatmul.mubr.f32.gmra.mxu0 %v2601
        %v2863 = vpop.f32.mrf.mxu0
        %v2864 = vadd.f32 0.0, %v2863
        %v2865 = vpop.f32.mrf.mxu0
        %2866 = vmatprep.mubr.f32.mxu0 %v2634
        %2867 = vmatmul.mubr.f32.gmra.mxu0 %v2602
        %v2868 = vpop.f32.mrf.mxu0
        %v2869 = vadd.f32 0.0, %v2868
        %v2870 = vpop.f32.mrf.mxu0
        %2871 = vmatprep.mubr.f32.mxu0 %v2635
        %2872 = vmatmul.mubr.f32.gmra.mxu0 %v2603
        %v2873 = vpop.f32.mrf.mxu0
        %v2874 = vadd.f32 0.0, %v2873
        %v2875 = vpop.f32.mrf.mxu0
        %2876 = vmatprep.mubr.f32.mxu0 %v2636
        %2877 = vmatmul.mubr.f32.gmra.mxu0 %v2604
        %v2878 = vpop.f32.mrf.mxu0
        %v2879 = vadd.f32 0.0, %v2878
        %v2880 = vpop.f32.mrf.mxu0
        %2881 = vmatprep.mubr.f32.mxu0 %v2637
        %2882 = vmatmul.mubr.f32.gmra.mxu0 %v2605
        %v2883 = vpop.f32.mrf.mxu0
        %v2884 = vadd.f32 0.0, %v2883
        %v2885 = vpop.f32.mrf.mxu0
        %2886 = vmatprep.mubr.f32.mxu0 %v2638
        %2887 = vmatmul.mubr.f32.gmra.mxu0 %v2606
        %v2888 = vpop.f32.mrf.mxu0
        %v2889 = vadd.f32 0.0, %v2888
        %v2890 = vpop.f32.mrf.mxu0
        %2891 = vmatprep.mubr.f32.mxu0 %v2639
        %2892 = vmatmul.mubr.f32.gmra.mxu0 %v2607
        %v2893 = vpop.f32.mrf.mxu0
        %v2894 = vadd.f32 0.0, %v2893
        %v2895 = vpop.f32.mrf.mxu0
        %2896 = vmatprep.mubr.f32.mxu0 %v2640
        %2897 = vmatmul.mubr.f32.gmra.mxu0 %v2608
        %v2898 = vpop.f32.mrf.mxu0
        %v2899 = vadd.f32 0.0, %v2898
        %v2900 = vpop.f32.mrf.mxu0
        %2901 = vmatprep.mubr.f32.mxu0 %v2641
        %2902 = vmatmul.mubr.f32.gmra.mxu0 %v2609
        %v2903 = vpop.f32.mrf.mxu0
        %v2904 = vadd.f32 0.0, %v2903
        %v2905 = vpop.f32.mrf.mxu0
        %2906 = vmatprep.mubr.f32.mxu0 %v2642
        %2907 = vmatmul.mubr.f32.gmra.mxu0 %v2610
        %v2908 = vpop.f32.mrf.mxu0
        %v2909 = vadd.f32 0.0, %v2908
        %v2910 = vpop.f32.mrf.mxu0
        %2911 = vmatprep.mubr.f32.mxu0 %v2643
        %2912 = vmatmul.mubr.f32.gmra.mxu0 %v2611
        %v2913 = vpop.f32.mrf.mxu0
        %v2914 = vadd.f32 0.0, %v2913
        %v2915 = vpop.f32.mrf.mxu0
        %2916 = vmatprep.mubr.f32.mxu0 %v2644
        %2917 = vmatmul.mubr.f32.gmra.mxu0 %v2612
        %v2918 = vpop.f32.mrf.mxu0
        %v2919 = vadd.f32 0.0, %v2918
        %v2920 = vpop.f32.mrf.mxu0
        %2921 = vmatprep.mubr.f32.mxu0 %v2645
        %2922 = vmatmul.mubr.f32.gmra.mxu0 %v2613
        %v2923 = vpop.f32.mrf.mxu0
        %v2924 = vadd.f32 0.0, %v2923
        %v2925 = vpop.f32.mrf.mxu0
        %2926 = vmatprep.mubr.f32.mxu0 %v2646
        %2927 = vmatmul.mubr.f32.gmra.mxu0 %v2614
        %v2928 = vpop.f32.mrf.mxu0
        %v2929 = vadd.f32 0.0, %v2928
        %v2930 = vpop.f32.mrf.mxu0
        %2931 = vmatprep.mubr.f32.mxu0 %v2647
        %2932 = vmatmul.mubr.f32.gmra.mxu0 %v2615
        %v2933 = vpop.f32.mrf.mxu0
        %v2934 = vadd.f32 0.0, %v2933
        %v2935 = vpop.f32.mrf.mxu0
        %2936 = vmatprep.mubr.f32.mxu0 %v2648
        %2937 = vmatmul.mubr.f32.gmra.mxu0 %v2616
        %v2938 = vpop.f32.mrf.mxu0
        %v2939 = vadd.f32 0.0, %v2938
        %v2940 = vpop.f32.mrf.mxu0
        %2941 = vmatprep.mubr.f32.mxu0 %v2649
        %2942 = vmatmul.mubr.f32.gmra.mxu0 %v2617
        %v2943 = vpop.f32.mrf.mxu0
        %v2944 = vadd.f32 0.0, %v2943
        %v2945 = vpop.f32.mrf.mxu0
        %2946 = vmatprep.mubr.f32.mxu0 %v2650
        %2947 = vmatmul.mubr.f32.gmra.mxu0 %v2618
        %v2948 = vpop.f32.mrf.mxu0
        %v2949 = vadd.f32 0.0, %v2948
        %v2950 = vpop.f32.mrf.mxu0
        %2951 = vmatprep.mubr.f32.mxu0 %v2651
        %2952 = vmatmul.mubr.f32.gmra.mxu0 %v2619
        %v2953 = vpop.f32.mrf.mxu0
        %v2954 = vadd.f32 0.0, %v2953
        %v2955 = vpop.f32.mrf.mxu0
        %2956 = vdwg.mxu0
        %2957 = vmatprep.subr.mxu0 0.0
        %2958 = vmatpush1.msra.mxu0 %v2731
        %2959 = vmatprep.subr.mxu0 0.0
        %2960 = vmatpush1.msra.mxu0 %v2730
        %2961 = vmatprep.subr.mxu0 0.0
        %2962 = vmatpush1.msra.mxu0 %v2729
        %2963 = vmatprep.subr.mxu0 0.0
        %2964 = vmatpush1.msra.mxu0 %v2728
        %2965 = vmatprep.subr.mxu0 0.0
        %2966 = vmatpush1.msra.mxu0 %v2727
        %2967 = vmatprep.subr.mxu0 0.0
        %2968 = vmatpush1.msra.mxu0 %v2726
        %2969 = vmatprep.subr.mxu0 0.0
        %2970 = vmatpush1.msra.mxu0 %v2725
        %2971 = vmatprep.subr.mxu0 0.0
        %2972 = vmatpush1.msra.mxu0 %v2724
        %2973 = vmatprep.subr.mxu0 0.0
        %2974 = vmatpush1.msra.mxu0 %v2723
        %2975 = vmatprep.subr.mxu0 0.0
        %2976 = vmatpush1.msra.mxu0 %v2722
        %2977 = vmatprep.subr.mxu0 0.0
        %2978 = vmatpush1.msra.mxu0 %v2721
        %2979 = vmatprep.subr.mxu0 0.0
        %2980 = vmatpush1.msra.mxu0 %v2720
        %2981 = vmatprep.subr.mxu0 0.0
        %2982 = vmatpush1.msra.mxu0 %v2719
        %2983 = vmatprep.subr.mxu0 0.0
        %2984 = vmatpush1.msra.mxu0 %v2718
        %2985 = vmatprep.subr.mxu0 0.0
        %2986 = vmatpush1.msra.mxu0 %v2717
        %2987 = vmatprep.subr.mxu0 0.0
        %2988 = vmatpush1.msra.mxu0 %v2716
        %2989 = vmatprep.subr.mxu0 0.0
        %2990 = vmatpush2.msra.mxu0 0.0
        %2991 = vmatprep.subr.mxu0 0.0
        %2992 = vmatpush2.msra.mxu0 0.0
        %2993 = vmatprep.subr.mxu0 0.0
        %2994 = vmatpush2.msra.mxu0 0.0
        %2995 = vmatprep.subr.mxu0 0.0
        %2996 = vmatpush2.msra.mxu0 0.0
        %2997 = vmatprep.subr.mxu0 0.0
        %2998 = vmatpush2.msra.mxu0 0.0
        %2999 = vmatprep.subr.mxu0 0.0
        %3000 = vmatpush2.msra.mxu0 0.0
        %3001 = vmatprep.subr.mxu0 0.0
        %3002 = vmatpush2.msra.mxu0 0.0
        %3003 = vmatprep.subr.mxu0 0.0
        %3004 = vmatpush2.msra.mxu0 0.0
        %3005 = vmatprep.subr.mxu0 0.0
        %3006 = vmatpush2.msra.mxu0 0.0
        %3007 = vmatprep.subr.mxu0 0.0
        %3008 = vmatpush2.msra.mxu0 0.0
        %3009 = vmatprep.subr.mxu0 0.0
        %3010 = vmatpush2.msra.mxu0 0.0
        %3011 = vmatprep.subr.mxu0 0.0
        %3012 = vmatpush2.msra.mxu0 0.0
        %3013 = vmatprep.subr.mxu0 0.0
        %3014 = vmatpush2.msra.mxu0 0.0
        %3015 = vmatprep.subr.mxu0 0.0
        %3016 = vmatpush2.msra.mxu0 0.0
        %3017 = vmatprep.subr.mxu0 0.0
        %3018 = vmatpush2.msra.mxu0 0.0
        %3019 = vmatprep.subr.mxu0 0.0
        %3020 = vmatpush2.msra.mxu0 0.0
        %3021 = vmatprep.mubr.f32.mxu0 0.0
        %3022 = vmatmul.mubr.f32.gmra.mxu0 %v2652
        %v3023 = vpop.f32.mrf.mxu0
        %v3024 = vadd.f32 %v2799, %v3023
        %v3025 = vpop.f32.mrf.mxu0
        %3026 = vmatprep.mubr.f32.mxu0 0.0
        %3027 = vmatmul.mubr.f32.gmra.mxu0 %v2653
        %v3028 = vpop.f32.mrf.mxu0
        %v3029 = vadd.f32 %v2804, %v3028
        %v3030 = vpop.f32.mrf.mxu0
        %3031 = vmatprep.mubr.f32.mxu0 0.0
        %3032 = vmatmul.mubr.f32.gmra.mxu0 %v2654
        %v3033 = vpop.f32.mrf.mxu0
        %v3034 = vadd.f32 %v2809, %v3033
        %v3035 = vpop.f32.mrf.mxu0
        %3036 = vmatprep.mubr.f32.mxu0 0.0
        %3037 = vmatmul.mubr.f32.gmra.mxu0 %v2655
        %v3038 = vpop.f32.mrf.mxu0
        %v3039 = vadd.f32 %v2814, %v3038
        %v3040 = vpop.f32.mrf.mxu0
        %3041 = vmatprep.mubr.f32.mxu0 0.0
        %3042 = vmatmul.mubr.f32.gmra.mxu0 %v2656
        %v3043 = vpop.f32.mrf.mxu0
        %v3044 = vadd.f32 %v2819, %v3043
        %v3045 = vpop.f32.mrf.mxu0
        %3046 = vmatprep.mubr.f32.mxu0 0.0
        %3047 = vmatmul.mubr.f32.gmra.mxu0 %v2657
        %v3048 = vpop.f32.mrf.mxu0
        %v3049 = vadd.f32 %v2824, %v3048
        %v3050 = vpop.f32.mrf.mxu0
        %3051 = vmatprep.mubr.f32.mxu0 0.0
        %3052 = vmatmul.mubr.f32.gmra.mxu0 %v2658
        %v3053 = vpop.f32.mrf.mxu0
        %v3054 = vadd.f32 %v2829, %v3053
        %v3055 = vpop.f32.mrf.mxu0
        %3056 = vmatprep.mubr.f32.mxu0 0.0
        %3057 = vmatmul.mubr.f32.gmra.mxu0 %v2659
        %v3058 = vpop.f32.mrf.mxu0
        %v3059 = vadd.f32 %v2834, %v3058
        %v3060 = vpop.f32.mrf.mxu0
        %3061 = vmatprep.mubr.f32.mxu0 0.0
        %3062 = vmatmul.mubr.f32.gmra.mxu0 %v2660
        %v3063 = vpop.f32.mrf.mxu0
        %v3064 = vadd.f32 %v2839, %v3063
        %v3065 = vpop.f32.mrf.mxu0
        %3066 = vmatprep.mubr.f32.mxu0 0.0
        %3067 = vmatmul.mubr.f32.gmra.mxu0 %v2661
        %v3068 = vpop.f32.mrf.mxu0
        %v3069 = vadd.f32 %v2844, %v3068
        %v3070 = vpop.f32.mrf.mxu0
        %3071 = vmatprep.mubr.f32.mxu0 0.0
        %3072 = vmatmul.mubr.f32.gmra.mxu0 %v2662
        %v3073 = vpop.f32.mrf.mxu0
        %v3074 = vadd.f32 %v2849, %v3073
        %v3075 = vpop.f32.mrf.mxu0
        %3076 = vmatprep.mubr.f32.mxu0 0.0
        %3077 = vmatmul.mubr.f32.gmra.mxu0 %v2663
        %v3078 = vpop.f32.mrf.mxu0
        %v3079 = vadd.f32 %v2854, %v3078
        %v3080 = vpop.f32.mrf.mxu0
        %3081 = vmatprep.mubr.f32.mxu0 0.0
        %3082 = vmatmul.mubr.f32.gmra.mxu0 %v2664
        %v3083 = vpop.f32.mrf.mxu0
        %v3084 = vadd.f32 %v2859, %v3083
        %v3085 = vpop.f32.mrf.mxu0
        %3086 = vmatprep.mubr.f32.mxu0 0.0
        %3087 = vmatmul.mubr.f32.gmra.mxu0 %v2665
        %v3088 = vpop.f32.mrf.mxu0
        %v3089 = vadd.f32 %v2864, %v3088
        %v3090 = vpop.f32.mrf.mxu0
        %3091 = vmatprep.mubr.f32.mxu0 0.0
        %3092 = vmatmul.mubr.f32.gmra.mxu0 %v2666
        %v3093 = vpop.f32.mrf.mxu0
        %v3094 = vadd.f32 %v2869, %v3093
        %v3095 = vpop.f32.mrf.mxu0
        %3096 = vmatprep.mubr.f32.mxu0 0.0
        %3097 = vmatmul.mubr.f32.gmra.mxu0 %v2667
        %v3098 = vpop.f32.mrf.mxu0
        %v3099 = vadd.f32 %v2874, %v3098
        %v3100 = vpop.f32.mrf.mxu0
        %3101 = vmatprep.mubr.f32.mxu0 0.0
        %3102 = vmatmul.mubr.f32.gmra.mxu0 %v2668
        %v3103 = vpop.f32.mrf.mxu0
        %v3104 = vadd.f32 %v2879, %v3103
        %v3105 = vpop.f32.mrf.mxu0
        %3106 = vmatprep.mubr.f32.mxu0 0.0
        %3107 = vmatmul.mubr.f32.gmra.mxu0 %v2669
        %v3108 = vpop.f32.mrf.mxu0
        %v3109 = vadd.f32 %v2884, %v3108
        %v3110 = vpop.f32.mrf.mxu0
        %3111 = vmatprep.mubr.f32.mxu0 0.0
        %3112 = vmatmul.mubr.f32.gmra.mxu0 %v2670
        %v3113 = vpop.f32.mrf.mxu0
        %v3114 = vadd.f32 %v2889, %v3113
        %v3115 = vpop.f32.mrf.mxu0
        %3116 = vmatprep.mubr.f32.mxu0 0.0
        %3117 = vmatmul.mubr.f32.gmra.mxu0 %v2671
        %v3118 = vpop.f32.mrf.mxu0
        %v3119 = vadd.f32 %v2894, %v3118
        %v3120 = vpop.f32.mrf.mxu0
        %3121 = vmatprep.mubr.f32.mxu0 0.0
        %3122 = vmatmul.mubr.f32.gmra.mxu0 %v2672
        %v3123 = vpop.f32.mrf.mxu0
        %v3124 = vadd.f32 %v2899, %v3123
        %v3125 = vpop.f32.mrf.mxu0
        %3126 = vmatprep.mubr.f32.mxu0 0.0
        %3127 = vmatmul.mubr.f32.gmra.mxu0 %v2673
        %v3128 = vpop.f32.mrf.mxu0
        %v3129 = vadd.f32 %v2904, %v3128
        %v3130 = vpop.f32.mrf.mxu0
        %3131 = vmatprep.mubr.f32.mxu0 0.0
        %3132 = vmatmul.mubr.f32.gmra.mxu0 %v2674
        %v3133 = vpop.f32.mrf.mxu0
        %v3134 = vadd.f32 %v2909, %v3133
        %v3135 = vpop.f32.mrf.mxu0
        %3136 = vmatprep.mubr.f32.mxu0 0.0
        %3137 = vmatmul.mubr.f32.gmra.mxu0 %v2675
        %v3138 = vpop.f32.mrf.mxu0
        %v3139 = vadd.f32 %v2914, %v3138
        %v3140 = vpop.f32.mrf.mxu0
        %3141 = vmatprep.mubr.f32.mxu0 0.0
        %3142 = vmatmul.mubr.f32.gmra.mxu0 %v2676
        %v3143 = vpop.f32.mrf.mxu0
        %v3144 = vadd.f32 %v2919, %v3143
        %v3145 = vpop.f32.mrf.mxu0
        %3146 = vmatprep.mubr.f32.mxu0 0.0
        %3147 = vmatmul.mubr.f32.gmra.mxu0 %v2677
        %v3148 = vpop.f32.mrf.mxu0
        %v3149 = vadd.f32 %v2924, %v3148
        %v3150 = vpop.f32.mrf.mxu0
        %3151 = vmatprep.mubr.f32.mxu0 0.0
        %3152 = vmatmul.mubr.f32.gmra.mxu0 %v2678
        %v3153 = vpop.f32.mrf.mxu0
        %v3154 = vadd.f32 %v2929, %v3153
        %v3155 = vpop.f32.mrf.mxu0
        %3156 = vmatprep.mubr.f32.mxu0 0.0
        %3157 = vmatmul.mubr.f32.gmra.mxu0 %v2679
        %v3158 = vpop.f32.mrf.mxu0
        %v3159 = vadd.f32 %v2934, %v3158
        %v3160 = vpop.f32.mrf.mxu0
        %3161 = vmatprep.mubr.f32.mxu0 0.0
        %3162 = vmatmul.mubr.f32.gmra.mxu0 %v2680
        %v3163 = vpop.f32.mrf.mxu0
        %v3164 = vadd.f32 %v2939, %v3163
        %v3165 = vpop.f32.mrf.mxu0
        %3166 = vmatprep.mubr.f32.mxu0 0.0
        %3167 = vmatmul.mubr.f32.gmra.mxu0 %v2681
        %v3168 = vpop.f32.mrf.mxu0
        %v3169 = vadd.f32 %v2944, %v3168
        %v3170 = vpop.f32.mrf.mxu0
        %3171 = vmatprep.mubr.f32.mxu0 0.0
        %3172 = vmatmul.mubr.f32.gmra.mxu0 %v2682
        %v3173 = vpop.f32.mrf.mxu0
        %v3174 = vadd.f32 %v2949, %v3173
        %v3175 = vpop.f32.mrf.mxu0
        %3176 = vmatprep.mubr.f32.mxu0 0.0
        %3177 = vmatmul.mubr.f32.gmra.mxu0 %v2683
        %v3178 = vpop.f32.mrf.mxu0
        %v3179 = vadd.f32 %v2954, %v3178
        %v3180 = vpop.f32.mrf.mxu0
        %3181 = vdwg.mxu0
        %3182 = vst [vmem:[#allocation5] sm:$0xff] %v3024
        %3183 = vst [vmem:[#allocation5 + $0x8] sm:$0xff] %v3029
        %3184 = vst [vmem:[#allocation5 + $0x10] sm:$0xff] %v3034
        %3185 = vst [vmem:[#allocation5 + $0x18] sm:$0xff] %v3039
        %3186 = vst [vmem:[#allocation5 + $0x20] sm:$0xff] %v3044
        %3187 = vst [vmem:[#allocation5 + $0x28] sm:$0xff] %v3049
        %3188 = vst [vmem:[#allocation5 + $0x30] sm:$0xff] %v3054
        %3189 = vst [vmem:[#allocation5 + $0x38] sm:$0xff] %v3059
        %3190 = vst [vmem:[#allocation5 + $0x40] sm:$0xff] %v3064
        %3191 = vst [vmem:[#allocation5 + $0x48] sm:$0xff] %v3069
        %3192 = vst [vmem:[#allocation5 + $0x50] sm:$0xff] %v3074
        %3193 = vst [vmem:[#allocation5 + $0x58] sm:$0xff] %v3079
        %3194 = vst [vmem:[#allocation5 + $0x60] sm:$0xff] %v3084
        %3195 = vst [vmem:[#allocation5 + $0x68] sm:$0xff] %v3089
        %3196 = vst [vmem:[#allocation5 + $0x70] sm:$0xff] %v3094
        %3197 = vst [vmem:[#allocation5 + $0x78] sm:$0xff] %v3099
        %3198 = vst [vmem:[#allocation5 + $0x80] sm:$0xff] %v3104
        %3199 = vst [vmem:[#allocation5 + $0x88] sm:$0xff] %v3109
        %3200 = vst [vmem:[#allocation5 + $0x90] sm:$0xff] %v3114
        %3201 = vst [vmem:[#allocation5 + $0x98] sm:$0xff] %v3119
        %3202 = vst [vmem:[#allocation5 + $0xa0] sm:$0xff] %v3124
        %3203 = vst [vmem:[#allocation5 + $0xa8] sm:$0xff] %v3129
        %3204 = vst [vmem:[#allocation5 + $0xb0] sm:$0xff] %v3134
        %3205 = vst [vmem:[#allocation5 + $0xb8] sm:$0xff] %v3139
        %3206 = vst [vmem:[#allocation5 + $0xc0] sm:$0xff] %v3144
        %3207 = vst [vmem:[#allocation5 + $0xc8] sm:$0xff] %v3149
        %3208 = vst [vmem:[#allocation5 + $0xd0] sm:$0xff] %v3154
        %3209 = vst [vmem:[#allocation5 + $0xd8] sm:$0xff] %v3159
        %3210 = vst [vmem:[#allocation5 + $0xe0] sm:$0xff] %v3164
        %3211 = vst [vmem:[#allocation5 + $0xe8] sm:$0xff] %v3169
        %3212 = vst [vmem:[#allocation5 + $0xf0] sm:$0xff] %v3174
        %3213 = vst [vmem:[#allocation5 + $0xf8] sm:$0xff] %v3179
        %v3214 = vld [vmem:[%s412] sm:$0xff]
        %v3215 = vld [vmem:[%s412 + $0x8] sm:$0xff]
        %v3216 = vld [vmem:[%s412 + $0x18] sm:$0xff]
        %v3217 = vld [vmem:[%s412 + $0x20] sm:$0xff]
        %v3218 = vld [vmem:[%s412 + $0x30] sm:$0xff]
        %v3219 = vld [vmem:[%s412 + $0x38] sm:$0xff]
        %v3220 = vld [vmem:[%s412 + $0x48] sm:$0xff]
        %v3221 = vld [vmem:[%s412 + $0x50] sm:$0xff]
        %v3222 = vld [vmem:[%s412 + $0x60] sm:$0xff]
        %v3223 = vld [vmem:[%s412 + $0x68] sm:$0xff]
        %v3224 = vld [vmem:[%s412 + $0x78] sm:$0xff]
        %v3225 = vld [vmem:[%s412 + $0x80] sm:$0xff]
        %v3226 = vld [vmem:[%s412 + $0x90] sm:$0xff]
        %v3227 = vld [vmem:[%s412 + $0x98] sm:$0xff]
        %v3228 = vld [vmem:[%s412 + $0xa8] sm:$0xff]
        %v3229 = vld [vmem:[%s412 + $0xb0] sm:$0xff]
        %v3230 = vld [vmem:[%s412 + $0xc0] sm:$0xff]
        %v3231 = vld [vmem:[%s412 + $0xc8] sm:$0xff]
        %v3232 = vld [vmem:[%s412 + $0xd8] sm:$0xff]
        %v3233 = vld [vmem:[%s412 + $0xe0] sm:$0xff]
        %v3234 = vld [vmem:[%s412 + $0xf0] sm:$0xff]
        %v3235 = vld [vmem:[%s412 + $0xf8] sm:$0xff]
        %v3236 = vld [vmem:[%s412 + $0x108] sm:$0xff]
        %v3237 = vld [vmem:[%s412 + $0x110] sm:$0xff]
        %v3238 = vld [vmem:[%s412 + $0x120] sm:$0xff]
        %v3239 = vld [vmem:[%s412 + $0x128] sm:$0xff]
        %v3240 = vld [vmem:[%s412 + $0x138] sm:$0xff]
        %v3241 = vld [vmem:[%s412 + $0x140] sm:$0xff]
        %v3242 = vld [vmem:[%s412 + $0x150] sm:$0xff]
        %v3243 = vld [vmem:[%s412 + $0x158] sm:$0xff]
        %v3244 = vld [vmem:[%s412 + $0x168] sm:$0xff]
        %v3245 = vld [vmem:[%s412 + $0x170] sm:$0xff]
        %v3246 = vld [vmem:[%s412 + $0x1] sm:$0xff]
        %v3247 = vld [vmem:[%s412 + $0x9] sm:$0xff]
        %v3248 = vld [vmem:[%s412 + $0x19] sm:$0xff]
        %v3249 = vld [vmem:[%s412 + $0x21] sm:$0xff]
        %v3250 = vld [vmem:[%s412 + $0x31] sm:$0xff]
        %v3251 = vld [vmem:[%s412 + $0x39] sm:$0xff]
        %v3252 = vld [vmem:[%s412 + $0x49] sm:$0xff]
        %v3253 = vld [vmem:[%s412 + $0x51] sm:$0xff]
        %v3254 = vld [vmem:[%s412 + $0x61] sm:$0xff]
        %v3255 = vld [vmem:[%s412 + $0x69] sm:$0xff]
        %v3256 = vld [vmem:[%s412 + $0x79] sm:$0xff]
        %v3257 = vld [vmem:[%s412 + $0x81] sm:$0xff]
        %v3258 = vld [vmem:[%s412 + $0x91] sm:$0xff]
        %v3259 = vld [vmem:[%s412 + $0x99] sm:$0xff]
        %v3260 = vld [vmem:[%s412 + $0xa9] sm:$0xff]
        %v3261 = vld [vmem:[%s412 + $0xb1] sm:$0xff]
        %v3262 = vld [vmem:[%s412 + $0xc1] sm:$0xff]
        %v3263 = vld [vmem:[%s412 + $0xc9] sm:$0xff]
        %v3264 = vld [vmem:[%s412 + $0xd9] sm:$0xff]
        %v3265 = vld [vmem:[%s412 + $0xe1] sm:$0xff]
        %v3266 = vld [vmem:[%s412 + $0xf1] sm:$0xff]
        %v3267 = vld [vmem:[%s412 + $0xf9] sm:$0xff]
        %v3268 = vld [vmem:[%s412 + $0x109] sm:$0xff]
        %v3269 = vld [vmem:[%s412 + $0x111] sm:$0xff]
        %v3270 = vld [vmem:[%s412 + $0x121] sm:$0xff]
        %v3271 = vld [vmem:[%s412 + $0x129] sm:$0xff]
        %v3272 = vld [vmem:[%s412 + $0x139] sm:$0xff]
        %v3273 = vld [vmem:[%s412 + $0x141] sm:$0xff]
        %v3274 = vld [vmem:[%s412 + $0x151] sm:$0xff]
        %v3275 = vld [vmem:[%s412 + $0x159] sm:$0xff]
        %v3276 = vld [vmem:[%s412 + $0x169] sm:$0xff]
        %v3277 = vld [vmem:[%s412 + $0x171] sm:$0xff]
        %v3278 = vld [vmem:[%s412 + $0x2] sm:$0xff]
        %v3279 = vld [vmem:[%s412 + $0xa] sm:$0xff]
        %v3280 = vld [vmem:[%s412 + $0x1a] sm:$0xff]
        %v3281 = vld [vmem:[%s412 + $0x22] sm:$0xff]
        %v3282 = vld [vmem:[%s412 + $0x32] sm:$0xff]
        %v3283 = vld [vmem:[%s412 + $0x3a] sm:$0xff]
        %v3284 = vld [vmem:[%s412 + $0x4a] sm:$0xff]
        %v3285 = vld [vmem:[%s412 + $0x52] sm:$0xff]
        %v3286 = vld [vmem:[%s412 + $0x62] sm:$0xff]
        %v3287 = vld [vmem:[%s412 + $0x6a] sm:$0xff]
        %v3288 = vld [vmem:[%s412 + $0x7a] sm:$0xff]
        %v3289 = vld [vmem:[%s412 + $0x82] sm:$0xff]
        %v3290 = vld [vmem:[%s412 + $0x92] sm:$0xff]
        %v3291 = vld [vmem:[%s412 + $0x9a] sm:$0xff]
        %v3292 = vld [vmem:[%s412 + $0xaa] sm:$0xff]
        %v3293 = vld [vmem:[%s412 + $0xb2] sm:$0xff]
        %v3294 = vld [vmem:[%s412 + $0xc2] sm:$0xff]
        %v3295 = vld [vmem:[%s412 + $0xca] sm:$0xff]
        %v3296 = vld [vmem:[%s412 + $0xda] sm:$0xff]
        %v3297 = vld [vmem:[%s412 + $0xe2] sm:$0xff]
        %v3298 = vld [vmem:[%s412 + $0xf2] sm:$0xff]
        %v3299 = vld [vmem:[%s412 + $0xfa] sm:$0xff]
        %v3300 = vld [vmem:[%s412 + $0x10a] sm:$0xff]
        %v3301 = vld [vmem:[%s412 + $0x112] sm:$0xff]
        %v3302 = vld [vmem:[%s412 + $0x122] sm:$0xff]
        %v3303 = vld [vmem:[%s412 + $0x12a] sm:$0xff]
        %v3304 = vld [vmem:[%s412 + $0x13a] sm:$0xff]
        %v3305 = vld [vmem:[%s412 + $0x142] sm:$0xff]
        %v3306 = vld [vmem:[%s412 + $0x152] sm:$0xff]
        %v3307 = vld [vmem:[%s412 + $0x15a] sm:$0xff]
        %v3308 = vld [vmem:[%s412 + $0x16a] sm:$0xff]
        %v3309 = vld [vmem:[%s412 + $0x172] sm:$0xff]
        %s3310 = scalar_lea.vmem %s3, 384
        %v3311 = vld [vmem:[%s3310] sm:$0xff]
        %v3312 = vld [vmem:[%s3310 + $0x8] sm:$0xff]
        %v3313 = vld [vmem:[%s3310 + $0x10] sm:$0xff]
        %v3314 = vld [vmem:[%s3310 + $0x18] sm:$0xff]
        %v3315 = vld [vmem:[%s3310 + $0x20] sm:$0xff]
        %v3316 = vld [vmem:[%s3310 + $0x28] sm:$0xff]
        %v3317 = vld [vmem:[%s3310 + $0x30] sm:$0xff]
        %v3318 = vld [vmem:[%s3310 + $0x38] sm:$0xff]
        %v3319 = vld [vmem:[%s3310 + $0x40] sm:$0xff]
        %v3320 = vld [vmem:[%s3310 + $0x48] sm:$0xff]
        %v3321 = vld [vmem:[%s3310 + $0x50] sm:$0xff]
        %v3322 = vld [vmem:[%s3310 + $0x58] sm:$0xff]
        %v3323 = vld [vmem:[%s3310 + $0x60] sm:$0xff]
        %v3324 = vld [vmem:[%s3310 + $0x68] sm:$0xff]
        %v3325 = vld [vmem:[%s3310 + $0x70] sm:$0xff]
        %v3326 = vld [vmem:[%s3310 + $0x78] sm:$0xff]
        %v3327 = vld [vmem:[%s3310 + $0x80] sm:$0xff]
        %v3328 = vld [vmem:[%s3310 + $0x88] sm:$0xff]
        %v3329 = vld [vmem:[%s3310 + $0x90] sm:$0xff]
        %v3330 = vld [vmem:[%s3310 + $0x98] sm:$0xff]
        %v3331 = vld [vmem:[%s3310 + $0xa0] sm:$0xff]
        %v3332 = vld [vmem:[%s3310 + $0xa8] sm:$0xff]
        %v3333 = vld [vmem:[%s3310 + $0xb0] sm:$0xff]
        %v3334 = vld [vmem:[%s3310 + $0xb8] sm:$0xff]
        %v3335 = vld [vmem:[%s3310 + $0xc0] sm:$0xff]
        %v3336 = vld [vmem:[%s3310 + $0xc8] sm:$0xff]
        %v3337 = vld [vmem:[%s3310 + $0xd0] sm:$0xff]
        %v3338 = vld [vmem:[%s3310 + $0xd8] sm:$0xff]
        %v3339 = vld [vmem:[%s3310 + $0xe0] sm:$0xff]
        %v3340 = vld [vmem:[%s3310 + $0xe8] sm:$0xff]
        %v3341 = vld [vmem:[%s3310 + $0xf0] sm:$0xff]
        %v3342 = vld [vmem:[%s3310 + $0xf8] sm:$0xff]
        %v3343 = vld [vmem:[%s3310 + $0x100] sm:$0xff]
        %v3344 = vld [vmem:[%s3310 + $0x108] sm:$0xff]
        %v3345 = vld [vmem:[%s3310 + $0x110] sm:$0xff]
        %v3346 = vld [vmem:[%s3310 + $0x118] sm:$0xff]
        %v3347 = vld [vmem:[%s3310 + $0x120] sm:$0xff]
        %v3348 = vld [vmem:[%s3310 + $0x128] sm:$0xff]
        %v3349 = vld [vmem:[%s3310 + $0x130] sm:$0xff]
        %v3350 = vld [vmem:[%s3310 + $0x138] sm:$0xff]
        %v3351 = vld [vmem:[%s3310 + $0x140] sm:$0xff]
        %v3352 = vld [vmem:[%s3310 + $0x148] sm:$0xff]
        %v3353 = vld [vmem:[%s3310 + $0x150] sm:$0xff]
        %v3354 = vld [vmem:[%s3310 + $0x158] sm:$0xff]
        %v3355 = vld [vmem:[%s3310 + $0x160] sm:$0xff]
        %v3356 = vld [vmem:[%s3310 + $0x168] sm:$0xff]
        %v3357 = vld [vmem:[%s3310 + $0x170] sm:$0xff]
        %v3358 = vld [vmem:[%s3310 + $0x178] sm:$0xff]
        %3359 = vmatprep.subr.mxu0 0.0
        %3360 = vmatpush1.msra.mxu0 %v3326
        %3361 = vmatprep.subr.mxu0 0.0
        %3362 = vmatpush1.msra.mxu0 %v3325
        %3363 = vmatprep.subr.mxu0 0.0
        %3364 = vmatpush1.msra.mxu0 %v3324
        %3365 = vmatprep.subr.mxu0 0.0
        %3366 = vmatpush1.msra.mxu0 %v3323
        %3367 = vmatprep.subr.mxu0 0.0
        %3368 = vmatpush1.msra.mxu0 %v3322
        %3369 = vmatprep.subr.mxu0 0.0
        %3370 = vmatpush1.msra.mxu0 %v3321
        %3371 = vmatprep.subr.mxu0 0.0
        %3372 = vmatpush1.msra.mxu0 %v3320
        %3373 = vmatprep.subr.mxu0 0.0
        %3374 = vmatpush1.msra.mxu0 %v3319
        %3375 = vmatprep.subr.mxu0 0.0
        %3376 = vmatpush1.msra.mxu0 %v3318
        %3377 = vmatprep.subr.mxu0 0.0
        %3378 = vmatpush1.msra.mxu0 %v3317
        %3379 = vmatprep.subr.mxu0 0.0
        %3380 = vmatpush1.msra.mxu0 %v3316
        %3381 = vmatprep.subr.mxu0 0.0
        %3382 = vmatpush1.msra.mxu0 %v3315
        %3383 = vmatprep.subr.mxu0 0.0
        %3384 = vmatpush1.msra.mxu0 %v3314
        %3385 = vmatprep.subr.mxu0 0.0
        %3386 = vmatpush1.msra.mxu0 %v3313
        %3387 = vmatprep.subr.mxu0 0.0
        %3388 = vmatpush1.msra.mxu0 %v3312
        %3389 = vmatprep.subr.mxu0 0.0
        %3390 = vmatpush1.msra.mxu0 %v3311
        %3391 = vmatprep.subr.mxu0 0.0
        %3392 = vmatpush2.msra.mxu0 %v3342
        %3393 = vmatprep.subr.mxu0 0.0
        %3394 = vmatpush2.msra.mxu0 %v3341
        %3395 = vmatprep.subr.mxu0 0.0
        %3396 = vmatpush2.msra.mxu0 %v3340
        %3397 = vmatprep.subr.mxu0 0.0
        %3398 = vmatpush2.msra.mxu0 %v3339
        %3399 = vmatprep.subr.mxu0 0.0
        %3400 = vmatpush2.msra.mxu0 %v3338
        %3401 = vmatprep.subr.mxu0 0.0
        %3402 = vmatpush2.msra.mxu0 %v3337
        %3403 = vmatprep.subr.mxu0 0.0
        %3404 = vmatpush2.msra.mxu0 %v3336
        %3405 = vmatprep.subr.mxu0 0.0
        %3406 = vmatpush2.msra.mxu0 %v3335
        %3407 = vmatprep.subr.mxu0 0.0
        %3408 = vmatpush2.msra.mxu0 %v3334
        %3409 = vmatprep.subr.mxu0 0.0
        %3410 = vmatpush2.msra.mxu0 %v3333
        %3411 = vmatprep.subr.mxu0 0.0
        %3412 = vmatpush2.msra.mxu0 %v3332
        %3413 = vmatprep.subr.mxu0 0.0
        %3414 = vmatpush2.msra.mxu0 %v3331
        %3415 = vmatprep.subr.mxu0 0.0
        %3416 = vmatpush2.msra.mxu0 %v3330
        %3417 = vmatprep.subr.mxu0 0.0
        %3418 = vmatpush2.msra.mxu0 %v3329
        %3419 = vmatprep.subr.mxu0 0.0
        %3420 = vmatpush2.msra.mxu0 %v3328
        %3421 = vmatprep.subr.mxu0 0.0
        %3422 = vmatpush2.msra.mxu0 %v3327
        %3423 = vmatprep.mubr.f32.mxu0 %v3246
        %3424 = vmatmul.mubr.f32.gmra.mxu0 %v3214
        %v3425 = vpop.f32.mrf.mxu0
        %v3426 = vadd.f32 0.0, %v3425
        %v3427 = vpop.f32.mrf.mxu0
        %3428 = vmatprep.mubr.f32.mxu0 %v3247
        %3429 = vmatmul.mubr.f32.gmra.mxu0 %v3215
        %v3430 = vpop.f32.mrf.mxu0
        %v3431 = vadd.f32 0.0, %v3430
        %v3432 = vpop.f32.mrf.mxu0
        %3433 = vmatprep.mubr.f32.mxu0 %v3248
        %3434 = vmatmul.mubr.f32.gmra.mxu0 %v3216
        %v3435 = vpop.f32.mrf.mxu0
        %v3436 = vadd.f32 0.0, %v3435
        %v3437 = vpop.f32.mrf.mxu0
        %3438 = vmatprep.mubr.f32.mxu0 %v3249
        %3439 = vmatmul.mubr.f32.gmra.mxu0 %v3217
        %v3440 = vpop.f32.mrf.mxu0
        %v3441 = vadd.f32 0.0, %v3440
        %v3442 = vpop.f32.mrf.mxu0
        %3443 = vmatprep.mubr.f32.mxu0 %v3250
        %3444 = vmatmul.mubr.f32.gmra.mxu0 %v3218
        %v3445 = vpop.f32.mrf.mxu0
        %v3446 = vadd.f32 0.0, %v3445
        %v3447 = vpop.f32.mrf.mxu0
        %3448 = vmatprep.mubr.f32.mxu0 %v3251
        %3449 = vmatmul.mubr.f32.gmra.mxu0 %v3219
        %v3450 = vpop.f32.mrf.mxu0
        %v3451 = vadd.f32 0.0, %v3450
        %v3452 = vpop.f32.mrf.mxu0
        %3453 = vmatprep.mubr.f32.mxu0 %v3252
        %3454 = vmatmul.mubr.f32.gmra.mxu0 %v3220
        %v3455 = vpop.f32.mrf.mxu0
        %v3456 = vadd.f32 0.0, %v3455
        %v3457 = vpop.f32.mrf.mxu0
        %3458 = vmatprep.mubr.f32.mxu0 %v3253
        %3459 = vmatmul.mubr.f32.gmra.mxu0 %v3221
        %v3460 = vpop.f32.mrf.mxu0
        %v3461 = vadd.f32 0.0, %v3460
        %v3462 = vpop.f32.mrf.mxu0
        %3463 = vmatprep.mubr.f32.mxu0 %v3254
        %3464 = vmatmul.mubr.f32.gmra.mxu0 %v3222
        %v3465 = vpop.f32.mrf.mxu0
        %v3466 = vadd.f32 0.0, %v3465
        %v3467 = vpop.f32.mrf.mxu0
        %3468 = vmatprep.mubr.f32.mxu0 %v3255
        %3469 = vmatmul.mubr.f32.gmra.mxu0 %v3223
        %v3470 = vpop.f32.mrf.mxu0
        %v3471 = vadd.f32 0.0, %v3470
        %v3472 = vpop.f32.mrf.mxu0
        %3473 = vmatprep.mubr.f32.mxu0 %v3256
        %3474 = vmatmul.mubr.f32.gmra.mxu0 %v3224
        %v3475 = vpop.f32.mrf.mxu0
        %v3476 = vadd.f32 0.0, %v3475
        %v3477 = vpop.f32.mrf.mxu0
        %3478 = vmatprep.mubr.f32.mxu0 %v3257
        %3479 = vmatmul.mubr.f32.gmra.mxu0 %v3225
        %v3480 = vpop.f32.mrf.mxu0
        %v3481 = vadd.f32 0.0, %v3480
        %v3482 = vpop.f32.mrf.mxu0
        %3483 = vmatprep.mubr.f32.mxu0 %v3258
        %3484 = vmatmul.mubr.f32.gmra.mxu0 %v3226
        %v3485 = vpop.f32.mrf.mxu0
        %v3486 = vadd.f32 0.0, %v3485
        %v3487 = vpop.f32.mrf.mxu0
        %3488 = vmatprep.mubr.f32.mxu0 %v3259
        %3489 = vmatmul.mubr.f32.gmra.mxu0 %v3227
        %v3490 = vpop.f32.mrf.mxu0
        %v3491 = vadd.f32 0.0, %v3490
        %v3492 = vpop.f32.mrf.mxu0
        %3493 = vmatprep.mubr.f32.mxu0 %v3260
        %3494 = vmatmul.mubr.f32.gmra.mxu0 %v3228
        %v3495 = vpop.f32.mrf.mxu0
        %v3496 = vadd.f32 0.0, %v3495
        %v3497 = vpop.f32.mrf.mxu0
        %3498 = vmatprep.mubr.f32.mxu0 %v3261
        %3499 = vmatmul.mubr.f32.gmra.mxu0 %v3229
        %v3500 = vpop.f32.mrf.mxu0
        %v3501 = vadd.f32 0.0, %v3500
        %v3502 = vpop.f32.mrf.mxu0
        %3503 = vmatprep.mubr.f32.mxu0 %v3262
        %3504 = vmatmul.mubr.f32.gmra.mxu0 %v3230
        %v3505 = vpop.f32.mrf.mxu0
        %v3506 = vadd.f32 0.0, %v3505
        %v3507 = vpop.f32.mrf.mxu0
        %3508 = vmatprep.mubr.f32.mxu0 %v3263
        %3509 = vmatmul.mubr.f32.gmra.mxu0 %v3231
        %v3510 = vpop.f32.mrf.mxu0
        %v3511 = vadd.f32 0.0, %v3510
        %v3512 = vpop.f32.mrf.mxu0
        %3513 = vmatprep.mubr.f32.mxu0 %v3264
        %3514 = vmatmul.mubr.f32.gmra.mxu0 %v3232
        %v3515 = vpop.f32.mrf.mxu0
        %v3516 = vadd.f32 0.0, %v3515
        %v3517 = vpop.f32.mrf.mxu0
        %3518 = vmatprep.mubr.f32.mxu0 %v3265
        %3519 = vmatmul.mubr.f32.gmra.mxu0 %v3233
        %v3520 = vpop.f32.mrf.mxu0
        %v3521 = vadd.f32 0.0, %v3520
        %v3522 = vpop.f32.mrf.mxu0
        %3523 = vmatprep.mubr.f32.mxu0 %v3266
        %3524 = vmatmul.mubr.f32.gmra.mxu0 %v3234
        %v3525 = vpop.f32.mrf.mxu0
        %v3526 = vadd.f32 0.0, %v3525
        %v3527 = vpop.f32.mrf.mxu0
        %3528 = vmatprep.mubr.f32.mxu0 %v3267
        %3529 = vmatmul.mubr.f32.gmra.mxu0 %v3235
        %v3530 = vpop.f32.mrf.mxu0
        %v3531 = vadd.f32 0.0, %v3530
        %v3532 = vpop.f32.mrf.mxu0
        %3533 = vmatprep.mubr.f32.mxu0 %v3268
        %3534 = vmatmul.mubr.f32.gmra.mxu0 %v3236
        %v3535 = vpop.f32.mrf.mxu0
        %v3536 = vadd.f32 0.0, %v3535
        %v3537 = vpop.f32.mrf.mxu0
        %3538 = vmatprep.mubr.f32.mxu0 %v3269
        %3539 = vmatmul.mubr.f32.gmra.mxu0 %v3237
        %v3540 = vpop.f32.mrf.mxu0
        %v3541 = vadd.f32 0.0, %v3540
        %v3542 = vpop.f32.mrf.mxu0
        %3543 = vmatprep.mubr.f32.mxu0 %v3270
        %3544 = vmatmul.mubr.f32.gmra.mxu0 %v3238
        %v3545 = vpop.f32.mrf.mxu0
        %v3546 = vadd.f32 0.0, %v3545
        %v3547 = vpop.f32.mrf.mxu0
        %3548 = vmatprep.mubr.f32.mxu0 %v3271
        %3549 = vmatmul.mubr.f32.gmra.mxu0 %v3239
        %v3550 = vpop.f32.mrf.mxu0
        %v3551 = vadd.f32 0.0, %v3550
        %v3552 = vpop.f32.mrf.mxu0
        %3553 = vmatprep.mubr.f32.mxu0 %v3272
        %3554 = vmatmul.mubr.f32.gmra.mxu0 %v3240
        %v3555 = vpop.f32.mrf.mxu0
        %v3556 = vadd.f32 0.0, %v3555
        %v3557 = vpop.f32.mrf.mxu0
        %3558 = vmatprep.mubr.f32.mxu0 %v3273
        %3559 = vmatmul.mubr.f32.gmra.mxu0 %v3241
        %v3560 = vpop.f32.mrf.mxu0
        %v3561 = vadd.f32 0.0, %v3560
        %v3562 = vpop.f32.mrf.mxu0
        %3563 = vmatprep.mubr.f32.mxu0 %v3274
        %3564 = vmatmul.mubr.f32.gmra.mxu0 %v3242
        %v3565 = vpop.f32.mrf.mxu0
        %v3566 = vadd.f32 0.0, %v3565
        %v3567 = vpop.f32.mrf.mxu0
        %3568 = vmatprep.mubr.f32.mxu0 %v3275
        %3569 = vmatmul.mubr.f32.gmra.mxu0 %v3243
        %v3570 = vpop.f32.mrf.mxu0
        %v3571 = vadd.f32 0.0, %v3570
        %v3572 = vpop.f32.mrf.mxu0
        %3573 = vmatprep.mubr.f32.mxu0 %v3276
        %3574 = vmatmul.mubr.f32.gmra.mxu0 %v3244
        %v3575 = vpop.f32.mrf.mxu0
        %v3576 = vadd.f32 0.0, %v3575
        %v3577 = vpop.f32.mrf.mxu0
        %3578 = vmatprep.mubr.f32.mxu0 %v3277
        %3579 = vmatmul.mubr.f32.gmra.mxu0 %v3245
        %v3580 = vpop.f32.mrf.mxu0
        %v3581 = vadd.f32 0.0, %v3580
        %v3582 = vpop.f32.mrf.mxu0
        %3583 = vdwg.mxu0
        %3584 = vmatprep.subr.mxu0 0.0
        %3585 = vmatpush1.msra.mxu0 %v3358
        %3586 = vmatprep.subr.mxu0 0.0
        %3587 = vmatpush1.msra.mxu0 %v3357
        %3588 = vmatprep.subr.mxu0 0.0
        %3589 = vmatpush1.msra.mxu0 %v3356
        %3590 = vmatprep.subr.mxu0 0.0
        %3591 = vmatpush1.msra.mxu0 %v3355
        %3592 = vmatprep.subr.mxu0 0.0
        %3593 = vmatpush1.msra.mxu0 %v3354
        %3594 = vmatprep.subr.mxu0 0.0
        %3595 = vmatpush1.msra.mxu0 %v3353
        %3596 = vmatprep.subr.mxu0 0.0
        %3597 = vmatpush1.msra.mxu0 %v3352
        %3598 = vmatprep.subr.mxu0 0.0
        %3599 = vmatpush1.msra.mxu0 %v3351
        %3600 = vmatprep.subr.mxu0 0.0
        %3601 = vmatpush1.msra.mxu0 %v3350
        %3602 = vmatprep.subr.mxu0 0.0
        %3603 = vmatpush1.msra.mxu0 %v3349
        %3604 = vmatprep.subr.mxu0 0.0
        %3605 = vmatpush1.msra.mxu0 %v3348
        %3606 = vmatprep.subr.mxu0 0.0
        %3607 = vmatpush1.msra.mxu0 %v3347
        %3608 = vmatprep.subr.mxu0 0.0
        %3609 = vmatpush1.msra.mxu0 %v3346
        %3610 = vmatprep.subr.mxu0 0.0
        %3611 = vmatpush1.msra.mxu0 %v3345
        %3612 = vmatprep.subr.mxu0 0.0
        %3613 = vmatpush1.msra.mxu0 %v3344
        %3614 = vmatprep.subr.mxu0 0.0
        %3615 = vmatpush1.msra.mxu0 %v3343
        %3616 = vmatprep.subr.mxu0 0.0
        %3617 = vmatpush2.msra.mxu0 0.0
        %3618 = vmatprep.subr.mxu0 0.0
        %3619 = vmatpush2.msra.mxu0 0.0
        %3620 = vmatprep.subr.mxu0 0.0
        %3621 = vmatpush2.msra.mxu0 0.0
        %3622 = vmatprep.subr.mxu0 0.0
        %3623 = vmatpush2.msra.mxu0 0.0
        %3624 = vmatprep.subr.mxu0 0.0
        %3625 = vmatpush2.msra.mxu0 0.0
        %3626 = vmatprep.subr.mxu0 0.0
        %3627 = vmatpush2.msra.mxu0 0.0
        %3628 = vmatprep.subr.mxu0 0.0
        %3629 = vmatpush2.msra.mxu0 0.0
        %3630 = vmatprep.subr.mxu0 0.0
        %3631 = vmatpush2.msra.mxu0 0.0
        %3632 = vmatprep.subr.mxu0 0.0
        %3633 = vmatpush2.msra.mxu0 0.0
        %3634 = vmatprep.subr.mxu0 0.0
        %3635 = vmatpush2.msra.mxu0 0.0
        %3636 = vmatprep.subr.mxu0 0.0
        %3637 = vmatpush2.msra.mxu0 0.0
        %3638 = vmatprep.subr.mxu0 0.0
        %3639 = vmatpush2.msra.mxu0 0.0
        %3640 = vmatprep.subr.mxu0 0.0
        %3641 = vmatpush2.msra.mxu0 0.0
        %3642 = vmatprep.subr.mxu0 0.0
        %3643 = vmatpush2.msra.mxu0 0.0
        %3644 = vmatprep.subr.mxu0 0.0
        %3645 = vmatpush2.msra.mxu0 0.0
        %3646 = vmatprep.subr.mxu0 0.0
        %3647 = vmatpush2.msra.mxu0 0.0
        %3648 = vmatprep.mubr.f32.mxu0 0.0
        %3649 = vmatmul.mubr.f32.gmra.mxu0 %v3278
        %v3650 = vpop.f32.mrf.mxu0
        %v3651 = vadd.f32 %v3426, %v3650
        %v3652 = vpop.f32.mrf.mxu0
        %3653 = vmatprep.mubr.f32.mxu0 0.0
        %3654 = vmatmul.mubr.f32.gmra.mxu0 %v3279
        %v3655 = vpop.f32.mrf.mxu0
        %v3656 = vadd.f32 %v3431, %v3655
        %v3657 = vpop.f32.mrf.mxu0
        %3658 = vmatprep.mubr.f32.mxu0 0.0
        %3659 = vmatmul.mubr.f32.gmra.mxu0 %v3280
        %v3660 = vpop.f32.mrf.mxu0
        %v3661 = vadd.f32 %v3436, %v3660
        %v3662 = vpop.f32.mrf.mxu0
        %3663 = vmatprep.mubr.f32.mxu0 0.0
        %3664 = vmatmul.mubr.f32.gmra.mxu0 %v3281
        %v3665 = vpop.f32.mrf.mxu0
        %v3666 = vadd.f32 %v3441, %v3665
        %v3667 = vpop.f32.mrf.mxu0
        %3668 = vmatprep.mubr.f32.mxu0 0.0
        %3669 = vmatmul.mubr.f32.gmra.mxu0 %v3282
        %v3670 = vpop.f32.mrf.mxu0
        %v3671 = vadd.f32 %v3446, %v3670
        %v3672 = vpop.f32.mrf.mxu0
        %3673 = vmatprep.mubr.f32.mxu0 0.0
        %3674 = vmatmul.mubr.f32.gmra.mxu0 %v3283
        %v3675 = vpop.f32.mrf.mxu0
        %v3676 = vadd.f32 %v3451, %v3675
        %v3677 = vpop.f32.mrf.mxu0
        %3678 = vmatprep.mubr.f32.mxu0 0.0
        %3679 = vmatmul.mubr.f32.gmra.mxu0 %v3284
        %v3680 = vpop.f32.mrf.mxu0
        %v3681 = vadd.f32 %v3456, %v3680
        %v3682 = vpop.f32.mrf.mxu0
        %3683 = vmatprep.mubr.f32.mxu0 0.0
        %3684 = vmatmul.mubr.f32.gmra.mxu0 %v3285
        %v3685 = vpop.f32.mrf.mxu0
        %v3686 = vadd.f32 %v3461, %v3685
        %v3687 = vpop.f32.mrf.mxu0
        %3688 = vmatprep.mubr.f32.mxu0 0.0
        %3689 = vmatmul.mubr.f32.gmra.mxu0 %v3286
        %v3690 = vpop.f32.mrf.mxu0
        %v3691 = vadd.f32 %v3466, %v3690
        %v3692 = vpop.f32.mrf.mxu0
        %3693 = vmatprep.mubr.f32.mxu0 0.0
        %3694 = vmatmul.mubr.f32.gmra.mxu0 %v3287
        %v3695 = vpop.f32.mrf.mxu0
        %v3696 = vadd.f32 %v3471, %v3695
        %v3697 = vpop.f32.mrf.mxu0
        %3698 = vmatprep.mubr.f32.mxu0 0.0
        %3699 = vmatmul.mubr.f32.gmra.mxu0 %v3288
        %v3700 = vpop.f32.mrf.mxu0
        %v3701 = vadd.f32 %v3476, %v3700
        %v3702 = vpop.f32.mrf.mxu0
        %3703 = vmatprep.mubr.f32.mxu0 0.0
        %3704 = vmatmul.mubr.f32.gmra.mxu0 %v3289
        %v3705 = vpop.f32.mrf.mxu0
        %v3706 = vadd.f32 %v3481, %v3705
        %v3707 = vpop.f32.mrf.mxu0
        %3708 = vmatprep.mubr.f32.mxu0 0.0
        %3709 = vmatmul.mubr.f32.gmra.mxu0 %v3290
        %v3710 = vpop.f32.mrf.mxu0
        %v3711 = vadd.f32 %v3486, %v3710
        %v3712 = vpop.f32.mrf.mxu0
        %3713 = vmatprep.mubr.f32.mxu0 0.0
        %3714 = vmatmul.mubr.f32.gmra.mxu0 %v3291
        %v3715 = vpop.f32.mrf.mxu0
        %v3716 = vadd.f32 %v3491, %v3715
        %v3717 = vpop.f32.mrf.mxu0
        %3718 = vmatprep.mubr.f32.mxu0 0.0
        %3719 = vmatmul.mubr.f32.gmra.mxu0 %v3292
        %v3720 = vpop.f32.mrf.mxu0
        %v3721 = vadd.f32 %v3496, %v3720
        %v3722 = vpop.f32.mrf.mxu0
        %3723 = vmatprep.mubr.f32.mxu0 0.0
        %3724 = vmatmul.mubr.f32.gmra.mxu0 %v3293
        %v3725 = vpop.f32.mrf.mxu0
        %v3726 = vadd.f32 %v3501, %v3725
        %v3727 = vpop.f32.mrf.mxu0
        %3728 = vmatprep.mubr.f32.mxu0 0.0
        %3729 = vmatmul.mubr.f32.gmra.mxu0 %v3294
        %v3730 = vpop.f32.mrf.mxu0
        %v3731 = vadd.f32 %v3506, %v3730
        %v3732 = vpop.f32.mrf.mxu0
        %3733 = vmatprep.mubr.f32.mxu0 0.0
        %3734 = vmatmul.mubr.f32.gmra.mxu0 %v3295
        %v3735 = vpop.f32.mrf.mxu0
        %v3736 = vadd.f32 %v3511, %v3735
        %v3737 = vpop.f32.mrf.mxu0
        %3738 = vmatprep.mubr.f32.mxu0 0.0
        %3739 = vmatmul.mubr.f32.gmra.mxu0 %v3296
        %v3740 = vpop.f32.mrf.mxu0
        %v3741 = vadd.f32 %v3516, %v3740
        %v3742 = vpop.f32.mrf.mxu0
        %3743 = vmatprep.mubr.f32.mxu0 0.0
        %3744 = vmatmul.mubr.f32.gmra.mxu0 %v3297
        %v3745 = vpop.f32.mrf.mxu0
        %v3746 = vadd.f32 %v3521, %v3745
        %v3747 = vpop.f32.mrf.mxu0
        %3748 = vmatprep.mubr.f32.mxu0 0.0
        %3749 = vmatmul.mubr.f32.gmra.mxu0 %v3298
        %v3750 = vpop.f32.mrf.mxu0
        %v3751 = vadd.f32 %v3526, %v3750
        %v3752 = vpop.f32.mrf.mxu0
        %3753 = vmatprep.mubr.f32.mxu0 0.0
        %3754 = vmatmul.mubr.f32.gmra.mxu0 %v3299
        %v3755 = vpop.f32.mrf.mxu0
        %v3756 = vadd.f32 %v3531, %v3755
        %v3757 = vpop.f32.mrf.mxu0
        %3758 = vmatprep.mubr.f32.mxu0 0.0
        %3759 = vmatmul.mubr.f32.gmra.mxu0 %v3300
        %v3760 = vpop.f32.mrf.mxu0
        %v3761 = vadd.f32 %v3536, %v3760
        %v3762 = vpop.f32.mrf.mxu0
        %3763 = vmatprep.mubr.f32.mxu0 0.0
        %3764 = vmatmul.mubr.f32.gmra.mxu0 %v3301
        %v3765 = vpop.f32.mrf.mxu0
        %v3766 = vadd.f32 %v3541, %v3765
        %v3767 = vpop.f32.mrf.mxu0
        %3768 = vmatprep.mubr.f32.mxu0 0.0
        %3769 = vmatmul.mubr.f32.gmra.mxu0 %v3302
        %v3770 = vpop.f32.mrf.mxu0
        %v3771 = vadd.f32 %v3546, %v3770
        %v3772 = vpop.f32.mrf.mxu0
        %3773 = vmatprep.mubr.f32.mxu0 0.0
        %3774 = vmatmul.mubr.f32.gmra.mxu0 %v3303
        %v3775 = vpop.f32.mrf.mxu0
        %v3776 = vadd.f32 %v3551, %v3775
        %v3777 = vpop.f32.mrf.mxu0
        %3778 = vmatprep.mubr.f32.mxu0 0.0
        %3779 = vmatmul.mubr.f32.gmra.mxu0 %v3304
        %v3780 = vpop.f32.mrf.mxu0
        %v3781 = vadd.f32 %v3556, %v3780
        %v3782 = vpop.f32.mrf.mxu0
        %3783 = vmatprep.mubr.f32.mxu0 0.0
        %3784 = vmatmul.mubr.f32.gmra.mxu0 %v3305
        %v3785 = vpop.f32.mrf.mxu0
        %v3786 = vadd.f32 %v3561, %v3785
        %v3787 = vpop.f32.mrf.mxu0
        %3788 = vmatprep.mubr.f32.mxu0 0.0
        %3789 = vmatmul.mubr.f32.gmra.mxu0 %v3306
        %v3790 = vpop.f32.mrf.mxu0
        %v3791 = vadd.f32 %v3566, %v3790
        %v3792 = vpop.f32.mrf.mxu0
        %3793 = vmatprep.mubr.f32.mxu0 0.0
        %3794 = vmatmul.mubr.f32.gmra.mxu0 %v3307
        %v3795 = vpop.f32.mrf.mxu0
        %v3796 = vadd.f32 %v3571, %v3795
        %v3797 = vpop.f32.mrf.mxu0
        %3798 = vmatprep.mubr.f32.mxu0 0.0
        %3799 = vmatmul.mubr.f32.gmra.mxu0 %v3308
        %v3800 = vpop.f32.mrf.mxu0
        %v3801 = vadd.f32 %v3576, %v3800
        %v3802 = vpop.f32.mrf.mxu0
        %3803 = vmatprep.mubr.f32.mxu0 0.0
        %3804 = vmatmul.mubr.f32.gmra.mxu0 %v3309
        %v3805 = vpop.f32.mrf.mxu0
        %v3806 = vadd.f32 %v3581, %v3805
        %v3807 = vpop.f32.mrf.mxu0
        %3808 = vdwg.mxu0
        %v3809 = vld [vmem:[#allocation5] sm:$0xff]
        %v3810 = vld [vmem:[#allocation5 + $0x8] sm:$0xff]
        %v3811 = vld [vmem:[#allocation5 + $0x10] sm:$0xff]
        %v3812 = vld [vmem:[#allocation5 + $0x18] sm:$0xff]
        %v3813 = vld [vmem:[#allocation5 + $0x20] sm:$0xff]
        %v3814 = vld [vmem:[#allocation5 + $0x28] sm:$0xff]
        %v3815 = vld [vmem:[#allocation5 + $0x30] sm:$0xff]
        %v3816 = vld [vmem:[#allocation5 + $0x38] sm:$0xff]
        %v3817 = vld [vmem:[#allocation5 + $0x40] sm:$0xff]
        %v3818 = vld [vmem:[#allocation5 + $0x48] sm:$0xff]
        %v3819 = vld [vmem:[#allocation5 + $0x50] sm:$0xff]
        %v3820 = vld [vmem:[#allocation5 + $0x58] sm:$0xff]
        %v3821 = vld [vmem:[#allocation5 + $0x60] sm:$0xff]
        %v3822 = vld [vmem:[#allocation5 + $0x68] sm:$0xff]
        %v3823 = vld [vmem:[#allocation5 + $0x70] sm:$0xff]
        %v3824 = vld [vmem:[#allocation5 + $0x78] sm:$0xff]
        %v3825 = vld [vmem:[#allocation5 + $0x80] sm:$0xff]
        %v3826 = vld [vmem:[#allocation5 + $0x88] sm:$0xff]
        %v3827 = vld [vmem:[#allocation5 + $0x90] sm:$0xff]
        %v3828 = vld [vmem:[#allocation5 + $0x98] sm:$0xff]
        %v3829 = vld [vmem:[#allocation5 + $0xa0] sm:$0xff]
        %v3830 = vld [vmem:[#allocation5 + $0xa8] sm:$0xff]
        %v3831 = vld [vmem:[#allocation5 + $0xb0] sm:$0xff]
        %v3832 = vld [vmem:[#allocation5 + $0xb8] sm:$0xff]
        %v3833 = vld [vmem:[#allocation5 + $0xc0] sm:$0xff]
        %v3834 = vld [vmem:[#allocation5 + $0xc8] sm:$0xff]
        %v3835 = vld [vmem:[#allocation5 + $0xd0] sm:$0xff]
        %v3836 = vld [vmem:[#allocation5 + $0xd8] sm:$0xff]
        %v3837 = vld [vmem:[#allocation5 + $0xe0] sm:$0xff]
        %v3838 = vld [vmem:[#allocation5 + $0xe8] sm:$0xff]
        %v3839 = vld [vmem:[#allocation5 + $0xf0] sm:$0xff]
        %v3840 = vld [vmem:[#allocation5 + $0xf8] sm:$0xff]
        %v3841 = vadd.f32 %v3809, %v3651
        %v3842 = vadd.f32 %v3810, %v3656
        %v3843 = vadd.f32 %v3811, %v3661
        %v3844 = vadd.f32 %v3812, %v3666
        %v3845 = vadd.f32 %v3813, %v3671
        %v3846 = vadd.f32 %v3814, %v3676
        %v3847 = vadd.f32 %v3815, %v3681
        %v3848 = vadd.f32 %v3816, %v3686
        %v3849 = vadd.f32 %v3817, %v3691
        %v3850 = vadd.f32 %v3818, %v3696
        %v3851 = vadd.f32 %v3819, %v3701
        %v3852 = vadd.f32 %v3820, %v3706
        %v3853 = vadd.f32 %v3821, %v3711
        %v3854 = vadd.f32 %v3822, %v3716
        %v3855 = vadd.f32 %v3823, %v3721
        %v3856 = vadd.f32 %v3824, %v3726
        %v3857 = vadd.f32 %v3825, %v3731
        %v3858 = vadd.f32 %v3826, %v3736
        %v3859 = vadd.f32 %v3827, %v3741
        %v3860 = vadd.f32 %v3828, %v3746
        %v3861 = vadd.f32 %v3829, %v3751
        %v3862 = vadd.f32 %v3830, %v3756
        %v3863 = vadd.f32 %v3831, %v3761
        %v3864 = vadd.f32 %v3832, %v3766
        %v3865 = vadd.f32 %v3833, %v3771
        %v3866 = vadd.f32 %v3834, %v3776
        %v3867 = vadd.f32 %v3835, %v3781
        %v3868 = vadd.f32 %v3836, %v3786
        %v3869 = vadd.f32 %v3837, %v3791
        %v3870 = vadd.f32 %v3838, %v3796
        %v3871 = vadd.f32 %v3839, %v3801
        %v3872 = vadd.f32 %v3840, %v3806
        %3873 = vst [vmem:[#allocation5] sm:$0xff] %v3841
        %3874 = vst [vmem:[#allocation5 + $0x8] sm:$0xff] %v3842
        %3875 = vst [vmem:[#allocation5 + $0x10] sm:$0xff] %v3843
        %3876 = vst [vmem:[#allocation5 + $0x18] sm:$0xff] %v3844
        %3877 = vst [vmem:[#allocation5 + $0x20] sm:$0xff] %v3845
        %3878 = vst [vmem:[#allocation5 + $0x28] sm:$0xff] %v3846
        %3879 = vst [vmem:[#allocation5 + $0x30] sm:$0xff] %v3847
        %3880 = vst [vmem:[#allocation5 + $0x38] sm:$0xff] %v3848
        %3881 = vst [vmem:[#allocation5 + $0x40] sm:$0xff] %v3849
        %3882 = vst [vmem:[#allocation5 + $0x48] sm:$0xff] %v3850
        %3883 = vst [vmem:[#allocation5 + $0x50] sm:$0xff] %v3851
        %3884 = vst [vmem:[#allocation5 + $0x58] sm:$0xff] %v3852
        %3885 = vst [vmem:[#allocation5 + $0x60] sm:$0xff] %v3853
        %3886 = vst [vmem:[#allocation5 + $0x68] sm:$0xff] %v3854
        %3887 = vst [vmem:[#allocation5 + $0x70] sm:$0xff] %v3855
        %3888 = vst [vmem:[#allocation5 + $0x78] sm:$0xff] %v3856
        %3889 = vst [vmem:[#allocation5 + $0x80] sm:$0xff] %v3857
        %3890 = vst [vmem:[#allocation5 + $0x88] sm:$0xff] %v3858
        %3891 = vst [vmem:[#allocation5 + $0x90] sm:$0xff] %v3859
        %3892 = vst [vmem:[#allocation5 + $0x98] sm:$0xff] %v3860
        %3893 = vst [vmem:[#allocation5 + $0xa0] sm:$0xff] %v3861
        %3894 = vst [vmem:[#allocation5 + $0xa8] sm:$0xff] %v3862
        %3895 = vst [vmem:[#allocation5 + $0xb0] sm:$0xff] %v3863
        %3896 = vst [vmem:[#allocation5 + $0xb8] sm:$0xff] %v3864
        %3897 = vst [vmem:[#allocation5 + $0xc0] sm:$0xff] %v3865
        %3898 = vst [vmem:[#allocation5 + $0xc8] sm:$0xff] %v3866
        %3899 = vst [vmem:[#allocation5 + $0xd0] sm:$0xff] %v3867
        %3900 = vst [vmem:[#allocation5 + $0xd8] sm:$0xff] %v3868
        %3901 = vst [vmem:[#allocation5 + $0xe0] sm:$0xff] %v3869
        %3902 = vst [vmem:[#allocation5 + $0xe8] sm:$0xff] %v3870
        %3903 = vst [vmem:[#allocation5 + $0xf0] sm:$0xff] %v3871
        %3904 = vst [vmem:[#allocation5 + $0xf8] sm:$0xff] %v3872
        %v3905 = vld [vmem:[%s1762] sm:$0xff]
        %v3906 = vld [vmem:[%s1762 + $0x8] sm:$0xff]
        %v3907 = vld [vmem:[%s1762 + $0x18] sm:$0xff]
        %v3908 = vld [vmem:[%s1762 + $0x20] sm:$0xff]
        %v3909 = vld [vmem:[%s1762 + $0x30] sm:$0xff]
        %v3910 = vld [vmem:[%s1762 + $0x38] sm:$0xff]
        %v3911 = vld [vmem:[%s1762 + $0x48] sm:$0xff]
        %v3912 = vld [vmem:[%s1762 + $0x50] sm:$0xff]
        %v3913 = vld [vmem:[%s1762 + $0x60] sm:$0xff]
        %v3914 = vld [vmem:[%s1762 + $0x68] sm:$0xff]
        %v3915 = vld [vmem:[%s1762 + $0x78] sm:$0xff]
        %v3916 = vld [vmem:[%s1762 + $0x80] sm:$0xff]
        %v3917 = vld [vmem:[%s1762 + $0x90] sm:$0xff]
        %v3918 = vld [vmem:[%s1762 + $0x98] sm:$0xff]
        %v3919 = vld [vmem:[%s1762 + $0xa8] sm:$0xff]
        %v3920 = vld [vmem:[%s1762 + $0xb0] sm:$0xff]
        %v3921 = vld [vmem:[%s1762 + $0xc0] sm:$0xff]
        %v3922 = vld [vmem:[%s1762 + $0xc8] sm:$0xff]
        %v3923 = vld [vmem:[%s1762 + $0xd8] sm:$0xff]
        %v3924 = vld [vmem:[%s1762 + $0xe0] sm:$0xff]
        %v3925 = vld [vmem:[%s1762 + $0xf0] sm:$0xff]
        %v3926 = vld [vmem:[%s1762 + $0xf8] sm:$0xff]
        %v3927 = vld [vmem:[%s1762 + $0x108] sm:$0xff]
        %v3928 = vld [vmem:[%s1762 + $0x110] sm:$0xff]
        %v3929 = vld [vmem:[%s1762 + $0x120] sm:$0xff]
        %v3930 = vld [vmem:[%s1762 + $0x128] sm:$0xff]
        %v3931 = vld [vmem:[%s1762 + $0x138] sm:$0xff]
        %v3932 = vld [vmem:[%s1762 + $0x140] sm:$0xff]
        %v3933 = vld [vmem:[%s1762 + $0x150] sm:$0xff]
        %v3934 = vld [vmem:[%s1762 + $0x158] sm:$0xff]
        %v3935 = vld [vmem:[%s1762 + $0x168] sm:$0xff]
        %v3936 = vld [vmem:[%s1762 + $0x170] sm:$0xff]
        %v3937 = vld [vmem:[%s1762 + $0x1] sm:$0xff]
        %v3938 = vld [vmem:[%s1762 + $0x9] sm:$0xff]
        %v3939 = vld [vmem:[%s1762 + $0x19] sm:$0xff]
        %v3940 = vld [vmem:[%s1762 + $0x21] sm:$0xff]
        %v3941 = vld [vmem:[%s1762 + $0x31] sm:$0xff]
        %v3942 = vld [vmem:[%s1762 + $0x39] sm:$0xff]
        %v3943 = vld [vmem:[%s1762 + $0x49] sm:$0xff]
        %v3944 = vld [vmem:[%s1762 + $0x51] sm:$0xff]
        %v3945 = vld [vmem:[%s1762 + $0x61] sm:$0xff]
        %v3946 = vld [vmem:[%s1762 + $0x69] sm:$0xff]
        %v3947 = vld [vmem:[%s1762 + $0x79] sm:$0xff]
        %v3948 = vld [vmem:[%s1762 + $0x81] sm:$0xff]
        %v3949 = vld [vmem:[%s1762 + $0x91] sm:$0xff]
        %v3950 = vld [vmem:[%s1762 + $0x99] sm:$0xff]
        %v3951 = vld [vmem:[%s1762 + $0xa9] sm:$0xff]
        %v3952 = vld [vmem:[%s1762 + $0xb1] sm:$0xff]
        %v3953 = vld [vmem:[%s1762 + $0xc1] sm:$0xff]
        %v3954 = vld [vmem:[%s1762 + $0xc9] sm:$0xff]
        %v3955 = vld [vmem:[%s1762 + $0xd9] sm:$0xff]
        %v3956 = vld [vmem:[%s1762 + $0xe1] sm:$0xff]
        %v3957 = vld [vmem:[%s1762 + $0xf1] sm:$0xff]
        %v3958 = vld [vmem:[%s1762 + $0xf9] sm:$0xff]
        %v3959 = vld [vmem:[%s1762 + $0x109] sm:$0xff]
        %v3960 = vld [vmem:[%s1762 + $0x111] sm:$0xff]
        %v3961 = vld [vmem:[%s1762 + $0x121] sm:$0xff]
        %v3962 = vld [vmem:[%s1762 + $0x129] sm:$0xff]
        %v3963 = vld [vmem:[%s1762 + $0x139] sm:$0xff]
        %v3964 = vld [vmem:[%s1762 + $0x141] sm:$0xff]
        %v3965 = vld [vmem:[%s1762 + $0x151] sm:$0xff]
        %v3966 = vld [vmem:[%s1762 + $0x159] sm:$0xff]
        %v3967 = vld [vmem:[%s1762 + $0x169] sm:$0xff]
        %v3968 = vld [vmem:[%s1762 + $0x171] sm:$0xff]
        %v3969 = vld [vmem:[%s1762 + $0x2] sm:$0xff]
        %v3970 = vld [vmem:[%s1762 + $0xa] sm:$0xff]
        %v3971 = vld [vmem:[%s1762 + $0x1a] sm:$0xff]
        %v3972 = vld [vmem:[%s1762 + $0x22] sm:$0xff]
        %v3973 = vld [vmem:[%s1762 + $0x32] sm:$0xff]
        %v3974 = vld [vmem:[%s1762 + $0x3a] sm:$0xff]
        %v3975 = vld [vmem:[%s1762 + $0x4a] sm:$0xff]
        %v3976 = vld [vmem:[%s1762 + $0x52] sm:$0xff]
        %v3977 = vld [vmem:[%s1762 + $0x62] sm:$0xff]
        %v3978 = vld [vmem:[%s1762 + $0x6a] sm:$0xff]
        %v3979 = vld [vmem:[%s1762 + $0x7a] sm:$0xff]
        %v3980 = vld [vmem:[%s1762 + $0x82] sm:$0xff]
        %v3981 = vld [vmem:[%s1762 + $0x92] sm:$0xff]
        %v3982 = vld [vmem:[%s1762 + $0x9a] sm:$0xff]
        %v3983 = vld [vmem:[%s1762 + $0xaa] sm:$0xff]
        %v3984 = vld [vmem:[%s1762 + $0xb2] sm:$0xff]
        %v3985 = vld [vmem:[%s1762 + $0xc2] sm:$0xff]
        %v3986 = vld [vmem:[%s1762 + $0xca] sm:$0xff]
        %v3987 = vld [vmem:[%s1762 + $0xda] sm:$0xff]
        %v3988 = vld [vmem:[%s1762 + $0xe2] sm:$0xff]
        %v3989 = vld [vmem:[%s1762 + $0xf2] sm:$0xff]
        %v3990 = vld [vmem:[%s1762 + $0xfa] sm:$0xff]
        %v3991 = vld [vmem:[%s1762 + $0x10a] sm:$0xff]
        %v3992 = vld [vmem:[%s1762 + $0x112] sm:$0xff]
        %v3993 = vld [vmem:[%s1762 + $0x122] sm:$0xff]
        %v3994 = vld [vmem:[%s1762 + $0x12a] sm:$0xff]
        %v3995 = vld [vmem:[%s1762 + $0x13a] sm:$0xff]
        %v3996 = vld [vmem:[%s1762 + $0x142] sm:$0xff]
        %v3997 = vld [vmem:[%s1762 + $0x152] sm:$0xff]
        %v3998 = vld [vmem:[%s1762 + $0x15a] sm:$0xff]
        %v3999 = vld [vmem:[%s1762 + $0x16a] sm:$0xff]
        %v4000 = vld [vmem:[%s1762 + $0x172] sm:$0xff]
        %s4001 = scalar_lea.vmem %s3, 768
        %v4002 = vld [vmem:[%s4001] sm:$0xff]
        %v4003 = vld [vmem:[%s4001 + $0x8] sm:$0xff]
        %v4004 = vld [vmem:[%s4001 + $0x10] sm:$0xff]
        %v4005 = vld [vmem:[%s4001 + $0x18] sm:$0xff]
        %v4006 = vld [vmem:[%s4001 + $0x20] sm:$0xff]
        %v4007 = vld [vmem:[%s4001 + $0x28] sm:$0xff]
        %v4008 = vld [vmem:[%s4001 + $0x30] sm:$0xff]
        %v4009 = vld [vmem:[%s4001 + $0x38] sm:$0xff]
        %v4010 = vld [vmem:[%s4001 + $0x40] sm:$0xff]
        %v4011 = vld [vmem:[%s4001 + $0x48] sm:$0xff]
        %v4012 = vld [vmem:[%s4001 + $0x50] sm:$0xff]
        %v4013 = vld [vmem:[%s4001 + $0x58] sm:$0xff]
        %v4014 = vld [vmem:[%s4001 + $0x60] sm:$0xff]
        %v4015 = vld [vmem:[%s4001 + $0x68] sm:$0xff]
        %v4016 = vld [vmem:[%s4001 + $0x70] sm:$0xff]
        %v4017 = vld [vmem:[%s4001 + $0x78] sm:$0xff]
        %v4018 = vld [vmem:[%s4001 + $0x80] sm:$0xff]
        %v4019 = vld [vmem:[%s4001 + $0x88] sm:$0xff]
        %v4020 = vld [vmem:[%s4001 + $0x90] sm:$0xff]
        %v4021 = vld [vmem:[%s4001 + $0x98] sm:$0xff]
        %v4022 = vld [vmem:[%s4001 + $0xa0] sm:$0xff]
        %v4023 = vld [vmem:[%s4001 + $0xa8] sm:$0xff]
        %v4024 = vld [vmem:[%s4001 + $0xb0] sm:$0xff]
        %v4025 = vld [vmem:[%s4001 + $0xb8] sm:$0xff]
        %v4026 = vld [vmem:[%s4001 + $0xc0] sm:$0xff]
        %v4027 = vld [vmem:[%s4001 + $0xc8] sm:$0xff]
        %v4028 = vld [vmem:[%s4001 + $0xd0] sm:$0xff]
        %v4029 = vld [vmem:[%s4001 + $0xd8] sm:$0xff]
        %v4030 = vld [vmem:[%s4001 + $0xe0] sm:$0xff]
        %v4031 = vld [vmem:[%s4001 + $0xe8] sm:$0xff]
        %v4032 = vld [vmem:[%s4001 + $0xf0] sm:$0xff]
        %v4033 = vld [vmem:[%s4001 + $0xf8] sm:$0xff]
        %v4034 = vld [vmem:[%s4001 + $0x100] sm:$0xff]
        %v4035 = vld [vmem:[%s4001 + $0x108] sm:$0xff]
        %v4036 = vld [vmem:[%s4001 + $0x110] sm:$0xff]
        %v4037 = vld [vmem:[%s4001 + $0x118] sm:$0xff]
        %v4038 = vld [vmem:[%s4001 + $0x120] sm:$0xff]
        %v4039 = vld [vmem:[%s4001 + $0x128] sm:$0xff]
        %v4040 = vld [vmem:[%s4001 + $0x130] sm:$0xff]
        %v4041 = vld [vmem:[%s4001 + $0x138] sm:$0xff]
        %v4042 = vld [vmem:[%s4001 + $0x140] sm:$0xff]
        %v4043 = vld [vmem:[%s4001 + $0x148] sm:$0xff]
        %v4044 = vld [vmem:[%s4001 + $0x150] sm:$0xff]
        %v4045 = vld [vmem:[%s4001 + $0x158] sm:$0xff]
        %v4046 = vld [vmem:[%s4001 + $0x160] sm:$0xff]
        %v4047 = vld [vmem:[%s4001 + $0x168] sm:$0xff]
        %v4048 = vld [vmem:[%s4001 + $0x170] sm:$0xff]
        %v4049 = vld [vmem:[%s4001 + $0x178] sm:$0xff]
        %4050 = vmatprep.subr.mxu0 0.0
        %4051 = vmatpush1.msra.mxu0 %v4017
        %4052 = vmatprep.subr.mxu0 0.0
        %4053 = vmatpush1.msra.mxu0 %v4016
        %4054 = vmatprep.subr.mxu0 0.0
        %4055 = vmatpush1.msra.mxu0 %v4015
        %4056 = vmatprep.subr.mxu0 0.0
        %4057 = vmatpush1.msra.mxu0 %v4014
        %4058 = vmatprep.subr.mxu0 0.0
        %4059 = vmatpush1.msra.mxu0 %v4013
        %4060 = vmatprep.subr.mxu0 0.0
        %4061 = vmatpush1.msra.mxu0 %v4012
        %4062 = vmatprep.subr.mxu0 0.0
        %4063 = vmatpush1.msra.mxu0 %v4011
        %4064 = vmatprep.subr.mxu0 0.0
        %4065 = vmatpush1.msra.mxu0 %v4010
        %4066 = vmatprep.subr.mxu0 0.0
        %4067 = vmatpush1.msra.mxu0 %v4009
        %4068 = vmatprep.subr.mxu0 0.0
        %4069 = vmatpush1.msra.mxu0 %v4008
        %4070 = vmatprep.subr.mxu0 0.0
        %4071 = vmatpush1.msra.mxu0 %v4007
        %4072 = vmatprep.subr.mxu0 0.0
        %4073 = vmatpush1.msra.mxu0 %v4006
        %4074 = vmatprep.subr.mxu0 0.0
        %4075 = vmatpush1.msra.mxu0 %v4005
        %4076 = vmatprep.subr.mxu0 0.0
        %4077 = vmatpush1.msra.mxu0 %v4004
        %4078 = vmatprep.subr.mxu0 0.0
        %4079 = vmatpush1.msra.mxu0 %v4003
        %4080 = vmatprep.subr.mxu0 0.0
        %4081 = vmatpush1.msra.mxu0 %v4002
        %4082 = vmatprep.subr.mxu0 0.0
        %4083 = vmatpush2.msra.mxu0 %v4033
        %4084 = vmatprep.subr.mxu0 0.0
        %4085 = vmatpush2.msra.mxu0 %v4032
        %4086 = vmatprep.subr.mxu0 0.0
        %4087 = vmatpush2.msra.mxu0 %v4031
        %4088 = vmatprep.subr.mxu0 0.0
        %4089 = vmatpush2.msra.mxu0 %v4030
        %4090 = vmatprep.subr.mxu0 0.0
        %4091 = vmatpush2.msra.mxu0 %v4029
        %4092 = vmatprep.subr.mxu0 0.0
        %4093 = vmatpush2.msra.mxu0 %v4028
        %4094 = vmatprep.subr.mxu0 0.0
        %4095 = vmatpush2.msra.mxu0 %v4027
        %4096 = vmatprep.subr.mxu0 0.0
        %4097 = vmatpush2.msra.mxu0 %v4026
        %4098 = vmatprep.subr.mxu0 0.0
        %4099 = vmatpush2.msra.mxu0 %v4025
        %4100 = vmatprep.subr.mxu0 0.0
        %4101 = vmatpush2.msra.mxu0 %v4024
        %4102 = vmatprep.subr.mxu0 0.0
        %4103 = vmatpush2.msra.mxu0 %v4023
        %4104 = vmatprep.subr.mxu0 0.0
        %4105 = vmatpush2.msra.mxu0 %v4022
        %4106 = vmatprep.subr.mxu0 0.0
        %4107 = vmatpush2.msra.mxu0 %v4021
        %4108 = vmatprep.subr.mxu0 0.0
        %4109 = vmatpush2.msra.mxu0 %v4020
        %4110 = vmatprep.subr.mxu0 0.0
        %4111 = vmatpush2.msra.mxu0 %v4019
        %4112 = vmatprep.subr.mxu0 0.0
        %4113 = vmatpush2.msra.mxu0 %v4018
        %4114 = vmatprep.mubr.f32.mxu0 %v3937
        %4115 = vmatmul.mubr.f32.gmra.mxu0 %v3905
        %v4116 = vpop.f32.mrf.mxu0
        %v4117 = vadd.f32 0.0, %v4116
        %v4118 = vpop.f32.mrf.mxu0
        %4119 = vmatprep.mubr.f32.mxu0 %v3938
        %4120 = vmatmul.mubr.f32.gmra.mxu0 %v3906
        %v4121 = vpop.f32.mrf.mxu0
        %v4122 = vadd.f32 0.0, %v4121
        %v4123 = vpop.f32.mrf.mxu0
        %4124 = vmatprep.mubr.f32.mxu0 %v3939
        %4125 = vmatmul.mubr.f32.gmra.mxu0 %v3907
        %v4126 = vpop.f32.mrf.mxu0
        %v4127 = vadd.f32 0.0, %v4126
        %v4128 = vpop.f32.mrf.mxu0
        %4129 = vmatprep.mubr.f32.mxu0 %v3940
        %4130 = vmatmul.mubr.f32.gmra.mxu0 %v3908
        %v4131 = vpop.f32.mrf.mxu0
        %v4132 = vadd.f32 0.0, %v4131
        %v4133 = vpop.f32.mrf.mxu0
        %4134 = vmatprep.mubr.f32.mxu0 %v3941
        %4135 = vmatmul.mubr.f32.gmra.mxu0 %v3909
        %v4136 = vpop.f32.mrf.mxu0
        %v4137 = vadd.f32 0.0, %v4136
        %v4138 = vpop.f32.mrf.mxu0
        %4139 = vmatprep.mubr.f32.mxu0 %v3942
        %4140 = vmatmul.mubr.f32.gmra.mxu0 %v3910
        %v4141 = vpop.f32.mrf.mxu0
        %v4142 = vadd.f32 0.0, %v4141
        %v4143 = vpop.f32.mrf.mxu0
        %4144 = vmatprep.mubr.f32.mxu0 %v3943
        %4145 = vmatmul.mubr.f32.gmra.mxu0 %v3911
        %v4146 = vpop.f32.mrf.mxu0
        %v4147 = vadd.f32 0.0, %v4146
        %v4148 = vpop.f32.mrf.mxu0
        %4149 = vmatprep.mubr.f32.mxu0 %v3944
        %4150 = vmatmul.mubr.f32.gmra.mxu0 %v3912
        %v4151 = vpop.f32.mrf.mxu0
        %v4152 = vadd.f32 0.0, %v4151
        %v4153 = vpop.f32.mrf.mxu0
        %4154 = vmatprep.mubr.f32.mxu0 %v3945
        %4155 = vmatmul.mubr.f32.gmra.mxu0 %v3913
        %v4156 = vpop.f32.mrf.mxu0
        %v4157 = vadd.f32 0.0, %v4156
        %v4158 = vpop.f32.mrf.mxu0
        %4159 = vmatprep.mubr.f32.mxu0 %v3946
        %4160 = vmatmul.mubr.f32.gmra.mxu0 %v3914
        %v4161 = vpop.f32.mrf.mxu0
        %v4162 = vadd.f32 0.0, %v4161
        %v4163 = vpop.f32.mrf.mxu0
        %4164 = vmatprep.mubr.f32.mxu0 %v3947
        %4165 = vmatmul.mubr.f32.gmra.mxu0 %v3915
        %v4166 = vpop.f32.mrf.mxu0
        %v4167 = vadd.f32 0.0, %v4166
        %v4168 = vpop.f32.mrf.mxu0
        %4169 = vmatprep.mubr.f32.mxu0 %v3948
        %4170 = vmatmul.mubr.f32.gmra.mxu0 %v3916
        %v4171 = vpop.f32.mrf.mxu0
        %v4172 = vadd.f32 0.0, %v4171
        %v4173 = vpop.f32.mrf.mxu0
        %4174 = vmatprep.mubr.f32.mxu0 %v3949
        %4175 = vmatmul.mubr.f32.gmra.mxu0 %v3917
        %v4176 = vpop.f32.mrf.mxu0
        %v4177 = vadd.f32 0.0, %v4176
        %v4178 = vpop.f32.mrf.mxu0
        %4179 = vmatprep.mubr.f32.mxu0 %v3950
        %4180 = vmatmul.mubr.f32.gmra.mxu0 %v3918
        %v4181 = vpop.f32.mrf.mxu0
        %v4182 = vadd.f32 0.0, %v4181
        %v4183 = vpop.f32.mrf.mxu0
        %4184 = vmatprep.mubr.f32.mxu0 %v3951
        %4185 = vmatmul.mubr.f32.gmra.mxu0 %v3919
        %v4186 = vpop.f32.mrf.mxu0
        %v4187 = vadd.f32 0.0, %v4186
        %v4188 = vpop.f32.mrf.mxu0
        %4189 = vmatprep.mubr.f32.mxu0 %v3952
        %4190 = vmatmul.mubr.f32.gmra.mxu0 %v3920
        %v4191 = vpop.f32.mrf.mxu0
        %v4192 = vadd.f32 0.0, %v4191
        %v4193 = vpop.f32.mrf.mxu0
        %4194 = vmatprep.mubr.f32.mxu0 %v3953
        %4195 = vmatmul.mubr.f32.gmra.mxu0 %v3921
        %v4196 = vpop.f32.mrf.mxu0
        %v4197 = vadd.f32 0.0, %v4196
        %v4198 = vpop.f32.mrf.mxu0
        %4199 = vmatprep.mubr.f32.mxu0 %v3954
        %4200 = vmatmul.mubr.f32.gmra.mxu0 %v3922
        %v4201 = vpop.f32.mrf.mxu0
        %v4202 = vadd.f32 0.0, %v4201
        %v4203 = vpop.f32.mrf.mxu0
        %4204 = vmatprep.mubr.f32.mxu0 %v3955
        %4205 = vmatmul.mubr.f32.gmra.mxu0 %v3923
        %v4206 = vpop.f32.mrf.mxu0
        %v4207 = vadd.f32 0.0, %v4206
        %v4208 = vpop.f32.mrf.mxu0
        %4209 = vmatprep.mubr.f32.mxu0 %v3956
        %4210 = vmatmul.mubr.f32.gmra.mxu0 %v3924
        %v4211 = vpop.f32.mrf.mxu0
        %v4212 = vadd.f32 0.0, %v4211
        %v4213 = vpop.f32.mrf.mxu0
        %4214 = vmatprep.mubr.f32.mxu0 %v3957
        %4215 = vmatmul.mubr.f32.gmra.mxu0 %v3925
        %v4216 = vpop.f32.mrf.mxu0
        %v4217 = vadd.f32 0.0, %v4216
        %v4218 = vpop.f32.mrf.mxu0
        %4219 = vmatprep.mubr.f32.mxu0 %v3958
        %4220 = vmatmul.mubr.f32.gmra.mxu0 %v3926
        %v4221 = vpop.f32.mrf.mxu0
        %v4222 = vadd.f32 0.0, %v4221
        %v4223 = vpop.f32.mrf.mxu0
        %4224 = vmatprep.mubr.f32.mxu0 %v3959
        %4225 = vmatmul.mubr.f32.gmra.mxu0 %v3927
        %v4226 = vpop.f32.mrf.mxu0
        %v4227 = vadd.f32 0.0, %v4226
        %v4228 = vpop.f32.mrf.mxu0
        %4229 = vmatprep.mubr.f32.mxu0 %v3960
        %4230 = vmatmul.mubr.f32.gmra.mxu0 %v3928
        %v4231 = vpop.f32.mrf.mxu0
        %v4232 = vadd.f32 0.0, %v4231
        %v4233 = vpop.f32.mrf.mxu0
        %4234 = vmatprep.mubr.f32.mxu0 %v3961
        %4235 = vmatmul.mubr.f32.gmra.mxu0 %v3929
        %v4236 = vpop.f32.mrf.mxu0
        %v4237 = vadd.f32 0.0, %v4236
        %v4238 = vpop.f32.mrf.mxu0
        %4239 = vmatprep.mubr.f32.mxu0 %v3962
        %4240 = vmatmul.mubr.f32.gmra.mxu0 %v3930
        %v4241 = vpop.f32.mrf.mxu0
        %v4242 = vadd.f32 0.0, %v4241
        %v4243 = vpop.f32.mrf.mxu0
        %4244 = vmatprep.mubr.f32.mxu0 %v3963
        %4245 = vmatmul.mubr.f32.gmra.mxu0 %v3931
        %v4246 = vpop.f32.mrf.mxu0
        %v4247 = vadd.f32 0.0, %v4246
        %v4248 = vpop.f32.mrf.mxu0
        %4249 = vmatprep.mubr.f32.mxu0 %v3964
        %4250 = vmatmul.mubr.f32.gmra.mxu0 %v3932
        %v4251 = vpop.f32.mrf.mxu0
        %v4252 = vadd.f32 0.0, %v4251
        %v4253 = vpop.f32.mrf.mxu0
        %4254 = vmatprep.mubr.f32.mxu0 %v3965
        %4255 = vmatmul.mubr.f32.gmra.mxu0 %v3933
        %v4256 = vpop.f32.mrf.mxu0
        %v4257 = vadd.f32 0.0, %v4256
        %v4258 = vpop.f32.mrf.mxu0
        %4259 = vmatprep.mubr.f32.mxu0 %v3966
        %4260 = vmatmul.mubr.f32.gmra.mxu0 %v3934
        %v4261 = vpop.f32.mrf.mxu0
        %v4262 = vadd.f32 0.0, %v4261
        %v4263 = vpop.f32.mrf.mxu0
        %4264 = vmatprep.mubr.f32.mxu0 %v3967
        %4265 = vmatmul.mubr.f32.gmra.mxu0 %v3935
        %v4266 = vpop.f32.mrf.mxu0
        %v4267 = vadd.f32 0.0, %v4266
        %v4268 = vpop.f32.mrf.mxu0
        %4269 = vmatprep.mubr.f32.mxu0 %v3968
        %4270 = vmatmul.mubr.f32.gmra.mxu0 %v3936
        %v4271 = vpop.f32.mrf.mxu0
        %v4272 = vadd.f32 0.0, %v4271
        %v4273 = vpop.f32.mrf.mxu0
        %4274 = vdwg.mxu0
        %4275 = vmatprep.subr.mxu0 0.0
        %4276 = vmatpush1.msra.mxu0 %v4049
        %4277 = vmatprep.subr.mxu0 0.0
        %4278 = vmatpush1.msra.mxu0 %v4048
        %4279 = vmatprep.subr.mxu0 0.0
        %4280 = vmatpush1.msra.mxu0 %v4047
        %4281 = vmatprep.subr.mxu0 0.0
        %4282 = vmatpush1.msra.mxu0 %v4046
        %4283 = vmatprep.subr.mxu0 0.0
        %4284 = vmatpush1.msra.mxu0 %v4045
        %4285 = vmatprep.subr.mxu0 0.0
        %4286 = vmatpush1.msra.mxu0 %v4044
        %4287 = vmatprep.subr.mxu0 0.0
        %4288 = vmatpush1.msra.mxu0 %v4043
        %4289 = vmatprep.subr.mxu0 0.0
        %4290 = vmatpush1.msra.mxu0 %v4042
        %4291 = vmatprep.subr.mxu0 0.0
        %4292 = vmatpush1.msra.mxu0 %v4041
        %4293 = vmatprep.subr.mxu0 0.0
        %4294 = vmatpush1.msra.mxu0 %v4040
        %4295 = vmatprep.subr.mxu0 0.0
        %4296 = vmatpush1.msra.mxu0 %v4039
        %4297 = vmatprep.subr.mxu0 0.0
        %4298 = vmatpush1.msra.mxu0 %v4038
        %4299 = vmatprep.subr.mxu0 0.0
        %4300 = vmatpush1.msra.mxu0 %v4037
        %4301 = vmatprep.subr.mxu0 0.0
        %4302 = vmatpush1.msra.mxu0 %v4036
        %4303 = vmatprep.subr.mxu0 0.0
        %4304 = vmatpush1.msra.mxu0 %v4035
        %4305 = vmatprep.subr.mxu0 0.0
        %4306 = vmatpush1.msra.mxu0 %v4034
        %4307 = vmatprep.subr.mxu0 0.0
        %4308 = vmatpush2.msra.mxu0 0.0
        %4309 = vmatprep.subr.mxu0 0.0
        %4310 = vmatpush2.msra.mxu0 0.0
        %4311 = vmatprep.subr.mxu0 0.0
        %4312 = vmatpush2.msra.mxu0 0.0
        %4313 = vmatprep.subr.mxu0 0.0
        %4314 = vmatpush2.msra.mxu0 0.0
        %4315 = vmatprep.subr.mxu0 0.0
        %4316 = vmatpush2.msra.mxu0 0.0
        %4317 = vmatprep.subr.mxu0 0.0
        %4318 = vmatpush2.msra.mxu0 0.0
        %4319 = vmatprep.subr.mxu0 0.0
        %4320 = vmatpush2.msra.mxu0 0.0
        %4321 = vmatprep.subr.mxu0 0.0
        %4322 = vmatpush2.msra.mxu0 0.0
        %4323 = vmatprep.subr.mxu0 0.0
        %4324 = vmatpush2.msra.mxu0 0.0
        %4325 = vmatprep.subr.mxu0 0.0
        %4326 = vmatpush2.msra.mxu0 0.0
        %4327 = vmatprep.subr.mxu0 0.0
        %4328 = vmatpush2.msra.mxu0 0.0
        %4329 = vmatprep.subr.mxu0 0.0
        %4330 = vmatpush2.msra.mxu0 0.0
        %4331 = vmatprep.subr.mxu0 0.0
        %4332 = vmatpush2.msra.mxu0 0.0
        %4333 = vmatprep.subr.mxu0 0.0
        %4334 = vmatpush2.msra.mxu0 0.0
        %4335 = vmatprep.subr.mxu0 0.0
        %4336 = vmatpush2.msra.mxu0 0.0
        %4337 = vmatprep.subr.mxu0 0.0
        %4338 = vmatpush2.msra.mxu0 0.0
        %4339 = vmatprep.mubr.f32.mxu0 0.0
        %4340 = vmatmul.mubr.f32.gmra.mxu0 %v3969
        %v4341 = vpop.f32.mrf.mxu0
        %v4342 = vadd.f32 %v4117, %v4341
        %v4343 = vpop.f32.mrf.mxu0
        %4344 = vmatprep.mubr.f32.mxu0 0.0
        %4345 = vmatmul.mubr.f32.gmra.mxu0 %v3970
        %v4346 = vpop.f32.mrf.mxu0
        %v4347 = vadd.f32 %v4122, %v4346
        %v4348 = vpop.f32.mrf.mxu0
        %4349 = vmatprep.mubr.f32.mxu0 0.0
        %4350 = vmatmul.mubr.f32.gmra.mxu0 %v3971
        %v4351 = vpop.f32.mrf.mxu0
        %v4352 = vadd.f32 %v4127, %v4351
        %v4353 = vpop.f32.mrf.mxu0
        %4354 = vmatprep.mubr.f32.mxu0 0.0
        %4355 = vmatmul.mubr.f32.gmra.mxu0 %v3972
        %v4356 = vpop.f32.mrf.mxu0
        %v4357 = vadd.f32 %v4132, %v4356
        %v4358 = vpop.f32.mrf.mxu0
        %4359 = vmatprep.mubr.f32.mxu0 0.0
        %4360 = vmatmul.mubr.f32.gmra.mxu0 %v3973
        %v4361 = vpop.f32.mrf.mxu0
        %v4362 = vadd.f32 %v4137, %v4361
        %v4363 = vpop.f32.mrf.mxu0
        %4364 = vmatprep.mubr.f32.mxu0 0.0
        %4365 = vmatmul.mubr.f32.gmra.mxu0 %v3974
        %v4366 = vpop.f32.mrf.mxu0
        %v4367 = vadd.f32 %v4142, %v4366
        %v4368 = vpop.f32.mrf.mxu0
        %4369 = vmatprep.mubr.f32.mxu0 0.0
        %4370 = vmatmul.mubr.f32.gmra.mxu0 %v3975
        %v4371 = vpop.f32.mrf.mxu0
        %v4372 = vadd.f32 %v4147, %v4371
        %v4373 = vpop.f32.mrf.mxu0
        %4374 = vmatprep.mubr.f32.mxu0 0.0
        %4375 = vmatmul.mubr.f32.gmra.mxu0 %v3976
        %v4376 = vpop.f32.mrf.mxu0
        %v4377 = vadd.f32 %v4152, %v4376
        %v4378 = vpop.f32.mrf.mxu0
        %4379 = vmatprep.mubr.f32.mxu0 0.0
        %4380 = vmatmul.mubr.f32.gmra.mxu0 %v3977
        %v4381 = vpop.f32.mrf.mxu0
        %v4382 = vadd.f32 %v4157, %v4381
        %v4383 = vpop.f32.mrf.mxu0
        %4384 = vmatprep.mubr.f32.mxu0 0.0
        %4385 = vmatmul.mubr.f32.gmra.mxu0 %v3978
        %v4386 = vpop.f32.mrf.mxu0
        %v4387 = vadd.f32 %v4162, %v4386
        %v4388 = vpop.f32.mrf.mxu0
        %4389 = vmatprep.mubr.f32.mxu0 0.0
        %4390 = vmatmul.mubr.f32.gmra.mxu0 %v3979
        %v4391 = vpop.f32.mrf.mxu0
        %v4392 = vadd.f32 %v4167, %v4391
        %v4393 = vpop.f32.mrf.mxu0
        %4394 = vmatprep.mubr.f32.mxu0 0.0
        %4395 = vmatmul.mubr.f32.gmra.mxu0 %v3980
        %v4396 = vpop.f32.mrf.mxu0
        %v4397 = vadd.f32 %v4172, %v4396
        %v4398 = vpop.f32.mrf.mxu0
        %4399 = vmatprep.mubr.f32.mxu0 0.0
        %4400 = vmatmul.mubr.f32.gmra.mxu0 %v3981
        %v4401 = vpop.f32.mrf.mxu0
        %v4402 = vadd.f32 %v4177, %v4401
        %v4403 = vpop.f32.mrf.mxu0
        %4404 = vmatprep.mubr.f32.mxu0 0.0
        %4405 = vmatmul.mubr.f32.gmra.mxu0 %v3982
        %v4406 = vpop.f32.mrf.mxu0
        %v4407 = vadd.f32 %v4182, %v4406
        %v4408 = vpop.f32.mrf.mxu0
        %4409 = vmatprep.mubr.f32.mxu0 0.0
        %4410 = vmatmul.mubr.f32.gmra.mxu0 %v3983
        %v4411 = vpop.f32.mrf.mxu0
        %v4412 = vadd.f32 %v4187, %v4411
        %v4413 = vpop.f32.mrf.mxu0
        %4414 = vmatprep.mubr.f32.mxu0 0.0
        %4415 = vmatmul.mubr.f32.gmra.mxu0 %v3984
        %v4416 = vpop.f32.mrf.mxu0
        %v4417 = vadd.f32 %v4192, %v4416
        %v4418 = vpop.f32.mrf.mxu0
        %4419 = vmatprep.mubr.f32.mxu0 0.0
        %4420 = vmatmul.mubr.f32.gmra.mxu0 %v3985
        %v4421 = vpop.f32.mrf.mxu0
        %v4422 = vadd.f32 %v4197, %v4421
        %v4423 = vpop.f32.mrf.mxu0
        %4424 = vmatprep.mubr.f32.mxu0 0.0
        %4425 = vmatmul.mubr.f32.gmra.mxu0 %v3986
        %v4426 = vpop.f32.mrf.mxu0
        %v4427 = vadd.f32 %v4202, %v4426
        %v4428 = vpop.f32.mrf.mxu0
        %4429 = vmatprep.mubr.f32.mxu0 0.0
        %4430 = vmatmul.mubr.f32.gmra.mxu0 %v3987
        %v4431 = vpop.f32.mrf.mxu0
        %v4432 = vadd.f32 %v4207, %v4431
        %v4433 = vpop.f32.mrf.mxu0
        %4434 = vmatprep.mubr.f32.mxu0 0.0
        %4435 = vmatmul.mubr.f32.gmra.mxu0 %v3988
        %v4436 = vpop.f32.mrf.mxu0
        %v4437 = vadd.f32 %v4212, %v4436
        %v4438 = vpop.f32.mrf.mxu0
        %4439 = vmatprep.mubr.f32.mxu0 0.0
        %4440 = vmatmul.mubr.f32.gmra.mxu0 %v3989
        %v4441 = vpop.f32.mrf.mxu0
        %v4442 = vadd.f32 %v4217, %v4441
        %v4443 = vpop.f32.mrf.mxu0
        %4444 = vmatprep.mubr.f32.mxu0 0.0
        %4445 = vmatmul.mubr.f32.gmra.mxu0 %v3990
        %v4446 = vpop.f32.mrf.mxu0
        %v4447 = vadd.f32 %v4222, %v4446
        %v4448 = vpop.f32.mrf.mxu0
        %4449 = vmatprep.mubr.f32.mxu0 0.0
        %4450 = vmatmul.mubr.f32.gmra.mxu0 %v3991
        %v4451 = vpop.f32.mrf.mxu0
        %v4452 = vadd.f32 %v4227, %v4451
        %v4453 = vpop.f32.mrf.mxu0
        %4454 = vmatprep.mubr.f32.mxu0 0.0
        %4455 = vmatmul.mubr.f32.gmra.mxu0 %v3992
        %v4456 = vpop.f32.mrf.mxu0
        %v4457 = vadd.f32 %v4232, %v4456
        %v4458 = vpop.f32.mrf.mxu0
        %4459 = vmatprep.mubr.f32.mxu0 0.0
        %4460 = vmatmul.mubr.f32.gmra.mxu0 %v3993
        %v4461 = vpop.f32.mrf.mxu0
        %v4462 = vadd.f32 %v4237, %v4461
        %v4463 = vpop.f32.mrf.mxu0
        %4464 = vmatprep.mubr.f32.mxu0 0.0
        %4465 = vmatmul.mubr.f32.gmra.mxu0 %v3994
        %v4466 = vpop.f32.mrf.mxu0
        %v4467 = vadd.f32 %v4242, %v4466
        %v4468 = vpop.f32.mrf.mxu0
        %4469 = vmatprep.mubr.f32.mxu0 0.0
        %4470 = vmatmul.mubr.f32.gmra.mxu0 %v3995
        %v4471 = vpop.f32.mrf.mxu0
        %v4472 = vadd.f32 %v4247, %v4471
        %v4473 = vpop.f32.mrf.mxu0
        %4474 = vmatprep.mubr.f32.mxu0 0.0
        %4475 = vmatmul.mubr.f32.gmra.mxu0 %v3996
        %v4476 = vpop.f32.mrf.mxu0
        %v4477 = vadd.f32 %v4252, %v4476
        %v4478 = vpop.f32.mrf.mxu0
        %4479 = vmatprep.mubr.f32.mxu0 0.0
        %4480 = vmatmul.mubr.f32.gmra.mxu0 %v3997
        %v4481 = vpop.f32.mrf.mxu0
        %v4482 = vadd.f32 %v4257, %v4481
        %v4483 = vpop.f32.mrf.mxu0
        %4484 = vmatprep.mubr.f32.mxu0 0.0
        %4485 = vmatmul.mubr.f32.gmra.mxu0 %v3998
        %v4486 = vpop.f32.mrf.mxu0
        %v4487 = vadd.f32 %v4262, %v4486
        %v4488 = vpop.f32.mrf.mxu0
        %4489 = vmatprep.mubr.f32.mxu0 0.0
        %4490 = vmatmul.mubr.f32.gmra.mxu0 %v3999
        %v4491 = vpop.f32.mrf.mxu0
        %v4492 = vadd.f32 %v4267, %v4491
        %v4493 = vpop.f32.mrf.mxu0
        %4494 = vmatprep.mubr.f32.mxu0 0.0
        %4495 = vmatmul.mubr.f32.gmra.mxu0 %v4000
        %v4496 = vpop.f32.mrf.mxu0
        %v4497 = vadd.f32 %v4272, %v4496
        %v4498 = vpop.f32.mrf.mxu0
        %4499 = vdwg.mxu0
        %v4500 = vld [vmem:[#allocation5] sm:$0xff]
        %v4501 = vld [vmem:[#allocation5 + $0x8] sm:$0xff]
        %v4502 = vld [vmem:[#allocation5 + $0x10] sm:$0xff]
        %v4503 = vld [vmem:[#allocation5 + $0x18] sm:$0xff]
        %v4504 = vld [vmem:[#allocation5 + $0x20] sm:$0xff]
        %v4505 = vld [vmem:[#allocation5 + $0x28] sm:$0xff]
        %v4506 = vld [vmem:[#allocation5 + $0x30] sm:$0xff]
        %v4507 = vld [vmem:[#allocation5 + $0x38] sm:$0xff]
        %v4508 = vld [vmem:[#allocation5 + $0x40] sm:$0xff]
        %v4509 = vld [vmem:[#allocation5 + $0x48] sm:$0xff]
        %v4510 = vld [vmem:[#allocation5 + $0x50] sm:$0xff]
        %v4511 = vld [vmem:[#allocation5 + $0x58] sm:$0xff]
        %v4512 = vld [vmem:[#allocation5 + $0x60] sm:$0xff]
        %v4513 = vld [vmem:[#allocation5 + $0x68] sm:$0xff]
        %v4514 = vld [vmem:[#allocation5 + $0x70] sm:$0xff]
        %v4515 = vld [vmem:[#allocation5 + $0x78] sm:$0xff]
        %v4516 = vld [vmem:[#allocation5 + $0x80] sm:$0xff]
        %v4517 = vld [vmem:[#allocation5 + $0x88] sm:$0xff]
        %v4518 = vld [vmem:[#allocation5 + $0x90] sm:$0xff]
        %v4519 = vld [vmem:[#allocation5 + $0x98] sm:$0xff]
        %v4520 = vld [vmem:[#allocation5 + $0xa0] sm:$0xff]
        %v4521 = vld [vmem:[#allocation5 + $0xa8] sm:$0xff]
        %v4522 = vld [vmem:[#allocation5 + $0xb0] sm:$0xff]
        %v4523 = vld [vmem:[#allocation5 + $0xb8] sm:$0xff]
        %v4524 = vld [vmem:[#allocation5 + $0xc0] sm:$0xff]
        %v4525 = vld [vmem:[#allocation5 + $0xc8] sm:$0xff]
        %v4526 = vld [vmem:[#allocation5 + $0xd0] sm:$0xff]
        %v4527 = vld [vmem:[#allocation5 + $0xd8] sm:$0xff]
        %v4528 = vld [vmem:[#allocation5 + $0xe0] sm:$0xff]
        %v4529 = vld [vmem:[#allocation5 + $0xe8] sm:$0xff]
        %v4530 = vld [vmem:[#allocation5 + $0xf0] sm:$0xff]
        %v4531 = vld [vmem:[#allocation5 + $0xf8] sm:$0xff]
        %v4532 = vadd.f32 %v4500, %v4342
        %v4533 = vadd.f32 %v4501, %v4347
        %v4534 = vadd.f32 %v4502, %v4352
        %v4535 = vadd.f32 %v4503, %v4357
        %v4536 = vadd.f32 %v4504, %v4362
        %v4537 = vadd.f32 %v4505, %v4367
        %v4538 = vadd.f32 %v4506, %v4372
        %v4539 = vadd.f32 %v4507, %v4377
        %v4540 = vadd.f32 %v4508, %v4382
        %v4541 = vadd.f32 %v4509, %v4387
        %v4542 = vadd.f32 %v4510, %v4392
        %v4543 = vadd.f32 %v4511, %v4397
        %v4544 = vadd.f32 %v4512, %v4402
        %v4545 = vadd.f32 %v4513, %v4407
        %v4546 = vadd.f32 %v4514, %v4412
        %v4547 = vadd.f32 %v4515, %v4417
        %v4548 = vadd.f32 %v4516, %v4422
        %v4549 = vadd.f32 %v4517, %v4427
        %v4550 = vadd.f32 %v4518, %v4432
        %v4551 = vadd.f32 %v4519, %v4437
        %v4552 = vadd.f32 %v4520, %v4442
        %v4553 = vadd.f32 %v4521, %v4447
        %v4554 = vadd.f32 %v4522, %v4452
        %v4555 = vadd.f32 %v4523, %v4457
        %v4556 = vadd.f32 %v4524, %v4462
        %v4557 = vadd.f32 %v4525, %v4467
        %v4558 = vadd.f32 %v4526, %v4472
        %v4559 = vadd.f32 %v4527, %v4477
        %v4560 = vadd.f32 %v4528, %v4482
        %v4561 = vadd.f32 %v4529, %v4487
        %v4562 = vadd.f32 %v4530, %v4492
        %v4563 = vadd.f32 %v4531, %v4497
        %4564 = vst [vmem:[#allocation5] sm:$0xff] %v4532
        %4565 = vst [vmem:[#allocation5 + $0x8] sm:$0xff] %v4533
        %4566 = vst [vmem:[#allocation5 + $0x10] sm:$0xff] %v4534
        %4567 = vst [vmem:[#allocation5 + $0x18] sm:$0xff] %v4535
        %4568 = vst [vmem:[#allocation5 + $0x20] sm:$0xff] %v4536
        %4569 = vst [vmem:[#allocation5 + $0x28] sm:$0xff] %v4537
        %4570 = vst [vmem:[#allocation5 + $0x30] sm:$0xff] %v4538
        %4571 = vst [vmem:[#allocation5 + $0x38] sm:$0xff] %v4539
        %4572 = vst [vmem:[#allocation5 + $0x40] sm:$0xff] %v4540
        %4573 = vst [vmem:[#allocation5 + $0x48] sm:$0xff] %v4541
        %4574 = vst [vmem:[#allocation5 + $0x50] sm:$0xff] %v4542
        %4575 = vst [vmem:[#allocation5 + $0x58] sm:$0xff] %v4543
        %4576 = vst [vmem:[#allocation5 + $0x60] sm:$0xff] %v4544
        %4577 = vst [vmem:[#allocation5 + $0x68] sm:$0xff] %v4545
        %4578 = vst [vmem:[#allocation5 + $0x70] sm:$0xff] %v4546
        %4579 = vst [vmem:[#allocation5 + $0x78] sm:$0xff] %v4547
        %4580 = vst [vmem:[#allocation5 + $0x80] sm:$0xff] %v4548
        %4581 = vst [vmem:[#allocation5 + $0x88] sm:$0xff] %v4549
        %4582 = vst [vmem:[#allocation5 + $0x90] sm:$0xff] %v4550
        %4583 = vst [vmem:[#allocation5 + $0x98] sm:$0xff] %v4551
        %4584 = vst [vmem:[#allocation5 + $0xa0] sm:$0xff] %v4552
        %4585 = vst [vmem:[#allocation5 + $0xa8] sm:$0xff] %v4553
        %4586 = vst [vmem:[#allocation5 + $0xb0] sm:$0xff] %v4554
        %4587 = vst [vmem:[#allocation5 + $0xb8] sm:$0xff] %v4555
        %4588 = vst [vmem:[#allocation5 + $0xc0] sm:$0xff] %v4556
        %4589 = vst [vmem:[#allocation5 + $0xc8] sm:$0xff] %v4557
        %4590 = vst [vmem:[#allocation5 + $0xd0] sm:$0xff] %v4558
        %4591 = vst [vmem:[#allocation5 + $0xd8] sm:$0xff] %v4559
        %4592 = vst [vmem:[#allocation5 + $0xe0] sm:$0xff] %v4560
        %4593 = vst [vmem:[#allocation5 + $0xe8] sm:$0xff] %v4561
        %4594 = vst [vmem:[#allocation5 + $0xf0] sm:$0xff] %v4562
        %4595 = vst [vmem:[#allocation5 + $0xf8] sm:$0xff] %v4563
        %v4596 = vld [vmem:[#allocation5] sm:$0xff]
        %v4597 = vld [vmem:[#allocation5 + $0x8] sm:$0xff]
        %v4598 = vld [vmem:[#allocation5 + $0x10] sm:$0xff]
        %v4599 = vld [vmem:[#allocation5 + $0x18] sm:$0xff]
        %v4600 = vld [vmem:[#allocation5 + $0x20] sm:$0xff]
        %v4601 = vld [vmem:[#allocation5 + $0x28] sm:$0xff]
        %v4602 = vld [vmem:[#allocation5 + $0x30] sm:$0xff]
        %v4603 = vld [vmem:[#allocation5 + $0x38] sm:$0xff]
        %v4604 = vld [vmem:[#allocation5 + $0x40] sm:$0xff]
        %v4605 = vld [vmem:[#allocation5 + $0x48] sm:$0xff]
        %v4606 = vld [vmem:[#allocation5 + $0x50] sm:$0xff]
        %v4607 = vld [vmem:[#allocation5 + $0x58] sm:$0xff]
        %v4608 = vld [vmem:[#allocation5 + $0x60] sm:$0xff]
        %v4609 = vld [vmem:[#allocation5 + $0x68] sm:$0xff]
        %v4610 = vld [vmem:[#allocation5 + $0x70] sm:$0xff]
        %v4611 = vld [vmem:[#allocation5 + $0x78] sm:$0xff]
        %v4612 = vld [vmem:[#allocation5 + $0x80] sm:$0xff]
        %v4613 = vld [vmem:[#allocation5 + $0x88] sm:$0xff]
        %v4614 = vld [vmem:[#allocation5 + $0x90] sm:$0xff]
        %v4615 = vld [vmem:[#allocation5 + $0x98] sm:$0xff]
        %v4616 = vld [vmem:[#allocation5 + $0xa0] sm:$0xff]
        %v4617 = vld [vmem:[#allocation5 + $0xa8] sm:$0xff]
        %v4618 = vld [vmem:[#allocation5 + $0xb0] sm:$0xff]
        %v4619 = vld [vmem:[#allocation5 + $0xb8] sm:$0xff]
        %v4620 = vld [vmem:[#allocation5 + $0xc0] sm:$0xff]
        %v4621 = vld [vmem:[#allocation5 + $0xc8] sm:$0xff]
        %v4622 = vld [vmem:[#allocation5 + $0xd0] sm:$0xff]
        %v4623 = vld [vmem:[#allocation5 + $0xd8] sm:$0xff]
        %v4624 = vld [vmem:[#allocation5 + $0xe0] sm:$0xff]
        %v4625 = vld [vmem:[#allocation5 + $0xe8] sm:$0xff]
        %v4626 = vld [vmem:[#allocation5 + $0xf0] sm:$0xff]
        %v4627 = vld [vmem:[#allocation5 + $0xf8] sm:$0xff]
        %v4628 = vmax.f32 %v4596, 0.0
        %v4629 = vmax.f32 %v4597, 0.0
        %v4630 = vmax.f32 %v4598, 0.0
        %v4631 = vmax.f32 %v4599, 0.0
        %v4632 = vmax.f32 %v4600, 0.0
        %v4633 = vmax.f32 %v4601, 0.0
        %v4634 = vmax.f32 %v4602, 0.0
        %v4635 = vmax.f32 %v4603, 0.0
        %v4636 = vmax.f32 %v4604, 0.0
        %v4637 = vmax.f32 %v4605, 0.0
        %v4638 = vmax.f32 %v4606, 0.0
        %v4639 = vmax.f32 %v4607, 0.0
        %v4640 = vmax.f32 %v4608, 0.0
        %v4641 = vmax.f32 %v4609, 0.0
        %v4642 = vmax.f32 %v4610, 0.0
        %v4643 = vmax.f32 %v4611, 0.0
        %v4644 = vmax.f32 %v4612, 0.0
        %v4645 = vmax.f32 %v4613, 0.0
        %v4646 = vmax.f32 %v4614, 0.0
        %v4647 = vmax.f32 %v4615, 0.0
        %v4648 = vmax.f32 %v4616, 0.0
        %v4649 = vmax.f32 %v4617, 0.0
        %v4650 = vmax.f32 %v4618, 0.0
        %v4651 = vmax.f32 %v4619, 0.0
        %v4652 = vmax.f32 %v4620, 0.0
        %v4653 = vmax.f32 %v4621, 0.0
        %v4654 = vmax.f32 %v4622, 0.0
        %v4655 = vmax.f32 %v4623, 0.0
        %v4656 = vmax.f32 %v4624, 0.0
        %v4657 = vmax.f32 %v4625, 0.0
        %v4658 = vmax.f32 %v4626, 0.0
        %v4659 = vmax.f32 %v4627, 0.0
        %s4660 = scalar_lea.vmem [#allocation3], 24
        %4661 = vst [vmem:[%s4660 + $0x1] sm:$0xff] %v4628
        %4662 = vst [vmem:[%s4660 + $0x9] sm:$0xff] %v4629
        %4663 = vst [vmem:[%s4660 + $0x19] sm:$0xff] %v4630
        %4664 = vst [vmem:[%s4660 + $0x21] sm:$0xff] %v4631
        %4665 = vst [vmem:[%s4660 + $0x31] sm:$0xff] %v4632
        %4666 = vst [vmem:[%s4660 + $0x39] sm:$0xff] %v4633
        %4667 = vst [vmem:[%s4660 + $0x49] sm:$0xff] %v4634
        %4668 = vst [vmem:[%s4660 + $0x51] sm:$0xff] %v4635
        %4669 = vst [vmem:[%s4660 + $0x61] sm:$0xff] %v4636
        %4670 = vst [vmem:[%s4660 + $0x69] sm:$0xff] %v4637
        %4671 = vst [vmem:[%s4660 + $0x79] sm:$0xff] %v4638
        %4672 = vst [vmem:[%s4660 + $0x81] sm:$0xff] %v4639
        %4673 = vst [vmem:[%s4660 + $0x91] sm:$0xff] %v4640
        %4674 = vst [vmem:[%s4660 + $0x99] sm:$0xff] %v4641
        %4675 = vst [vmem:[%s4660 + $0xa9] sm:$0xff] %v4642
        %4676 = vst [vmem:[%s4660 + $0xb1] sm:$0xff] %v4643
        %4677 = vst [vmem:[%s4660 + $0xc1] sm:$0xff] %v4644
        %4678 = vst [vmem:[%s4660 + $0xc9] sm:$0xff] %v4645
        %4679 = vst [vmem:[%s4660 + $0xd9] sm:$0xff] %v4646
        %4680 = vst [vmem:[%s4660 + $0xe1] sm:$0xff] %v4647
        %4681 = vst [vmem:[%s4660 + $0xf1] sm:$0xff] %v4648
        %4682 = vst [vmem:[%s4660 + $0xf9] sm:$0xff] %v4649
        %4683 = vst [vmem:[%s4660 + $0x109] sm:$0xff] %v4650
        %4684 = vst [vmem:[%s4660 + $0x111] sm:$0xff] %v4651
        %4685 = vst [vmem:[%s4660 + $0x121] sm:$0xff] %v4652
        %4686 = vst [vmem:[%s4660 + $0x129] sm:$0xff] %v4653
        %4687 = vst [vmem:[%s4660 + $0x139] sm:$0xff] %v4654
        %4688 = vst [vmem:[%s4660 + $0x141] sm:$0xff] %v4655
        %4689 = vst [vmem:[%s4660 + $0x151] sm:$0xff] %v4656
        %4690 = vst [vmem:[%s4660 + $0x159] sm:$0xff] %v4657
        %4691 = vst [vmem:[%s4660 + $0x169] sm:$0xff] %v4658
        %4692 = vst [vmem:[%s4660 + $0x171] sm:$0xff] %v4659
        %v4693 = vld [vmem:[#allocation3] sm:$0xff]
        %v4694 = vld [vmem:[#allocation3 + $0x8] sm:$0xff]
        %v4695 = vld [vmem:[#allocation3 + $0x18] sm:$0xff]
        %v4696 = vld [vmem:[#allocation3 + $0x20] sm:$0xff]
        %v4697 = vld [vmem:[#allocation3 + $0x30] sm:$0xff]
        %v4698 = vld [vmem:[#allocation3 + $0x38] sm:$0xff]
        %v4699 = vld [vmem:[#allocation3 + $0x48] sm:$0xff]
        %v4700 = vld [vmem:[#allocation3 + $0x50] sm:$0xff]
        %v4701 = vld [vmem:[#allocation3 + $0x60] sm:$0xff]
        %v4702 = vld [vmem:[#allocation3 + $0x68] sm:$0xff]
        %v4703 = vld [vmem:[#allocation3 + $0x78] sm:$0xff]
        %v4704 = vld [vmem:[#allocation3 + $0x80] sm:$0xff]
        %v4705 = vld [vmem:[#allocation3 + $0x90] sm:$0xff]
        %v4706 = vld [vmem:[#allocation3 + $0x98] sm:$0xff]
        %v4707 = vld [vmem:[#allocation3 + $0xa8] sm:$0xff]
        %v4708 = vld [vmem:[#allocation3 + $0xb0] sm:$0xff]
        %v4709 = vld [vmem:[#allocation3 + $0xc0] sm:$0xff]
        %v4710 = vld [vmem:[#allocation3 + $0xc8] sm:$0xff]
        %v4711 = vld [vmem:[#allocation3 + $0xd8] sm:$0xff]
        %v4712 = vld [vmem:[#allocation3 + $0xe0] sm:$0xff]
        %v4713 = vld [vmem:[#allocation3 + $0xf0] sm:$0xff]
        %v4714 = vld [vmem:[#allocation3 + $0xf8] sm:$0xff]
        %v4715 = vld [vmem:[#allocation3 + $0x108] sm:$0xff]
        %v4716 = vld [vmem:[#allocation3 + $0x110] sm:$0xff]
        %v4717 = vld [vmem:[#allocation3 + $0x120] sm:$0xff]
        %v4718 = vld [vmem:[#allocation3 + $0x128] sm:$0xff]
        %v4719 = vld [vmem:[#allocation3 + $0x138] sm:$0xff]
        %v4720 = vld [vmem:[#allocation3 + $0x140] sm:$0xff]
        %v4721 = vld [vmem:[#allocation3 + $0x150] sm:$0xff]
        %v4722 = vld [vmem:[#allocation3 + $0x158] sm:$0xff]
        %v4723 = vld [vmem:[#allocation3 + $0x168] sm:$0xff]
        %v4724 = vld [vmem:[#allocation3 + $0x170] sm:$0xff]
        %v4725 = vld [vmem:[#allocation3 + $0x1] sm:$0xff]
        %v4726 = vld [vmem:[#allocation3 + $0x9] sm:$0xff]
        %v4727 = vld [vmem:[#allocation3 + $0x19] sm:$0xff]
        %v4728 = vld [vmem:[#allocation3 + $0x21] sm:$0xff]
        %v4729 = vld [vmem:[#allocation3 + $0x31] sm:$0xff]
        %v4730 = vld [vmem:[#allocation3 + $0x39] sm:$0xff]
        %v4731 = vld [vmem:[#allocation3 + $0x49] sm:$0xff]
        %v4732 = vld [vmem:[#allocation3 + $0x51] sm:$0xff]
        %v4733 = vld [vmem:[#allocation3 + $0x61] sm:$0xff]
        %v4734 = vld [vmem:[#allocation3 + $0x69] sm:$0xff]
        %v4735 = vld [vmem:[#allocation3 + $0x79] sm:$0xff]
        %v4736 = vld [vmem:[#allocation3 + $0x81] sm:$0xff]
        %v4737 = vld [vmem:[#allocation3 + $0x91] sm:$0xff]
        %v4738 = vld [vmem:[#allocation3 + $0x99] sm:$0xff]
        %v4739 = vld [vmem:[#allocation3 + $0xa9] sm:$0xff]
        %v4740 = vld [vmem:[#allocation3 + $0xb1] sm:$0xff]
        %v4741 = vld [vmem:[#allocation3 + $0xc1] sm:$0xff]
        %v4742 = vld [vmem:[#allocation3 + $0xc9] sm:$0xff]
        %v4743 = vld [vmem:[#allocation3 + $0xd9] sm:$0xff]
        %v4744 = vld [vmem:[#allocation3 + $0xe1] sm:$0xff]
        %v4745 = vld [vmem:[#allocation3 + $0xf1] sm:$0xff]
        %v4746 = vld [vmem:[#allocation3 + $0xf9] sm:$0xff]
        %v4747 = vld [vmem:[#allocation3 + $0x109] sm:$0xff]
        %v4748 = vld [vmem:[#allocation3 + $0x111] sm:$0xff]
        %v4749 = vld [vmem:[#allocation3 + $0x121] sm:$0xff]
        %v4750 = vld [vmem:[#allocation3 + $0x129] sm:$0xff]
        %v4751 = vld [vmem:[#allocation3 + $0x139] sm:$0xff]
        %v4752 = vld [vmem:[#allocation3 + $0x141] sm:$0xff]
        %v4753 = vld [vmem:[#allocation3 + $0x151] sm:$0xff]
        %v4754 = vld [vmem:[#allocation3 + $0x159] sm:$0xff]
        %v4755 = vld [vmem:[#allocation3 + $0x169] sm:$0xff]
        %v4756 = vld [vmem:[#allocation3 + $0x171] sm:$0xff]
        %v4757 = vld [vmem:[#allocation3 + $0x2] sm:$0xff]
        %v4758 = vld [vmem:[#allocation3 + $0xa] sm:$0xff]
        %v4759 = vld [vmem:[#allocation3 + $0x1a] sm:$0xff]
        %v4760 = vld [vmem:[#allocation3 + $0x22] sm:$0xff]
        %v4761 = vld [vmem:[#allocation3 + $0x32] sm:$0xff]
        %v4762 = vld [vmem:[#allocation3 + $0x3a] sm:$0xff]
        %v4763 = vld [vmem:[#allocation3 + $0x4a] sm:$0xff]
        %v4764 = vld [vmem:[#allocation3 + $0x52] sm:$0xff]
        %v4765 = vld [vmem:[#allocation3 + $0x62] sm:$0xff]
        %v4766 = vld [vmem:[#allocation3 + $0x6a] sm:$0xff]
        %v4767 = vld [vmem:[#allocation3 + $0x7a] sm:$0xff]
        %v4768 = vld [vmem:[#allocation3 + $0x82] sm:$0xff]
        %v4769 = vld [vmem:[#allocation3 + $0x92] sm:$0xff]
        %v4770 = vld [vmem:[#allocation3 + $0x9a] sm:$0xff]
        %v4771 = vld [vmem:[#allocation3 + $0xaa] sm:$0xff]
        %v4772 = vld [vmem:[#allocation3 + $0xb2] sm:$0xff]
        %v4773 = vld [vmem:[#allocation3 + $0xc2] sm:$0xff]
        %v4774 = vld [vmem:[#allocation3 + $0xca] sm:$0xff]
        %v4775 = vld [vmem:[#allocation3 + $0xda] sm:$0xff]
        %v4776 = vld [vmem:[#allocation3 + $0xe2] sm:$0xff]
        %v4777 = vld [vmem:[#allocation3 + $0xf2] sm:$0xff]
        %v4778 = vld [vmem:[#allocation3 + $0xfa] sm:$0xff]
        %v4779 = vld [vmem:[#allocation3 + $0x10a] sm:$0xff]
        %v4780 = vld [vmem:[#allocation3 + $0x112] sm:$0xff]
        %v4781 = vld [vmem:[#allocation3 + $0x122] sm:$0xff]
        %v4782 = vld [vmem:[#allocation3 + $0x12a] sm:$0xff]
        %v4783 = vld [vmem:[#allocation3 + $0x13a] sm:$0xff]
        %v4784 = vld [vmem:[#allocation3 + $0x142] sm:$0xff]
        %v4785 = vld [vmem:[#allocation3 + $0x152] sm:$0xff]
        %v4786 = vld [vmem:[#allocation3 + $0x15a] sm:$0xff]
        %v4787 = vld [vmem:[#allocation3 + $0x16a] sm:$0xff]
        %v4788 = vld [vmem:[#allocation3 + $0x172] sm:$0xff]
        %v4789 = vld [vmem:[%s4] sm:$0xff]
        %v4790 = vld [vmem:[%s4 + $0x8] sm:$0xff]
        %v4791 = vld [vmem:[%s4 + $0x10] sm:$0xff]
        %v4792 = vld [vmem:[%s4 + $0x18] sm:$0xff]
        %v4793 = vld [vmem:[%s4 + $0x20] sm:$0xff]
        %v4794 = vld [vmem:[%s4 + $0x28] sm:$0xff]
        %v4795 = vld [vmem:[%s4 + $0x30] sm:$0xff]
        %v4796 = vld [vmem:[%s4 + $0x38] sm:$0xff]
        %v4797 = vld [vmem:[%s4 + $0x40] sm:$0xff]
        %v4798 = vld [vmem:[%s4 + $0x48] sm:$0xff]
        %v4799 = vld [vmem:[%s4 + $0x50] sm:$0xff]
        %v4800 = vld [vmem:[%s4 + $0x58] sm:$0xff]
        %v4801 = vld [vmem:[%s4 + $0x60] sm:$0xff]
        %v4802 = vld [vmem:[%s4 + $0x68] sm:$0xff]
        %v4803 = vld [vmem:[%s4 + $0x70] sm:$0xff]
        %v4804 = vld [vmem:[%s4 + $0x78] sm:$0xff]
        %v4805 = vld [vmem:[%s4 + $0x80] sm:$0xff]
        %v4806 = vld [vmem:[%s4 + $0x88] sm:$0xff]
        %v4807 = vld [vmem:[%s4 + $0x90] sm:$0xff]
        %v4808 = vld [vmem:[%s4 + $0x98] sm:$0xff]
        %v4809 = vld [vmem:[%s4 + $0xa0] sm:$0xff]
        %v4810 = vld [vmem:[%s4 + $0xa8] sm:$0xff]
        %v4811 = vld [vmem:[%s4 + $0xb0] sm:$0xff]
        %v4812 = vld [vmem:[%s4 + $0xb8] sm:$0xff]
        %v4813 = vld [vmem:[%s4 + $0xc0] sm:$0xff]
        %v4814 = vld [vmem:[%s4 + $0xc8] sm:$0xff]
        %v4815 = vld [vmem:[%s4 + $0xd0] sm:$0xff]
        %v4816 = vld [vmem:[%s4 + $0xd8] sm:$0xff]
        %v4817 = vld [vmem:[%s4 + $0xe0] sm:$0xff]
        %v4818 = vld [vmem:[%s4 + $0xe8] sm:$0xff]
        %v4819 = vld [vmem:[%s4 + $0xf0] sm:$0xff]
        %v4820 = vld [vmem:[%s4 + $0xf8] sm:$0xff]
        %v4821 = vld [vmem:[%s4 + $0x100] sm:$0xff]
        %v4822 = vld [vmem:[%s4 + $0x108] sm:$0xff]
        %v4823 = vld [vmem:[%s4 + $0x110] sm:$0xff]
        %v4824 = vld [vmem:[%s4 + $0x118] sm:$0xff]
        %v4825 = vld [vmem:[%s4 + $0x120] sm:$0xff]
        %v4826 = vld [vmem:[%s4 + $0x128] sm:$0xff]
        %v4827 = vld [vmem:[%s4 + $0x130] sm:$0xff]
        %v4828 = vld [vmem:[%s4 + $0x138] sm:$0xff]
        %v4829 = vld [vmem:[%s4 + $0x140] sm:$0xff]
        %v4830 = vld [vmem:[%s4 + $0x148] sm:$0xff]
        %v4831 = vld [vmem:[%s4 + $0x150] sm:$0xff]
        %v4832 = vld [vmem:[%s4 + $0x158] sm:$0xff]
        %v4833 = vld [vmem:[%s4 + $0x160] sm:$0xff]
        %v4834 = vld [vmem:[%s4 + $0x168] sm:$0xff]
        %v4835 = vld [vmem:[%s4 + $0x170] sm:$0xff]
        %v4836 = vld [vmem:[%s4 + $0x178] sm:$0xff]
        %4837 = vmatprep.subr.mxu0 0.0
        %4838 = vmatpush1.msra.mxu0 %v4804
        %4839 = vmatprep.subr.mxu0 0.0
        %4840 = vmatpush1.msra.mxu0 %v4803
        %4841 = vmatprep.subr.mxu0 0.0
        %4842 = vmatpush1.msra.mxu0 %v4802
        %4843 = vmatprep.subr.mxu0 0.0
        %4844 = vmatpush1.msra.mxu0 %v4801
        %4845 = vmatprep.subr.mxu0 0.0
        %4846 = vmatpush1.msra.mxu0 %v4800
        %4847 = vmatprep.subr.mxu0 0.0
        %4848 = vmatpush1.msra.mxu0 %v4799
        %4849 = vmatprep.subr.mxu0 0.0
        %4850 = vmatpush1.msra.mxu0 %v4798
        %4851 = vmatprep.subr.mxu0 0.0
        %4852 = vmatpush1.msra.mxu0 %v4797
        %4853 = vmatprep.subr.mxu0 0.0
        %4854 = vmatpush1.msra.mxu0 %v4796
        %4855 = vmatprep.subr.mxu0 0.0
        %4856 = vmatpush1.msra.mxu0 %v4795
        %4857 = vmatprep.subr.mxu0 0.0
        %4858 = vmatpush1.msra.mxu0 %v4794
        %4859 = vmatprep.subr.mxu0 0.0
        %4860 = vmatpush1.msra.mxu0 %v4793
        %4861 = vmatprep.subr.mxu0 0.0
        %4862 = vmatpush1.msra.mxu0 %v4792
        %4863 = vmatprep.subr.mxu0 0.0
        %4864 = vmatpush1.msra.mxu0 %v4791
        %4865 = vmatprep.subr.mxu0 0.0
        %4866 = vmatpush1.msra.mxu0 %v4790
        %4867 = vmatprep.subr.mxu0 0.0
        %4868 = vmatpush1.msra.mxu0 %v4789
        %4869 = vmatprep.subr.mxu0 0.0
        %4870 = vmatpush2.msra.mxu0 %v4820
        %4871 = vmatprep.subr.mxu0 0.0
        %4872 = vmatpush2.msra.mxu0 %v4819
        %4873 = vmatprep.subr.mxu0 0.0
        %4874 = vmatpush2.msra.mxu0 %v4818
        %4875 = vmatprep.subr.mxu0 0.0
        %4876 = vmatpush2.msra.mxu0 %v4817
        %4877 = vmatprep.subr.mxu0 0.0
        %4878 = vmatpush2.msra.mxu0 %v4816
        %4879 = vmatprep.subr.mxu0 0.0
        %4880 = vmatpush2.msra.mxu0 %v4815
        %4881 = vmatprep.subr.mxu0 0.0
        %4882 = vmatpush2.msra.mxu0 %v4814
        %4883 = vmatprep.subr.mxu0 0.0
        %4884 = vmatpush2.msra.mxu0 %v4813
        %4885 = vmatprep.subr.mxu0 0.0
        %4886 = vmatpush2.msra.mxu0 %v4812
        %4887 = vmatprep.subr.mxu0 0.0
        %4888 = vmatpush2.msra.mxu0 %v4811
        %4889 = vmatprep.subr.mxu0 0.0
        %4890 = vmatpush2.msra.mxu0 %v4810
        %4891 = vmatprep.subr.mxu0 0.0
        %4892 = vmatpush2.msra.mxu0 %v4809
        %4893 = vmatprep.subr.mxu0 0.0
        %4894 = vmatpush2.msra.mxu0 %v4808
        %4895 = vmatprep.subr.mxu0 0.0
        %4896 = vmatpush2.msra.mxu0 %v4807
        %4897 = vmatprep.subr.mxu0 0.0
        %4898 = vmatpush2.msra.mxu0 %v4806
        %4899 = vmatprep.subr.mxu0 0.0
        %4900 = vmatpush2.msra.mxu0 %v4805
        %4901 = vmatprep.mubr.f32.mxu0 %v4725
        %4902 = vmatmul.mubr.f32.gmra.mxu0 %v4693
        %v4903 = vpop.f32.mrf.mxu0
        %v4904 = vadd.f32 0.0, %v4903
        %v4905 = vpop.f32.mrf.mxu0
        %4906 = vmatprep.mubr.f32.mxu0 %v4726
        %4907 = vmatmul.mubr.f32.gmra.mxu0 %v4694
        %v4908 = vpop.f32.mrf.mxu0
        %v4909 = vadd.f32 0.0, %v4908
        %v4910 = vpop.f32.mrf.mxu0
        %4911 = vmatprep.mubr.f32.mxu0 %v4727
        %4912 = vmatmul.mubr.f32.gmra.mxu0 %v4695
        %v4913 = vpop.f32.mrf.mxu0
        %v4914 = vadd.f32 0.0, %v4913
        %v4915 = vpop.f32.mrf.mxu0
        %4916 = vmatprep.mubr.f32.mxu0 %v4728
        %4917 = vmatmul.mubr.f32.gmra.mxu0 %v4696
        %v4918 = vpop.f32.mrf.mxu0
        %v4919 = vadd.f32 0.0, %v4918
        %v4920 = vpop.f32.mrf.mxu0
        %4921 = vmatprep.mubr.f32.mxu0 %v4729
        %4922 = vmatmul.mubr.f32.gmra.mxu0 %v4697
        %v4923 = vpop.f32.mrf.mxu0
        %v4924 = vadd.f32 0.0, %v4923
        %v4925 = vpop.f32.mrf.mxu0
        %4926 = vmatprep.mubr.f32.mxu0 %v4730
        %4927 = vmatmul.mubr.f32.gmra.mxu0 %v4698
        %v4928 = vpop.f32.mrf.mxu0
        %v4929 = vadd.f32 0.0, %v4928
        %v4930 = vpop.f32.mrf.mxu0
        %4931 = vmatprep.mubr.f32.mxu0 %v4731
        %4932 = vmatmul.mubr.f32.gmra.mxu0 %v4699
        %v4933 = vpop.f32.mrf.mxu0
        %v4934 = vadd.f32 0.0, %v4933
        %v4935 = vpop.f32.mrf.mxu0
        %4936 = vmatprep.mubr.f32.mxu0 %v4732
        %4937 = vmatmul.mubr.f32.gmra.mxu0 %v4700
        %v4938 = vpop.f32.mrf.mxu0
        %v4939 = vadd.f32 0.0, %v4938
        %v4940 = vpop.f32.mrf.mxu0
        %4941 = vmatprep.mubr.f32.mxu0 %v4733
        %4942 = vmatmul.mubr.f32.gmra.mxu0 %v4701
        %v4943 = vpop.f32.mrf.mxu0
        %v4944 = vadd.f32 0.0, %v4943
        %v4945 = vpop.f32.mrf.mxu0
        %4946 = vmatprep.mubr.f32.mxu0 %v4734
        %4947 = vmatmul.mubr.f32.gmra.mxu0 %v4702
        %v4948 = vpop.f32.mrf.mxu0
        %v4949 = vadd.f32 0.0, %v4948
        %v4950 = vpop.f32.mrf.mxu0
        %4951 = vmatprep.mubr.f32.mxu0 %v4735
        %4952 = vmatmul.mubr.f32.gmra.mxu0 %v4703
        %v4953 = vpop.f32.mrf.mxu0
        %v4954 = vadd.f32 0.0, %v4953
        %v4955 = vpop.f32.mrf.mxu0
        %4956 = vmatprep.mubr.f32.mxu0 %v4736
        %4957 = vmatmul.mubr.f32.gmra.mxu0 %v4704
        %v4958 = vpop.f32.mrf.mxu0
        %v4959 = vadd.f32 0.0, %v4958
        %v4960 = vpop.f32.mrf.mxu0
        %4961 = vmatprep.mubr.f32.mxu0 %v4737
        %4962 = vmatmul.mubr.f32.gmra.mxu0 %v4705
        %v4963 = vpop.f32.mrf.mxu0
        %v4964 = vadd.f32 0.0, %v4963
        %v4965 = vpop.f32.mrf.mxu0
        %4966 = vmatprep.mubr.f32.mxu0 %v4738
        %4967 = vmatmul.mubr.f32.gmra.mxu0 %v4706
        %v4968 = vpop.f32.mrf.mxu0
        %v4969 = vadd.f32 0.0, %v4968
        %v4970 = vpop.f32.mrf.mxu0
        %4971 = vmatprep.mubr.f32.mxu0 %v4739
        %4972 = vmatmul.mubr.f32.gmra.mxu0 %v4707
        %v4973 = vpop.f32.mrf.mxu0
        %v4974 = vadd.f32 0.0, %v4973
        %v4975 = vpop.f32.mrf.mxu0
        %4976 = vmatprep.mubr.f32.mxu0 %v4740
        %4977 = vmatmul.mubr.f32.gmra.mxu0 %v4708
        %v4978 = vpop.f32.mrf.mxu0
        %v4979 = vadd.f32 0.0, %v4978
        %v4980 = vpop.f32.mrf.mxu0
        %4981 = vmatprep.mubr.f32.mxu0 %v4741
        %4982 = vmatmul.mubr.f32.gmra.mxu0 %v4709
        %v4983 = vpop.f32.mrf.mxu0
        %v4984 = vadd.f32 0.0, %v4983
        %v4985 = vpop.f32.mrf.mxu0
        %4986 = vmatprep.mubr.f32.mxu0 %v4742
        %4987 = vmatmul.mubr.f32.gmra.mxu0 %v4710
        %v4988 = vpop.f32.mrf.mxu0
        %v4989 = vadd.f32 0.0, %v4988
        %v4990 = vpop.f32.mrf.mxu0
        %4991 = vmatprep.mubr.f32.mxu0 %v4743
        %4992 = vmatmul.mubr.f32.gmra.mxu0 %v4711
        %v4993 = vpop.f32.mrf.mxu0
        %v4994 = vadd.f32 0.0, %v4993
        %v4995 = vpop.f32.mrf.mxu0
        %4996 = vmatprep.mubr.f32.mxu0 %v4744
        %4997 = vmatmul.mubr.f32.gmra.mxu0 %v4712
        %v4998 = vpop.f32.mrf.mxu0
        %v4999 = vadd.f32 0.0, %v4998
        %v5000 = vpop.f32.mrf.mxu0
        %5001 = vmatprep.mubr.f32.mxu0 %v4745
        %5002 = vmatmul.mubr.f32.gmra.mxu0 %v4713
        %v5003 = vpop.f32.mrf.mxu0
        %v5004 = vadd.f32 0.0, %v5003
        %v5005 = vpop.f32.mrf.mxu0
        %5006 = vmatprep.mubr.f32.mxu0 %v4746
        %5007 = vmatmul.mubr.f32.gmra.mxu0 %v4714
        %v5008 = vpop.f32.mrf.mxu0
        %v5009 = vadd.f32 0.0, %v5008
        %v5010 = vpop.f32.mrf.mxu0
        %5011 = vmatprep.mubr.f32.mxu0 %v4747
        %5012 = vmatmul.mubr.f32.gmra.mxu0 %v4715
        %v5013 = vpop.f32.mrf.mxu0
        %v5014 = vadd.f32 0.0, %v5013
        %v5015 = vpop.f32.mrf.mxu0
        %5016 = vmatprep.mubr.f32.mxu0 %v4748
        %5017 = vmatmul.mubr.f32.gmra.mxu0 %v4716
        %v5018 = vpop.f32.mrf.mxu0
        %v5019 = vadd.f32 0.0, %v5018
        %v5020 = vpop.f32.mrf.mxu0
        %5021 = vmatprep.mubr.f32.mxu0 %v4749
        %5022 = vmatmul.mubr.f32.gmra.mxu0 %v4717
        %v5023 = vpop.f32.mrf.mxu0
        %v5024 = vadd.f32 0.0, %v5023
        %v5025 = vpop.f32.mrf.mxu0
        %5026 = vmatprep.mubr.f32.mxu0 %v4750
        %5027 = vmatmul.mubr.f32.gmra.mxu0 %v4718
        %v5028 = vpop.f32.mrf.mxu0
        %v5029 = vadd.f32 0.0, %v5028
        %v5030 = vpop.f32.mrf.mxu0
        %5031 = vmatprep.mubr.f32.mxu0 %v4751
        %5032 = vmatmul.mubr.f32.gmra.mxu0 %v4719
        %v5033 = vpop.f32.mrf.mxu0
        %v5034 = vadd.f32 0.0, %v5033
        %v5035 = vpop.f32.mrf.mxu0
        %5036 = vmatprep.mubr.f32.mxu0 %v4752
        %5037 = vmatmul.mubr.f32.gmra.mxu0 %v4720
        %v5038 = vpop.f32.mrf.mxu0
        %v5039 = vadd.f32 0.0, %v5038
        %v5040 = vpop.f32.mrf.mxu0
        %5041 = vmatprep.mubr.f32.mxu0 %v4753
        %5042 = vmatmul.mubr.f32.gmra.mxu0 %v4721
        %v5043 = vpop.f32.mrf.mxu0
        %v5044 = vadd.f32 0.0, %v5043
        %v5045 = vpop.f32.mrf.mxu0
        %5046 = vmatprep.mubr.f32.mxu0 %v4754
        %5047 = vmatmul.mubr.f32.gmra.mxu0 %v4722
        %v5048 = vpop.f32.mrf.mxu0
        %v5049 = vadd.f32 0.0, %v5048
        %v5050 = vpop.f32.mrf.mxu0
        %5051 = vmatprep.mubr.f32.mxu0 %v4755
        %5052 = vmatmul.mubr.f32.gmra.mxu0 %v4723
        %v5053 = vpop.f32.mrf.mxu0
        %v5054 = vadd.f32 0.0, %v5053
        %v5055 = vpop.f32.mrf.mxu0
        %5056 = vmatprep.mubr.f32.mxu0 %v4756
        %5057 = vmatmul.mubr.f32.gmra.mxu0 %v4724
        %v5058 = vpop.f32.mrf.mxu0
        %v5059 = vadd.f32 0.0, %v5058
        %v5060 = vpop.f32.mrf.mxu0
        %5061 = vdwg.mxu0
        %5062 = vmatprep.subr.mxu0 0.0
        %5063 = vmatpush1.msra.mxu0 %v4836
        %5064 = vmatprep.subr.mxu0 0.0
        %5065 = vmatpush1.msra.mxu0 %v4835
        %5066 = vmatprep.subr.mxu0 0.0
        %5067 = vmatpush1.msra.mxu0 %v4834
        %5068 = vmatprep.subr.mxu0 0.0
        %5069 = vmatpush1.msra.mxu0 %v4833
        %5070 = vmatprep.subr.mxu0 0.0
        %5071 = vmatpush1.msra.mxu0 %v4832
        %5072 = vmatprep.subr.mxu0 0.0
        %5073 = vmatpush1.msra.mxu0 %v4831
        %5074 = vmatprep.subr.mxu0 0.0
        %5075 = vmatpush1.msra.mxu0 %v4830
        %5076 = vmatprep.subr.mxu0 0.0
        %5077 = vmatpush1.msra.mxu0 %v4829
        %5078 = vmatprep.subr.mxu0 0.0
        %5079 = vmatpush1.msra.mxu0 %v4828
        %5080 = vmatprep.subr.mxu0 0.0
        %5081 = vmatpush1.msra.mxu0 %v4827
        %5082 = vmatprep.subr.mxu0 0.0
        %5083 = vmatpush1.msra.mxu0 %v4826
        %5084 = vmatprep.subr.mxu0 0.0
        %5085 = vmatpush1.msra.mxu0 %v4825
        %5086 = vmatprep.subr.mxu0 0.0
        %5087 = vmatpush1.msra.mxu0 %v4824
        %5088 = vmatprep.subr.mxu0 0.0
        %5089 = vmatpush1.msra.mxu0 %v4823
        %5090 = vmatprep.subr.mxu0 0.0
        %5091 = vmatpush1.msra.mxu0 %v4822
        %5092 = vmatprep.subr.mxu0 0.0
        %5093 = vmatpush1.msra.mxu0 %v4821
        %5094 = vmatprep.subr.mxu0 0.0
        %5095 = vmatpush2.msra.mxu0 0.0
        %5096 = vmatprep.subr.mxu0 0.0
        %5097 = vmatpush2.msra.mxu0 0.0
        %5098 = vmatprep.subr.mxu0 0.0
        %5099 = vmatpush2.msra.mxu0 0.0
        %5100 = vmatprep.subr.mxu0 0.0
        %5101 = vmatpush2.msra.mxu0 0.0
        %5102 = vmatprep.subr.mxu0 0.0
        %5103 = vmatpush2.msra.mxu0 0.0
        %5104 = vmatprep.subr.mxu0 0.0
        %5105 = vmatpush2.msra.mxu0 0.0
        %5106 = vmatprep.subr.mxu0 0.0
        %5107 = vmatpush2.msra.mxu0 0.0
        %5108 = vmatprep.subr.mxu0 0.0
        %5109 = vmatpush2.msra.mxu0 0.0
        %5110 = vmatprep.subr.mxu0 0.0
        %5111 = vmatpush2.msra.mxu0 0.0
        %5112 = vmatprep.subr.mxu0 0.0
        %5113 = vmatpush2.msra.mxu0 0.0
        %5114 = vmatprep.subr.mxu0 0.0
        %5115 = vmatpush2.msra.mxu0 0.0
        %5116 = vmatprep.subr.mxu0 0.0
        %5117 = vmatpush2.msra.mxu0 0.0
        %5118 = vmatprep.subr.mxu0 0.0
        %5119 = vmatpush2.msra.mxu0 0.0
        %5120 = vmatprep.subr.mxu0 0.0
        %5121 = vmatpush2.msra.mxu0 0.0
        %5122 = vmatprep.subr.mxu0 0.0
        %5123 = vmatpush2.msra.mxu0 0.0
        %5124 = vmatprep.subr.mxu0 0.0
        %5125 = vmatpush2.msra.mxu0 0.0
        %5126 = vmatprep.mubr.f32.mxu0 0.0
        %5127 = vmatmul.mubr.f32.gmra.mxu0 %v4757
        %v5128 = vpop.f32.mrf.mxu0
        %v5129 = vadd.f32 %v4904, %v5128
        %v5130 = vpop.f32.mrf.mxu0
        %5131 = vmatprep.mubr.f32.mxu0 0.0
        %5132 = vmatmul.mubr.f32.gmra.mxu0 %v4758
        %v5133 = vpop.f32.mrf.mxu0
        %v5134 = vadd.f32 %v4909, %v5133
        %v5135 = vpop.f32.mrf.mxu0
        %5136 = vmatprep.mubr.f32.mxu0 0.0
        %5137 = vmatmul.mubr.f32.gmra.mxu0 %v4759
        %v5138 = vpop.f32.mrf.mxu0
        %v5139 = vadd.f32 %v4914, %v5138
        %v5140 = vpop.f32.mrf.mxu0
        %5141 = vmatprep.mubr.f32.mxu0 0.0
        %5142 = vmatmul.mubr.f32.gmra.mxu0 %v4760
        %v5143 = vpop.f32.mrf.mxu0
        %v5144 = vadd.f32 %v4919, %v5143
        %v5145 = vpop.f32.mrf.mxu0
        %5146 = vmatprep.mubr.f32.mxu0 0.0
        %5147 = vmatmul.mubr.f32.gmra.mxu0 %v4761
        %v5148 = vpop.f32.mrf.mxu0
        %v5149 = vadd.f32 %v4924, %v5148
        %v5150 = vpop.f32.mrf.mxu0
        %5151 = vmatprep.mubr.f32.mxu0 0.0
        %5152 = vmatmul.mubr.f32.gmra.mxu0 %v4762
        %v5153 = vpop.f32.mrf.mxu0
        %v5154 = vadd.f32 %v4929, %v5153
        %v5155 = vpop.f32.mrf.mxu0
        %5156 = vmatprep.mubr.f32.mxu0 0.0
        %5157 = vmatmul.mubr.f32.gmra.mxu0 %v4763
        %v5158 = vpop.f32.mrf.mxu0
        %v5159 = vadd.f32 %v4934, %v5158
        %v5160 = vpop.f32.mrf.mxu0
        %5161 = vmatprep.mubr.f32.mxu0 0.0
        %5162 = vmatmul.mubr.f32.gmra.mxu0 %v4764
        %v5163 = vpop.f32.mrf.mxu0
        %v5164 = vadd.f32 %v4939, %v5163
        %v5165 = vpop.f32.mrf.mxu0
        %5166 = vmatprep.mubr.f32.mxu0 0.0
        %5167 = vmatmul.mubr.f32.gmra.mxu0 %v4765
        %v5168 = vpop.f32.mrf.mxu0
        %v5169 = vadd.f32 %v4944, %v5168
        %v5170 = vpop.f32.mrf.mxu0
        %5171 = vmatprep.mubr.f32.mxu0 0.0
        %5172 = vmatmul.mubr.f32.gmra.mxu0 %v4766
        %v5173 = vpop.f32.mrf.mxu0
        %v5174 = vadd.f32 %v4949, %v5173
        %v5175 = vpop.f32.mrf.mxu0
        %5176 = vmatprep.mubr.f32.mxu0 0.0
        %5177 = vmatmul.mubr.f32.gmra.mxu0 %v4767
        %v5178 = vpop.f32.mrf.mxu0
        %v5179 = vadd.f32 %v4954, %v5178
        %v5180 = vpop.f32.mrf.mxu0
        %5181 = vmatprep.mubr.f32.mxu0 0.0
        %5182 = vmatmul.mubr.f32.gmra.mxu0 %v4768
        %v5183 = vpop.f32.mrf.mxu0
        %v5184 = vadd.f32 %v4959, %v5183
        %v5185 = vpop.f32.mrf.mxu0
        %5186 = vmatprep.mubr.f32.mxu0 0.0
        %5187 = vmatmul.mubr.f32.gmra.mxu0 %v4769
        %v5188 = vpop.f32.mrf.mxu0
        %v5189 = vadd.f32 %v4964, %v5188
        %v5190 = vpop.f32.mrf.mxu0
        %5191 = vmatprep.mubr.f32.mxu0 0.0
        %5192 = vmatmul.mubr.f32.gmra.mxu0 %v4770
        %v5193 = vpop.f32.mrf.mxu0
        %v5194 = vadd.f32 %v4969, %v5193
        %v5195 = vpop.f32.mrf.mxu0
        %5196 = vmatprep.mubr.f32.mxu0 0.0
        %5197 = vmatmul.mubr.f32.gmra.mxu0 %v4771
        %v5198 = vpop.f32.mrf.mxu0
        %v5199 = vadd.f32 %v4974, %v5198
        %v5200 = vpop.f32.mrf.mxu0
        %5201 = vmatprep.mubr.f32.mxu0 0.0
        %5202 = vmatmul.mubr.f32.gmra.mxu0 %v4772
        %v5203 = vpop.f32.mrf.mxu0
        %v5204 = vadd.f32 %v4979, %v5203
        %v5205 = vpop.f32.mrf.mxu0
        %5206 = vmatprep.mubr.f32.mxu0 0.0
        %5207 = vmatmul.mubr.f32.gmra.mxu0 %v4773
        %v5208 = vpop.f32.mrf.mxu0
        %v5209 = vadd.f32 %v4984, %v5208
        %v5210 = vpop.f32.mrf.mxu0
        %5211 = vmatprep.mubr.f32.mxu0 0.0
        %5212 = vmatmul.mubr.f32.gmra.mxu0 %v4774
        %v5213 = vpop.f32.mrf.mxu0
        %v5214 = vadd.f32 %v4989, %v5213
        %v5215 = vpop.f32.mrf.mxu0
        %5216 = vmatprep.mubr.f32.mxu0 0.0
        %5217 = vmatmul.mubr.f32.gmra.mxu0 %v4775
        %v5218 = vpop.f32.mrf.mxu0
        %v5219 = vadd.f32 %v4994, %v5218
        %v5220 = vpop.f32.mrf.mxu0
        %5221 = vmatprep.mubr.f32.mxu0 0.0
        %5222 = vmatmul.mubr.f32.gmra.mxu0 %v4776
        %v5223 = vpop.f32.mrf.mxu0
        %v5224 = vadd.f32 %v4999, %v5223
        %v5225 = vpop.f32.mrf.mxu0
        %5226 = vmatprep.mubr.f32.mxu0 0.0
        %5227 = vmatmul.mubr.f32.gmra.mxu0 %v4777
        %v5228 = vpop.f32.mrf.mxu0
        %v5229 = vadd.f32 %v5004, %v5228
        %v5230 = vpop.f32.mrf.mxu0
        %5231 = vmatprep.mubr.f32.mxu0 0.0
        %5232 = vmatmul.mubr.f32.gmra.mxu0 %v4778
        %v5233 = vpop.f32.mrf.mxu0
        %v5234 = vadd.f32 %v5009, %v5233
        %v5235 = vpop.f32.mrf.mxu0
        %5236 = vmatprep.mubr.f32.mxu0 0.0
        %5237 = vmatmul.mubr.f32.gmra.mxu0 %v4779
        %v5238 = vpop.f32.mrf.mxu0
        %v5239 = vadd.f32 %v5014, %v5238
        %v5240 = vpop.f32.mrf.mxu0
        %5241 = vmatprep.mubr.f32.mxu0 0.0
        %5242 = vmatmul.mubr.f32.gmra.mxu0 %v4780
        %v5243 = vpop.f32.mrf.mxu0
        %v5244 = vadd.f32 %v5019, %v5243
        %v5245 = vpop.f32.mrf.mxu0
        %5246 = vmatprep.mubr.f32.mxu0 0.0
        %5247 = vmatmul.mubr.f32.gmra.mxu0 %v4781
        %v5248 = vpop.f32.mrf.mxu0
        %v5249 = vadd.f32 %v5024, %v5248
        %v5250 = vpop.f32.mrf.mxu0
        %5251 = vmatprep.mubr.f32.mxu0 0.0
        %5252 = vmatmul.mubr.f32.gmra.mxu0 %v4782
        %v5253 = vpop.f32.mrf.mxu0
        %v5254 = vadd.f32 %v5029, %v5253
        %v5255 = vpop.f32.mrf.mxu0
        %5256 = vmatprep.mubr.f32.mxu0 0.0
        %5257 = vmatmul.mubr.f32.gmra.mxu0 %v4783
        %v5258 = vpop.f32.mrf.mxu0
        %v5259 = vadd.f32 %v5034, %v5258
        %v5260 = vpop.f32.mrf.mxu0
        %5261 = vmatprep.mubr.f32.mxu0 0.0
        %5262 = vmatmul.mubr.f32.gmra.mxu0 %v4784
        %v5263 = vpop.f32.mrf.mxu0
        %v5264 = vadd.f32 %v5039, %v5263
        %v5265 = vpop.f32.mrf.mxu0
        %5266 = vmatprep.mubr.f32.mxu0 0.0
        %5267 = vmatmul.mubr.f32.gmra.mxu0 %v4785
        %v5268 = vpop.f32.mrf.mxu0
        %v5269 = vadd.f32 %v5044, %v5268
        %v5270 = vpop.f32.mrf.mxu0
        %5271 = vmatprep.mubr.f32.mxu0 0.0
        %5272 = vmatmul.mubr.f32.gmra.mxu0 %v4786
        %v5273 = vpop.f32.mrf.mxu0
        %v5274 = vadd.f32 %v5049, %v5273
        %v5275 = vpop.f32.mrf.mxu0
        %5276 = vmatprep.mubr.f32.mxu0 0.0
        %5277 = vmatmul.mubr.f32.gmra.mxu0 %v4787
        %v5278 = vpop.f32.mrf.mxu0
        %v5279 = vadd.f32 %v5054, %v5278
        %v5280 = vpop.f32.mrf.mxu0
        %5281 = vmatprep.mubr.f32.mxu0 0.0
        %5282 = vmatmul.mubr.f32.gmra.mxu0 %v4788
        %v5283 = vpop.f32.mrf.mxu0
        %v5284 = vadd.f32 %v5059, %v5283
        %v5285 = vpop.f32.mrf.mxu0
        %5286 = vdwg.mxu0
        %5287 = vst [vmem:[#allocation5] sm:$0xff] %v5129
        %5288 = vst [vmem:[#allocation5 + $0x8] sm:$0xff] %v5134
        %5289 = vst [vmem:[#allocation5 + $0x10] sm:$0xff] %v5139
        %5290 = vst [vmem:[#allocation5 + $0x18] sm:$0xff] %v5144
        %5291 = vst [vmem:[#allocation5 + $0x20] sm:$0xff] %v5149
        %5292 = vst [vmem:[#allocation5 + $0x28] sm:$0xff] %v5154
        %5293 = vst [vmem:[#allocation5 + $0x30] sm:$0xff] %v5159
        %5294 = vst [vmem:[#allocation5 + $0x38] sm:$0xff] %v5164
        %5295 = vst [vmem:[#allocation5 + $0x40] sm:$0xff] %v5169
        %5296 = vst [vmem:[#allocation5 + $0x48] sm:$0xff] %v5174
        %5297 = vst [vmem:[#allocation5 + $0x50] sm:$0xff] %v5179
        %5298 = vst [vmem:[#allocation5 + $0x58] sm:$0xff] %v5184
        %5299 = vst [vmem:[#allocation5 + $0x60] sm:$0xff] %v5189
        %5300 = vst [vmem:[#allocation5 + $0x68] sm:$0xff] %v5194
        %5301 = vst [vmem:[#allocation5 + $0x70] sm:$0xff] %v5199
        %5302 = vst [vmem:[#allocation5 + $0x78] sm:$0xff] %v5204
        %5303 = vst [vmem:[#allocation5 + $0x80] sm:$0xff] %v5209
        %5304 = vst [vmem:[#allocation5 + $0x88] sm:$0xff] %v5214
        %5305 = vst [vmem:[#allocation5 + $0x90] sm:$0xff] %v5219
        %5306 = vst [vmem:[#allocation5 + $0x98] sm:$0xff] %v5224
        %5307 = vst [vmem:[#allocation5 + $0xa0] sm:$0xff] %v5229
        %5308 = vst [vmem:[#allocation5 + $0xa8] sm:$0xff] %v5234
        %5309 = vst [vmem:[#allocation5 + $0xb0] sm:$0xff] %v5239
        %5310 = vst [vmem:[#allocation5 + $0xb8] sm:$0xff] %v5244
        %5311 = vst [vmem:[#allocation5 + $0xc0] sm:$0xff] %v5249
        %5312 = vst [vmem:[#allocation5 + $0xc8] sm:$0xff] %v5254
        %5313 = vst [vmem:[#allocation5 + $0xd0] sm:$0xff] %v5259
        %5314 = vst [vmem:[#allocation5 + $0xd8] sm:$0xff] %v5264
        %5315 = vst [vmem:[#allocation5 + $0xe0] sm:$0xff] %v5269
        %5316 = vst [vmem:[#allocation5 + $0xe8] sm:$0xff] %v5274
        %5317 = vst [vmem:[#allocation5 + $0xf0] sm:$0xff] %v5279
        %5318 = vst [vmem:[#allocation5 + $0xf8] sm:$0xff] %v5284
        %v5319 = vld [vmem:[%s4660] sm:$0xff]
        %v5320 = vld [vmem:[%s4660 + $0x8] sm:$0xff]
        %v5321 = vld [vmem:[%s4660 + $0x18] sm:$0xff]
        %v5322 = vld [vmem:[%s4660 + $0x20] sm:$0xff]
        %v5323 = vld [vmem:[%s4660 + $0x30] sm:$0xff]
        %v5324 = vld [vmem:[%s4660 + $0x38] sm:$0xff]
        %v5325 = vld [vmem:[%s4660 + $0x48] sm:$0xff]
        %v5326 = vld [vmem:[%s4660 + $0x50] sm:$0xff]
        %v5327 = vld [vmem:[%s4660 + $0x60] sm:$0xff]
        %v5328 = vld [vmem:[%s4660 + $0x68] sm:$0xff]
        %v5329 = vld [vmem:[%s4660 + $0x78] sm:$0xff]
        %v5330 = vld [vmem:[%s4660 + $0x80] sm:$0xff]
        %v5331 = vld [vmem:[%s4660 + $0x90] sm:$0xff]
        %v5332 = vld [vmem:[%s4660 + $0x98] sm:$0xff]
        %v5333 = vld [vmem:[%s4660 + $0xa8] sm:$0xff]
        %v5334 = vld [vmem:[%s4660 + $0xb0] sm:$0xff]
        %v5335 = vld [vmem:[%s4660 + $0xc0] sm:$0xff]
        %v5336 = vld [vmem:[%s4660 + $0xc8] sm:$0xff]
        %v5337 = vld [vmem:[%s4660 + $0xd8] sm:$0xff]
        %v5338 = vld [vmem:[%s4660 + $0xe0] sm:$0xff]
        %v5339 = vld [vmem:[%s4660 + $0xf0] sm:$0xff]
        %v5340 = vld [vmem:[%s4660 + $0xf8] sm:$0xff]
        %v5341 = vld [vmem:[%s4660 + $0x108] sm:$0xff]
        %v5342 = vld [vmem:[%s4660 + $0x110] sm:$0xff]
        %v5343 = vld [vmem:[%s4660 + $0x120] sm:$0xff]
        %v5344 = vld [vmem:[%s4660 + $0x128] sm:$0xff]
        %v5345 = vld [vmem:[%s4660 + $0x138] sm:$0xff]
        %v5346 = vld [vmem:[%s4660 + $0x140] sm:$0xff]
        %v5347 = vld [vmem:[%s4660 + $0x150] sm:$0xff]
        %v5348 = vld [vmem:[%s4660 + $0x158] sm:$0xff]
        %v5349 = vld [vmem:[%s4660 + $0x168] sm:$0xff]
        %v5350 = vld [vmem:[%s4660 + $0x170] sm:$0xff]
        %v5351 = vld [vmem:[%s4660 + $0x1] sm:$0xff]
        %v5352 = vld [vmem:[%s4660 + $0x9] sm:$0xff]
        %v5353 = vld [vmem:[%s4660 + $0x19] sm:$0xff]
        %v5354 = vld [vmem:[%s4660 + $0x21] sm:$0xff]
        %v5355 = vld [vmem:[%s4660 + $0x31] sm:$0xff]
        %v5356 = vld [vmem:[%s4660 + $0x39] sm:$0xff]
        %v5357 = vld [vmem:[%s4660 + $0x49] sm:$0xff]
        %v5358 = vld [vmem:[%s4660 + $0x51] sm:$0xff]
        %v5359 = vld [vmem:[%s4660 + $0x61] sm:$0xff]
        %v5360 = vld [vmem:[%s4660 + $0x69] sm:$0xff]
        %v5361 = vld [vmem:[%s4660 + $0x79] sm:$0xff]
        %v5362 = vld [vmem:[%s4660 + $0x81] sm:$0xff]
        %v5363 = vld [vmem:[%s4660 + $0x91] sm:$0xff]
        %v5364 = vld [vmem:[%s4660 + $0x99] sm:$0xff]
        %v5365 = vld [vmem:[%s4660 + $0xa9] sm:$0xff]
        %v5366 = vld [vmem:[%s4660 + $0xb1] sm:$0xff]
        %v5367 = vld [vmem:[%s4660 + $0xc1] sm:$0xff]
        %v5368 = vld [vmem:[%s4660 + $0xc9] sm:$0xff]
        %v5369 = vld [vmem:[%s4660 + $0xd9] sm:$0xff]
        %v5370 = vld [vmem:[%s4660 + $0xe1] sm:$0xff]
        %v5371 = vld [vmem:[%s4660 + $0xf1] sm:$0xff]
        %v5372 = vld [vmem:[%s4660 + $0xf9] sm:$0xff]
        %v5373 = vld [vmem:[%s4660 + $0x109] sm:$0xff]
        %v5374 = vld [vmem:[%s4660 + $0x111] sm:$0xff]
        %v5375 = vld [vmem:[%s4660 + $0x121] sm:$0xff]
        %v5376 = vld [vmem:[%s4660 + $0x129] sm:$0xff]
        %v5377 = vld [vmem:[%s4660 + $0x139] sm:$0xff]
        %v5378 = vld [vmem:[%s4660 + $0x141] sm:$0xff]
        %v5379 = vld [vmem:[%s4660 + $0x151] sm:$0xff]
        %v5380 = vld [vmem:[%s4660 + $0x159] sm:$0xff]
        %v5381 = vld [vmem:[%s4660 + $0x169] sm:$0xff]
        %v5382 = vld [vmem:[%s4660 + $0x171] sm:$0xff]
        %v5383 = vld [vmem:[%s4660 + $0x2] sm:$0xff]
        %v5384 = vld [vmem:[%s4660 + $0xa] sm:$0xff]
        %v5385 = vld [vmem:[%s4660 + $0x1a] sm:$0xff]
        %v5386 = vld [vmem:[%s4660 + $0x22] sm:$0xff]
        %v5387 = vld [vmem:[%s4660 + $0x32] sm:$0xff]
        %v5388 = vld [vmem:[%s4660 + $0x3a] sm:$0xff]
        %v5389 = vld [vmem:[%s4660 + $0x4a] sm:$0xff]
        %v5390 = vld [vmem:[%s4660 + $0x52] sm:$0xff]
        %v5391 = vld [vmem:[%s4660 + $0x62] sm:$0xff]
        %v5392 = vld [vmem:[%s4660 + $0x6a] sm:$0xff]
        %v5393 = vld [vmem:[%s4660 + $0x7a] sm:$0xff]
        %v5394 = vld [vmem:[%s4660 + $0x82] sm:$0xff]
        %v5395 = vld [vmem:[%s4660 + $0x92] sm:$0xff]
        %v5396 = vld [vmem:[%s4660 + $0x9a] sm:$0xff]
        %v5397 = vld [vmem:[%s4660 + $0xaa] sm:$0xff]
        %v5398 = vld [vmem:[%s4660 + $0xb2] sm:$0xff]
        %v5399 = vld [vmem:[%s4660 + $0xc2] sm:$0xff]
        %v5400 = vld [vmem:[%s4660 + $0xca] sm:$0xff]
        %v5401 = vld [vmem:[%s4660 + $0xda] sm:$0xff]
        %v5402 = vld [vmem:[%s4660 + $0xe2] sm:$0xff]
        %v5403 = vld [vmem:[%s4660 + $0xf2] sm:$0xff]
        %v5404 = vld [vmem:[%s4660 + $0xfa] sm:$0xff]
        %v5405 = vld [vmem:[%s4660 + $0x10a] sm:$0xff]
        %v5406 = vld [vmem:[%s4660 + $0x112] sm:$0xff]
        %v5407 = vld [vmem:[%s4660 + $0x122] sm:$0xff]
        %v5408 = vld [vmem:[%s4660 + $0x12a] sm:$0xff]
        %v5409 = vld [vmem:[%s4660 + $0x13a] sm:$0xff]
        %v5410 = vld [vmem:[%s4660 + $0x142] sm:$0xff]
        %v5411 = vld [vmem:[%s4660 + $0x152] sm:$0xff]
        %v5412 = vld [vmem:[%s4660 + $0x15a] sm:$0xff]
        %v5413 = vld [vmem:[%s4660 + $0x16a] sm:$0xff]
        %v5414 = vld [vmem:[%s4660 + $0x172] sm:$0xff]
        %s5415 = scalar_lea.vmem %s4, 384
        %v5416 = vld [vmem:[%s5415] sm:$0xff]
        %v5417 = vld [vmem:[%s5415 + $0x8] sm:$0xff]
        %v5418 = vld [vmem:[%s5415 + $0x10] sm:$0xff]
        %v5419 = vld [vmem:[%s5415 + $0x18] sm:$0xff]
        %v5420 = vld [vmem:[%s5415 + $0x20] sm:$0xff]
        %v5421 = vld [vmem:[%s5415 + $0x28] sm:$0xff]
        %v5422 = vld [vmem:[%s5415 + $0x30] sm:$0xff]
        %v5423 = vld [vmem:[%s5415 + $0x38] sm:$0xff]
        %v5424 = vld [vmem:[%s5415 + $0x40] sm:$0xff]
        %v5425 = vld [vmem:[%s5415 + $0x48] sm:$0xff]
        %v5426 = vld [vmem:[%s5415 + $0x50] sm:$0xff]
        %v5427 = vld [vmem:[%s5415 + $0x58] sm:$0xff]
        %v5428 = vld [vmem:[%s5415 + $0x60] sm:$0xff]
        %v5429 = vld [vmem:[%s5415 + $0x68] sm:$0xff]
        %v5430 = vld [vmem:[%s5415 + $0x70] sm:$0xff]
        %v5431 = vld [vmem:[%s5415 + $0x78] sm:$0xff]
        %v5432 = vld [vmem:[%s5415 + $0x80] sm:$0xff]
        %v5433 = vld [vmem:[%s5415 + $0x88] sm:$0xff]
        %v5434 = vld [vmem:[%s5415 + $0x90] sm:$0xff]
        %v5435 = vld [vmem:[%s5415 + $0x98] sm:$0xff]
        %v5436 = vld [vmem:[%s5415 + $0xa0] sm:$0xff]
        %v5437 = vld [vmem:[%s5415 + $0xa8] sm:$0xff]
        %v5438 = vld [vmem:[%s5415 + $0xb0] sm:$0xff]
        %v5439 = vld [vmem:[%s5415 + $0xb8] sm:$0xff]
        %v5440 = vld [vmem:[%s5415 + $0xc0] sm:$0xff]
        %v5441 = vld [vmem:[%s5415 + $0xc8] sm:$0xff]
        %v5442 = vld [vmem:[%s5415 + $0xd0] sm:$0xff]
        %v5443 = vld [vmem:[%s5415 + $0xd8] sm:$0xff]
        %v5444 = vld [vmem:[%s5415 + $0xe0] sm:$0xff]
        %v5445 = vld [vmem:[%s5415 + $0xe8] sm:$0xff]
        %v5446 = vld [vmem:[%s5415 + $0xf0] sm:$0xff]
        %v5447 = vld [vmem:[%s5415 + $0xf8] sm:$0xff]
        %v5448 = vld [vmem:[%s5415 + $0x100] sm:$0xff]
        %v5449 = vld [vmem:[%s5415 + $0x108] sm:$0xff]
        %v5450 = vld [vmem:[%s5415 + $0x110] sm:$0xff]
        %v5451 = vld [vmem:[%s5415 + $0x118] sm:$0xff]
        %v5452 = vld [vmem:[%s5415 + $0x120] sm:$0xff]
        %v5453 = vld [vmem:[%s5415 + $0x128] sm:$0xff]
        %v5454 = vld [vmem:[%s5415 + $0x130] sm:$0xff]
        %v5455 = vld [vmem:[%s5415 + $0x138] sm:$0xff]
        %v5456 = vld [vmem:[%s5415 + $0x140] sm:$0xff]
        %v5457 = vld [vmem:[%s5415 + $0x148] sm:$0xff]
        %v5458 = vld [vmem:[%s5415 + $0x150] sm:$0xff]
        %v5459 = vld [vmem:[%s5415 + $0x158] sm:$0xff]
        %v5460 = vld [vmem:[%s5415 + $0x160] sm:$0xff]
        %v5461 = vld [vmem:[%s5415 + $0x168] sm:$0xff]
        %v5462 = vld [vmem:[%s5415 + $0x170] sm:$0xff]
        %v5463 = vld [vmem:[%s5415 + $0x178] sm:$0xff]
        %5464 = vmatprep.subr.mxu0 0.0
        %5465 = vmatpush1.msra.mxu0 %v5431
        %5466 = vmatprep.subr.mxu0 0.0
        %5467 = vmatpush1.msra.mxu0 %v5430
        %5468 = vmatprep.subr.mxu0 0.0
        %5469 = vmatpush1.msra.mxu0 %v5429
        %5470 = vmatprep.subr.mxu0 0.0
        %5471 = vmatpush1.msra.mxu0 %v5428
        %5472 = vmatprep.subr.mxu0 0.0
        %5473 = vmatpush1.msra.mxu0 %v5427
        %5474 = vmatprep.subr.mxu0 0.0
        %5475 = vmatpush1.msra.mxu0 %v5426
        %5476 = vmatprep.subr.mxu0 0.0
        %5477 = vmatpush1.msra.mxu0 %v5425
        %5478 = vmatprep.subr.mxu0 0.0
        %5479 = vmatpush1.msra.mxu0 %v5424
        %5480 = vmatprep.subr.mxu0 0.0
        %5481 = vmatpush1.msra.mxu0 %v5423
        %5482 = vmatprep.subr.mxu0 0.0
        %5483 = vmatpush1.msra.mxu0 %v5422
        %5484 = vmatprep.subr.mxu0 0.0
        %5485 = vmatpush1.msra.mxu0 %v5421
        %5486 = vmatprep.subr.mxu0 0.0
        %5487 = vmatpush1.msra.mxu0 %v5420
        %5488 = vmatprep.subr.mxu0 0.0
        %5489 = vmatpush1.msra.mxu0 %v5419
        %5490 = vmatprep.subr.mxu0 0.0
        %5491 = vmatpush1.msra.mxu0 %v5418
        %5492 = vmatprep.subr.mxu0 0.0
        %5493 = vmatpush1.msra.mxu0 %v5417
        %5494 = vmatprep.subr.mxu0 0.0
        %5495 = vmatpush1.msra.mxu0 %v5416
        %5496 = vmatprep.subr.mxu0 0.0
        %5497 = vmatpush2.msra.mxu0 %v5447
        %5498 = vmatprep.subr.mxu0 0.0
        %5499 = vmatpush2.msra.mxu0 %v5446
        %5500 = vmatprep.subr.mxu0 0.0
        %5501 = vmatpush2.msra.mxu0 %v5445
        %5502 = vmatprep.subr.mxu0 0.0
        %5503 = vmatpush2.msra.mxu0 %v5444
        %5504 = vmatprep.subr.mxu0 0.0
        %5505 = vmatpush2.msra.mxu0 %v5443
        %5506 = vmatprep.subr.mxu0 0.0
        %5507 = vmatpush2.msra.mxu0 %v5442
        %5508 = vmatprep.subr.mxu0 0.0
        %5509 = vmatpush2.msra.mxu0 %v5441
        %5510 = vmatprep.subr.mxu0 0.0
        %5511 = vmatpush2.msra.mxu0 %v5440
        %5512 = vmatprep.subr.mxu0 0.0
        %5513 = vmatpush2.msra.mxu0 %v5439
        %5514 = vmatprep.subr.mxu0 0.0
        %5515 = vmatpush2.msra.mxu0 %v5438
        %5516 = vmatprep.subr.mxu0 0.0
        %5517 = vmatpush2.msra.mxu0 %v5437
        %5518 = vmatprep.subr.mxu0 0.0
        %5519 = vmatpush2.msra.mxu0 %v5436
        %5520 = vmatprep.subr.mxu0 0.0
        %5521 = vmatpush2.msra.mxu0 %v5435
        %5522 = vmatprep.subr.mxu0 0.0
        %5523 = vmatpush2.msra.mxu0 %v5434
        %5524 = vmatprep.subr.mxu0 0.0
        %5525 = vmatpush2.msra.mxu0 %v5433
        %5526 = vmatprep.subr.mxu0 0.0
        %5527 = vmatpush2.msra.mxu0 %v5432
        %5528 = vmatprep.mubr.f32.mxu0 %v5351
        %5529 = vmatmul.mubr.f32.gmra.mxu0 %v5319
        %v5530 = vpop.f32.mrf.mxu0
        %v5531 = vadd.f32 0.0, %v5530
        %v5532 = vpop.f32.mrf.mxu0
        %5533 = vmatprep.mubr.f32.mxu0 %v5352
        %5534 = vmatmul.mubr.f32.gmra.mxu0 %v5320
        %v5535 = vpop.f32.mrf.mxu0
        %v5536 = vadd.f32 0.0, %v5535
        %v5537 = vpop.f32.mrf.mxu0
        %5538 = vmatprep.mubr.f32.mxu0 %v5353
        %5539 = vmatmul.mubr.f32.gmra.mxu0 %v5321
        %v5540 = vpop.f32.mrf.mxu0
        %v5541 = vadd.f32 0.0, %v5540
        %v5542 = vpop.f32.mrf.mxu0
        %5543 = vmatprep.mubr.f32.mxu0 %v5354
        %5544 = vmatmul.mubr.f32.gmra.mxu0 %v5322
        %v5545 = vpop.f32.mrf.mxu0
        %v5546 = vadd.f32 0.0, %v5545
        %v5547 = vpop.f32.mrf.mxu0
        %5548 = vmatprep.mubr.f32.mxu0 %v5355
        %5549 = vmatmul.mubr.f32.gmra.mxu0 %v5323
        %v5550 = vpop.f32.mrf.mxu0
        %v5551 = vadd.f32 0.0, %v5550
        %v5552 = vpop.f32.mrf.mxu0
        %5553 = vmatprep.mubr.f32.mxu0 %v5356
        %5554 = vmatmul.mubr.f32.gmra.mxu0 %v5324
        %v5555 = vpop.f32.mrf.mxu0
        %v5556 = vadd.f32 0.0, %v5555
        %v5557 = vpop.f32.mrf.mxu0
        %5558 = vmatprep.mubr.f32.mxu0 %v5357
        %5559 = vmatmul.mubr.f32.gmra.mxu0 %v5325
        %v5560 = vpop.f32.mrf.mxu0
        %v5561 = vadd.f32 0.0, %v5560
        %v5562 = vpop.f32.mrf.mxu0
        %5563 = vmatprep.mubr.f32.mxu0 %v5358
        %5564 = vmatmul.mubr.f32.gmra.mxu0 %v5326
        %v5565 = vpop.f32.mrf.mxu0
        %v5566 = vadd.f32 0.0, %v5565
        %v5567 = vpop.f32.mrf.mxu0
        %5568 = vmatprep.mubr.f32.mxu0 %v5359
        %5569 = vmatmul.mubr.f32.gmra.mxu0 %v5327
        %v5570 = vpop.f32.mrf.mxu0
        %v5571 = vadd.f32 0.0, %v5570
        %v5572 = vpop.f32.mrf.mxu0
        %5573 = vmatprep.mubr.f32.mxu0 %v5360
        %5574 = vmatmul.mubr.f32.gmra.mxu0 %v5328
        %v5575 = vpop.f32.mrf.mxu0
        %v5576 = vadd.f32 0.0, %v5575
        %v5577 = vpop.f32.mrf.mxu0
        %5578 = vmatprep.mubr.f32.mxu0 %v5361
        %5579 = vmatmul.mubr.f32.gmra.mxu0 %v5329
        %v5580 = vpop.f32.mrf.mxu0
        %v5581 = vadd.f32 0.0, %v5580
        %v5582 = vpop.f32.mrf.mxu0
        %5583 = vmatprep.mubr.f32.mxu0 %v5362
        %5584 = vmatmul.mubr.f32.gmra.mxu0 %v5330
        %v5585 = vpop.f32.mrf.mxu0
        %v5586 = vadd.f32 0.0, %v5585
        %v5587 = vpop.f32.mrf.mxu0
        %5588 = vmatprep.mubr.f32.mxu0 %v5363
        %5589 = vmatmul.mubr.f32.gmra.mxu0 %v5331
        %v5590 = vpop.f32.mrf.mxu0
        %v5591 = vadd.f32 0.0, %v5590
        %v5592 = vpop.f32.mrf.mxu0
        %5593 = vmatprep.mubr.f32.mxu0 %v5364
        %5594 = vmatmul.mubr.f32.gmra.mxu0 %v5332
        %v5595 = vpop.f32.mrf.mxu0
        %v5596 = vadd.f32 0.0, %v5595
        %v5597 = vpop.f32.mrf.mxu0
        %5598 = vmatprep.mubr.f32.mxu0 %v5365
        %5599 = vmatmul.mubr.f32.gmra.mxu0 %v5333
        %v5600 = vpop.f32.mrf.mxu0
        %v5601 = vadd.f32 0.0, %v5600
        %v5602 = vpop.f32.mrf.mxu0
        %5603 = vmatprep.mubr.f32.mxu0 %v5366
        %5604 = vmatmul.mubr.f32.gmra.mxu0 %v5334
        %v5605 = vpop.f32.mrf.mxu0
        %v5606 = vadd.f32 0.0, %v5605
        %v5607 = vpop.f32.mrf.mxu0
        %5608 = vmatprep.mubr.f32.mxu0 %v5367
        %5609 = vmatmul.mubr.f32.gmra.mxu0 %v5335
        %v5610 = vpop.f32.mrf.mxu0
        %v5611 = vadd.f32 0.0, %v5610
        %v5612 = vpop.f32.mrf.mxu0
        %5613 = vmatprep.mubr.f32.mxu0 %v5368
        %5614 = vmatmul.mubr.f32.gmra.mxu0 %v5336
        %v5615 = vpop.f32.mrf.mxu0
        %v5616 = vadd.f32 0.0, %v5615
        %v5617 = vpop.f32.mrf.mxu0
        %5618 = vmatprep.mubr.f32.mxu0 %v5369
        %5619 = vmatmul.mubr.f32.gmra.mxu0 %v5337
        %v5620 = vpop.f32.mrf.mxu0
        %v5621 = vadd.f32 0.0, %v5620
        %v5622 = vpop.f32.mrf.mxu0
        %5623 = vmatprep.mubr.f32.mxu0 %v5370
        %5624 = vmatmul.mubr.f32.gmra.mxu0 %v5338
        %v5625 = vpop.f32.mrf.mxu0
        %v5626 = vadd.f32 0.0, %v5625
        %v5627 = vpop.f32.mrf.mxu0
        %5628 = vmatprep.mubr.f32.mxu0 %v5371
        %5629 = vmatmul.mubr.f32.gmra.mxu0 %v5339
        %v5630 = vpop.f32.mrf.mxu0
        %v5631 = vadd.f32 0.0, %v5630
        %v5632 = vpop.f32.mrf.mxu0
        %5633 = vmatprep.mubr.f32.mxu0 %v5372
        %5634 = vmatmul.mubr.f32.gmra.mxu0 %v5340
        %v5635 = vpop.f32.mrf.mxu0
        %v5636 = vadd.f32 0.0, %v5635
        %v5637 = vpop.f32.mrf.mxu0
        %5638 = vmatprep.mubr.f32.mxu0 %v5373
        %5639 = vmatmul.mubr.f32.gmra.mxu0 %v5341
        %v5640 = vpop.f32.mrf.mxu0
        %v5641 = vadd.f32 0.0, %v5640
        %v5642 = vpop.f32.mrf.mxu0
        %5643 = vmatprep.mubr.f32.mxu0 %v5374
        %5644 = vmatmul.mubr.f32.gmra.mxu0 %v5342
        %v5645 = vpop.f32.mrf.mxu0
        %v5646 = vadd.f32 0.0, %v5645
        %v5647 = vpop.f32.mrf.mxu0
        %5648 = vmatprep.mubr.f32.mxu0 %v5375
        %5649 = vmatmul.mubr.f32.gmra.mxu0 %v5343
        %v5650 = vpop.f32.mrf.mxu0
        %v5651 = vadd.f32 0.0, %v5650
        %v5652 = vpop.f32.mrf.mxu0
        %5653 = vmatprep.mubr.f32.mxu0 %v5376
        %5654 = vmatmul.mubr.f32.gmra.mxu0 %v5344
        %v5655 = vpop.f32.mrf.mxu0
        %v5656 = vadd.f32 0.0, %v5655
        %v5657 = vpop.f32.mrf.mxu0
        %5658 = vmatprep.mubr.f32.mxu0 %v5377
        %5659 = vmatmul.mubr.f32.gmra.mxu0 %v5345
        %v5660 = vpop.f32.mrf.mxu0
        %v5661 = vadd.f32 0.0, %v5660
        %v5662 = vpop.f32.mrf.mxu0
        %5663 = vmatprep.mubr.f32.mxu0 %v5378
        %5664 = vmatmul.mubr.f32.gmra.mxu0 %v5346
        %v5665 = vpop.f32.mrf.mxu0
        %v5666 = vadd.f32 0.0, %v5665
        %v5667 = vpop.f32.mrf.mxu0
        %5668 = vmatprep.mubr.f32.mxu0 %v5379
        %5669 = vmatmul.mubr.f32.gmra.mxu0 %v5347
        %v5670 = vpop.f32.mrf.mxu0
        %v5671 = vadd.f32 0.0, %v5670
        %v5672 = vpop.f32.mrf.mxu0
        %5673 = vmatprep.mubr.f32.mxu0 %v5380
        %5674 = vmatmul.mubr.f32.gmra.mxu0 %v5348
        %v5675 = vpop.f32.mrf.mxu0
        %v5676 = vadd.f32 0.0, %v5675
        %v5677 = vpop.f32.mrf.mxu0
        %5678 = vmatprep.mubr.f32.mxu0 %v5381
        %5679 = vmatmul.mubr.f32.gmra.mxu0 %v5349
        %v5680 = vpop.f32.mrf.mxu0
        %v5681 = vadd.f32 0.0, %v5680
        %v5682 = vpop.f32.mrf.mxu0
        %5683 = vmatprep.mubr.f32.mxu0 %v5382
        %5684 = vmatmul.mubr.f32.gmra.mxu0 %v5350
        %v5685 = vpop.f32.mrf.mxu0
        %v5686 = vadd.f32 0.0, %v5685
        %v5687 = vpop.f32.mrf.mxu0
        %5688 = vdwg.mxu0
        %5689 = vmatprep.subr.mxu0 0.0
        %5690 = vmatpush1.msra.mxu0 %v5463
        %5691 = vmatprep.subr.mxu0 0.0
        %5692 = vmatpush1.msra.mxu0 %v5462
        %5693 = vmatprep.subr.mxu0 0.0
        %5694 = vmatpush1.msra.mxu0 %v5461
        %5695 = vmatprep.subr.mxu0 0.0
        %5696 = vmatpush1.msra.mxu0 %v5460
        %5697 = vmatprep.subr.mxu0 0.0
        %5698 = vmatpush1.msra.mxu0 %v5459
        %5699 = vmatprep.subr.mxu0 0.0
        %5700 = vmatpush1.msra.mxu0 %v5458
        %5701 = vmatprep.subr.mxu0 0.0
        %5702 = vmatpush1.msra.mxu0 %v5457
        %5703 = vmatprep.subr.mxu0 0.0
        %5704 = vmatpush1.msra.mxu0 %v5456
        %5705 = vmatprep.subr.mxu0 0.0
        %5706 = vmatpush1.msra.mxu0 %v5455
        %5707 = vmatprep.subr.mxu0 0.0
        %5708 = vmatpush1.msra.mxu0 %v5454
        %5709 = vmatprep.subr.mxu0 0.0
        %5710 = vmatpush1.msra.mxu0 %v5453
        %5711 = vmatprep.subr.mxu0 0.0
        %5712 = vmatpush1.msra.mxu0 %v5452
        %5713 = vmatprep.subr.mxu0 0.0
        %5714 = vmatpush1.msra.mxu0 %v5451
        %5715 = vmatprep.subr.mxu0 0.0
        %5716 = vmatpush1.msra.mxu0 %v5450
        %5717 = vmatprep.subr.mxu0 0.0
        %5718 = vmatpush1.msra.mxu0 %v5449
        %5719 = vmatprep.subr.mxu0 0.0
        %5720 = vmatpush1.msra.mxu0 %v5448
        %5721 = vmatprep.subr.mxu0 0.0
        %5722 = vmatpush2.msra.mxu0 0.0
        %5723 = vmatprep.subr.mxu0 0.0
        %5724 = vmatpush2.msra.mxu0 0.0
        %5725 = vmatprep.subr.mxu0 0.0
        %5726 = vmatpush2.msra.mxu0 0.0
        %5727 = vmatprep.subr.mxu0 0.0
        %5728 = vmatpush2.msra.mxu0 0.0
        %5729 = vmatprep.subr.mxu0 0.0
        %5730 = vmatpush2.msra.mxu0 0.0
        %5731 = vmatprep.subr.mxu0 0.0
        %5732 = vmatpush2.msra.mxu0 0.0
        %5733 = vmatprep.subr.mxu0 0.0
        %5734 = vmatpush2.msra.mxu0 0.0
        %5735 = vmatprep.subr.mxu0 0.0
        %5736 = vmatpush2.msra.mxu0 0.0
        %5737 = vmatprep.subr.mxu0 0.0
        %5738 = vmatpush2.msra.mxu0 0.0
        %5739 = vmatprep.subr.mxu0 0.0
        %5740 = vmatpush2.msra.mxu0 0.0
        %5741 = vmatprep.subr.mxu0 0.0
        %5742 = vmatpush2.msra.mxu0 0.0
        %5743 = vmatprep.subr.mxu0 0.0
        %5744 = vmatpush2.msra.mxu0 0.0
        %5745 = vmatprep.subr.mxu0 0.0
        %5746 = vmatpush2.msra.mxu0 0.0
        %5747 = vmatprep.subr.mxu0 0.0
        %5748 = vmatpush2.msra.mxu0 0.0
        %5749 = vmatprep.subr.mxu0 0.0
        %5750 = vmatpush2.msra.mxu0 0.0
        %5751 = vmatprep.subr.mxu0 0.0
        %5752 = vmatpush2.msra.mxu0 0.0
        %5753 = vmatprep.mubr.f32.mxu0 0.0
        %5754 = vmatmul.mubr.f32.gmra.mxu0 %v5383
        %v5755 = vpop.f32.mrf.mxu0
        %v5756 = vadd.f32 %v5531, %v5755
        %v5757 = vpop.f32.mrf.mxu0
        %5758 = vmatprep.mubr.f32.mxu0 0.0
        %5759 = vmatmul.mubr.f32.gmra.mxu0 %v5384
        %v5760 = vpop.f32.mrf.mxu0
        %v5761 = vadd.f32 %v5536, %v5760
        %v5762 = vpop.f32.mrf.mxu0
        %5763 = vmatprep.mubr.f32.mxu0 0.0
        %5764 = vmatmul.mubr.f32.gmra.mxu0 %v5385
        %v5765 = vpop.f32.mrf.mxu0
        %v5766 = vadd.f32 %v5541, %v5765
        %v5767 = vpop.f32.mrf.mxu0
        %5768 = vmatprep.mubr.f32.mxu0 0.0
        %5769 = vmatmul.mubr.f32.gmra.mxu0 %v5386
        %v5770 = vpop.f32.mrf.mxu0
        %v5771 = vadd.f32 %v5546, %v5770
        %v5772 = vpop.f32.mrf.mxu0
        %5773 = vmatprep.mubr.f32.mxu0 0.0
        %5774 = vmatmul.mubr.f32.gmra.mxu0 %v5387
        %v5775 = vpop.f32.mrf.mxu0
        %v5776 = vadd.f32 %v5551, %v5775
        %v5777 = vpop.f32.mrf.mxu0
        %5778 = vmatprep.mubr.f32.mxu0 0.0
        %5779 = vmatmul.mubr.f32.gmra.mxu0 %v5388
        %v5780 = vpop.f32.mrf.mxu0
        %v5781 = vadd.f32 %v5556, %v5780
        %v5782 = vpop.f32.mrf.mxu0
        %5783 = vmatprep.mubr.f32.mxu0 0.0
        %5784 = vmatmul.mubr.f32.gmra.mxu0 %v5389
        %v5785 = vpop.f32.mrf.mxu0
        %v5786 = vadd.f32 %v5561, %v5785
        %v5787 = vpop.f32.mrf.mxu0
        %5788 = vmatprep.mubr.f32.mxu0 0.0
        %5789 = vmatmul.mubr.f32.gmra.mxu0 %v5390
        %v5790 = vpop.f32.mrf.mxu0
        %v5791 = vadd.f32 %v5566, %v5790
        %v5792 = vpop.f32.mrf.mxu0
        %5793 = vmatprep.mubr.f32.mxu0 0.0
        %5794 = vmatmul.mubr.f32.gmra.mxu0 %v5391
        %v5795 = vpop.f32.mrf.mxu0
        %v5796 = vadd.f32 %v5571, %v5795
        %v5797 = vpop.f32.mrf.mxu0
        %5798 = vmatprep.mubr.f32.mxu0 0.0
        %5799 = vmatmul.mubr.f32.gmra.mxu0 %v5392
        %v5800 = vpop.f32.mrf.mxu0
        %v5801 = vadd.f32 %v5576, %v5800
        %v5802 = vpop.f32.mrf.mxu0
        %5803 = vmatprep.mubr.f32.mxu0 0.0
        %5804 = vmatmul.mubr.f32.gmra.mxu0 %v5393
        %v5805 = vpop.f32.mrf.mxu0
        %v5806 = vadd.f32 %v5581, %v5805
        %v5807 = vpop.f32.mrf.mxu0
        %5808 = vmatprep.mubr.f32.mxu0 0.0
        %5809 = vmatmul.mubr.f32.gmra.mxu0 %v5394
        %v5810 = vpop.f32.mrf.mxu0
        %v5811 = vadd.f32 %v5586, %v5810
        %v5812 = vpop.f32.mrf.mxu0
        %5813 = vmatprep.mubr.f32.mxu0 0.0
        %5814 = vmatmul.mubr.f32.gmra.mxu0 %v5395
        %v5815 = vpop.f32.mrf.mxu0
        %v5816 = vadd.f32 %v5591, %v5815
        %v5817 = vpop.f32.mrf.mxu0
        %5818 = vmatprep.mubr.f32.mxu0 0.0
        %5819 = vmatmul.mubr.f32.gmra.mxu0 %v5396
        %v5820 = vpop.f32.mrf.mxu0
        %v5821 = vadd.f32 %v5596, %v5820
        %v5822 = vpop.f32.mrf.mxu0
        %5823 = vmatprep.mubr.f32.mxu0 0.0
        %5824 = vmatmul.mubr.f32.gmra.mxu0 %v5397
        %v5825 = vpop.f32.mrf.mxu0
        %v5826 = vadd.f32 %v5601, %v5825
        %v5827 = vpop.f32.mrf.mxu0
        %5828 = vmatprep.mubr.f32.mxu0 0.0
        %5829 = vmatmul.mubr.f32.gmra.mxu0 %v5398
        %v5830 = vpop.f32.mrf.mxu0
        %v5831 = vadd.f32 %v5606, %v5830
        %v5832 = vpop.f32.mrf.mxu0
        %5833 = vmatprep.mubr.f32.mxu0 0.0
        %5834 = vmatmul.mubr.f32.gmra.mxu0 %v5399
        %v5835 = vpop.f32.mrf.mxu0
        %v5836 = vadd.f32 %v5611, %v5835
        %v5837 = vpop.f32.mrf.mxu0
        %5838 = vmatprep.mubr.f32.mxu0 0.0
        %5839 = vmatmul.mubr.f32.gmra.mxu0 %v5400
        %v5840 = vpop.f32.mrf.mxu0
        %v5841 = vadd.f32 %v5616, %v5840
        %v5842 = vpop.f32.mrf.mxu0
        %5843 = vmatprep.mubr.f32.mxu0 0.0
        %5844 = vmatmul.mubr.f32.gmra.mxu0 %v5401
        %v5845 = vpop.f32.mrf.mxu0
        %v5846 = vadd.f32 %v5621, %v5845
        %v5847 = vpop.f32.mrf.mxu0
        %5848 = vmatprep.mubr.f32.mxu0 0.0
        %5849 = vmatmul.mubr.f32.gmra.mxu0 %v5402
        %v5850 = vpop.f32.mrf.mxu0
        %v5851 = vadd.f32 %v5626, %v5850
        %v5852 = vpop.f32.mrf.mxu0
        %5853 = vmatprep.mubr.f32.mxu0 0.0
        %5854 = vmatmul.mubr.f32.gmra.mxu0 %v5403
        %v5855 = vpop.f32.mrf.mxu0
        %v5856 = vadd.f32 %v5631, %v5855
        %v5857 = vpop.f32.mrf.mxu0
        %5858 = vmatprep.mubr.f32.mxu0 0.0
        %5859 = vmatmul.mubr.f32.gmra.mxu0 %v5404
        %v5860 = vpop.f32.mrf.mxu0
        %v5861 = vadd.f32 %v5636, %v5860
        %v5862 = vpop.f32.mrf.mxu0
        %5863 = vmatprep.mubr.f32.mxu0 0.0
        %5864 = vmatmul.mubr.f32.gmra.mxu0 %v5405
        %v5865 = vpop.f32.mrf.mxu0
        %v5866 = vadd.f32 %v5641, %v5865
        %v5867 = vpop.f32.mrf.mxu0
        %5868 = vmatprep.mubr.f32.mxu0 0.0
        %5869 = vmatmul.mubr.f32.gmra.mxu0 %v5406
        %v5870 = vpop.f32.mrf.mxu0
        %v5871 = vadd.f32 %v5646, %v5870
        %v5872 = vpop.f32.mrf.mxu0
        %5873 = vmatprep.mubr.f32.mxu0 0.0
        %5874 = vmatmul.mubr.f32.gmra.mxu0 %v5407
        %v5875 = vpop.f32.mrf.mxu0
        %v5876 = vadd.f32 %v5651, %v5875
        %v5877 = vpop.f32.mrf.mxu0
        %5878 = vmatprep.mubr.f32.mxu0 0.0
        %5879 = vmatmul.mubr.f32.gmra.mxu0 %v5408
        %v5880 = vpop.f32.mrf.mxu0
        %v5881 = vadd.f32 %v5656, %v5880
        %v5882 = vpop.f32.mrf.mxu0
        %5883 = vmatprep.mubr.f32.mxu0 0.0
        %5884 = vmatmul.mubr.f32.gmra.mxu0 %v5409
        %v5885 = vpop.f32.mrf.mxu0
        %v5886 = vadd.f32 %v5661, %v5885
        %v5887 = vpop.f32.mrf.mxu0
        %5888 = vmatprep.mubr.f32.mxu0 0.0
        %5889 = vmatmul.mubr.f32.gmra.mxu0 %v5410
        %v5890 = vpop.f32.mrf.mxu0
        %v5891 = vadd.f32 %v5666, %v5890
        %v5892 = vpop.f32.mrf.mxu0
        %5893 = vmatprep.mubr.f32.mxu0 0.0
        %5894 = vmatmul.mubr.f32.gmra.mxu0 %v5411
        %v5895 = vpop.f32.mrf.mxu0
        %v5896 = vadd.f32 %v5671, %v5895
        %v5897 = vpop.f32.mrf.mxu0
        %5898 = vmatprep.mubr.f32.mxu0 0.0
        %5899 = vmatmul.mubr.f32.gmra.mxu0 %v5412
        %v5900 = vpop.f32.mrf.mxu0
        %v5901 = vadd.f32 %v5676, %v5900
        %v5902 = vpop.f32.mrf.mxu0
        %5903 = vmatprep.mubr.f32.mxu0 0.0
        %5904 = vmatmul.mubr.f32.gmra.mxu0 %v5413
        %v5905 = vpop.f32.mrf.mxu0
        %v5906 = vadd.f32 %v5681, %v5905
        %v5907 = vpop.f32.mrf.mxu0
        %5908 = vmatprep.mubr.f32.mxu0 0.0
        %5909 = vmatmul.mubr.f32.gmra.mxu0 %v5414
        %v5910 = vpop.f32.mrf.mxu0
        %v5911 = vadd.f32 %v5686, %v5910
        %v5912 = vpop.f32.mrf.mxu0
        %5913 = vdwg.mxu0
        %v5914 = vld [vmem:[#allocation5] sm:$0xff]
        %v5915 = vld [vmem:[#allocation5 + $0x8] sm:$0xff]
        %v5916 = vld [vmem:[#allocation5 + $0x10] sm:$0xff]
        %v5917 = vld [vmem:[#allocation5 + $0x18] sm:$0xff]
        %v5918 = vld [vmem:[#allocation5 + $0x20] sm:$0xff]
        %v5919 = vld [vmem:[#allocation5 + $0x28] sm:$0xff]
        %v5920 = vld [vmem:[#allocation5 + $0x30] sm:$0xff]
        %v5921 = vld [vmem:[#allocation5 + $0x38] sm:$0xff]
        %v5922 = vld [vmem:[#allocation5 + $0x40] sm:$0xff]
        %v5923 = vld [vmem:[#allocation5 + $0x48] sm:$0xff]
        %v5924 = vld [vmem:[#allocation5 + $0x50] sm:$0xff]
        %v5925 = vld [vmem:[#allocation5 + $0x58] sm:$0xff]
        %v5926 = vld [vmem:[#allocation5 + $0x60] sm:$0xff]
        %v5927 = vld [vmem:[#allocation5 + $0x68] sm:$0xff]
        %v5928 = vld [vmem:[#allocation5 + $0x70] sm:$0xff]
        %v5929 = vld [vmem:[#allocation5 + $0x78] sm:$0xff]
        %v5930 = vld [vmem:[#allocation5 + $0x80] sm:$0xff]
        %v5931 = vld [vmem:[#allocation5 + $0x88] sm:$0xff]
        %v5932 = vld [vmem:[#allocation5 + $0x90] sm:$0xff]
        %v5933 = vld [vmem:[#allocation5 + $0x98] sm:$0xff]
        %v5934 = vld [vmem:[#allocation5 + $0xa0] sm:$0xff]
        %v5935 = vld [vmem:[#allocation5 + $0xa8] sm:$0xff]
        %v5936 = vld [vmem:[#allocation5 + $0xb0] sm:$0xff]
        %v5937 = vld [vmem:[#allocation5 + $0xb8] sm:$0xff]
        %v5938 = vld [vmem:[#allocation5 + $0xc0] sm:$0xff]
        %v5939 = vld [vmem:[#allocation5 + $0xc8] sm:$0xff]
        %v5940 = vld [vmem:[#allocation5 + $0xd0] sm:$0xff]
        %v5941 = vld [vmem:[#allocation5 + $0xd8] sm:$0xff]
        %v5942 = vld [vmem:[#allocation5 + $0xe0] sm:$0xff]
        %v5943 = vld [vmem:[#allocation5 + $0xe8] sm:$0xff]
        %v5944 = vld [vmem:[#allocation5 + $0xf0] sm:$0xff]
        %v5945 = vld [vmem:[#allocation5 + $0xf8] sm:$0xff]
        %v5946 = vadd.f32 %v5914, %v5756
        %v5947 = vadd.f32 %v5915, %v5761
        %v5948 = vadd.f32 %v5916, %v5766
        %v5949 = vadd.f32 %v5917, %v5771
        %v5950 = vadd.f32 %v5918, %v5776
        %v5951 = vadd.f32 %v5919, %v5781
        %v5952 = vadd.f32 %v5920, %v5786
        %v5953 = vadd.f32 %v5921, %v5791
        %v5954 = vadd.f32 %v5922, %v5796
        %v5955 = vadd.f32 %v5923, %v5801
        %v5956 = vadd.f32 %v5924, %v5806
        %v5957 = vadd.f32 %v5925, %v5811
        %v5958 = vadd.f32 %v5926, %v5816
        %v5959 = vadd.f32 %v5927, %v5821
        %v5960 = vadd.f32 %v5928, %v5826
        %v5961 = vadd.f32 %v5929, %v5831
        %v5962 = vadd.f32 %v5930, %v5836
        %v5963 = vadd.f32 %v5931, %v5841
        %v5964 = vadd.f32 %v5932, %v5846
        %v5965 = vadd.f32 %v5933, %v5851
        %v5966 = vadd.f32 %v5934, %v5856
        %v5967 = vadd.f32 %v5935, %v5861
        %v5968 = vadd.f32 %v5936, %v5866
        %v5969 = vadd.f32 %v5937, %v5871
        %v5970 = vadd.f32 %v5938, %v5876
        %v5971 = vadd.f32 %v5939, %v5881
        %v5972 = vadd.f32 %v5940, %v5886
        %v5973 = vadd.f32 %v5941, %v5891
        %v5974 = vadd.f32 %v5942, %v5896
        %v5975 = vadd.f32 %v5943, %v5901
        %v5976 = vadd.f32 %v5944, %v5906
        %v5977 = vadd.f32 %v5945, %v5911
        %5978 = vst [vmem:[#allocation5] sm:$0xff] %v5946
        %5979 = vst [vmem:[#allocation5 + $0x8] sm:$0xff] %v5947
        %5980 = vst [vmem:[#allocation5 + $0x10] sm:$0xff] %v5948
        %5981 = vst [vmem:[#allocation5 + $0x18] sm:$0xff] %v5949
        %5982 = vst [vmem:[#allocation5 + $0x20] sm:$0xff] %v5950
        %5983 = vst [vmem:[#allocation5 + $0x28] sm:$0xff] %v5951
        %5984 = vst [vmem:[#allocation5 + $0x30] sm:$0xff] %v5952
        %5985 = vst [vmem:[#allocation5 + $0x38] sm:$0xff] %v5953
        %5986 = vst [vmem:[#allocation5 + $0x40] sm:$0xff] %v5954
        %5987 = vst [vmem:[#allocation5 + $0x48] sm:$0xff] %v5955
        %5988 = vst [vmem:[#allocation5 + $0x50] sm:$0xff] %v5956
        %5989 = vst [vmem:[#allocation5 + $0x58] sm:$0xff] %v5957
        %5990 = vst [vmem:[#allocation5 + $0x60] sm:$0xff] %v5958
        %5991 = vst [vmem:[#allocation5 + $0x68] sm:$0xff] %v5959
        %5992 = vst [vmem:[#allocation5 + $0x70] sm:$0xff] %v5960
        %5993 = vst [vmem:[#allocation5 + $0x78] sm:$0xff] %v5961
        %5994 = vst [vmem:[#allocation5 + $0x80] sm:$0xff] %v5962
        %5995 = vst [vmem:[#allocation5 + $0x88] sm:$0xff] %v5963
        %5996 = vst [vmem:[#allocation5 + $0x90] sm:$0xff] %v5964
        %5997 = vst [vmem:[#allocation5 + $0x98] sm:$0xff] %v5965
        %5998 = vst [vmem:[#allocation5 + $0xa0] sm:$0xff] %v5966
        %5999 = vst [vmem:[#allocation5 + $0xa8] sm:$0xff] %v5967
        %6000 = vst [vmem:[#allocation5 + $0xb0] sm:$0xff] %v5968
        %6001 = vst [vmem:[#allocation5 + $0xb8] sm:$0xff] %v5969
        %6002 = vst [vmem:[#allocation5 + $0xc0] sm:$0xff] %v5970
        %6003 = vst [vmem:[#allocation5 + $0xc8] sm:$0xff] %v5971
        %6004 = vst [vmem:[#allocation5 + $0xd0] sm:$0xff] %v5972
        %6005 = vst [vmem:[#allocation5 + $0xd8] sm:$0xff] %v5973
        %6006 = vst [vmem:[#allocation5 + $0xe0] sm:$0xff] %v5974
        %6007 = vst [vmem:[#allocation5 + $0xe8] sm:$0xff] %v5975
        %6008 = vst [vmem:[#allocation5 + $0xf0] sm:$0xff] %v5976
        %6009 = vst [vmem:[#allocation5 + $0xf8] sm:$0xff] %v5977
        %s6010 = scalar_lea.vmem [#allocation3], 48
        %v6011 = vld [vmem:[%s6010] sm:$0xff]
        %v6012 = vld [vmem:[%s6010 + $0x8] sm:$0xff]
        %v6013 = vld [vmem:[%s6010 + $0x18] sm:$0xff]
        %v6014 = vld [vmem:[%s6010 + $0x20] sm:$0xff]
        %v6015 = vld [vmem:[%s6010 + $0x30] sm:$0xff]
        %v6016 = vld [vmem:[%s6010 + $0x38] sm:$0xff]
        %v6017 = vld [vmem:[%s6010 + $0x48] sm:$0xff]
        %v6018 = vld [vmem:[%s6010 + $0x50] sm:$0xff]
        %v6019 = vld [vmem:[%s6010 + $0x60] sm:$0xff]
        %v6020 = vld [vmem:[%s6010 + $0x68] sm:$0xff]
        %v6021 = vld [vmem:[%s6010 + $0x78] sm:$0xff]
        %v6022 = vld [vmem:[%s6010 + $0x80] sm:$0xff]
        %v6023 = vld [vmem:[%s6010 + $0x90] sm:$0xff]
        %v6024 = vld [vmem:[%s6010 + $0x98] sm:$0xff]
        %v6025 = vld [vmem:[%s6010 + $0xa8] sm:$0xff]
        %v6026 = vld [vmem:[%s6010 + $0xb0] sm:$0xff]
        %v6027 = vld [vmem:[%s6010 + $0xc0] sm:$0xff]
        %v6028 = vld [vmem:[%s6010 + $0xc8] sm:$0xff]
        %v6029 = vld [vmem:[%s6010 + $0xd8] sm:$0xff]
        %v6030 = vld [vmem:[%s6010 + $0xe0] sm:$0xff]
        %v6031 = vld [vmem:[%s6010 + $0xf0] sm:$0xff]
        %v6032 = vld [vmem:[%s6010 + $0xf8] sm:$0xff]
        %v6033 = vld [vmem:[%s6010 + $0x108] sm:$0xff]
        %v6034 = vld [vmem:[%s6010 + $0x110] sm:$0xff]
        %v6035 = vld [vmem:[%s6010 + $0x120] sm:$0xff]
        %v6036 = vld [vmem:[%s6010 + $0x128] sm:$0xff]
        %v6037 = vld [vmem:[%s6010 + $0x138] sm:$0xff]
        %v6038 = vld [vmem:[%s6010 + $0x140] sm:$0xff]
        %v6039 = vld [vmem:[%s6010 + $0x150] sm:$0xff]
        %v6040 = vld [vmem:[%s6010 + $0x158] sm:$0xff]
        %v6041 = vld [vmem:[%s6010 + $0x168] sm:$0xff]
        %v6042 = vld [vmem:[%s6010 + $0x170] sm:$0xff]
        %v6043 = vld [vmem:[%s6010 + $0x1] sm:$0xff]
        %v6044 = vld [vmem:[%s6010 + $0x9] sm:$0xff]
        %v6045 = vld [vmem:[%s6010 + $0x19] sm:$0xff]
        %v6046 = vld [vmem:[%s6010 + $0x21] sm:$0xff]
        %v6047 = vld [vmem:[%s6010 + $0x31] sm:$0xff]
        %v6048 = vld [vmem:[%s6010 + $0x39] sm:$0xff]
        %v6049 = vld [vmem:[%s6010 + $0x49] sm:$0xff]
        %v6050 = vld [vmem:[%s6010 + $0x51] sm:$0xff]
        %v6051 = vld [vmem:[%s6010 + $0x61] sm:$0xff]
        %v6052 = vld [vmem:[%s6010 + $0x69] sm:$0xff]
        %v6053 = vld [vmem:[%s6010 + $0x79] sm:$0xff]
        %v6054 = vld [vmem:[%s6010 + $0x81] sm:$0xff]
        %v6055 = vld [vmem:[%s6010 + $0x91] sm:$0xff]
        %v6056 = vld [vmem:[%s6010 + $0x99] sm:$0xff]
        %v6057 = vld [vmem:[%s6010 + $0xa9] sm:$0xff]
        %v6058 = vld [vmem:[%s6010 + $0xb1] sm:$0xff]
        %v6059 = vld [vmem:[%s6010 + $0xc1] sm:$0xff]
        %v6060 = vld [vmem:[%s6010 + $0xc9] sm:$0xff]
        %v6061 = vld [vmem:[%s6010 + $0xd9] sm:$0xff]
        %v6062 = vld [vmem:[%s6010 + $0xe1] sm:$0xff]
        %v6063 = vld [vmem:[%s6010 + $0xf1] sm:$0xff]
        %v6064 = vld [vmem:[%s6010 + $0xf9] sm:$0xff]
        %v6065 = vld [vmem:[%s6010 + $0x109] sm:$0xff]
        %v6066 = vld [vmem:[%s6010 + $0x111] sm:$0xff]
        %v6067 = vld [vmem:[%s6010 + $0x121] sm:$0xff]
        %v6068 = vld [vmem:[%s6010 + $0x129] sm:$0xff]
        %v6069 = vld [vmem:[%s6010 + $0x139] sm:$0xff]
        %v6070 = vld [vmem:[%s6010 + $0x141] sm:$0xff]
        %v6071 = vld [vmem:[%s6010 + $0x151] sm:$0xff]
        %v6072 = vld [vmem:[%s6010 + $0x159] sm:$0xff]
        %v6073 = vld [vmem:[%s6010 + $0x169] sm:$0xff]
        %v6074 = vld [vmem:[%s6010 + $0x171] sm:$0xff]
        %v6075 = vld [vmem:[%s6010 + $0x2] sm:$0xff]
        %v6076 = vld [vmem:[%s6010 + $0xa] sm:$0xff]
        %v6077 = vld [vmem:[%s6010 + $0x1a] sm:$0xff]
        %v6078 = vld [vmem:[%s6010 + $0x22] sm:$0xff]
        %v6079 = vld [vmem:[%s6010 + $0x32] sm:$0xff]
        %v6080 = vld [vmem:[%s6010 + $0x3a] sm:$0xff]
        %v6081 = vld [vmem:[%s6010 + $0x4a] sm:$0xff]
        %v6082 = vld [vmem:[%s6010 + $0x52] sm:$0xff]
        %v6083 = vld [vmem:[%s6010 + $0x62] sm:$0xff]
        %v6084 = vld [vmem:[%s6010 + $0x6a] sm:$0xff]
        %v6085 = vld [vmem:[%s6010 + $0x7a] sm:$0xff]
        %v6086 = vld [vmem:[%s6010 + $0x82] sm:$0xff]
        %v6087 = vld [vmem:[%s6010 + $0x92] sm:$0xff]
        %v6088 = vld [vmem:[%s6010 + $0x9a] sm:$0xff]
        %v6089 = vld [vmem:[%s6010 + $0xaa] sm:$0xff]
        %v6090 = vld [vmem:[%s6010 + $0xb2] sm:$0xff]
        %v6091 = vld [vmem:[%s6010 + $0xc2] sm:$0xff]
        %v6092 = vld [vmem:[%s6010 + $0xca] sm:$0xff]
        %v6093 = vld [vmem:[%s6010 + $0xda] sm:$0xff]
        %v6094 = vld [vmem:[%s6010 + $0xe2] sm:$0xff]
        %v6095 = vld [vmem:[%s6010 + $0xf2] sm:$0xff]
        %v6096 = vld [vmem:[%s6010 + $0xfa] sm:$0xff]
        %v6097 = vld [vmem:[%s6010 + $0x10a] sm:$0xff]
        %v6098 = vld [vmem:[%s6010 + $0x112] sm:$0xff]
        %v6099 = vld [vmem:[%s6010 + $0x122] sm:$0xff]
        %v6100 = vld [vmem:[%s6010 + $0x12a] sm:$0xff]
        %v6101 = vld [vmem:[%s6010 + $0x13a] sm:$0xff]
        %v6102 = vld [vmem:[%s6010 + $0x142] sm:$0xff]
        %v6103 = vld [vmem:[%s6010 + $0x152] sm:$0xff]
        %v6104 = vld [vmem:[%s6010 + $0x15a] sm:$0xff]
        %v6105 = vld [vmem:[%s6010 + $0x16a] sm:$0xff]
        %v6106 = vld [vmem:[%s6010 + $0x172] sm:$0xff]
        %s6107 = scalar_lea.vmem %s4, 768
        %v6108 = vld [vmem:[%s6107] sm:$0xff]
        %v6109 = vld [vmem:[%s6107 + $0x8] sm:$0xff]
        %v6110 = vld [vmem:[%s6107 + $0x10] sm:$0xff]
        %v6111 = vld [vmem:[%s6107 + $0x18] sm:$0xff]
        %v6112 = vld [vmem:[%s6107 + $0x20] sm:$0xff]
        %v6113 = vld [vmem:[%s6107 + $0x28] sm:$0xff]
        %v6114 = vld [vmem:[%s6107 + $0x30] sm:$0xff]
        %v6115 = vld [vmem:[%s6107 + $0x38] sm:$0xff]
        %v6116 = vld [vmem:[%s6107 + $0x40] sm:$0xff]
        %v6117 = vld [vmem:[%s6107 + $0x48] sm:$0xff]
        %v6118 = vld [vmem:[%s6107 + $0x50] sm:$0xff]
        %v6119 = vld [vmem:[%s6107 + $0x58] sm:$0xff]
        %v6120 = vld [vmem:[%s6107 + $0x60] sm:$0xff]
        %v6121 = vld [vmem:[%s6107 + $0x68] sm:$0xff]
        %v6122 = vld [vmem:[%s6107 + $0x70] sm:$0xff]
        %v6123 = vld [vmem:[%s6107 + $0x78] sm:$0xff]
        %v6124 = vld [vmem:[%s6107 + $0x80] sm:$0xff]
        %v6125 = vld [vmem:[%s6107 + $0x88] sm:$0xff]
        %v6126 = vld [vmem:[%s6107 + $0x90] sm:$0xff]
        %v6127 = vld [vmem:[%s6107 + $0x98] sm:$0xff]
        %v6128 = vld [vmem:[%s6107 + $0xa0] sm:$0xff]
        %v6129 = vld [vmem:[%s6107 + $0xa8] sm:$0xff]
        %v6130 = vld [vmem:[%s6107 + $0xb0] sm:$0xff]
        %v6131 = vld [vmem:[%s6107 + $0xb8] sm:$0xff]
        %v6132 = vld [vmem:[%s6107 + $0xc0] sm:$0xff]
        %v6133 = vld [vmem:[%s6107 + $0xc8] sm:$0xff]
        %v6134 = vld [vmem:[%s6107 + $0xd0] sm:$0xff]
        %v6135 = vld [vmem:[%s6107 + $0xd8] sm:$0xff]
        %v6136 = vld [vmem:[%s6107 + $0xe0] sm:$0xff]
        %v6137 = vld [vmem:[%s6107 + $0xe8] sm:$0xff]
        %v6138 = vld [vmem:[%s6107 + $0xf0] sm:$0xff]
        %v6139 = vld [vmem:[%s6107 + $0xf8] sm:$0xff]
        %v6140 = vld [vmem:[%s6107 + $0x100] sm:$0xff]
        %v6141 = vld [vmem:[%s6107 + $0x108] sm:$0xff]
        %v6142 = vld [vmem:[%s6107 + $0x110] sm:$0xff]
        %v6143 = vld [vmem:[%s6107 + $0x118] sm:$0xff]
        %v6144 = vld [vmem:[%s6107 + $0x120] sm:$0xff]
        %v6145 = vld [vmem:[%s6107 + $0x128] sm:$0xff]
        %v6146 = vld [vmem:[%s6107 + $0x130] sm:$0xff]
        %v6147 = vld [vmem:[%s6107 + $0x138] sm:$0xff]
        %v6148 = vld [vmem:[%s6107 + $0x140] sm:$0xff]
        %v6149 = vld [vmem:[%s6107 + $0x148] sm:$0xff]
        %v6150 = vld [vmem:[%s6107 + $0x150] sm:$0xff]
        %v6151 = vld [vmem:[%s6107 + $0x158] sm:$0xff]
        %v6152 = vld [vmem:[%s6107 + $0x160] sm:$0xff]
        %v6153 = vld [vmem:[%s6107 + $0x168] sm:$0xff]
        %v6154 = vld [vmem:[%s6107 + $0x170] sm:$0xff]
        %v6155 = vld [vmem:[%s6107 + $0x178] sm:$0xff]
        %6156 = vmatprep.subr.mxu0 0.0
        %6157 = vmatpush1.msra.mxu0 %v6123
        %6158 = vmatprep.subr.mxu0 0.0
        %6159 = vmatpush1.msra.mxu0 %v6122
        %6160 = vmatprep.subr.mxu0 0.0
        %6161 = vmatpush1.msra.mxu0 %v6121
        %6162 = vmatprep.subr.mxu0 0.0
        %6163 = vmatpush1.msra.mxu0 %v6120
        %6164 = vmatprep.subr.mxu0 0.0
        %6165 = vmatpush1.msra.mxu0 %v6119
        %6166 = vmatprep.subr.mxu0 0.0
        %6167 = vmatpush1.msra.mxu0 %v6118
        %6168 = vmatprep.subr.mxu0 0.0
        %6169 = vmatpush1.msra.mxu0 %v6117
        %6170 = vmatprep.subr.mxu0 0.0
        %6171 = vmatpush1.msra.mxu0 %v6116
        %6172 = vmatprep.subr.mxu0 0.0
        %6173 = vmatpush1.msra.mxu0 %v6115
        %6174 = vmatprep.subr.mxu0 0.0
        %6175 = vmatpush1.msra.mxu0 %v6114
        %6176 = vmatprep.subr.mxu0 0.0
        %6177 = vmatpush1.msra.mxu0 %v6113
        %6178 = vmatprep.subr.mxu0 0.0
        %6179 = vmatpush1.msra.mxu0 %v6112
        %6180 = vmatprep.subr.mxu0 0.0
        %6181 = vmatpush1.msra.mxu0 %v6111
        %6182 = vmatprep.subr.mxu0 0.0
        %6183 = vmatpush1.msra.mxu0 %v6110
        %6184 = vmatprep.subr.mxu0 0.0
        %6185 = vmatpush1.msra.mxu0 %v6109
        %6186 = vmatprep.subr.mxu0 0.0
        %6187 = vmatpush1.msra.mxu0 %v6108
        %6188 = vmatprep.subr.mxu0 0.0
        %6189 = vmatpush2.msra.mxu0 %v6139
        %6190 = vmatprep.subr.mxu0 0.0
        %6191 = vmatpush2.msra.mxu0 %v6138
        %6192 = vmatprep.subr.mxu0 0.0
        %6193 = vmatpush2.msra.mxu0 %v6137
        %6194 = vmatprep.subr.mxu0 0.0
        %6195 = vmatpush2.msra.mxu0 %v6136
        %6196 = vmatprep.subr.mxu0 0.0
        %6197 = vmatpush2.msra.mxu0 %v6135
        %6198 = vmatprep.subr.mxu0 0.0
        %6199 = vmatpush2.msra.mxu0 %v6134
        %6200 = vmatprep.subr.mxu0 0.0
        %6201 = vmatpush2.msra.mxu0 %v6133
        %6202 = vmatprep.subr.mxu0 0.0
        %6203 = vmatpush2.msra.mxu0 %v6132
        %6204 = vmatprep.subr.mxu0 0.0
        %6205 = vmatpush2.msra.mxu0 %v6131
        %6206 = vmatprep.subr.mxu0 0.0
        %6207 = vmatpush2.msra.mxu0 %v6130
        %6208 = vmatprep.subr.mxu0 0.0
        %6209 = vmatpush2.msra.mxu0 %v6129
        %6210 = vmatprep.subr.mxu0 0.0
        %6211 = vmatpush2.msra.mxu0 %v6128
        %6212 = vmatprep.subr.mxu0 0.0
        %6213 = vmatpush2.msra.mxu0 %v6127
        %6214 = vmatprep.subr.mxu0 0.0
        %6215 = vmatpush2.msra.mxu0 %v6126
        %6216 = vmatprep.subr.mxu0 0.0
        %6217 = vmatpush2.msra.mxu0 %v6125
        %6218 = vmatprep.subr.mxu0 0.0
        %6219 = vmatpush2.msra.mxu0 %v6124
        %6220 = vmatprep.mubr.f32.mxu0 %v6043
        %6221 = vmatmul.mubr.f32.gmra.mxu0 %v6011
        %v6222 = vpop.f32.mrf.mxu0
        %v6223 = vadd.f32 0.0, %v6222
        %v6224 = vpop.f32.mrf.mxu0
        %6225 = vmatprep.mubr.f32.mxu0 %v6044
        %6226 = vmatmul.mubr.f32.gmra.mxu0 %v6012
        %v6227 = vpop.f32.mrf.mxu0
        %v6228 = vadd.f32 0.0, %v6227
        %v6229 = vpop.f32.mrf.mxu0
        %6230 = vmatprep.mubr.f32.mxu0 %v6045
        %6231 = vmatmul.mubr.f32.gmra.mxu0 %v6013
        %v6232 = vpop.f32.mrf.mxu0
        %v6233 = vadd.f32 0.0, %v6232
        %v6234 = vpop.f32.mrf.mxu0
        %6235 = vmatprep.mubr.f32.mxu0 %v6046
        %6236 = vmatmul.mubr.f32.gmra.mxu0 %v6014
        %v6237 = vpop.f32.mrf.mxu0
        %v6238 = vadd.f32 0.0, %v6237
        %v6239 = vpop.f32.mrf.mxu0
        %6240 = vmatprep.mubr.f32.mxu0 %v6047
        %6241 = vmatmul.mubr.f32.gmra.mxu0 %v6015
        %v6242 = vpop.f32.mrf.mxu0
        %v6243 = vadd.f32 0.0, %v6242
        %v6244 = vpop.f32.mrf.mxu0
        %6245 = vmatprep.mubr.f32.mxu0 %v6048
        %6246 = vmatmul.mubr.f32.gmra.mxu0 %v6016
        %v6247 = vpop.f32.mrf.mxu0
        %v6248 = vadd.f32 0.0, %v6247
        %v6249 = vpop.f32.mrf.mxu0
        %6250 = vmatprep.mubr.f32.mxu0 %v6049
        %6251 = vmatmul.mubr.f32.gmra.mxu0 %v6017
        %v6252 = vpop.f32.mrf.mxu0
        %v6253 = vadd.f32 0.0, %v6252
        %v6254 = vpop.f32.mrf.mxu0
        %6255 = vmatprep.mubr.f32.mxu0 %v6050
        %6256 = vmatmul.mubr.f32.gmra.mxu0 %v6018
        %v6257 = vpop.f32.mrf.mxu0
        %v6258 = vadd.f32 0.0, %v6257
        %v6259 = vpop.f32.mrf.mxu0
        %6260 = vmatprep.mubr.f32.mxu0 %v6051
        %6261 = vmatmul.mubr.f32.gmra.mxu0 %v6019
        %v6262 = vpop.f32.mrf.mxu0
        %v6263 = vadd.f32 0.0, %v6262
        %v6264 = vpop.f32.mrf.mxu0
        %6265 = vmatprep.mubr.f32.mxu0 %v6052
        %6266 = vmatmul.mubr.f32.gmra.mxu0 %v6020
        %v6267 = vpop.f32.mrf.mxu0
        %v6268 = vadd.f32 0.0, %v6267
        %v6269 = vpop.f32.mrf.mxu0
        %6270 = vmatprep.mubr.f32.mxu0 %v6053
        %6271 = vmatmul.mubr.f32.gmra.mxu0 %v6021
        %v6272 = vpop.f32.mrf.mxu0
        %v6273 = vadd.f32 0.0, %v6272
        %v6274 = vpop.f32.mrf.mxu0
        %6275 = vmatprep.mubr.f32.mxu0 %v6054
        %6276 = vmatmul.mubr.f32.gmra.mxu0 %v6022
        %v6277 = vpop.f32.mrf.mxu0
        %v6278 = vadd.f32 0.0, %v6277
        %v6279 = vpop.f32.mrf.mxu0
        %6280 = vmatprep.mubr.f32.mxu0 %v6055
        %6281 = vmatmul.mubr.f32.gmra.mxu0 %v6023
        %v6282 = vpop.f32.mrf.mxu0
        %v6283 = vadd.f32 0.0, %v6282
        %v6284 = vpop.f32.mrf.mxu0
        %6285 = vmatprep.mubr.f32.mxu0 %v6056
        %6286 = vmatmul.mubr.f32.gmra.mxu0 %v6024
        %v6287 = vpop.f32.mrf.mxu0
        %v6288 = vadd.f32 0.0, %v6287
        %v6289 = vpop.f32.mrf.mxu0
        %6290 = vmatprep.mubr.f32.mxu0 %v6057
        %6291 = vmatmul.mubr.f32.gmra.mxu0 %v6025
        %v6292 = vpop.f32.mrf.mxu0
        %v6293 = vadd.f32 0.0, %v6292
        %v6294 = vpop.f32.mrf.mxu0
        %6295 = vmatprep.mubr.f32.mxu0 %v6058
        %6296 = vmatmul.mubr.f32.gmra.mxu0 %v6026
        %v6297 = vpop.f32.mrf.mxu0
        %v6298 = vadd.f32 0.0, %v6297
        %v6299 = vpop.f32.mrf.mxu0
        %6300 = vmatprep.mubr.f32.mxu0 %v6059
        %6301 = vmatmul.mubr.f32.gmra.mxu0 %v6027
        %v6302 = vpop.f32.mrf.mxu0
        %v6303 = vadd.f32 0.0, %v6302
        %v6304 = vpop.f32.mrf.mxu0
        %6305 = vmatprep.mubr.f32.mxu0 %v6060
        %6306 = vmatmul.mubr.f32.gmra.mxu0 %v6028
        %v6307 = vpop.f32.mrf.mxu0
        %v6308 = vadd.f32 0.0, %v6307
        %v6309 = vpop.f32.mrf.mxu0
        %6310 = vmatprep.mubr.f32.mxu0 %v6061
        %6311 = vmatmul.mubr.f32.gmra.mxu0 %v6029
        %v6312 = vpop.f32.mrf.mxu0
        %v6313 = vadd.f32 0.0, %v6312
        %v6314 = vpop.f32.mrf.mxu0
        %6315 = vmatprep.mubr.f32.mxu0 %v6062
        %6316 = vmatmul.mubr.f32.gmra.mxu0 %v6030
        %v6317 = vpop.f32.mrf.mxu0
        %v6318 = vadd.f32 0.0, %v6317
        %v6319 = vpop.f32.mrf.mxu0
        %6320 = vmatprep.mubr.f32.mxu0 %v6063
        %6321 = vmatmul.mubr.f32.gmra.mxu0 %v6031
        %v6322 = vpop.f32.mrf.mxu0
        %v6323 = vadd.f32 0.0, %v6322
        %v6324 = vpop.f32.mrf.mxu0
        %6325 = vmatprep.mubr.f32.mxu0 %v6064
        %6326 = vmatmul.mubr.f32.gmra.mxu0 %v6032
        %v6327 = vpop.f32.mrf.mxu0
        %v6328 = vadd.f32 0.0, %v6327
        %v6329 = vpop.f32.mrf.mxu0
        %6330 = vmatprep.mubr.f32.mxu0 %v6065
        %6331 = vmatmul.mubr.f32.gmra.mxu0 %v6033
        %v6332 = vpop.f32.mrf.mxu0
        %v6333 = vadd.f32 0.0, %v6332
        %v6334 = vpop.f32.mrf.mxu0
        %6335 = vmatprep.mubr.f32.mxu0 %v6066
        %6336 = vmatmul.mubr.f32.gmra.mxu0 %v6034
        %v6337 = vpop.f32.mrf.mxu0
        %v6338 = vadd.f32 0.0, %v6337
        %v6339 = vpop.f32.mrf.mxu0
        %6340 = vmatprep.mubr.f32.mxu0 %v6067
        %6341 = vmatmul.mubr.f32.gmra.mxu0 %v6035
        %v6342 = vpop.f32.mrf.mxu0
        %v6343 = vadd.f32 0.0, %v6342
        %v6344 = vpop.f32.mrf.mxu0
        %6345 = vmatprep.mubr.f32.mxu0 %v6068
        %6346 = vmatmul.mubr.f32.gmra.mxu0 %v6036
        %v6347 = vpop.f32.mrf.mxu0
        %v6348 = vadd.f32 0.0, %v6347
        %v6349 = vpop.f32.mrf.mxu0
        %6350 = vmatprep.mubr.f32.mxu0 %v6069
        %6351 = vmatmul.mubr.f32.gmra.mxu0 %v6037
        %v6352 = vpop.f32.mrf.mxu0
        %v6353 = vadd.f32 0.0, %v6352
        %v6354 = vpop.f32.mrf.mxu0
        %6355 = vmatprep.mubr.f32.mxu0 %v6070
        %6356 = vmatmul.mubr.f32.gmra.mxu0 %v6038
        %v6357 = vpop.f32.mrf.mxu0
        %v6358 = vadd.f32 0.0, %v6357
        %v6359 = vpop.f32.mrf.mxu0
        %6360 = vmatprep.mubr.f32.mxu0 %v6071
        %6361 = vmatmul.mubr.f32.gmra.mxu0 %v6039
        %v6362 = vpop.f32.mrf.mxu0
        %v6363 = vadd.f32 0.0, %v6362
        %v6364 = vpop.f32.mrf.mxu0
        %6365 = vmatprep.mubr.f32.mxu0 %v6072
        %6366 = vmatmul.mubr.f32.gmra.mxu0 %v6040
        %v6367 = vpop.f32.mrf.mxu0
        %v6368 = vadd.f32 0.0, %v6367
        %v6369 = vpop.f32.mrf.mxu0
        %6370 = vmatprep.mubr.f32.mxu0 %v6073
        %6371 = vmatmul.mubr.f32.gmra.mxu0 %v6041
        %v6372 = vpop.f32.mrf.mxu0
        %v6373 = vadd.f32 0.0, %v6372
        %v6374 = vpop.f32.mrf.mxu0
        %6375 = vmatprep.mubr.f32.mxu0 %v6074
        %6376 = vmatmul.mubr.f32.gmra.mxu0 %v6042
        %v6377 = vpop.f32.mrf.mxu0
        %v6378 = vadd.f32 0.0, %v6377
        %v6379 = vpop.f32.mrf.mxu0
        %6380 = vdwg.mxu0
        %6381 = vmatprep.subr.mxu0 0.0
        %6382 = vmatpush1.msra.mxu0 %v6155
        %6383 = vmatprep.subr.mxu0 0.0
        %6384 = vmatpush1.msra.mxu0 %v6154
        %6385 = vmatprep.subr.mxu0 0.0
        %6386 = vmatpush1.msra.mxu0 %v6153
        %6387 = vmatprep.subr.mxu0 0.0
        %6388 = vmatpush1.msra.mxu0 %v6152
        %6389 = vmatprep.subr.mxu0 0.0
        %6390 = vmatpush1.msra.mxu0 %v6151
        %6391 = vmatprep.subr.mxu0 0.0
        %6392 = vmatpush1.msra.mxu0 %v6150
        %6393 = vmatprep.subr.mxu0 0.0
        %6394 = vmatpush1.msra.mxu0 %v6149
        %6395 = vmatprep.subr.mxu0 0.0
        %6396 = vmatpush1.msra.mxu0 %v6148
        %6397 = vmatprep.subr.mxu0 0.0
        %6398 = vmatpush1.msra.mxu0 %v6147
        %6399 = vmatprep.subr.mxu0 0.0
        %6400 = vmatpush1.msra.mxu0 %v6146
        %6401 = vmatprep.subr.mxu0 0.0
        %6402 = vmatpush1.msra.mxu0 %v6145
        %6403 = vmatprep.subr.mxu0 0.0
        %6404 = vmatpush1.msra.mxu0 %v6144
        %6405 = vmatprep.subr.mxu0 0.0
        %6406 = vmatpush1.msra.mxu0 %v6143
        %6407 = vmatprep.subr.mxu0 0.0
        %6408 = vmatpush1.msra.mxu0 %v6142
        %6409 = vmatprep.subr.mxu0 0.0
        %6410 = vmatpush1.msra.mxu0 %v6141
        %6411 = vmatprep.subr.mxu0 0.0
        %6412 = vmatpush1.msra.mxu0 %v6140
        %6413 = vmatprep.subr.mxu0 0.0
        %6414 = vmatpush2.msra.mxu0 0.0
        %6415 = vmatprep.subr.mxu0 0.0
        %6416 = vmatpush2.msra.mxu0 0.0
        %6417 = vmatprep.subr.mxu0 0.0
        %6418 = vmatpush2.msra.mxu0 0.0
        %6419 = vmatprep.subr.mxu0 0.0
        %6420 = vmatpush2.msra.mxu0 0.0
        %6421 = vmatprep.subr.mxu0 0.0
        %6422 = vmatpush2.msra.mxu0 0.0
        %6423 = vmatprep.subr.mxu0 0.0
        %6424 = vmatpush2.msra.mxu0 0.0
        %6425 = vmatprep.subr.mxu0 0.0
        %6426 = vmatpush2.msra.mxu0 0.0
        %6427 = vmatprep.subr.mxu0 0.0
        %6428 = vmatpush2.msra.mxu0 0.0
        %6429 = vmatprep.subr.mxu0 0.0
        %6430 = vmatpush2.msra.mxu0 0.0
        %6431 = vmatprep.subr.mxu0 0.0
        %6432 = vmatpush2.msra.mxu0 0.0
        %6433 = vmatprep.subr.mxu0 0.0
        %6434 = vmatpush2.msra.mxu0 0.0
        %6435 = vmatprep.subr.mxu0 0.0
        %6436 = vmatpush2.msra.mxu0 0.0
        %6437 = vmatprep.subr.mxu0 0.0
        %6438 = vmatpush2.msra.mxu0 0.0
        %6439 = vmatprep.subr.mxu0 0.0
        %6440 = vmatpush2.msra.mxu0 0.0
        %6441 = vmatprep.subr.mxu0 0.0
        %6442 = vmatpush2.msra.mxu0 0.0
        %6443 = vmatprep.subr.mxu0 0.0
        %6444 = vmatpush2.msra.mxu0 0.0
        %6445 = vmatprep.mubr.f32.mxu0 0.0
        %6446 = vmatmul.mubr.f32.gmra.mxu0 %v6075
        %v6447 = vpop.f32.mrf.mxu0
        %v6448 = vadd.f32 %v6223, %v6447
        %v6449 = vpop.f32.mrf.mxu0
        %6450 = vmatprep.mubr.f32.mxu0 0.0
        %6451 = vmatmul.mubr.f32.gmra.mxu0 %v6076
        %v6452 = vpop.f32.mrf.mxu0
        %v6453 = vadd.f32 %v6228, %v6452
        %v6454 = vpop.f32.mrf.mxu0
        %6455 = vmatprep.mubr.f32.mxu0 0.0
        %6456 = vmatmul.mubr.f32.gmra.mxu0 %v6077
        %v6457 = vpop.f32.mrf.mxu0
        %v6458 = vadd.f32 %v6233, %v6457
        %v6459 = vpop.f32.mrf.mxu0
        %6460 = vmatprep.mubr.f32.mxu0 0.0
        %6461 = vmatmul.mubr.f32.gmra.mxu0 %v6078
        %v6462 = vpop.f32.mrf.mxu0
        %v6463 = vadd.f32 %v6238, %v6462
        %v6464 = vpop.f32.mrf.mxu0
        %6465 = vmatprep.mubr.f32.mxu0 0.0
        %6466 = vmatmul.mubr.f32.gmra.mxu0 %v6079
        %v6467 = vpop.f32.mrf.mxu0
        %v6468 = vadd.f32 %v6243, %v6467
        %v6469 = vpop.f32.mrf.mxu0
        %6470 = vmatprep.mubr.f32.mxu0 0.0
        %6471 = vmatmul.mubr.f32.gmra.mxu0 %v6080
        %v6472 = vpop.f32.mrf.mxu0
        %v6473 = vadd.f32 %v6248, %v6472
        %v6474 = vpop.f32.mrf.mxu0
        %6475 = vmatprep.mubr.f32.mxu0 0.0
        %6476 = vmatmul.mubr.f32.gmra.mxu0 %v6081
        %v6477 = vpop.f32.mrf.mxu0
        %v6478 = vadd.f32 %v6253, %v6477
        %v6479 = vpop.f32.mrf.mxu0
        %6480 = vmatprep.mubr.f32.mxu0 0.0
        %6481 = vmatmul.mubr.f32.gmra.mxu0 %v6082
        %v6482 = vpop.f32.mrf.mxu0
        %v6483 = vadd.f32 %v6258, %v6482
        %v6484 = vpop.f32.mrf.mxu0
        %6485 = vmatprep.mubr.f32.mxu0 0.0
        %6486 = vmatmul.mubr.f32.gmra.mxu0 %v6083
        %v6487 = vpop.f32.mrf.mxu0
        %v6488 = vadd.f32 %v6263, %v6487
        %v6489 = vpop.f32.mrf.mxu0
        %6490 = vmatprep.mubr.f32.mxu0 0.0
        %6491 = vmatmul.mubr.f32.gmra.mxu0 %v6084
        %v6492 = vpop.f32.mrf.mxu0
        %v6493 = vadd.f32 %v6268, %v6492
        %v6494 = vpop.f32.mrf.mxu0
        %6495 = vmatprep.mubr.f32.mxu0 0.0
        %6496 = vmatmul.mubr.f32.gmra.mxu0 %v6085
        %v6497 = vpop.f32.mrf.mxu0
        %v6498 = vadd.f32 %v6273, %v6497
        %v6499 = vpop.f32.mrf.mxu0
        %6500 = vmatprep.mubr.f32.mxu0 0.0
        %6501 = vmatmul.mubr.f32.gmra.mxu0 %v6086
        %v6502 = vpop.f32.mrf.mxu0
        %v6503 = vadd.f32 %v6278, %v6502
        %v6504 = vpop.f32.mrf.mxu0
        %6505 = vmatprep.mubr.f32.mxu0 0.0
        %6506 = vmatmul.mubr.f32.gmra.mxu0 %v6087
        %v6507 = vpop.f32.mrf.mxu0
        %v6508 = vadd.f32 %v6283, %v6507
        %v6509 = vpop.f32.mrf.mxu0
        %6510 = vmatprep.mubr.f32.mxu0 0.0
        %6511 = vmatmul.mubr.f32.gmra.mxu0 %v6088
        %v6512 = vpop.f32.mrf.mxu0
        %v6513 = vadd.f32 %v6288, %v6512
        %v6514 = vpop.f32.mrf.mxu0
        %6515 = vmatprep.mubr.f32.mxu0 0.0
        %6516 = vmatmul.mubr.f32.gmra.mxu0 %v6089
        %v6517 = vpop.f32.mrf.mxu0
        %v6518 = vadd.f32 %v6293, %v6517
        %v6519 = vpop.f32.mrf.mxu0
        %6520 = vmatprep.mubr.f32.mxu0 0.0
        %6521 = vmatmul.mubr.f32.gmra.mxu0 %v6090
        %v6522 = vpop.f32.mrf.mxu0
        %v6523 = vadd.f32 %v6298, %v6522
        %v6524 = vpop.f32.mrf.mxu0
        %6525 = vmatprep.mubr.f32.mxu0 0.0
        %6526 = vmatmul.mubr.f32.gmra.mxu0 %v6091
        %v6527 = vpop.f32.mrf.mxu0
        %v6528 = vadd.f32 %v6303, %v6527
        %v6529 = vpop.f32.mrf.mxu0
        %6530 = vmatprep.mubr.f32.mxu0 0.0
        %6531 = vmatmul.mubr.f32.gmra.mxu0 %v6092
        %v6532 = vpop.f32.mrf.mxu0
        %v6533 = vadd.f32 %v6308, %v6532
        %v6534 = vpop.f32.mrf.mxu0
        %6535 = vmatprep.mubr.f32.mxu0 0.0
        %6536 = vmatmul.mubr.f32.gmra.mxu0 %v6093
        %v6537 = vpop.f32.mrf.mxu0
        %v6538 = vadd.f32 %v6313, %v6537
        %v6539 = vpop.f32.mrf.mxu0
        %6540 = vmatprep.mubr.f32.mxu0 0.0
        %6541 = vmatmul.mubr.f32.gmra.mxu0 %v6094
        %v6542 = vpop.f32.mrf.mxu0
        %v6543 = vadd.f32 %v6318, %v6542
        %v6544 = vpop.f32.mrf.mxu0
        %6545 = vmatprep.mubr.f32.mxu0 0.0
        %6546 = vmatmul.mubr.f32.gmra.mxu0 %v6095
        %v6547 = vpop.f32.mrf.mxu0
        %v6548 = vadd.f32 %v6323, %v6547
        %v6549 = vpop.f32.mrf.mxu0
        %6550 = vmatprep.mubr.f32.mxu0 0.0
        %6551 = vmatmul.mubr.f32.gmra.mxu0 %v6096
        %v6552 = vpop.f32.mrf.mxu0
        %v6553 = vadd.f32 %v6328, %v6552
        %v6554 = vpop.f32.mrf.mxu0
        %6555 = vmatprep.mubr.f32.mxu0 0.0
        %6556 = vmatmul.mubr.f32.gmra.mxu0 %v6097
        %v6557 = vpop.f32.mrf.mxu0
        %v6558 = vadd.f32 %v6333, %v6557
        %v6559 = vpop.f32.mrf.mxu0
        %6560 = vmatprep.mubr.f32.mxu0 0.0
        %6561 = vmatmul.mubr.f32.gmra.mxu0 %v6098
        %v6562 = vpop.f32.mrf.mxu0
        %v6563 = vadd.f32 %v6338, %v6562
        %v6564 = vpop.f32.mrf.mxu0
        %6565 = vmatprep.mubr.f32.mxu0 0.0
        %6566 = vmatmul.mubr.f32.gmra.mxu0 %v6099
        %v6567 = vpop.f32.mrf.mxu0
        %v6568 = vadd.f32 %v6343, %v6567
        %v6569 = vpop.f32.mrf.mxu0
        %6570 = vmatprep.mubr.f32.mxu0 0.0
        %6571 = vmatmul.mubr.f32.gmra.mxu0 %v6100
        %v6572 = vpop.f32.mrf.mxu0
        %v6573 = vadd.f32 %v6348, %v6572
        %v6574 = vpop.f32.mrf.mxu0
        %6575 = vmatprep.mubr.f32.mxu0 0.0
        %6576 = vmatmul.mubr.f32.gmra.mxu0 %v6101
        %v6577 = vpop.f32.mrf.mxu0
        %v6578 = vadd.f32 %v6353, %v6577
        %v6579 = vpop.f32.mrf.mxu0
        %6580 = vmatprep.mubr.f32.mxu0 0.0
        %6581 = vmatmul.mubr.f32.gmra.mxu0 %v6102
        %v6582 = vpop.f32.mrf.mxu0
        %v6583 = vadd.f32 %v6358, %v6582
        %v6584 = vpop.f32.mrf.mxu0
        %6585 = vmatprep.mubr.f32.mxu0 0.0
        %6586 = vmatmul.mubr.f32.gmra.mxu0 %v6103
        %v6587 = vpop.f32.mrf.mxu0
        %v6588 = vadd.f32 %v6363, %v6587
        %v6589 = vpop.f32.mrf.mxu0
        %6590 = vmatprep.mubr.f32.mxu0 0.0
        %6591 = vmatmul.mubr.f32.gmra.mxu0 %v6104
        %v6592 = vpop.f32.mrf.mxu0
        %v6593 = vadd.f32 %v6368, %v6592
        %v6594 = vpop.f32.mrf.mxu0
        %6595 = vmatprep.mubr.f32.mxu0 0.0
        %6596 = vmatmul.mubr.f32.gmra.mxu0 %v6105
        %v6597 = vpop.f32.mrf.mxu0
        %v6598 = vadd.f32 %v6373, %v6597
        %v6599 = vpop.f32.mrf.mxu0
        %6600 = vmatprep.mubr.f32.mxu0 0.0
        %6601 = vmatmul.mubr.f32.gmra.mxu0 %v6106
        %v6602 = vpop.f32.mrf.mxu0
        %v6603 = vadd.f32 %v6378, %v6602
        %v6604 = vpop.f32.mrf.mxu0
        %6605 = vdwg.mxu0
        %v6606 = vld [vmem:[#allocation5] sm:$0xff]
        %v6607 = vld [vmem:[#allocation5 + $0x8] sm:$0xff]
        %v6608 = vld [vmem:[#allocation5 + $0x10] sm:$0xff]
        %v6609 = vld [vmem:[#allocation5 + $0x18] sm:$0xff]
        %v6610 = vld [vmem:[#allocation5 + $0x20] sm:$0xff]
        %v6611 = vld [vmem:[#allocation5 + $0x28] sm:$0xff]
        %v6612 = vld [vmem:[#allocation5 + $0x30] sm:$0xff]
        %v6613 = vld [vmem:[#allocation5 + $0x38] sm:$0xff]
        %v6614 = vld [vmem:[#allocation5 + $0x40] sm:$0xff]
        %v6615 = vld [vmem:[#allocation5 + $0x48] sm:$0xff]
        %v6616 = vld [vmem:[#allocation5 + $0x50] sm:$0xff]
        %v6617 = vld [vmem:[#allocation5 + $0x58] sm:$0xff]
        %v6618 = vld [vmem:[#allocation5 + $0x60] sm:$0xff]
        %v6619 = vld [vmem:[#allocation5 + $0x68] sm:$0xff]
        %v6620 = vld [vmem:[#allocation5 + $0x70] sm:$0xff]
        %v6621 = vld [vmem:[#allocation5 + $0x78] sm:$0xff]
        %v6622 = vld [vmem:[#allocation5 + $0x80] sm:$0xff]
        %v6623 = vld [vmem:[#allocation5 + $0x88] sm:$0xff]
        %v6624 = vld [vmem:[#allocation5 + $0x90] sm:$0xff]
        %v6625 = vld [vmem:[#allocation5 + $0x98] sm:$0xff]
        %v6626 = vld [vmem:[#allocation5 + $0xa0] sm:$0xff]
        %v6627 = vld [vmem:[#allocation5 + $0xa8] sm:$0xff]
        %v6628 = vld [vmem:[#allocation5 + $0xb0] sm:$0xff]
        %v6629 = vld [vmem:[#allocation5 + $0xb8] sm:$0xff]
        %v6630 = vld [vmem:[#allocation5 + $0xc0] sm:$0xff]
        %v6631 = vld [vmem:[#allocation5 + $0xc8] sm:$0xff]
        %v6632 = vld [vmem:[#allocation5 + $0xd0] sm:$0xff]
        %v6633 = vld [vmem:[#allocation5 + $0xd8] sm:$0xff]
        %v6634 = vld [vmem:[#allocation5 + $0xe0] sm:$0xff]
        %v6635 = vld [vmem:[#allocation5 + $0xe8] sm:$0xff]
        %v6636 = vld [vmem:[#allocation5 + $0xf0] sm:$0xff]
        %v6637 = vld [vmem:[#allocation5 + $0xf8] sm:$0xff]
        %v6638 = vadd.f32 %v6606, %v6448
        %v6639 = vadd.f32 %v6607, %v6453
        %v6640 = vadd.f32 %v6608, %v6458
        %v6641 = vadd.f32 %v6609, %v6463
        %v6642 = vadd.f32 %v6610, %v6468
        %v6643 = vadd.f32 %v6611, %v6473
        %v6644 = vadd.f32 %v6612, %v6478
        %v6645 = vadd.f32 %v6613, %v6483
        %v6646 = vadd.f32 %v6614, %v6488
        %v6647 = vadd.f32 %v6615, %v6493
        %v6648 = vadd.f32 %v6616, %v6498
        %v6649 = vadd.f32 %v6617, %v6503
        %v6650 = vadd.f32 %v6618, %v6508
        %v6651 = vadd.f32 %v6619, %v6513
        %v6652 = vadd.f32 %v6620, %v6518
        %v6653 = vadd.f32 %v6621, %v6523
        %v6654 = vadd.f32 %v6622, %v6528
        %v6655 = vadd.f32 %v6623, %v6533
        %v6656 = vadd.f32 %v6624, %v6538
        %v6657 = vadd.f32 %v6625, %v6543
        %v6658 = vadd.f32 %v6626, %v6548
        %v6659 = vadd.f32 %v6627, %v6553
        %v6660 = vadd.f32 %v6628, %v6558
        %v6661 = vadd.f32 %v6629, %v6563
        %v6662 = vadd.f32 %v6630, %v6568
        %v6663 = vadd.f32 %v6631, %v6573
        %v6664 = vadd.f32 %v6632, %v6578
        %v6665 = vadd.f32 %v6633, %v6583
        %v6666 = vadd.f32 %v6634, %v6588
        %v6667 = vadd.f32 %v6635, %v6593
        %v6668 = vadd.f32 %v6636, %v6598
        %v6669 = vadd.f32 %v6637, %v6603
        %6670 = vst [vmem:[#allocation5] sm:$0xff] %v6638
        %6671 = vst [vmem:[#allocation5 + $0x8] sm:$0xff] %v6639
        %6672 = vst [vmem:[#allocation5 + $0x10] sm:$0xff] %v6640
        %6673 = vst [vmem:[#allocation5 + $0x18] sm:$0xff] %v6641
        %6674 = vst [vmem:[#allocation5 + $0x20] sm:$0xff] %v6642
        %6675 = vst [vmem:[#allocation5 + $0x28] sm:$0xff] %v6643
        %6676 = vst [vmem:[#allocation5 + $0x30] sm:$0xff] %v6644
        %6677 = vst [vmem:[#allocation5 + $0x38] sm:$0xff] %v6645
        %6678 = vst [vmem:[#allocation5 + $0x40] sm:$0xff] %v6646
        %6679 = vst [vmem:[#allocation5 + $0x48] sm:$0xff] %v6647
        %6680 = vst [vmem:[#allocation5 + $0x50] sm:$0xff] %v6648
        %6681 = vst [vmem:[#allocation5 + $0x58] sm:$0xff] %v6649
        %6682 = vst [vmem:[#allocation5 + $0x60] sm:$0xff] %v6650
        %6683 = vst [vmem:[#allocation5 + $0x68] sm:$0xff] %v6651
        %6684 = vst [vmem:[#allocation5 + $0x70] sm:$0xff] %v6652
        %6685 = vst [vmem:[#allocation5 + $0x78] sm:$0xff] %v6653
        %6686 = vst [vmem:[#allocation5 + $0x80] sm:$0xff] %v6654
        %6687 = vst [vmem:[#allocation5 + $0x88] sm:$0xff] %v6655
        %6688 = vst [vmem:[#allocation5 + $0x90] sm:$0xff] %v6656
        %6689 = vst [vmem:[#allocation5 + $0x98] sm:$0xff] %v6657
        %6690 = vst [vmem:[#allocation5 + $0xa0] sm:$0xff] %v6658
        %6691 = vst [vmem:[#allocation5 + $0xa8] sm:$0xff] %v6659
        %6692 = vst [vmem:[#allocation5 + $0xb0] sm:$0xff] %v6660
        %6693 = vst [vmem:[#allocation5 + $0xb8] sm:$0xff] %v6661
        %6694 = vst [vmem:[#allocation5 + $0xc0] sm:$0xff] %v6662
        %6695 = vst [vmem:[#allocation5 + $0xc8] sm:$0xff] %v6663
        %6696 = vst [vmem:[#allocation5 + $0xd0] sm:$0xff] %v6664
        %6697 = vst [vmem:[#allocation5 + $0xd8] sm:$0xff] %v6665
        %6698 = vst [vmem:[#allocation5 + $0xe0] sm:$0xff] %v6666
        %6699 = vst [vmem:[#allocation5 + $0xe8] sm:$0xff] %v6667
        %6700 = vst [vmem:[#allocation5 + $0xf0] sm:$0xff] %v6668
        %6701 = vst [vmem:[#allocation5 + $0xf8] sm:$0xff] %v6669
        %v6702 = vld [vmem:[#allocation5] sm:$0xff]
        %v6703 = vld [vmem:[#allocation5 + $0x8] sm:$0xff]
        %v6704 = vld [vmem:[#allocation5 + $0x10] sm:$0xff]
        %v6705 = vld [vmem:[#allocation5 + $0x18] sm:$0xff]
        %v6706 = vld [vmem:[#allocation5 + $0x20] sm:$0xff]
        %v6707 = vld [vmem:[#allocation5 + $0x28] sm:$0xff]
        %v6708 = vld [vmem:[#allocation5 + $0x30] sm:$0xff]
        %v6709 = vld [vmem:[#allocation5 + $0x38] sm:$0xff]
        %v6710 = vld [vmem:[#allocation5 + $0x40] sm:$0xff]
        %v6711 = vld [vmem:[#allocation5 + $0x48] sm:$0xff]
        %v6712 = vld [vmem:[#allocation5 + $0x50] sm:$0xff]
        %v6713 = vld [vmem:[#allocation5 + $0x58] sm:$0xff]
        %v6714 = vld [vmem:[#allocation5 + $0x60] sm:$0xff]
        %v6715 = vld [vmem:[#allocation5 + $0x68] sm:$0xff]
        %v6716 = vld [vmem:[#allocation5 + $0x70] sm:$0xff]
        %v6717 = vld [vmem:[#allocation5 + $0x78] sm:$0xff]
        %v6718 = vld [vmem:[#allocation5 + $0x80] sm:$0xff]
        %v6719 = vld [vmem:[#allocation5 + $0x88] sm:$0xff]
        %v6720 = vld [vmem:[#allocation5 + $0x90] sm:$0xff]
        %v6721 = vld [vmem:[#allocation5 + $0x98] sm:$0xff]
        %v6722 = vld [vmem:[#allocation5 + $0xa0] sm:$0xff]
        %v6723 = vld [vmem:[#allocation5 + $0xa8] sm:$0xff]
        %v6724 = vld [vmem:[#allocation5 + $0xb0] sm:$0xff]
        %v6725 = vld [vmem:[#allocation5 + $0xb8] sm:$0xff]
        %v6726 = vld [vmem:[#allocation5 + $0xc0] sm:$0xff]
        %v6727 = vld [vmem:[#allocation5 + $0xc8] sm:$0xff]
        %v6728 = vld [vmem:[#allocation5 + $0xd0] sm:$0xff]
        %v6729 = vld [vmem:[#allocation5 + $0xd8] sm:$0xff]
        %v6730 = vld [vmem:[#allocation5 + $0xe0] sm:$0xff]
        %v6731 = vld [vmem:[#allocation5 + $0xe8] sm:$0xff]
        %v6732 = vld [vmem:[#allocation5 + $0xf0] sm:$0xff]
        %v6733 = vld [vmem:[#allocation5 + $0xf8] sm:$0xff]
        %v6734 = vld [vmem:[#allocation4] sm:$0xff]
        %v6735 = vld [vmem:[#allocation4 + $0x8] sm:$0xff]
        %v6736 = vld [vmem:[#allocation4 + $0x10] sm:$0xff]
        %v6737 = vld [vmem:[#allocation4 + $0x18] sm:$0xff]
        %v6738 = vld [vmem:[#allocation4 + $0x20] sm:$0xff]
        %v6739 = vld [vmem:[#allocation4 + $0x28] sm:$0xff]
        %v6740 = vld [vmem:[#allocation4 + $0x30] sm:$0xff]
        %v6741 = vld [vmem:[#allocation4 + $0x38] sm:$0xff]
        %v6742 = vld [vmem:[#allocation4 + $0x40] sm:$0xff]
        %v6743 = vld [vmem:[#allocation4 + $0x48] sm:$0xff]
        %v6744 = vld [vmem:[#allocation4 + $0x50] sm:$0xff]
        %v6745 = vld [vmem:[#allocation4 + $0x58] sm:$0xff]
        %v6746 = vld [vmem:[#allocation4 + $0x60] sm:$0xff]
        %v6747 = vld [vmem:[#allocation4 + $0x68] sm:$0xff]
        %v6748 = vld [vmem:[#allocation4 + $0x70] sm:$0xff]
        %v6749 = vld [vmem:[#allocation4 + $0x78] sm:$0xff]
        %v6750 = vld [vmem:[#allocation4 + $0x80] sm:$0xff]
        %v6751 = vld [vmem:[#allocation4 + $0x88] sm:$0xff]
        %v6752 = vld [vmem:[#allocation4 + $0x90] sm:$0xff]
        %v6753 = vld [vmem:[#allocation4 + $0x98] sm:$0xff]
        %v6754 = vld [vmem:[#allocation4 + $0xa0] sm:$0xff]
        %v6755 = vld [vmem:[#allocation4 + $0xa8] sm:$0xff]
        %v6756 = vld [vmem:[#allocation4 + $0xb0] sm:$0xff]
        %v6757 = vld [vmem:[#allocation4 + $0xb8] sm:$0xff]
        %v6758 = vld [vmem:[#allocation4 + $0xc0] sm:$0xff]
        %v6759 = vld [vmem:[#allocation4 + $0xc8] sm:$0xff]
        %v6760 = vld [vmem:[#allocation4 + $0xd0] sm:$0xff]
        %v6761 = vld [vmem:[#allocation4 + $0xd8] sm:$0xff]
        %v6762 = vld [vmem:[#allocation4 + $0xe0] sm:$0xff]
        %v6763 = vld [vmem:[#allocation4 + $0xe8] sm:$0xff]
        %v6764 = vld [vmem:[#allocation4 + $0xf0] sm:$0xff]
        %v6765 = vld [vmem:[#allocation4 + $0xf8] sm:$0xff]
        %v6766 = vadd.f32 %v6702, %v6734
        %v6767 = vadd.f32 %v6703, %v6735
        %v6768 = vadd.f32 %v6704, %v6736
        %v6769 = vadd.f32 %v6705, %v6737
        %v6770 = vadd.f32 %v6706, %v6738
        %v6771 = vadd.f32 %v6707, %v6739
        %v6772 = vadd.f32 %v6708, %v6740
        %v6773 = vadd.f32 %v6709, %v6741
        %v6774 = vadd.f32 %v6710, %v6742
        %v6775 = vadd.f32 %v6711, %v6743
        %v6776 = vadd.f32 %v6712, %v6744
        %v6777 = vadd.f32 %v6713, %v6745
        %v6778 = vadd.f32 %v6714, %v6746
        %v6779 = vadd.f32 %v6715, %v6747
        %v6780 = vadd.f32 %v6716, %v6748
        %v6781 = vadd.f32 %v6717, %v6749
        %v6782 = vadd.f32 %v6718, %v6750
        %v6783 = vadd.f32 %v6719, %v6751
        %v6784 = vadd.f32 %v6720, %v6752
        %v6785 = vadd.f32 %v6721, %v6753
        %v6786 = vadd.f32 %v6722, %v6754
        %v6787 = vadd.f32 %v6723, %v6755
        %v6788 = vadd.f32 %v6724, %v6756
        %v6789 = vadd.f32 %v6725, %v6757
        %v6790 = vadd.f32 %v6726, %v6758
        %v6791 = vadd.f32 %v6727, %v6759
        %v6792 = vadd.f32 %v6728, %v6760
        %v6793 = vadd.f32 %v6729, %v6761
        %v6794 = vadd.f32 %v6730, %v6762
        %v6795 = vadd.f32 %v6731, %v6763
        %v6796 = vadd.f32 %v6732, %v6764
        %v6797 = vadd.f32 %v6733, %v6765
        %v6798 = vmax.f32 %v6766, 0.0
        %v6799 = vmax.f32 %v6767, 0.0
        %v6800 = vmax.f32 %v6768, 0.0
        %v6801 = vmax.f32 %v6769, 0.0
        %v6802 = vmax.f32 %v6770, 0.0
        %v6803 = vmax.f32 %v6771, 0.0
        %v6804 = vmax.f32 %v6772, 0.0
        %v6805 = vmax.f32 %v6773, 0.0
        %v6806 = vmax.f32 %v6774, 0.0
        %v6807 = vmax.f32 %v6775, 0.0
        %v6808 = vmax.f32 %v6776, 0.0
        %v6809 = vmax.f32 %v6777, 0.0
        %v6810 = vmax.f32 %v6778, 0.0
        %v6811 = vmax.f32 %v6779, 0.0
        %v6812 = vmax.f32 %v6780, 0.0
        %v6813 = vmax.f32 %v6781, 0.0
        %v6814 = vmax.f32 %v6782, 0.0
        %v6815 = vmax.f32 %v6783, 0.0
        %v6816 = vmax.f32 %v6784, 0.0
        %v6817 = vmax.f32 %v6785, 0.0
        %v6818 = vmax.f32 %v6786, 0.0
        %v6819 = vmax.f32 %v6787, 0.0
        %v6820 = vmax.f32 %v6788, 0.0
        %v6821 = vmax.f32 %v6789, 0.0
        %v6822 = vmax.f32 %v6790, 0.0
        %v6823 = vmax.f32 %v6791, 0.0
        %v6824 = vmax.f32 %v6792, 0.0
        %v6825 = vmax.f32 %v6793, 0.0
        %v6826 = vmax.f32 %v6794, 0.0
        %v6827 = vmax.f32 %v6795, 0.0
        %v6828 = vmax.f32 %v6796, 0.0
        %v6829 = vmax.f32 %v6797, 0.0
        %6830 = vst [vmem:[%s412 + $0x1] sm:$0xff] %v6798
        %6831 = vst [vmem:[%s412 + $0x9] sm:$0xff] %v6799
        %6832 = vst [vmem:[%s412 + $0x19] sm:$0xff] %v6800
        %6833 = vst [vmem:[%s412 + $0x21] sm:$0xff] %v6801
        %6834 = vst [vmem:[%s412 + $0x31] sm:$0xff] %v6802
        %6835 = vst [vmem:[%s412 + $0x39] sm:$0xff] %v6803
        %6836 = vst [vmem:[%s412 + $0x49] sm:$0xff] %v6804
        %6837 = vst [vmem:[%s412 + $0x51] sm:$0xff] %v6805
        %6838 = vst [vmem:[%s412 + $0x61] sm:$0xff] %v6806
        %6839 = vst [vmem:[%s412 + $0x69] sm:$0xff] %v6807
        %6840 = vst [vmem:[%s412 + $0x79] sm:$0xff] %v6808
        %6841 = vst [vmem:[%s412 + $0x81] sm:$0xff] %v6809
        %6842 = vst [vmem:[%s412 + $0x91] sm:$0xff] %v6810
        %6843 = vst [vmem:[%s412 + $0x99] sm:$0xff] %v6811
        %6844 = vst [vmem:[%s412 + $0xa9] sm:$0xff] %v6812
        %6845 = vst [vmem:[%s412 + $0xb1] sm:$0xff] %v6813
        %6846 = vst [vmem:[%s412 + $0xc1] sm:$0xff] %v6814
        %6847 = vst [vmem:[%s412 + $0xc9] sm:$0xff] %v6815
        %6848 = vst [vmem:[%s412 + $0xd9] sm:$0xff] %v6816
        %6849 = vst [vmem:[%s412 + $0xe1] sm:$0xff] %v6817
        %6850 = vst [vmem:[%s412 + $0xf1] sm:$0xff] %v6818
        %6851 = vst [vmem:[%s412 + $0xf9] sm:$0xff] %v6819
        %6852 = vst [vmem:[%s412 + $0x109] sm:$0xff] %v6820
        %6853 = vst [vmem:[%s412 + $0x111] sm:$0xff] %v6821
        %6854 = vst [vmem:[%s412 + $0x121] sm:$0xff] %v6822
        %6855 = vst [vmem:[%s412 + $0x129] sm:$0xff] %v6823
        %6856 = vst [vmem:[%s412 + $0x139] sm:$0xff] %v6824
        %6857 = vst [vmem:[%s412 + $0x141] sm:$0xff] %v6825
        %6858 = vst [vmem:[%s412 + $0x151] sm:$0xff] %v6826
        %6859 = vst [vmem:[%s412 + $0x159] sm:$0xff] %v6827
        %6860 = vst [vmem:[%s412 + $0x169] sm:$0xff] %v6828
        %6861 = vst [vmem:[%s412 + $0x171] sm:$0xff] %v6829
      $region49: #{drrn_forward.1} parent=43 // loop_footer
        %s2587 = sadd.s32 1, %s2583
      $region50: #{drrn_forward.1} parent=43 // loop_footer_branch
        %2582 = sbr.rel target = $region46
      $region51: #{drrn_forward.1} parent=43 // loop_exit
        _
      %v6862 = vld [vmem:[#allocation2] sm:$0xff]
      %v6863 = vld [vmem:[#allocation2 + $0x8] sm:$0xff]
      %v6864 = vld [vmem:[#allocation2 + $0x18] sm:$0xff]
      %v6865 = vld [vmem:[#allocation2 + $0x20] sm:$0xff]
      %v6866 = vld [vmem:[#allocation2 + $0x30] sm:$0xff]
      %v6867 = vld [vmem:[#allocation2 + $0x38] sm:$0xff]
      %v6868 = vld [vmem:[#allocation2 + $0x48] sm:$0xff]
      %v6869 = vld [vmem:[#allocation2 + $0x50] sm:$0xff]
      %v6870 = vld [vmem:[#allocation2 + $0x60] sm:$0xff]
      %v6871 = vld [vmem:[#allocation2 + $0x68] sm:$0xff]
      %v6872 = vld [vmem:[#allocation2 + $0x78] sm:$0xff]
      %v6873 = vld [vmem:[#allocation2 + $0x80] sm:$0xff]
      %v6874 = vld [vmem:[#allocation2 + $0x90] sm:$0xff]
      %v6875 = vld [vmem:[#allocation2 + $0x98] sm:$0xff]
      %v6876 = vld [vmem:[#allocation2 + $0xa8] sm:$0xff]
      %v6877 = vld [vmem:[#allocation2 + $0xb0] sm:$0xff]
      %v6878 = vld [vmem:[#allocation2 + $0xc0] sm:$0xff]
      %v6879 = vld [vmem:[#allocation2 + $0xc8] sm:$0xff]
      %v6880 = vld [vmem:[#allocation2 + $0xd8] sm:$0xff]
      %v6881 = vld [vmem:[#allocation2 + $0xe0] sm:$0xff]
      %v6882 = vld [vmem:[#allocation2 + $0xf0] sm:$0xff]
      %v6883 = vld [vmem:[#allocation2 + $0xf8] sm:$0xff]
      %v6884 = vld [vmem:[#allocation2 + $0x108] sm:$0xff]
      %v6885 = vld [vmem:[#allocation2 + $0x110] sm:$0xff]
      %v6886 = vld [vmem:[#allocation2 + $0x120] sm:$0xff]
      %v6887 = vld [vmem:[#allocation2 + $0x128] sm:$0xff]
      %v6888 = vld [vmem:[#allocation2 + $0x138] sm:$0xff]
      %v6889 = vld [vmem:[#allocation2 + $0x140] sm:$0xff]
      %v6890 = vld [vmem:[#allocation2 + $0x150] sm:$0xff]
      %v6891 = vld [vmem:[#allocation2 + $0x158] sm:$0xff]
      %v6892 = vld [vmem:[#allocation2 + $0x168] sm:$0xff]
      %v6893 = vld [vmem:[#allocation2 + $0x170] sm:$0xff]
      %v6894 = vld [vmem:[#allocation2 + $0x1] sm:$0xff]
      %v6895 = vld [vmem:[#allocation2 + $0x9] sm:$0xff]
      %v6896 = vld [vmem:[#allocation2 + $0x19] sm:$0xff]
      %v6897 = vld [vmem:[#allocation2 + $0x21] sm:$0xff]
      %v6898 = vld [vmem:[#allocation2 + $0x31] sm:$0xff]
      %v6899 = vld [vmem:[#allocation2 + $0x39] sm:$0xff]
      %v6900 = vld [vmem:[#allocation2 + $0x49] sm:$0xff]
      %v6901 = vld [vmem:[#allocation2 + $0x51] sm:$0xff]
      %v6902 = vld [vmem:[#allocation2 + $0x61] sm:$0xff]
      %v6903 = vld [vmem:[#allocation2 + $0x69] sm:$0xff]
      %v6904 = vld [vmem:[#allocation2 + $0x79] sm:$0xff]
      %v6905 = vld [vmem:[#allocation2 + $0x81] sm:$0xff]
      %v6906 = vld [vmem:[#allocation2 + $0x91] sm:$0xff]
      %v6907 = vld [vmem:[#allocation2 + $0x99] sm:$0xff]
      %v6908 = vld [vmem:[#allocation2 + $0xa9] sm:$0xff]
      %v6909 = vld [vmem:[#allocation2 + $0xb1] sm:$0xff]
      %v6910 = vld [vmem:[#allocation2 + $0xc1] sm:$0xff]
      %v6911 = vld [vmem:[#allocation2 + $0xc9] sm:$0xff]
      %v6912 = vld [vmem:[#allocation2 + $0xd9] sm:$0xff]
      %v6913 = vld [vmem:[#allocation2 + $0xe1] sm:$0xff]
      %v6914 = vld [vmem:[#allocation2 + $0xf1] sm:$0xff]
      %v6915 = vld [vmem:[#allocation2 + $0xf9] sm:$0xff]
      %v6916 = vld [vmem:[#allocation2 + $0x109] sm:$0xff]
      %v6917 = vld [vmem:[#allocation2 + $0x111] sm:$0xff]
      %v6918 = vld [vmem:[#allocation2 + $0x121] sm:$0xff]
      %v6919 = vld [vmem:[#allocation2 + $0x129] sm:$0xff]
      %v6920 = vld [vmem:[#allocation2 + $0x139] sm:$0xff]
      %v6921 = vld [vmem:[#allocation2 + $0x141] sm:$0xff]
      %v6922 = vld [vmem:[#allocation2 + $0x151] sm:$0xff]
      %v6923 = vld [vmem:[#allocation2 + $0x159] sm:$0xff]
      %v6924 = vld [vmem:[#allocation2 + $0x169] sm:$0xff]
      %v6925 = vld [vmem:[#allocation2 + $0x171] sm:$0xff]
      %v6926 = vld [vmem:[#allocation2 + $0x2] sm:$0xff]
      %v6927 = vld [vmem:[#allocation2 + $0xa] sm:$0xff]
      %v6928 = vld [vmem:[#allocation2 + $0x1a] sm:$0xff]
      %v6929 = vld [vmem:[#allocation2 + $0x22] sm:$0xff]
      %v6930 = vld [vmem:[#allocation2 + $0x32] sm:$0xff]
      %v6931 = vld [vmem:[#allocation2 + $0x3a] sm:$0xff]
      %v6932 = vld [vmem:[#allocation2 + $0x4a] sm:$0xff]
      %v6933 = vld [vmem:[#allocation2 + $0x52] sm:$0xff]
      %v6934 = vld [vmem:[#allocation2 + $0x62] sm:$0xff]
      %v6935 = vld [vmem:[#allocation2 + $0x6a] sm:$0xff]
      %v6936 = vld [vmem:[#allocation2 + $0x7a] sm:$0xff]
      %v6937 = vld [vmem:[#allocation2 + $0x82] sm:$0xff]
      %v6938 = vld [vmem:[#allocation2 + $0x92] sm:$0xff]
      %v6939 = vld [vmem:[#allocation2 + $0x9a] sm:$0xff]
      %v6940 = vld [vmem:[#allocation2 + $0xaa] sm:$0xff]
      %v6941 = vld [vmem:[#allocation2 + $0xb2] sm:$0xff]
      %v6942 = vld [vmem:[#allocation2 + $0xc2] sm:$0xff]
      %v6943 = vld [vmem:[#allocation2 + $0xca] sm:$0xff]
      %v6944 = vld [vmem:[#allocation2 + $0xda] sm:$0xff]
      %v6945 = vld [vmem:[#allocation2 + $0xe2] sm:$0xff]
      %v6946 = vld [vmem:[#allocation2 + $0xf2] sm:$0xff]
      %v6947 = vld [vmem:[#allocation2 + $0xfa] sm:$0xff]
      %v6948 = vld [vmem:[#allocation2 + $0x10a] sm:$0xff]
      %v6949 = vld [vmem:[#allocation2 + $0x112] sm:$0xff]
      %v6950 = vld [vmem:[#allocation2 + $0x122] sm:$0xff]
      %v6951 = vld [vmem:[#allocation2 + $0x12a] sm:$0xff]
      %v6952 = vld [vmem:[#allocation2 + $0x13a] sm:$0xff]
      %v6953 = vld [vmem:[#allocation2 + $0x142] sm:$0xff]
      %v6954 = vld [vmem:[#allocation2 + $0x152] sm:$0xff]
      %v6955 = vld [vmem:[#allocation2 + $0x15a] sm:$0xff]
      %v6956 = vld [vmem:[#allocation2 + $0x16a] sm:$0xff]
      %v6957 = vld [vmem:[#allocation2 + $0x172] sm:$0xff]
      %v6958 = vld [vmem:[%s5] sm:$0xff]
      %v6959 = vld [vmem:[%s5 + $0x8] sm:$0xff]
      %v6960 = vld [vmem:[%s5 + $0x10] sm:$0xff]
      %v6961 = vld [vmem:[%s5 + $0x18] sm:$0xff]
      %v6962 = vld [vmem:[%s5 + $0x20] sm:$0xff]
      %v6963 = vld [vmem:[%s5 + $0x28] sm:$0xff]
      %v6964 = vld [vmem:[%s5 + $0x30] sm:$0xff]
      %v6965 = vld [vmem:[%s5 + $0x38] sm:$0xff]
      %v6966 = vld [vmem:[%s5 + $0x40] sm:$0xff]
      %v6967 = vld [vmem:[%s5 + $0x48] sm:$0xff]
      %v6968 = vld [vmem:[%s5 + $0x50] sm:$0xff]
      %v6969 = vld [vmem:[%s5 + $0x58] sm:$0xff]
      %v6970 = vld [vmem:[%s5 + $0x60] sm:$0xff]
      %v6971 = vld [vmem:[%s5 + $0x68] sm:$0xff]
      %v6972 = vld [vmem:[%s5 + $0x70] sm:$0xff]
      %v6973 = vld [vmem:[%s5 + $0x78] sm:$0xff]
      %v6974 = vld [vmem:[%s5 + $0x80] sm:$0xff]
      %v6975 = vld [vmem:[%s5 + $0x88] sm:$0xff]
      %v6976 = vld [vmem:[%s5 + $0x90] sm:$0xff]
      %v6977 = vld [vmem:[%s5 + $0x98] sm:$0xff]
      %v6978 = vld [vmem:[%s5 + $0xa0] sm:$0xff]
      %v6979 = vld [vmem:[%s5 + $0xa8] sm:$0xff]
      %v6980 = vld [vmem:[%s5 + $0xb0] sm:$0xff]
      %v6981 = vld [vmem:[%s5 + $0xb8] sm:$0xff]
      %v6982 = vld [vmem:[%s5 + $0xc0] sm:$0xff]
      %v6983 = vld [vmem:[%s5 + $0xc8] sm:$0xff]
      %v6984 = vld [vmem:[%s5 + $0xd0] sm:$0xff]
      %v6985 = vld [vmem:[%s5 + $0xd8] sm:$0xff]
      %v6986 = vld [vmem:[%s5 + $0xe0] sm:$0xff]
      %v6987 = vld [vmem:[%s5 + $0xe8] sm:$0xff]
      %v6988 = vld [vmem:[%s5 + $0xf0] sm:$0xff]
      %v6989 = vld [vmem:[%s5 + $0xf8] sm:$0xff]
      %v6990 = vld [vmem:[%s5 + $0x100] sm:$0xff]
      %v6991 = vld [vmem:[%s5 + $0x108] sm:$0xff]
      %v6992 = vld [vmem:[%s5 + $0x110] sm:$0xff]
      %v6993 = vld [vmem:[%s5 + $0x118] sm:$0xff]
      %v6994 = vld [vmem:[%s5 + $0x120] sm:$0xff]
      %v6995 = vld [vmem:[%s5 + $0x128] sm:$0xff]
      %v6996 = vld [vmem:[%s5 + $0x130] sm:$0xff]
      %v6997 = vld [vmem:[%s5 + $0x138] sm:$0xff]
      %v6998 = vld [vmem:[%s5 + $0x140] sm:$0xff]
      %v6999 = vld [vmem:[%s5 + $0x148] sm:$0xff]
      %v7000 = vld [vmem:[%s5 + $0x150] sm:$0xff]
      %v7001 = vld [vmem:[%s5 + $0x158] sm:$0xff]
      %v7002 = vld [vmem:[%s5 + $0x160] sm:$0xff]
      %v7003 = vld [vmem:[%s5 + $0x168] sm:$0xff]
      %v7004 = vld [vmem:[%s5 + $0x170] sm:$0xff]
      %v7005 = vld [vmem:[%s5 + $0x178] sm:$0xff]
      %7006 = vmatprep.subr.mxu0 0.0
      %7007 = vmatpush1.msra.mxu0 %v6973
      %7008 = vmatprep.subr.mxu0 0.0
      %7009 = vmatpush1.msra.mxu0 %v6972
      %7010 = vmatprep.subr.mxu0 0.0
      %7011 = vmatpush1.msra.mxu0 %v6971
      %7012 = vmatprep.subr.mxu0 0.0
      %7013 = vmatpush1.msra.mxu0 %v6970
      %7014 = vmatprep.subr.mxu0 0.0
      %7015 = vmatpush1.msra.mxu0 %v6969
      %7016 = vmatprep.subr.mxu0 0.0
      %7017 = vmatpush1.msra.mxu0 %v6968
      %7018 = vmatprep.subr.mxu0 0.0
      %7019 = vmatpush1.msra.mxu0 %v6967
      %7020 = vmatprep.subr.mxu0 0.0
      %7021 = vmatpush1.msra.mxu0 %v6966
      %7022 = vmatprep.subr.mxu0 0.0
      %7023 = vmatpush1.msra.mxu0 %v6965
      %7024 = vmatprep.subr.mxu0 0.0
      %7025 = vmatpush1.msra.mxu0 %v6964
      %7026 = vmatprep.subr.mxu0 0.0
      %7027 = vmatpush1.msra.mxu0 %v6963
      %7028 = vmatprep.subr.mxu0 0.0
      %7029 = vmatpush1.msra.mxu0 %v6962
      %7030 = vmatprep.subr.mxu0 0.0
      %7031 = vmatpush1.msra.mxu0 %v6961
      %7032 = vmatprep.subr.mxu0 0.0
      %7033 = vmatpush1.msra.mxu0 %v6960
      %7034 = vmatprep.subr.mxu0 0.0
      %7035 = vmatpush1.msra.mxu0 %v6959
      %7036 = vmatprep.subr.mxu0 0.0
      %7037 = vmatpush1.msra.mxu0 %v6958
      %7038 = vmatprep.subr.mxu0 0.0
      %7039 = vmatpush2.msra.mxu0 %v6989
      %7040 = vmatprep.subr.mxu0 0.0
      %7041 = vmatpush2.msra.mxu0 %v6988
      %7042 = vmatprep.subr.mxu0 0.0
      %7043 = vmatpush2.msra.mxu0 %v6987
      %7044 = vmatprep.subr.mxu0 0.0
      %7045 = vmatpush2.msra.mxu0 %v6986
      %7046 = vmatprep.subr.mxu0 0.0
      %7047 = vmatpush2.msra.mxu0 %v6985
      %7048 = vmatprep.subr.mxu0 0.0
      %7049 = vmatpush2.msra.mxu0 %v6984
      %7050 = vmatprep.subr.mxu0 0.0
      %7051 = vmatpush2.msra.mxu0 %v6983
      %7052 = vmatprep.subr.mxu0 0.0
      %7053 = vmatpush2.msra.mxu0 %v6982
      %7054 = vmatprep.subr.mxu0 0.0
      %7055 = vmatpush2.msra.mxu0 %v6981
      %7056 = vmatprep.subr.mxu0 0.0
      %7057 = vmatpush2.msra.mxu0 %v6980
      %7058 = vmatprep.subr.mxu0 0.0
      %7059 = vmatpush2.msra.mxu0 %v6979
      %7060 = vmatprep.subr.mxu0 0.0
      %7061 = vmatpush2.msra.mxu0 %v6978
      %7062 = vmatprep.subr.mxu0 0.0
      %7063 = vmatpush2.msra.mxu0 %v6977
      %7064 = vmatprep.subr.mxu0 0.0
      %7065 = vmatpush2.msra.mxu0 %v6976
      %7066 = vmatprep.subr.mxu0 0.0
      %7067 = vmatpush2.msra.mxu0 %v6975
      %7068 = vmatprep.subr.mxu0 0.0
      %7069 = vmatpush2.msra.mxu0 %v6974
      %7070 = vmatprep.mubr.f32.mxu0 %v6894
      %7071 = vmatmul.mubr.f32.gmra.mxu0 %v6862
      %v7072 = vpop.f32.mrf.mxu0
      %v7073 = vadd.f32 0.0, %v7072
      %v7074 = vpop.f32.mrf.mxu0
      %7075 = vmatprep.mubr.f32.mxu0 %v6895
      %7076 = vmatmul.mubr.f32.gmra.mxu0 %v6863
      %v7077 = vpop.f32.mrf.mxu0
      %v7078 = vadd.f32 0.0, %v7077
      %v7079 = vpop.f32.mrf.mxu0
      %7080 = vmatprep.mubr.f32.mxu0 %v6896
      %7081 = vmatmul.mubr.f32.gmra.mxu0 %v6864
      %v7082 = vpop.f32.mrf.mxu0
      %v7083 = vadd.f32 0.0, %v7082
      %v7084 = vpop.f32.mrf.mxu0
      %7085 = vmatprep.mubr.f32.mxu0 %v6897
      %7086 = vmatmul.mubr.f32.gmra.mxu0 %v6865
      %v7087 = vpop.f32.mrf.mxu0
      %v7088 = vadd.f32 0.0, %v7087
      %v7089 = vpop.f32.mrf.mxu0
      %7090 = vmatprep.mubr.f32.mxu0 %v6898
      %7091 = vmatmul.mubr.f32.gmra.mxu0 %v6866
      %v7092 = vpop.f32.mrf.mxu0
      %v7093 = vadd.f32 0.0, %v7092
      %v7094 = vpop.f32.mrf.mxu0
      %7095 = vmatprep.mubr.f32.mxu0 %v6899
      %7096 = vmatmul.mubr.f32.gmra.mxu0 %v6867
      %v7097 = vpop.f32.mrf.mxu0
      %v7098 = vadd.f32 0.0, %v7097
      %v7099 = vpop.f32.mrf.mxu0
      %7100 = vmatprep.mubr.f32.mxu0 %v6900
      %7101 = vmatmul.mubr.f32.gmra.mxu0 %v6868
      %v7102 = vpop.f32.mrf.mxu0
      %v7103 = vadd.f32 0.0, %v7102
      %v7104 = vpop.f32.mrf.mxu0
      %7105 = vmatprep.mubr.f32.mxu0 %v6901
      %7106 = vmatmul.mubr.f32.gmra.mxu0 %v6869
      %v7107 = vpop.f32.mrf.mxu0
      %v7108 = vadd.f32 0.0, %v7107
      %v7109 = vpop.f32.mrf.mxu0
      %7110 = vmatprep.mubr.f32.mxu0 %v6902
      %7111 = vmatmul.mubr.f32.gmra.mxu0 %v6870
      %v7112 = vpop.f32.mrf.mxu0
      %v7113 = vadd.f32 0.0, %v7112
      %v7114 = vpop.f32.mrf.mxu0
      %7115 = vmatprep.mubr.f32.mxu0 %v6903
      %7116 = vmatmul.mubr.f32.gmra.mxu0 %v6871
      %v7117 = vpop.f32.mrf.mxu0
      %v7118 = vadd.f32 0.0, %v7117
      %v7119 = vpop.f32.mrf.mxu0
      %7120 = vmatprep.mubr.f32.mxu0 %v6904
      %7121 = vmatmul.mubr.f32.gmra.mxu0 %v6872
      %v7122 = vpop.f32.mrf.mxu0
      %v7123 = vadd.f32 0.0, %v7122
      %v7124 = vpop.f32.mrf.mxu0
      %7125 = vmatprep.mubr.f32.mxu0 %v6905
      %7126 = vmatmul.mubr.f32.gmra.mxu0 %v6873
      %v7127 = vpop.f32.mrf.mxu0
      %v7128 = vadd.f32 0.0, %v7127
      %v7129 = vpop.f32.mrf.mxu0
      %7130 = vmatprep.mubr.f32.mxu0 %v6906
      %7131 = vmatmul.mubr.f32.gmra.mxu0 %v6874
      %v7132 = vpop.f32.mrf.mxu0
      %v7133 = vadd.f32 0.0, %v7132
      %v7134 = vpop.f32.mrf.mxu0
      %7135 = vmatprep.mubr.f32.mxu0 %v6907
      %7136 = vmatmul.mubr.f32.gmra.mxu0 %v6875
      %v7137 = vpop.f32.mrf.mxu0
      %v7138 = vadd.f32 0.0, %v7137
      %v7139 = vpop.f32.mrf.mxu0
      %7140 = vmatprep.mubr.f32.mxu0 %v6908
      %7141 = vmatmul.mubr.f32.gmra.mxu0 %v6876
      %v7142 = vpop.f32.mrf.mxu0
      %v7143 = vadd.f32 0.0, %v7142
      %v7144 = vpop.f32.mrf.mxu0
      %7145 = vmatprep.mubr.f32.mxu0 %v6909
      %7146 = vmatmul.mubr.f32.gmra.mxu0 %v6877
      %v7147 = vpop.f32.mrf.mxu0
      %v7148 = vadd.f32 0.0, %v7147
      %v7149 = vpop.f32.mrf.mxu0
      %7150 = vmatprep.mubr.f32.mxu0 %v6910
      %7151 = vmatmul.mubr.f32.gmra.mxu0 %v6878
      %v7152 = vpop.f32.mrf.mxu0
      %v7153 = vadd.f32 0.0, %v7152
      %v7154 = vpop.f32.mrf.mxu0
      %7155 = vmatprep.mubr.f32.mxu0 %v6911
      %7156 = vmatmul.mubr.f32.gmra.mxu0 %v6879
      %v7157 = vpop.f32.mrf.mxu0
      %v7158 = vadd.f32 0.0, %v7157
      %v7159 = vpop.f32.mrf.mxu0
      %7160 = vmatprep.mubr.f32.mxu0 %v6912
      %7161 = vmatmul.mubr.f32.gmra.mxu0 %v6880
      %v7162 = vpop.f32.mrf.mxu0
      %v7163 = vadd.f32 0.0, %v7162
      %v7164 = vpop.f32.mrf.mxu0
      %7165 = vmatprep.mubr.f32.mxu0 %v6913
      %7166 = vmatmul.mubr.f32.gmra.mxu0 %v6881
      %v7167 = vpop.f32.mrf.mxu0
      %v7168 = vadd.f32 0.0, %v7167
      %v7169 = vpop.f32.mrf.mxu0
      %7170 = vmatprep.mubr.f32.mxu0 %v6914
      %7171 = vmatmul.mubr.f32.gmra.mxu0 %v6882
      %v7172 = vpop.f32.mrf.mxu0
      %v7173 = vadd.f32 0.0, %v7172
      %v7174 = vpop.f32.mrf.mxu0
      %7175 = vmatprep.mubr.f32.mxu0 %v6915
      %7176 = vmatmul.mubr.f32.gmra.mxu0 %v6883
      %v7177 = vpop.f32.mrf.mxu0
      %v7178 = vadd.f32 0.0, %v7177
      %v7179 = vpop.f32.mrf.mxu0
      %7180 = vmatprep.mubr.f32.mxu0 %v6916
      %7181 = vmatmul.mubr.f32.gmra.mxu0 %v6884
      %v7182 = vpop.f32.mrf.mxu0
      %v7183 = vadd.f32 0.0, %v7182
      %v7184 = vpop.f32.mrf.mxu0
      %7185 = vmatprep.mubr.f32.mxu0 %v6917
      %7186 = vmatmul.mubr.f32.gmra.mxu0 %v6885
      %v7187 = vpop.f32.mrf.mxu0
      %v7188 = vadd.f32 0.0, %v7187
      %v7189 = vpop.f32.mrf.mxu0
      %7190 = vmatprep.mubr.f32.mxu0 %v6918
      %7191 = vmatmul.mubr.f32.gmra.mxu0 %v6886
      %v7192 = vpop.f32.mrf.mxu0
      %v7193 = vadd.f32 0.0, %v7192
      %v7194 = vpop.f32.mrf.mxu0
      %7195 = vmatprep.mubr.f32.mxu0 %v6919
      %7196 = vmatmul.mubr.f32.gmra.mxu0 %v6887
      %v7197 = vpop.f32.mrf.mxu0
      %v7198 = vadd.f32 0.0, %v7197
      %v7199 = vpop.f32.mrf.mxu0
      %7200 = vmatprep.mubr.f32.mxu0 %v6920
      %7201 = vmatmul.mubr.f32.gmra.mxu0 %v6888
      %v7202 = vpop.f32.mrf.mxu0
      %v7203 = vadd.f32 0.0, %v7202
      %v7204 = vpop.f32.mrf.mxu0
      %7205 = vmatprep.mubr.f32.mxu0 %v6921
      %7206 = vmatmul.mubr.f32.gmra.mxu0 %v6889
      %v7207 = vpop.f32.mrf.mxu0
      %v7208 = vadd.f32 0.0, %v7207
      %v7209 = vpop.f32.mrf.mxu0
      %7210 = vmatprep.mubr.f32.mxu0 %v6922
      %7211 = vmatmul.mubr.f32.gmra.mxu0 %v6890
      %v7212 = vpop.f32.mrf.mxu0
      %v7213 = vadd.f32 0.0, %v7212
      %v7214 = vpop.f32.mrf.mxu0
      %7215 = vmatprep.mubr.f32.mxu0 %v6923
      %7216 = vmatmul.mubr.f32.gmra.mxu0 %v6891
      %v7217 = vpop.f32.mrf.mxu0
      %v7218 = vadd.f32 0.0, %v7217
      %v7219 = vpop.f32.mrf.mxu0
      %7220 = vmatprep.mubr.f32.mxu0 %v6924
      %7221 = vmatmul.mubr.f32.gmra.mxu0 %v6892
      %v7222 = vpop.f32.mrf.mxu0
      %v7223 = vadd.f32 0.0, %v7222
      %v7224 = vpop.f32.mrf.mxu0
      %7225 = vmatprep.mubr.f32.mxu0 %v6925
      %7226 = vmatmul.mubr.f32.gmra.mxu0 %v6893
      %v7227 = vpop.f32.mrf.mxu0
      %v7228 = vadd.f32 0.0, %v7227
      %v7229 = vpop.f32.mrf.mxu0
      %7230 = vdwg.mxu0
      %7231 = vmatprep.subr.mxu0 0.0
      %7232 = vmatpush1.msra.mxu0 %v7005
      %7233 = vmatprep.subr.mxu0 0.0
      %7234 = vmatpush1.msra.mxu0 %v7004
      %7235 = vmatprep.subr.mxu0 0.0
      %7236 = vmatpush1.msra.mxu0 %v7003
      %7237 = vmatprep.subr.mxu0 0.0
      %7238 = vmatpush1.msra.mxu0 %v7002
      %7239 = vmatprep.subr.mxu0 0.0
      %7240 = vmatpush1.msra.mxu0 %v7001
      %7241 = vmatprep.subr.mxu0 0.0
      %7242 = vmatpush1.msra.mxu0 %v7000
      %7243 = vmatprep.subr.mxu0 0.0
      %7244 = vmatpush1.msra.mxu0 %v6999
      %7245 = vmatprep.subr.mxu0 0.0
      %7246 = vmatpush1.msra.mxu0 %v6998
      %7247 = vmatprep.subr.mxu0 0.0
      %7248 = vmatpush1.msra.mxu0 %v6997
      %7249 = vmatprep.subr.mxu0 0.0
      %7250 = vmatpush1.msra.mxu0 %v6996
      %7251 = vmatprep.subr.mxu0 0.0
      %7252 = vmatpush1.msra.mxu0 %v6995
      %7253 = vmatprep.subr.mxu0 0.0
      %7254 = vmatpush1.msra.mxu0 %v6994
      %7255 = vmatprep.subr.mxu0 0.0
      %7256 = vmatpush1.msra.mxu0 %v6993
      %7257 = vmatprep.subr.mxu0 0.0
      %7258 = vmatpush1.msra.mxu0 %v6992
      %7259 = vmatprep.subr.mxu0 0.0
      %7260 = vmatpush1.msra.mxu0 %v6991
      %7261 = vmatprep.subr.mxu0 0.0
      %7262 = vmatpush1.msra.mxu0 %v6990
      %7263 = vmatprep.subr.mxu0 0.0
      %7264 = vmatpush2.msra.mxu0 0.0
      %7265 = vmatprep.subr.mxu0 0.0
      %7266 = vmatpush2.msra.mxu0 0.0
      %7267 = vmatprep.subr.mxu0 0.0
      %7268 = vmatpush2.msra.mxu0 0.0
      %7269 = vmatprep.subr.mxu0 0.0
      %7270 = vmatpush2.msra.mxu0 0.0
      %7271 = vmatprep.subr.mxu0 0.0
      %7272 = vmatpush2.msra.mxu0 0.0
      %7273 = vmatprep.subr.mxu0 0.0
      %7274 = vmatpush2.msra.mxu0 0.0
      %7275 = vmatprep.subr.mxu0 0.0
      %7276 = vmatpush2.msra.mxu0 0.0
      %7277 = vmatprep.subr.mxu0 0.0
      %7278 = vmatpush2.msra.mxu0 0.0
      %7279 = vmatprep.subr.mxu0 0.0
      %7280 = vmatpush2.msra.mxu0 0.0
      %7281 = vmatprep.subr.mxu0 0.0
      %7282 = vmatpush2.msra.mxu0 0.0
      %7283 = vmatprep.subr.mxu0 0.0
      %7284 = vmatpush2.msra.mxu0 0.0
      %7285 = vmatprep.subr.mxu0 0.0
      %7286 = vmatpush2.msra.mxu0 0.0
      %7287 = vmatprep.subr.mxu0 0.0
      %7288 = vmatpush2.msra.mxu0 0.0
      %7289 = vmatprep.subr.mxu0 0.0
      %7290 = vmatpush2.msra.mxu0 0.0
      %7291 = vmatprep.subr.mxu0 0.0
      %7292 = vmatpush2.msra.mxu0 0.0
      %7293 = vmatprep.subr.mxu0 0.0
      %7294 = vmatpush2.msra.mxu0 0.0
      %7295 = vmatprep.mubr.f32.mxu0 0.0
      %7296 = vmatmul.mubr.f32.gmra.mxu0 %v6926
      %v7297 = vpop.f32.mrf.mxu0
      %v7298 = vadd.f32 %v7073, %v7297
      %v7299 = vpop.f32.mrf.mxu0
      %7300 = vmatprep.mubr.f32.mxu0 0.0
      %7301 = vmatmul.mubr.f32.gmra.mxu0 %v6927
      %v7302 = vpop.f32.mrf.mxu0
      %v7303 = vadd.f32 %v7078, %v7302
      %v7304 = vpop.f32.mrf.mxu0
      %7305 = vmatprep.mubr.f32.mxu0 0.0
      %7306 = vmatmul.mubr.f32.gmra.mxu0 %v6928
      %v7307 = vpop.f32.mrf.mxu0
      %v7308 = vadd.f32 %v7083, %v7307
      %v7309 = vpop.f32.mrf.mxu0
      %7310 = vmatprep.mubr.f32.mxu0 0.0
      %7311 = vmatmul.mubr.f32.gmra.mxu0 %v6929
      %v7312 = vpop.f32.mrf.mxu0
      %v7313 = vadd.f32 %v7088, %v7312
      %v7314 = vpop.f32.mrf.mxu0
      %7315 = vmatprep.mubr.f32.mxu0 0.0
      %7316 = vmatmul.mubr.f32.gmra.mxu0 %v6930
      %v7317 = vpop.f32.mrf.mxu0
      %v7318 = vadd.f32 %v7093, %v7317
      %v7319 = vpop.f32.mrf.mxu0
      %7320 = vmatprep.mubr.f32.mxu0 0.0
      %7321 = vmatmul.mubr.f32.gmra.mxu0 %v6931
      %v7322 = vpop.f32.mrf.mxu0
      %v7323 = vadd.f32 %v7098, %v7322
      %v7324 = vpop.f32.mrf.mxu0
      %7325 = vmatprep.mubr.f32.mxu0 0.0
      %7326 = vmatmul.mubr.f32.gmra.mxu0 %v6932
      %v7327 = vpop.f32.mrf.mxu0
      %v7328 = vadd.f32 %v7103, %v7327
      %v7329 = vpop.f32.mrf.mxu0
      %7330 = vmatprep.mubr.f32.mxu0 0.0
      %7331 = vmatmul.mubr.f32.gmra.mxu0 %v6933
      %v7332 = vpop.f32.mrf.mxu0
      %v7333 = vadd.f32 %v7108, %v7332
      %v7334 = vpop.f32.mrf.mxu0
      %7335 = vmatprep.mubr.f32.mxu0 0.0
      %7336 = vmatmul.mubr.f32.gmra.mxu0 %v6934
      %v7337 = vpop.f32.mrf.mxu0
      %v7338 = vadd.f32 %v7113, %v7337
      %v7339 = vpop.f32.mrf.mxu0
      %7340 = vmatprep.mubr.f32.mxu0 0.0
      %7341 = vmatmul.mubr.f32.gmra.mxu0 %v6935
      %v7342 = vpop.f32.mrf.mxu0
      %v7343 = vadd.f32 %v7118, %v7342
      %v7344 = vpop.f32.mrf.mxu0
      %7345 = vmatprep.mubr.f32.mxu0 0.0
      %7346 = vmatmul.mubr.f32.gmra.mxu0 %v6936
      %v7347 = vpop.f32.mrf.mxu0
      %v7348 = vadd.f32 %v7123, %v7347
      %v7349 = vpop.f32.mrf.mxu0
      %7350 = vmatprep.mubr.f32.mxu0 0.0
      %7351 = vmatmul.mubr.f32.gmra.mxu0 %v6937
      %v7352 = vpop.f32.mrf.mxu0
      %v7353 = vadd.f32 %v7128, %v7352
      %v7354 = vpop.f32.mrf.mxu0
      %7355 = vmatprep.mubr.f32.mxu0 0.0
      %7356 = vmatmul.mubr.f32.gmra.mxu0 %v6938
      %v7357 = vpop.f32.mrf.mxu0
      %v7358 = vadd.f32 %v7133, %v7357
      %v7359 = vpop.f32.mrf.mxu0
      %7360 = vmatprep.mubr.f32.mxu0 0.0
      %7361 = vmatmul.mubr.f32.gmra.mxu0 %v6939
      %v7362 = vpop.f32.mrf.mxu0
      %v7363 = vadd.f32 %v7138, %v7362
      %v7364 = vpop.f32.mrf.mxu0
      %7365 = vmatprep.mubr.f32.mxu0 0.0
      %7366 = vmatmul.mubr.f32.gmra.mxu0 %v6940
      %v7367 = vpop.f32.mrf.mxu0
      %v7368 = vadd.f32 %v7143, %v7367
      %v7369 = vpop.f32.mrf.mxu0
      %7370 = vmatprep.mubr.f32.mxu0 0.0
      %7371 = vmatmul.mubr.f32.gmra.mxu0 %v6941
      %v7372 = vpop.f32.mrf.mxu0
      %v7373 = vadd.f32 %v7148, %v7372
      %v7374 = vpop.f32.mrf.mxu0
      %7375 = vmatprep.mubr.f32.mxu0 0.0
      %7376 = vmatmul.mubr.f32.gmra.mxu0 %v6942
      %v7377 = vpop.f32.mrf.mxu0
      %v7378 = vadd.f32 %v7153, %v7377
      %v7379 = vpop.f32.mrf.mxu0
      %7380 = vmatprep.mubr.f32.mxu0 0.0
      %7381 = vmatmul.mubr.f32.gmra.mxu0 %v6943
      %v7382 = vpop.f32.mrf.mxu0
      %v7383 = vadd.f32 %v7158, %v7382
      %v7384 = vpop.f32.mrf.mxu0
      %7385 = vmatprep.mubr.f32.mxu0 0.0
      %7386 = vmatmul.mubr.f32.gmra.mxu0 %v6944
      %v7387 = vpop.f32.mrf.mxu0
      %v7388 = vadd.f32 %v7163, %v7387
      %v7389 = vpop.f32.mrf.mxu0
      %7390 = vmatprep.mubr.f32.mxu0 0.0
      %7391 = vmatmul.mubr.f32.gmra.mxu0 %v6945
      %v7392 = vpop.f32.mrf.mxu0
      %v7393 = vadd.f32 %v7168, %v7392
      %v7394 = vpop.f32.mrf.mxu0
      %7395 = vmatprep.mubr.f32.mxu0 0.0
      %7396 = vmatmul.mubr.f32.gmra.mxu0 %v6946
      %v7397 = vpop.f32.mrf.mxu0
      %v7398 = vadd.f32 %v7173, %v7397
      %v7399 = vpop.f32.mrf.mxu0
      %7400 = vmatprep.mubr.f32.mxu0 0.0
      %7401 = vmatmul.mubr.f32.gmra.mxu0 %v6947
      %v7402 = vpop.f32.mrf.mxu0
      %v7403 = vadd.f32 %v7178, %v7402
      %v7404 = vpop.f32.mrf.mxu0
      %7405 = vmatprep.mubr.f32.mxu0 0.0
      %7406 = vmatmul.mubr.f32.gmra.mxu0 %v6948
      %v7407 = vpop.f32.mrf.mxu0
      %v7408 = vadd.f32 %v7183, %v7407
      %v7409 = vpop.f32.mrf.mxu0
      %7410 = vmatprep.mubr.f32.mxu0 0.0
      %7411 = vmatmul.mubr.f32.gmra.mxu0 %v6949
      %v7412 = vpop.f32.mrf.mxu0
      %v7413 = vadd.f32 %v7188, %v7412
      %v7414 = vpop.f32.mrf.mxu0
      %7415 = vmatprep.mubr.f32.mxu0 0.0
      %7416 = vmatmul.mubr.f32.gmra.mxu0 %v6950
      %v7417 = vpop.f32.mrf.mxu0
      %v7418 = vadd.f32 %v7193, %v7417
      %v7419 = vpop.f32.mrf.mxu0
      %7420 = vmatprep.mubr.f32.mxu0 0.0
      %7421 = vmatmul.mubr.f32.gmra.mxu0 %v6951
      %v7422 = vpop.f32.mrf.mxu0
      %v7423 = vadd.f32 %v7198, %v7422
      %v7424 = vpop.f32.mrf.mxu0
      %7425 = vmatprep.mubr.f32.mxu0 0.0
      %7426 = vmatmul.mubr.f32.gmra.mxu0 %v6952
      %v7427 = vpop.f32.mrf.mxu0
      %v7428 = vadd.f32 %v7203, %v7427
      %v7429 = vpop.f32.mrf.mxu0
      %7430 = vmatprep.mubr.f32.mxu0 0.0
      %7431 = vmatmul.mubr.f32.gmra.mxu0 %v6953
      %v7432 = vpop.f32.mrf.mxu0
      %v7433 = vadd.f32 %v7208, %v7432
      %v7434 = vpop.f32.mrf.mxu0
      %7435 = vmatprep.mubr.f32.mxu0 0.0
      %7436 = vmatmul.mubr.f32.gmra.mxu0 %v6954
      %v7437 = vpop.f32.mrf.mxu0
      %v7438 = vadd.f32 %v7213, %v7437
      %v7439 = vpop.f32.mrf.mxu0
      %7440 = vmatprep.mubr.f32.mxu0 0.0
      %7441 = vmatmul.mubr.f32.gmra.mxu0 %v6955
      %v7442 = vpop.f32.mrf.mxu0
      %v7443 = vadd.f32 %v7218, %v7442
      %v7444 = vpop.f32.mrf.mxu0
      %7445 = vmatprep.mubr.f32.mxu0 0.0
      %7446 = vmatmul.mubr.f32.gmra.mxu0 %v6956
      %v7447 = vpop.f32.mrf.mxu0
      %v7448 = vadd.f32 %v7223, %v7447
      %v7449 = vpop.f32.mrf.mxu0
      %7450 = vmatprep.mubr.f32.mxu0 0.0
      %7451 = vmatmul.mubr.f32.gmra.mxu0 %v6957
      %v7452 = vpop.f32.mrf.mxu0
      %v7453 = vadd.f32 %v7228, %v7452
      %v7454 = vpop.f32.mrf.mxu0
      %7455 = vdwg.mxu0
      %7456 = vst [vmem:[#allocation5] sm:$0xff] %v7298
      %7457 = vst [vmem:[#allocation5 + $0x8] sm:$0xff] %v7303
      %7458 = vst [vmem:[#allocation5 + $0x10] sm:$0xff] %v7308
      %7459 = vst [vmem:[#allocation5 + $0x18] sm:$0xff] %v7313
      %7460 = vst [vmem:[#allocation5 + $0x20] sm:$0xff] %v7318
      %7461 = vst [vmem:[#allocation5 + $0x28] sm:$0xff] %v7323
      %7462 = vst [vmem:[#allocation5 + $0x30] sm:$0xff] %v7328
      %7463 = vst [vmem:[#allocation5 + $0x38] sm:$0xff] %v7333
      %7464 = vst [vmem:[#allocation5 + $0x40] sm:$0xff] %v7338
      %7465 = vst [vmem:[#allocation5 + $0x48] sm:$0xff] %v7343
      %7466 = vst [vmem:[#allocation5 + $0x50] sm:$0xff] %v7348
      %7467 = vst [vmem:[#allocation5 + $0x58] sm:$0xff] %v7353
      %7468 = vst [vmem:[#allocation5 + $0x60] sm:$0xff] %v7358
      %7469 = vst [vmem:[#allocation5 + $0x68] sm:$0xff] %v7363
      %7470 = vst [vmem:[#allocation5 + $0x70] sm:$0xff] %v7368
      %7471 = vst [vmem:[#allocation5 + $0x78] sm:$0xff] %v7373
      %7472 = vst [vmem:[#allocation5 + $0x80] sm:$0xff] %v7378
      %7473 = vst [vmem:[#allocation5 + $0x88] sm:$0xff] %v7383
      %7474 = vst [vmem:[#allocation5 + $0x90] sm:$0xff] %v7388
      %7475 = vst [vmem:[#allocation5 + $0x98] sm:$0xff] %v7393
      %7476 = vst [vmem:[#allocation5 + $0xa0] sm:$0xff] %v7398
      %7477 = vst [vmem:[#allocation5 + $0xa8] sm:$0xff] %v7403
      %7478 = vst [vmem:[#allocation5 + $0xb0] sm:$0xff] %v7408
      %7479 = vst [vmem:[#allocation5 + $0xb8] sm:$0xff] %v7413
      %7480 = vst [vmem:[#allocation5 + $0xc0] sm:$0xff] %v7418
      %7481 = vst [vmem:[#allocation5 + $0xc8] sm:$0xff] %v7423
      %7482 = vst [vmem:[#allocation5 + $0xd0] sm:$0xff] %v7428
      %7483 = vst [vmem:[#allocation5 + $0xd8] sm:$0xff] %v7433
      %7484 = vst [vmem:[#allocation5 + $0xe0] sm:$0xff] %v7438
      %7485 = vst [vmem:[#allocation5 + $0xe8] sm:$0xff] %v7443
      %7486 = vst [vmem:[#allocation5 + $0xf0] sm:$0xff] %v7448
      %7487 = vst [vmem:[#allocation5 + $0xf8] sm:$0xff] %v7453
      %v7488 = vld [vmem:[%s412] sm:$0xff]
      %v7489 = vld [vmem:[%s412 + $0x8] sm:$0xff]
      %v7490 = vld [vmem:[%s412 + $0x18] sm:$0xff]
      %v7491 = vld [vmem:[%s412 + $0x20] sm:$0xff]
      %v7492 = vld [vmem:[%s412 + $0x30] sm:$0xff]
      %v7493 = vld [vmem:[%s412 + $0x38] sm:$0xff]
      %v7494 = vld [vmem:[%s412 + $0x48] sm:$0xff]
      %v7495 = vld [vmem:[%s412 + $0x50] sm:$0xff]
      %v7496 = vld [vmem:[%s412 + $0x60] sm:$0xff]
      %v7497 = vld [vmem:[%s412 + $0x68] sm:$0xff]
      %v7498 = vld [vmem:[%s412 + $0x78] sm:$0xff]
      %v7499 = vld [vmem:[%s412 + $0x80] sm:$0xff]
      %v7500 = vld [vmem:[%s412 + $0x90] sm:$0xff]
      %v7501 = vld [vmem:[%s412 + $0x98] sm:$0xff]
      %v7502 = vld [vmem:[%s412 + $0xa8] sm:$0xff]
      %v7503 = vld [vmem:[%s412 + $0xb0] sm:$0xff]
      %v7504 = vld [vmem:[%s412 + $0xc0] sm:$0xff]
      %v7505 = vld [vmem:[%s412 + $0xc8] sm:$0xff]
      %v7506 = vld [vmem:[%s412 + $0xd8] sm:$0xff]
      %v7507 = vld [vmem:[%s412 + $0xe0] sm:$0xff]
      %v7508 = vld [vmem:[%s412 + $0xf0] sm:$0xff]
      %v7509 = vld [vmem:[%s412 + $0xf8] sm:$0xff]
      %v7510 = vld [vmem:[%s412 + $0x108] sm:$0xff]
      %v7511 = vld [vmem:[%s412 + $0x110] sm:$0xff]
      %v7512 = vld [vmem:[%s412 + $0x120] sm:$0xff]
      %v7513 = vld [vmem:[%s412 + $0x128] sm:$0xff]
      %v7514 = vld [vmem:[%s412 + $0x138] sm:$0xff]
      %v7515 = vld [vmem:[%s412 + $0x140] sm:$0xff]
      %v7516 = vld [vmem:[%s412 + $0x150] sm:$0xff]
      %v7517 = vld [vmem:[%s412 + $0x158] sm:$0xff]
      %v7518 = vld [vmem:[%s412 + $0x168] sm:$0xff]
      %v7519 = vld [vmem:[%s412 + $0x170] sm:$0xff]
      %v7520 = vld [vmem:[%s412 + $0x1] sm:$0xff]
      %v7521 = vld [vmem:[%s412 + $0x9] sm:$0xff]
      %v7522 = vld [vmem:[%s412 + $0x19] sm:$0xff]
      %v7523 = vld [vmem:[%s412 + $0x21] sm:$0xff]
      %v7524 = vld [vmem:[%s412 + $0x31] sm:$0xff]
      %v7525 = vld [vmem:[%s412 + $0x39] sm:$0xff]
      %v7526 = vld [vmem:[%s412 + $0x49] sm:$0xff]
      %v7527 = vld [vmem:[%s412 + $0x51] sm:$0xff]
      %v7528 = vld [vmem:[%s412 + $0x61] sm:$0xff]
      %v7529 = vld [vmem:[%s412 + $0x69] sm:$0xff]
      %v7530 = vld [vmem:[%s412 + $0x79] sm:$0xff]
      %v7531 = vld [vmem:[%s412 + $0x81] sm:$0xff]
      %v7532 = vld [vmem:[%s412 + $0x91] sm:$0xff]
      %v7533 = vld [vmem:[%s412 + $0x99] sm:$0xff]
      %v7534 = vld [vmem:[%s412 + $0xa9] sm:$0xff]
      %v7535 = vld [vmem:[%s412 + $0xb1] sm:$0xff]
      %v7536 = vld [vmem:[%s412 + $0xc1] sm:$0xff]
      %v7537 = vld [vmem:[%s412 + $0xc9] sm:$0xff]
      %v7538 = vld [vmem:[%s412 + $0xd9] sm:$0xff]
      %v7539 = vld [vmem:[%s412 + $0xe1] sm:$0xff]
      %v7540 = vld [vmem:[%s412 + $0xf1] sm:$0xff]
      %v7541 = vld [vmem:[%s412 + $0xf9] sm:$0xff]
      %v7542 = vld [vmem:[%s412 + $0x109] sm:$0xff]
      %v7543 = vld [vmem:[%s412 + $0x111] sm:$0xff]
      %v7544 = vld [vmem:[%s412 + $0x121] sm:$0xff]
      %v7545 = vld [vmem:[%s412 + $0x129] sm:$0xff]
      %v7546 = vld [vmem:[%s412 + $0x139] sm:$0xff]
      %v7547 = vld [vmem:[%s412 + $0x141] sm:$0xff]
      %v7548 = vld [vmem:[%s412 + $0x151] sm:$0xff]
      %v7549 = vld [vmem:[%s412 + $0x159] sm:$0xff]
      %v7550 = vld [vmem:[%s412 + $0x169] sm:$0xff]
      %v7551 = vld [vmem:[%s412 + $0x171] sm:$0xff]
      %v7552 = vld [vmem:[%s412 + $0x2] sm:$0xff]
      %v7553 = vld [vmem:[%s412 + $0xa] sm:$0xff]
      %v7554 = vld [vmem:[%s412 + $0x1a] sm:$0xff]
      %v7555 = vld [vmem:[%s412 + $0x22] sm:$0xff]
      %v7556 = vld [vmem:[%s412 + $0x32] sm:$0xff]
      %v7557 = vld [vmem:[%s412 + $0x3a] sm:$0xff]
      %v7558 = vld [vmem:[%s412 + $0x4a] sm:$0xff]
      %v7559 = vld [vmem:[%s412 + $0x52] sm:$0xff]
      %v7560 = vld [vmem:[%s412 + $0x62] sm:$0xff]
      %v7561 = vld [vmem:[%s412 + $0x6a] sm:$0xff]
      %v7562 = vld [vmem:[%s412 + $0x7a] sm:$0xff]
      %v7563 = vld [vmem:[%s412 + $0x82] sm:$0xff]
      %v7564 = vld [vmem:[%s412 + $0x92] sm:$0xff]
      %v7565 = vld [vmem:[%s412 + $0x9a] sm:$0xff]
      %v7566 = vld [vmem:[%s412 + $0xaa] sm:$0xff]
      %v7567 = vld [vmem:[%s412 + $0xb2] sm:$0xff]
      %v7568 = vld [vmem:[%s412 + $0xc2] sm:$0xff]
      %v7569 = vld [vmem:[%s412 + $0xca] sm:$0xff]
      %v7570 = vld [vmem:[%s412 + $0xda] sm:$0xff]
      %v7571 = vld [vmem:[%s412 + $0xe2] sm:$0xff]
      %v7572 = vld [vmem:[%s412 + $0xf2] sm:$0xff]
      %v7573 = vld [vmem:[%s412 + $0xfa] sm:$0xff]
      %v7574 = vld [vmem:[%s412 + $0x10a] sm:$0xff]
      %v7575 = vld [vmem:[%s412 + $0x112] sm:$0xff]
      %v7576 = vld [vmem:[%s412 + $0x122] sm:$0xff]
      %v7577 = vld [vmem:[%s412 + $0x12a] sm:$0xff]
      %v7578 = vld [vmem:[%s412 + $0x13a] sm:$0xff]
      %v7579 = vld [vmem:[%s412 + $0x142] sm:$0xff]
      %v7580 = vld [vmem:[%s412 + $0x152] sm:$0xff]
      %v7581 = vld [vmem:[%s412 + $0x15a] sm:$0xff]
      %v7582 = vld [vmem:[%s412 + $0x16a] sm:$0xff]
      %v7583 = vld [vmem:[%s412 + $0x172] sm:$0xff]
      %s7584 = scalar_lea.vmem %s5, 384
      %v7585 = vld [vmem:[%s7584] sm:$0xff]
      %v7586 = vld [vmem:[%s7584 + $0x8] sm:$0xff]
      %v7587 = vld [vmem:[%s7584 + $0x10] sm:$0xff]
      %v7588 = vld [vmem:[%s7584 + $0x18] sm:$0xff]
      %v7589 = vld [vmem:[%s7584 + $0x20] sm:$0xff]
      %v7590 = vld [vmem:[%s7584 + $0x28] sm:$0xff]
      %v7591 = vld [vmem:[%s7584 + $0x30] sm:$0xff]
      %v7592 = vld [vmem:[%s7584 + $0x38] sm:$0xff]
      %v7593 = vld [vmem:[%s7584 + $0x40] sm:$0xff]
      %v7594 = vld [vmem:[%s7584 + $0x48] sm:$0xff]
      %v7595 = vld [vmem:[%s7584 + $0x50] sm:$0xff]
      %v7596 = vld [vmem:[%s7584 + $0x58] sm:$0xff]
      %v7597 = vld [vmem:[%s7584 + $0x60] sm:$0xff]
      %v7598 = vld [vmem:[%s7584 + $0x68] sm:$0xff]
      %v7599 = vld [vmem:[%s7584 + $0x70] sm:$0xff]
      %v7600 = vld [vmem:[%s7584 + $0x78] sm:$0xff]
      %v7601 = vld [vmem:[%s7584 + $0x80] sm:$0xff]
      %v7602 = vld [vmem:[%s7584 + $0x88] sm:$0xff]
      %v7603 = vld [vmem:[%s7584 + $0x90] sm:$0xff]
      %v7604 = vld [vmem:[%s7584 + $0x98] sm:$0xff]
      %v7605 = vld [vmem:[%s7584 + $0xa0] sm:$0xff]
      %v7606 = vld [vmem:[%s7584 + $0xa8] sm:$0xff]
      %v7607 = vld [vmem:[%s7584 + $0xb0] sm:$0xff]
      %v7608 = vld [vmem:[%s7584 + $0xb8] sm:$0xff]
      %v7609 = vld [vmem:[%s7584 + $0xc0] sm:$0xff]
      %v7610 = vld [vmem:[%s7584 + $0xc8] sm:$0xff]
      %v7611 = vld [vmem:[%s7584 + $0xd0] sm:$0xff]
      %v7612 = vld [vmem:[%s7584 + $0xd8] sm:$0xff]
      %v7613 = vld [vmem:[%s7584 + $0xe0] sm:$0xff]
      %v7614 = vld [vmem:[%s7584 + $0xe8] sm:$0xff]
      %v7615 = vld [vmem:[%s7584 + $0xf0] sm:$0xff]
      %v7616 = vld [vmem:[%s7584 + $0xf8] sm:$0xff]
      %v7617 = vld [vmem:[%s7584 + $0x100] sm:$0xff]
      %v7618 = vld [vmem:[%s7584 + $0x108] sm:$0xff]
      %v7619 = vld [vmem:[%s7584 + $0x110] sm:$0xff]
      %v7620 = vld [vmem:[%s7584 + $0x118] sm:$0xff]
      %v7621 = vld [vmem:[%s7584 + $0x120] sm:$0xff]
      %v7622 = vld [vmem:[%s7584 + $0x128] sm:$0xff]
      %v7623 = vld [vmem:[%s7584 + $0x130] sm:$0xff]
      %v7624 = vld [vmem:[%s7584 + $0x138] sm:$0xff]
      %v7625 = vld [vmem:[%s7584 + $0x140] sm:$0xff]
      %v7626 = vld [vmem:[%s7584 + $0x148] sm:$0xff]
      %v7627 = vld [vmem:[%s7584 + $0x150] sm:$0xff]
      %v7628 = vld [vmem:[%s7584 + $0x158] sm:$0xff]
      %v7629 = vld [vmem:[%s7584 + $0x160] sm:$0xff]
      %v7630 = vld [vmem:[%s7584 + $0x168] sm:$0xff]
      %v7631 = vld [vmem:[%s7584 + $0x170] sm:$0xff]
      %v7632 = vld [vmem:[%s7584 + $0x178] sm:$0xff]
      %7633 = vmatprep.subr.mxu0 0.0
      %7634 = vmatpush1.msra.mxu0 %v7600
      %7635 = vmatprep.subr.mxu0 0.0
      %7636 = vmatpush1.msra.mxu0 %v7599
      %7637 = vmatprep.subr.mxu0 0.0
      %7638 = vmatpush1.msra.mxu0 %v7598
      %7639 = vmatprep.subr.mxu0 0.0
      %7640 = vmatpush1.msra.mxu0 %v7597
      %7641 = vmatprep.subr.mxu0 0.0
      %7642 = vmatpush1.msra.mxu0 %v7596
      %7643 = vmatprep.subr.mxu0 0.0
      %7644 = vmatpush1.msra.mxu0 %v7595
      %7645 = vmatprep.subr.mxu0 0.0
      %7646 = vmatpush1.msra.mxu0 %v7594
      %7647 = vmatprep.subr.mxu0 0.0
      %7648 = vmatpush1.msra.mxu0 %v7593
      %7649 = vmatprep.subr.mxu0 0.0
      %7650 = vmatpush1.msra.mxu0 %v7592
      %7651 = vmatprep.subr.mxu0 0.0
      %7652 = vmatpush1.msra.mxu0 %v7591
      %7653 = vmatprep.subr.mxu0 0.0
      %7654 = vmatpush1.msra.mxu0 %v7590
      %7655 = vmatprep.subr.mxu0 0.0
      %7656 = vmatpush1.msra.mxu0 %v7589
      %7657 = vmatprep.subr.mxu0 0.0
      %7658 = vmatpush1.msra.mxu0 %v7588
      %7659 = vmatprep.subr.mxu0 0.0
      %7660 = vmatpush1.msra.mxu0 %v7587
      %7661 = vmatprep.subr.mxu0 0.0
      %7662 = vmatpush1.msra.mxu0 %v7586
      %7663 = vmatprep.subr.mxu0 0.0
      %7664 = vmatpush1.msra.mxu0 %v7585
      %7665 = vmatprep.subr.mxu0 0.0
      %7666 = vmatpush2.msra.mxu0 %v7616
      %7667 = vmatprep.subr.mxu0 0.0
      %7668 = vmatpush2.msra.mxu0 %v7615
      %7669 = vmatprep.subr.mxu0 0.0
      %7670 = vmatpush2.msra.mxu0 %v7614
      %7671 = vmatprep.subr.mxu0 0.0
      %7672 = vmatpush2.msra.mxu0 %v7613
      %7673 = vmatprep.subr.mxu0 0.0
      %7674 = vmatpush2.msra.mxu0 %v7612
      %7675 = vmatprep.subr.mxu0 0.0
      %7676 = vmatpush2.msra.mxu0 %v7611
      %7677 = vmatprep.subr.mxu0 0.0
      %7678 = vmatpush2.msra.mxu0 %v7610
      %7679 = vmatprep.subr.mxu0 0.0
      %7680 = vmatpush2.msra.mxu0 %v7609
      %7681 = vmatprep.subr.mxu0 0.0
      %7682 = vmatpush2.msra.mxu0 %v7608
      %7683 = vmatprep.subr.mxu0 0.0
      %7684 = vmatpush2.msra.mxu0 %v7607
      %7685 = vmatprep.subr.mxu0 0.0
      %7686 = vmatpush2.msra.mxu0 %v7606
      %7687 = vmatprep.subr.mxu0 0.0
      %7688 = vmatpush2.msra.mxu0 %v7605
      %7689 = vmatprep.subr.mxu0 0.0
      %7690 = vmatpush2.msra.mxu0 %v7604
      %7691 = vmatprep.subr.mxu0 0.0
      %7692 = vmatpush2.msra.mxu0 %v7603
      %7693 = vmatprep.subr.mxu0 0.0
      %7694 = vmatpush2.msra.mxu0 %v7602
      %7695 = vmatprep.subr.mxu0 0.0
      %7696 = vmatpush2.msra.mxu0 %v7601
      %7697 = vmatprep.mubr.f32.mxu0 %v7520
      %7698 = vmatmul.mubr.f32.gmra.mxu0 %v7488
      %v7699 = vpop.f32.mrf.mxu0
      %v7700 = vadd.f32 0.0, %v7699
      %v7701 = vpop.f32.mrf.mxu0
      %7702 = vmatprep.mubr.f32.mxu0 %v7521
      %7703 = vmatmul.mubr.f32.gmra.mxu0 %v7489
      %v7704 = vpop.f32.mrf.mxu0
      %v7705 = vadd.f32 0.0, %v7704
      %v7706 = vpop.f32.mrf.mxu0
      %7707 = vmatprep.mubr.f32.mxu0 %v7522
      %7708 = vmatmul.mubr.f32.gmra.mxu0 %v7490
      %v7709 = vpop.f32.mrf.mxu0
      %v7710 = vadd.f32 0.0, %v7709
      %v7711 = vpop.f32.mrf.mxu0
      %7712 = vmatprep.mubr.f32.mxu0 %v7523
      %7713 = vmatmul.mubr.f32.gmra.mxu0 %v7491
      %v7714 = vpop.f32.mrf.mxu0
      %v7715 = vadd.f32 0.0, %v7714
      %v7716 = vpop.f32.mrf.mxu0
      %7717 = vmatprep.mubr.f32.mxu0 %v7524
      %7718 = vmatmul.mubr.f32.gmra.mxu0 %v7492
      %v7719 = vpop.f32.mrf.mxu0
      %v7720 = vadd.f32 0.0, %v7719
      %v7721 = vpop.f32.mrf.mxu0
      %7722 = vmatprep.mubr.f32.mxu0 %v7525
      %7723 = vmatmul.mubr.f32.gmra.mxu0 %v7493
      %v7724 = vpop.f32.mrf.mxu0
      %v7725 = vadd.f32 0.0, %v7724
      %v7726 = vpop.f32.mrf.mxu0
      %7727 = vmatprep.mubr.f32.mxu0 %v7526
      %7728 = vmatmul.mubr.f32.gmra.mxu0 %v7494
      %v7729 = vpop.f32.mrf.mxu0
      %v7730 = vadd.f32 0.0, %v7729
      %v7731 = vpop.f32.mrf.mxu0
      %7732 = vmatprep.mubr.f32.mxu0 %v7527
      %7733 = vmatmul.mubr.f32.gmra.mxu0 %v7495
      %v7734 = vpop.f32.mrf.mxu0
      %v7735 = vadd.f32 0.0, %v7734
      %v7736 = vpop.f32.mrf.mxu0
      %7737 = vmatprep.mubr.f32.mxu0 %v7528
      %7738 = vmatmul.mubr.f32.gmra.mxu0 %v7496
      %v7739 = vpop.f32.mrf.mxu0
      %v7740 = vadd.f32 0.0, %v7739
      %v7741 = vpop.f32.mrf.mxu0
      %7742 = vmatprep.mubr.f32.mxu0 %v7529
      %7743 = vmatmul.mubr.f32.gmra.mxu0 %v7497
      %v7744 = vpop.f32.mrf.mxu0
      %v7745 = vadd.f32 0.0, %v7744
      %v7746 = vpop.f32.mrf.mxu0
      %7747 = vmatprep.mubr.f32.mxu0 %v7530
      %7748 = vmatmul.mubr.f32.gmra.mxu0 %v7498
      %v7749 = vpop.f32.mrf.mxu0
      %v7750 = vadd.f32 0.0, %v7749
      %v7751 = vpop.f32.mrf.mxu0
      %7752 = vmatprep.mubr.f32.mxu0 %v7531
      %7753 = vmatmul.mubr.f32.gmra.mxu0 %v7499
      %v7754 = vpop.f32.mrf.mxu0
      %v7755 = vadd.f32 0.0, %v7754
      %v7756 = vpop.f32.mrf.mxu0
      %7757 = vmatprep.mubr.f32.mxu0 %v7532
      %7758 = vmatmul.mubr.f32.gmra.mxu0 %v7500
      %v7759 = vpop.f32.mrf.mxu0
      %v7760 = vadd.f32 0.0, %v7759
      %v7761 = vpop.f32.mrf.mxu0
      %7762 = vmatprep.mubr.f32.mxu0 %v7533
      %7763 = vmatmul.mubr.f32.gmra.mxu0 %v7501
      %v7764 = vpop.f32.mrf.mxu0
      %v7765 = vadd.f32 0.0, %v7764
      %v7766 = vpop.f32.mrf.mxu0
      %7767 = vmatprep.mubr.f32.mxu0 %v7534
      %7768 = vmatmul.mubr.f32.gmra.mxu0 %v7502
      %v7769 = vpop.f32.mrf.mxu0
      %v7770 = vadd.f32 0.0, %v7769
      %v7771 = vpop.f32.mrf.mxu0
      %7772 = vmatprep.mubr.f32.mxu0 %v7535
      %7773 = vmatmul.mubr.f32.gmra.mxu0 %v7503
      %v7774 = vpop.f32.mrf.mxu0
      %v7775 = vadd.f32 0.0, %v7774
      %v7776 = vpop.f32.mrf.mxu0
      %7777 = vmatprep.mubr.f32.mxu0 %v7536
      %7778 = vmatmul.mubr.f32.gmra.mxu0 %v7504
      %v7779 = vpop.f32.mrf.mxu0
      %v7780 = vadd.f32 0.0, %v7779
      %v7781 = vpop.f32.mrf.mxu0
      %7782 = vmatprep.mubr.f32.mxu0 %v7537
      %7783 = vmatmul.mubr.f32.gmra.mxu0 %v7505
      %v7784 = vpop.f32.mrf.mxu0
      %v7785 = vadd.f32 0.0, %v7784
      %v7786 = vpop.f32.mrf.mxu0
      %7787 = vmatprep.mubr.f32.mxu0 %v7538
      %7788 = vmatmul.mubr.f32.gmra.mxu0 %v7506
      %v7789 = vpop.f32.mrf.mxu0
      %v7790 = vadd.f32 0.0, %v7789
      %v7791 = vpop.f32.mrf.mxu0
      %7792 = vmatprep.mubr.f32.mxu0 %v7539
      %7793 = vmatmul.mubr.f32.gmra.mxu0 %v7507
      %v7794 = vpop.f32.mrf.mxu0
      %v7795 = vadd.f32 0.0, %v7794
      %v7796 = vpop.f32.mrf.mxu0
      %7797 = vmatprep.mubr.f32.mxu0 %v7540
      %7798 = vmatmul.mubr.f32.gmra.mxu0 %v7508
      %v7799 = vpop.f32.mrf.mxu0
      %v7800 = vadd.f32 0.0, %v7799
      %v7801 = vpop.f32.mrf.mxu0
      %7802 = vmatprep.mubr.f32.mxu0 %v7541
      %7803 = vmatmul.mubr.f32.gmra.mxu0 %v7509
      %v7804 = vpop.f32.mrf.mxu0
      %v7805 = vadd.f32 0.0, %v7804
      %v7806 = vpop.f32.mrf.mxu0
      %7807 = vmatprep.mubr.f32.mxu0 %v7542
      %7808 = vmatmul.mubr.f32.gmra.mxu0 %v7510
      %v7809 = vpop.f32.mrf.mxu0
      %v7810 = vadd.f32 0.0, %v7809
      %v7811 = vpop.f32.mrf.mxu0
      %7812 = vmatprep.mubr.f32.mxu0 %v7543
      %7813 = vmatmul.mubr.f32.gmra.mxu0 %v7511
      %v7814 = vpop.f32.mrf.mxu0
      %v7815 = vadd.f32 0.0, %v7814
      %v7816 = vpop.f32.mrf.mxu0
      %7817 = vmatprep.mubr.f32.mxu0 %v7544
      %7818 = vmatmul.mubr.f32.gmra.mxu0 %v7512
      %v7819 = vpop.f32.mrf.mxu0
      %v7820 = vadd.f32 0.0, %v7819
      %v7821 = vpop.f32.mrf.mxu0
      %7822 = vmatprep.mubr.f32.mxu0 %v7545
      %7823 = vmatmul.mubr.f32.gmra.mxu0 %v7513
      %v7824 = vpop.f32.mrf.mxu0
      %v7825 = vadd.f32 0.0, %v7824
      %v7826 = vpop.f32.mrf.mxu0
      %7827 = vmatprep.mubr.f32.mxu0 %v7546
      %7828 = vmatmul.mubr.f32.gmra.mxu0 %v7514
      %v7829 = vpop.f32.mrf.mxu0
      %v7830 = vadd.f32 0.0, %v7829
      %v7831 = vpop.f32.mrf.mxu0
      %7832 = vmatprep.mubr.f32.mxu0 %v7547
      %7833 = vmatmul.mubr.f32.gmra.mxu0 %v7515
      %v7834 = vpop.f32.mrf.mxu0
      %v7835 = vadd.f32 0.0, %v7834
      %v7836 = vpop.f32.mrf.mxu0
      %7837 = vmatprep.mubr.f32.mxu0 %v7548
      %7838 = vmatmul.mubr.f32.gmra.mxu0 %v7516
      %v7839 = vpop.f32.mrf.mxu0
      %v7840 = vadd.f32 0.0, %v7839
      %v7841 = vpop.f32.mrf.mxu0
      %7842 = vmatprep.mubr.f32.mxu0 %v7549
      %7843 = vmatmul.mubr.f32.gmra.mxu0 %v7517
      %v7844 = vpop.f32.mrf.mxu0
      %v7845 = vadd.f32 0.0, %v7844
      %v7846 = vpop.f32.mrf.mxu0
      %7847 = vmatprep.mubr.f32.mxu0 %v7550
      %7848 = vmatmul.mubr.f32.gmra.mxu0 %v7518
      %v7849 = vpop.f32.mrf.mxu0
      %v7850 = vadd.f32 0.0, %v7849
      %v7851 = vpop.f32.mrf.mxu0
      %7852 = vmatprep.mubr.f32.mxu0 %v7551
      %7853 = vmatmul.mubr.f32.gmra.mxu0 %v7519
      %v7854 = vpop.f32.mrf.mxu0
      %v7855 = vadd.f32 0.0, %v7854
      %v7856 = vpop.f32.mrf.mxu0
      %7857 = vdwg.mxu0
      %7858 = vmatprep.subr.mxu0 0.0
      %7859 = vmatpush1.msra.mxu0 %v7632
      %7860 = vmatprep.subr.mxu0 0.0
      %7861 = vmatpush1.msra.mxu0 %v7631
      %7862 = vmatprep.subr.mxu0 0.0
      %7863 = vmatpush1.msra.mxu0 %v7630
      %7864 = vmatprep.subr.mxu0 0.0
      %7865 = vmatpush1.msra.mxu0 %v7629
      %7866 = vmatprep.subr.mxu0 0.0
      %7867 = vmatpush1.msra.mxu0 %v7628
      %7868 = vmatprep.subr.mxu0 0.0
      %7869 = vmatpush1.msra.mxu0 %v7627
      %7870 = vmatprep.subr.mxu0 0.0
      %7871 = vmatpush1.msra.mxu0 %v7626
      %7872 = vmatprep.subr.mxu0 0.0
      %7873 = vmatpush1.msra.mxu0 %v7625
      %7874 = vmatprep.subr.mxu0 0.0
      %7875 = vmatpush1.msra.mxu0 %v7624
      %7876 = vmatprep.subr.mxu0 0.0
      %7877 = vmatpush1.msra.mxu0 %v7623
      %7878 = vmatprep.subr.mxu0 0.0
      %7879 = vmatpush1.msra.mxu0 %v7622
      %7880 = vmatprep.subr.mxu0 0.0
      %7881 = vmatpush1.msra.mxu0 %v7621
      %7882 = vmatprep.subr.mxu0 0.0
      %7883 = vmatpush1.msra.mxu0 %v7620
      %7884 = vmatprep.subr.mxu0 0.0
      %7885 = vmatpush1.msra.mxu0 %v7619
      %7886 = vmatprep.subr.mxu0 0.0
      %7887 = vmatpush1.msra.mxu0 %v7618
      %7888 = vmatprep.subr.mxu0 0.0
      %7889 = vmatpush1.msra.mxu0 %v7617
      %7890 = vmatprep.subr.mxu0 0.0
      %7891 = vmatpush2.msra.mxu0 0.0
      %7892 = vmatprep.subr.mxu0 0.0
      %7893 = vmatpush2.msra.mxu0 0.0
      %7894 = vmatprep.subr.mxu0 0.0
      %7895 = vmatpush2.msra.mxu0 0.0
      %7896 = vmatprep.subr.mxu0 0.0
      %7897 = vmatpush2.msra.mxu0 0.0
      %7898 = vmatprep.subr.mxu0 0.0
      %7899 = vmatpush2.msra.mxu0 0.0
      %7900 = vmatprep.subr.mxu0 0.0
      %7901 = vmatpush2.msra.mxu0 0.0
      %7902 = vmatprep.subr.mxu0 0.0
      %7903 = vmatpush2.msra.mxu0 0.0
      %7904 = vmatprep.subr.mxu0 0.0
      %7905 = vmatpush2.msra.mxu0 0.0
      %7906 = vmatprep.subr.mxu0 0.0
      %7907 = vmatpush2.msra.mxu0 0.0
      %7908 = vmatprep.subr.mxu0 0.0
      %7909 = vmatpush2.msra.mxu0 0.0
      %7910 = vmatprep.subr.mxu0 0.0
      %7911 = vmatpush2.msra.mxu0 0.0
      %7912 = vmatprep.subr.mxu0 0.0
      %7913 = vmatpush2.msra.mxu0 0.0
      %7914 = vmatprep.subr.mxu0 0.0
      %7915 = vmatpush2.msra.mxu0 0.0
      %7916 = vmatprep.subr.mxu0 0.0
      %7917 = vmatpush2.msra.mxu0 0.0
      %7918 = vmatprep.subr.mxu0 0.0
      %7919 = vmatpush2.msra.mxu0 0.0
      %7920 = vmatprep.subr.mxu0 0.0
      %7921 = vmatpush2.msra.mxu0 0.0
      %7922 = vmatprep.mubr.f32.mxu0 0.0
      %7923 = vmatmul.mubr.f32.gmra.mxu0 %v7552
      %v7924 = vpop.f32.mrf.mxu0
      %v7925 = vadd.f32 %v7700, %v7924
      %v7926 = vpop.f32.mrf.mxu0
      %7927 = vmatprep.mubr.f32.mxu0 0.0
      %7928 = vmatmul.mubr.f32.gmra.mxu0 %v7553
      %v7929 = vpop.f32.mrf.mxu0
      %v7930 = vadd.f32 %v7705, %v7929
      %v7931 = vpop.f32.mrf.mxu0
      %7932 = vmatprep.mubr.f32.mxu0 0.0
      %7933 = vmatmul.mubr.f32.gmra.mxu0 %v7554
      %v7934 = vpop.f32.mrf.mxu0
      %v7935 = vadd.f32 %v7710, %v7934
      %v7936 = vpop.f32.mrf.mxu0
      %7937 = vmatprep.mubr.f32.mxu0 0.0
      %7938 = vmatmul.mubr.f32.gmra.mxu0 %v7555
      %v7939 = vpop.f32.mrf.mxu0
      %v7940 = vadd.f32 %v7715, %v7939
      %v7941 = vpop.f32.mrf.mxu0
      %7942 = vmatprep.mubr.f32.mxu0 0.0
      %7943 = vmatmul.mubr.f32.gmra.mxu0 %v7556
      %v7944 = vpop.f32.mrf.mxu0
      %v7945 = vadd.f32 %v7720, %v7944
      %v7946 = vpop.f32.mrf.mxu0
      %7947 = vmatprep.mubr.f32.mxu0 0.0
      %7948 = vmatmul.mubr.f32.gmra.mxu0 %v7557
      %v7949 = vpop.f32.mrf.mxu0
      %v7950 = vadd.f32 %v7725, %v7949
      %v7951 = vpop.f32.mrf.mxu0
      %7952 = vmatprep.mubr.f32.mxu0 0.0
      %7953 = vmatmul.mubr.f32.gmra.mxu0 %v7558
      %v7954 = vpop.f32.mrf.mxu0
      %v7955 = vadd.f32 %v7730, %v7954
      %v7956 = vpop.f32.mrf.mxu0
      %7957 = vmatprep.mubr.f32.mxu0 0.0
      %7958 = vmatmul.mubr.f32.gmra.mxu0 %v7559
      %v7959 = vpop.f32.mrf.mxu0
      %v7960 = vadd.f32 %v7735, %v7959
      %v7961 = vpop.f32.mrf.mxu0
      %7962 = vmatprep.mubr.f32.mxu0 0.0
      %7963 = vmatmul.mubr.f32.gmra.mxu0 %v7560
      %v7964 = vpop.f32.mrf.mxu0
      %v7965 = vadd.f32 %v7740, %v7964
      %v7966 = vpop.f32.mrf.mxu0
      %7967 = vmatprep.mubr.f32.mxu0 0.0
      %7968 = vmatmul.mubr.f32.gmra.mxu0 %v7561
      %v7969 = vpop.f32.mrf.mxu0
      %v7970 = vadd.f32 %v7745, %v7969
      %v7971 = vpop.f32.mrf.mxu0
      %7972 = vmatprep.mubr.f32.mxu0 0.0
      %7973 = vmatmul.mubr.f32.gmra.mxu0 %v7562
      %v7974 = vpop.f32.mrf.mxu0
      %v7975 = vadd.f32 %v7750, %v7974
      %v7976 = vpop.f32.mrf.mxu0
      %7977 = vmatprep.mubr.f32.mxu0 0.0
      %7978 = vmatmul.mubr.f32.gmra.mxu0 %v7563
      %v7979 = vpop.f32.mrf.mxu0
      %v7980 = vadd.f32 %v7755, %v7979
      %v7981 = vpop.f32.mrf.mxu0
      %7982 = vmatprep.mubr.f32.mxu0 0.0
      %7983 = vmatmul.mubr.f32.gmra.mxu0 %v7564
      %v7984 = vpop.f32.mrf.mxu0
      %v7985 = vadd.f32 %v7760, %v7984
      %v7986 = vpop.f32.mrf.mxu0
      %7987 = vmatprep.mubr.f32.mxu0 0.0
      %7988 = vmatmul.mubr.f32.gmra.mxu0 %v7565
      %v7989 = vpop.f32.mrf.mxu0
      %v7990 = vadd.f32 %v7765, %v7989
      %v7991 = vpop.f32.mrf.mxu0
      %7992 = vmatprep.mubr.f32.mxu0 0.0
      %7993 = vmatmul.mubr.f32.gmra.mxu0 %v7566
      %v7994 = vpop.f32.mrf.mxu0
      %v7995 = vadd.f32 %v7770, %v7994
      %v7996 = vpop.f32.mrf.mxu0
      %7997 = vmatprep.mubr.f32.mxu0 0.0
      %7998 = vmatmul.mubr.f32.gmra.mxu0 %v7567
      %v7999 = vpop.f32.mrf.mxu0
      %v8000 = vadd.f32 %v7775, %v7999
      %v8001 = vpop.f32.mrf.mxu0
      %8002 = vmatprep.mubr.f32.mxu0 0.0
      %8003 = vmatmul.mubr.f32.gmra.mxu0 %v7568
      %v8004 = vpop.f32.mrf.mxu0
      %v8005 = vadd.f32 %v7780, %v8004
      %v8006 = vpop.f32.mrf.mxu0
      %8007 = vmatprep.mubr.f32.mxu0 0.0
      %8008 = vmatmul.mubr.f32.gmra.mxu0 %v7569
      %v8009 = vpop.f32.mrf.mxu0
      %v8010 = vadd.f32 %v7785, %v8009
      %v8011 = vpop.f32.mrf.mxu0
      %8012 = vmatprep.mubr.f32.mxu0 0.0
      %8013 = vmatmul.mubr.f32.gmra.mxu0 %v7570
      %v8014 = vpop.f32.mrf.mxu0
      %v8015 = vadd.f32 %v7790, %v8014
      %v8016 = vpop.f32.mrf.mxu0
      %8017 = vmatprep.mubr.f32.mxu0 0.0
      %8018 = vmatmul.mubr.f32.gmra.mxu0 %v7571
      %v8019 = vpop.f32.mrf.mxu0
      %v8020 = vadd.f32 %v7795, %v8019
      %v8021 = vpop.f32.mrf.mxu0
      %8022 = vmatprep.mubr.f32.mxu0 0.0
      %8023 = vmatmul.mubr.f32.gmra.mxu0 %v7572
      %v8024 = vpop.f32.mrf.mxu0
      %v8025 = vadd.f32 %v7800, %v8024
      %v8026 = vpop.f32.mrf.mxu0
      %8027 = vmatprep.mubr.f32.mxu0 0.0
      %8028 = vmatmul.mubr.f32.gmra.mxu0 %v7573
      %v8029 = vpop.f32.mrf.mxu0
      %v8030 = vadd.f32 %v7805, %v8029
      %v8031 = vpop.f32.mrf.mxu0
      %8032 = vmatprep.mubr.f32.mxu0 0.0
      %8033 = vmatmul.mubr.f32.gmra.mxu0 %v7574
      %v8034 = vpop.f32.mrf.mxu0
      %v8035 = vadd.f32 %v7810, %v8034
      %v8036 = vpop.f32.mrf.mxu0
      %8037 = vmatprep.mubr.f32.mxu0 0.0
      %8038 = vmatmul.mubr.f32.gmra.mxu0 %v7575
      %v8039 = vpop.f32.mrf.mxu0
      %v8040 = vadd.f32 %v7815, %v8039
      %v8041 = vpop.f32.mrf.mxu0
      %8042 = vmatprep.mubr.f32.mxu0 0.0
      %8043 = vmatmul.mubr.f32.gmra.mxu0 %v7576
      %v8044 = vpop.f32.mrf.mxu0
      %v8045 = vadd.f32 %v7820, %v8044
      %v8046 = vpop.f32.mrf.mxu0
      %8047 = vmatprep.mubr.f32.mxu0 0.0
      %8048 = vmatmul.mubr.f32.gmra.mxu0 %v7577
      %v8049 = vpop.f32.mrf.mxu0
      %v8050 = vadd.f32 %v7825, %v8049
      %v8051 = vpop.f32.mrf.mxu0
      %8052 = vmatprep.mubr.f32.mxu0 0.0
      %8053 = vmatmul.mubr.f32.gmra.mxu0 %v7578
      %v8054 = vpop.f32.mrf.mxu0
      %v8055 = vadd.f32 %v7830, %v8054
      %v8056 = vpop.f32.mrf.mxu0
      %8057 = vmatprep.mubr.f32.mxu0 0.0
      %8058 = vmatmul.mubr.f32.gmra.mxu0 %v7579
      %v8059 = vpop.f32.mrf.mxu0
      %v8060 = vadd.f32 %v7835, %v8059
      %v8061 = vpop.f32.mrf.mxu0
      %8062 = vmatprep.mubr.f32.mxu0 0.0
      %8063 = vmatmul.mubr.f32.gmra.mxu0 %v7580
      %v8064 = vpop.f32.mrf.mxu0
      %v8065 = vadd.f32 %v7840, %v8064
      %v8066 = vpop.f32.mrf.mxu0
      %8067 = vmatprep.mubr.f32.mxu0 0.0
      %8068 = vmatmul.mubr.f32.gmra.mxu0 %v7581
      %v8069 = vpop.f32.mrf.mxu0
      %v8070 = vadd.f32 %v7845, %v8069
      %v8071 = vpop.f32.mrf.mxu0
      %8072 = vmatprep.mubr.f32.mxu0 0.0
      %8073 = vmatmul.mubr.f32.gmra.mxu0 %v7582
      %v8074 = vpop.f32.mrf.mxu0
      %v8075 = vadd.f32 %v7850, %v8074
      %v8076 = vpop.f32.mrf.mxu0
      %8077 = vmatprep.mubr.f32.mxu0 0.0
      %8078 = vmatmul.mubr.f32.gmra.mxu0 %v7583
      %v8079 = vpop.f32.mrf.mxu0
      %v8080 = vadd.f32 %v7855, %v8079
      %v8081 = vpop.f32.mrf.mxu0
      %8082 = vdwg.mxu0
      %v8083 = vld [vmem:[#allocation5] sm:$0xff]
      %v8084 = vld [vmem:[#allocation5 + $0x8] sm:$0xff]
      %v8085 = vld [vmem:[#allocation5 + $0x10] sm:$0xff]
      %v8086 = vld [vmem:[#allocation5 + $0x18] sm:$0xff]
      %v8087 = vld [vmem:[#allocation5 + $0x20] sm:$0xff]
      %v8088 = vld [vmem:[#allocation5 + $0x28] sm:$0xff]
      %v8089 = vld [vmem:[#allocation5 + $0x30] sm:$0xff]
      %v8090 = vld [vmem:[#allocation5 + $0x38] sm:$0xff]
      %v8091 = vld [vmem:[#allocation5 + $0x40] sm:$0xff]
      %v8092 = vld [vmem:[#allocation5 + $0x48] sm:$0xff]
      %v8093 = vld [vmem:[#allocation5 + $0x50] sm:$0xff]
      %v8094 = vld [vmem:[#allocation5 + $0x58] sm:$0xff]
      %v8095 = vld [vmem:[#allocation5 + $0x60] sm:$0xff]
      %v8096 = vld [vmem:[#allocation5 + $0x68] sm:$0xff]
      %v8097 = vld [vmem:[#allocation5 + $0x70] sm:$0xff]
      %v8098 = vld [vmem:[#allocation5 + $0x78] sm:$0xff]
      %v8099 = vld [vmem:[#allocation5 + $0x80] sm:$0xff]
      %v8100 = vld [vmem:[#allocation5 + $0x88] sm:$0xff]
      %v8101 = vld [vmem:[#allocation5 + $0x90] sm:$0xff]
      %v8102 = vld [vmem:[#allocation5 + $0x98] sm:$0xff]
      %v8103 = vld [vmem:[#allocation5 + $0xa0] sm:$0xff]
      %v8104 = vld [vmem:[#allocation5 + $0xa8] sm:$0xff]
      %v8105 = vld [vmem:[#allocation5 + $0xb0] sm:$0xff]
      %v8106 = vld [vmem:[#allocation5 + $0xb8] sm:$0xff]
      %v8107 = vld [vmem:[#allocation5 + $0xc0] sm:$0xff]
      %v8108 = vld [vmem:[#allocation5 + $0xc8] sm:$0xff]
      %v8109 = vld [vmem:[#allocation5 + $0xd0] sm:$0xff]
      %v8110 = vld [vmem:[#allocation5 + $0xd8] sm:$0xff]
      %v8111 = vld [vmem:[#allocation5 + $0xe0] sm:$0xff]
      %v8112 = vld [vmem:[#allocation5 + $0xe8] sm:$0xff]
      %v8113 = vld [vmem:[#allocation5 + $0xf0] sm:$0xff]
      %v8114 = vld [vmem:[#allocation5 + $0xf8] sm:$0xff]
      %v8115 = vadd.f32 %v8083, %v7925
      %v8116 = vadd.f32 %v8084, %v7930
      %v8117 = vadd.f32 %v8085, %v7935
      %v8118 = vadd.f32 %v8086, %v7940
      %v8119 = vadd.f32 %v8087, %v7945
      %v8120 = vadd.f32 %v8088, %v7950
      %v8121 = vadd.f32 %v8089, %v7955
      %v8122 = vadd.f32 %v8090, %v7960
      %v8123 = vadd.f32 %v8091, %v7965
      %v8124 = vadd.f32 %v8092, %v7970
      %v8125 = vadd.f32 %v8093, %v7975
      %v8126 = vadd.f32 %v8094, %v7980
      %v8127 = vadd.f32 %v8095, %v7985
      %v8128 = vadd.f32 %v8096, %v7990
      %v8129 = vadd.f32 %v8097, %v7995
      %v8130 = vadd.f32 %v8098, %v8000
      %v8131 = vadd.f32 %v8099, %v8005
      %v8132 = vadd.f32 %v8100, %v8010
      %v8133 = vadd.f32 %v8101, %v8015
      %v8134 = vadd.f32 %v8102, %v8020
      %v8135 = vadd.f32 %v8103, %v8025
      %v8136 = vadd.f32 %v8104, %v8030
      %v8137 = vadd.f32 %v8105, %v8035
      %v8138 = vadd.f32 %v8106, %v8040
      %v8139 = vadd.f32 %v8107, %v8045
      %v8140 = vadd.f32 %v8108, %v8050
      %v8141 = vadd.f32 %v8109, %v8055
      %v8142 = vadd.f32 %v8110, %v8060
      %v8143 = vadd.f32 %v8111, %v8065
      %v8144 = vadd.f32 %v8112, %v8070
      %v8145 = vadd.f32 %v8113, %v8075
      %v8146 = vadd.f32 %v8114, %v8080
      %8147 = vst [vmem:[#allocation5] sm:$0xff] %v8115
      %8148 = vst [vmem:[#allocation5 + $0x8] sm:$0xff] %v8116
      %8149 = vst [vmem:[#allocation5 + $0x10] sm:$0xff] %v8117
      %8150 = vst [vmem:[#allocation5 + $0x18] sm:$0xff] %v8118
      %8151 = vst [vmem:[#allocation5 + $0x20] sm:$0xff] %v8119
      %8152 = vst [vmem:[#allocation5 + $0x28] sm:$0xff] %v8120
      %8153 = vst [vmem:[#allocation5 + $0x30] sm:$0xff] %v8121
      %8154 = vst [vmem:[#allocation5 + $0x38] sm:$0xff] %v8122
      %8155 = vst [vmem:[#allocation5 + $0x40] sm:$0xff] %v8123
      %8156 = vst [vmem:[#allocation5 + $0x48] sm:$0xff] %v8124
      %8157 = vst [vmem:[#allocation5 + $0x50] sm:$0xff] %v8125
      %8158 = vst [vmem:[#allocation5 + $0x58] sm:$0xff] %v8126
      %8159 = vst [vmem:[#allocation5 + $0x60] sm:$0xff] %v8127
      %8160 = vst [vmem:[#allocation5 + $0x68] sm:$0xff] %v8128
      %8161 = vst [vmem:[#allocation5 + $0x70] sm:$0xff] %v8129
      %8162 = vst [vmem:[#allocation5 + $0x78] sm:$0xff] %v8130
      %8163 = vst [vmem:[#allocation5 + $0x80] sm:$0xff] %v8131
      %8164 = vst [vmem:[#allocation5 + $0x88] sm:$0xff] %v8132
      %8165 = vst [vmem:[#allocation5 + $0x90] sm:$0xff] %v8133
      %8166 = vst [vmem:[#allocation5 + $0x98] sm:$0xff] %v8134
      %8167 = vst [vmem:[#allocation5 + $0xa0] sm:$0xff] %v8135
      %8168 = vst [vmem:[#allocation5 + $0xa8] sm:$0xff] %v8136
      %8169 = vst [vmem:[#allocation5 + $0xb0] sm:$0xff] %v8137
      %8170 = vst [vmem:[#allocation5 + $0xb8] sm:$0xff] %v8138
      %8171 = vst [vmem:[#allocation5 + $0xc0] sm:$0xff] %v8139
      %8172 = vst [vmem:[#allocation5 + $0xc8] sm:$0xff] %v8140
      %8173 = vst [vmem:[#allocation5 + $0xd0] sm:$0xff] %v8141
      %8174 = vst [vmem:[#allocation5 + $0xd8] sm:$0xff] %v8142
      %8175 = vst [vmem:[#allocation5 + $0xe0] sm:$0xff] %v8143
      %8176 = vst [vmem:[#allocation5 + $0xe8] sm:$0xff] %v8144
      %8177 = vst [vmem:[#allocation5 + $0xf0] sm:$0xff] %v8145
      %8178 = vst [vmem:[#allocation5 + $0xf8] sm:$0xff] %v8146
      %v8179 = vld [vmem:[%s1762] sm:$0xff]
      %v8180 = vld [vmem:[%s1762 + $0x8] sm:$0xff]
      %v8181 = vld [vmem:[%s1762 + $0x18] sm:$0xff]
      %v8182 = vld [vmem:[%s1762 + $0x20] sm:$0xff]
      %v8183 = vld [vmem:[%s1762 + $0x30] sm:$0xff]
      %v8184 = vld [vmem:[%s1762 + $0x38] sm:$0xff]
      %v8185 = vld [vmem:[%s1762 + $0x48] sm:$0xff]
      %v8186 = vld [vmem:[%s1762 + $0x50] sm:$0xff]
      %v8187 = vld [vmem:[%s1762 + $0x60] sm:$0xff]
      %v8188 = vld [vmem:[%s1762 + $0x68] sm:$0xff]
      %v8189 = vld [vmem:[%s1762 + $0x78] sm:$0xff]
      %v8190 = vld [vmem:[%s1762 + $0x80] sm:$0xff]
      %v8191 = vld [vmem:[%s1762 + $0x90] sm:$0xff]
      %v8192 = vld [vmem:[%s1762 + $0x98] sm:$0xff]
      %v8193 = vld [vmem:[%s1762 + $0xa8] sm:$0xff]
      %v8194 = vld [vmem:[%s1762 + $0xb0] sm:$0xff]
      %v8195 = vld [vmem:[%s1762 + $0xc0] sm:$0xff]
      %v8196 = vld [vmem:[%s1762 + $0xc8] sm:$0xff]
      %v8197 = vld [vmem:[%s1762 + $0xd8] sm:$0xff]
      %v8198 = vld [vmem:[%s1762 + $0xe0] sm:$0xff]
      %v8199 = vld [vmem:[%s1762 + $0xf0] sm:$0xff]
      %v8200 = vld [vmem:[%s1762 + $0xf8] sm:$0xff]
      %v8201 = vld [vmem:[%s1762 + $0x108] sm:$0xff]
      %v8202 = vld [vmem:[%s1762 + $0x110] sm:$0xff]
      %v8203 = vld [vmem:[%s1762 + $0x120] sm:$0xff]
      %v8204 = vld [vmem:[%s1762 + $0x128] sm:$0xff]
      %v8205 = vld [vmem:[%s1762 + $0x138] sm:$0xff]
      %v8206 = vld [vmem:[%s1762 + $0x140] sm:$0xff]
      %v8207 = vld [vmem:[%s1762 + $0x150] sm:$0xff]
      %v8208 = vld [vmem:[%s1762 + $0x158] sm:$0xff]
      %v8209 = vld [vmem:[%s1762 + $0x168] sm:$0xff]
      %v8210 = vld [vmem:[%s1762 + $0x170] sm:$0xff]
      %v8211 = vld [vmem:[%s1762 + $0x1] sm:$0xff]
      %v8212 = vld [vmem:[%s1762 + $0x9] sm:$0xff]
      %v8213 = vld [vmem:[%s1762 + $0x19] sm:$0xff]
      %v8214 = vld [vmem:[%s1762 + $0x21] sm:$0xff]
      %v8215 = vld [vmem:[%s1762 + $0x31] sm:$0xff]
      %v8216 = vld [vmem:[%s1762 + $0x39] sm:$0xff]
      %v8217 = vld [vmem:[%s1762 + $0x49] sm:$0xff]
      %v8218 = vld [vmem:[%s1762 + $0x51] sm:$0xff]
      %v8219 = vld [vmem:[%s1762 + $0x61] sm:$0xff]
      %v8220 = vld [vmem:[%s1762 + $0x69] sm:$0xff]
      %v8221 = vld [vmem:[%s1762 + $0x79] sm:$0xff]
      %v8222 = vld [vmem:[%s1762 + $0x81] sm:$0xff]
      %v8223 = vld [vmem:[%s1762 + $0x91] sm:$0xff]
      %v8224 = vld [vmem:[%s1762 + $0x99] sm:$0xff]
      %v8225 = vld [vmem:[%s1762 + $0xa9] sm:$0xff]
      %v8226 = vld [vmem:[%s1762 + $0xb1] sm:$0xff]
      %v8227 = vld [vmem:[%s1762 + $0xc1] sm:$0xff]
      %v8228 = vld [vmem:[%s1762 + $0xc9] sm:$0xff]
      %v8229 = vld [vmem:[%s1762 + $0xd9] sm:$0xff]
      %v8230 = vld [vmem:[%s1762 + $0xe1] sm:$0xff]
      %v8231 = vld [vmem:[%s1762 + $0xf1] sm:$0xff]
      %v8232 = vld [vmem:[%s1762 + $0xf9] sm:$0xff]
      %v8233 = vld [vmem:[%s1762 + $0x109] sm:$0xff]
      %v8234 = vld [vmem:[%s1762 + $0x111] sm:$0xff]
      %v8235 = vld [vmem:[%s1762 + $0x121] sm:$0xff]
      %v8236 = vld [vmem:[%s1762 + $0x129] sm:$0xff]
      %v8237 = vld [vmem:[%s1762 + $0x139] sm:$0xff]
      %v8238 = vld [vmem:[%s1762 + $0x141] sm:$0xff]
      %v8239 = vld [vmem:[%s1762 + $0x151] sm:$0xff]
      %v8240 = vld [vmem:[%s1762 + $0x159] sm:$0xff]
      %v8241 = vld [vmem:[%s1762 + $0x169] sm:$0xff]
      %v8242 = vld [vmem:[%s1762 + $0x171] sm:$0xff]
      %v8243 = vld [vmem:[%s1762 + $0x2] sm:$0xff]
      %v8244 = vld [vmem:[%s1762 + $0xa] sm:$0xff]
      %v8245 = vld [vmem:[%s1762 + $0x1a] sm:$0xff]
      %v8246 = vld [vmem:[%s1762 + $0x22] sm:$0xff]
      %v8247 = vld [vmem:[%s1762 + $0x32] sm:$0xff]
      %v8248 = vld [vmem:[%s1762 + $0x3a] sm:$0xff]
      %v8249 = vld [vmem:[%s1762 + $0x4a] sm:$0xff]
      %v8250 = vld [vmem:[%s1762 + $0x52] sm:$0xff]
      %v8251 = vld [vmem:[%s1762 + $0x62] sm:$0xff]
      %v8252 = vld [vmem:[%s1762 + $0x6a] sm:$0xff]
      %v8253 = vld [vmem:[%s1762 + $0x7a] sm:$0xff]
      %v8254 = vld [vmem:[%s1762 + $0x82] sm:$0xff]
      %v8255 = vld [vmem:[%s1762 + $0x92] sm:$0xff]
      %v8256 = vld [vmem:[%s1762 + $0x9a] sm:$0xff]
      %v8257 = vld [vmem:[%s1762 + $0xaa] sm:$0xff]
      %v8258 = vld [vmem:[%s1762 + $0xb2] sm:$0xff]
      %v8259 = vld [vmem:[%s1762 + $0xc2] sm:$0xff]
      %v8260 = vld [vmem:[%s1762 + $0xca] sm:$0xff]
      %v8261 = vld [vmem:[%s1762 + $0xda] sm:$0xff]
      %v8262 = vld [vmem:[%s1762 + $0xe2] sm:$0xff]
      %v8263 = vld [vmem:[%s1762 + $0xf2] sm:$0xff]
      %v8264 = vld [vmem:[%s1762 + $0xfa] sm:$0xff]
      %v8265 = vld [vmem:[%s1762 + $0x10a] sm:$0xff]
      %v8266 = vld [vmem:[%s1762 + $0x112] sm:$0xff]
      %v8267 = vld [vmem:[%s1762 + $0x122] sm:$0xff]
      %v8268 = vld [vmem:[%s1762 + $0x12a] sm:$0xff]
      %v8269 = vld [vmem:[%s1762 + $0x13a] sm:$0xff]
      %v8270 = vld [vmem:[%s1762 + $0x142] sm:$0xff]
      %v8271 = vld [vmem:[%s1762 + $0x152] sm:$0xff]
      %v8272 = vld [vmem:[%s1762 + $0x15a] sm:$0xff]
      %v8273 = vld [vmem:[%s1762 + $0x16a] sm:$0xff]
      %v8274 = vld [vmem:[%s1762 + $0x172] sm:$0xff]
      %s8275 = scalar_lea.vmem %s5, 768
      %v8276 = vld [vmem:[%s8275] sm:$0xff]
      %v8277 = vld [vmem:[%s8275 + $0x8] sm:$0xff]
      %v8278 = vld [vmem:[%s8275 + $0x10] sm:$0xff]
      %v8279 = vld [vmem:[%s8275 + $0x18] sm:$0xff]
      %v8280 = vld [vmem:[%s8275 + $0x20] sm:$0xff]
      %v8281 = vld [vmem:[%s8275 + $0x28] sm:$0xff]
      %v8282 = vld [vmem:[%s8275 + $0x30] sm:$0xff]
      %v8283 = vld [vmem:[%s8275 + $0x38] sm:$0xff]
      %v8284 = vld [vmem:[%s8275 + $0x40] sm:$0xff]
      %v8285 = vld [vmem:[%s8275 + $0x48] sm:$0xff]
      %v8286 = vld [vmem:[%s8275 + $0x50] sm:$0xff]
      %v8287 = vld [vmem:[%s8275 + $0x58] sm:$0xff]
      %v8288 = vld [vmem:[%s8275 + $0x60] sm:$0xff]
      %v8289 = vld [vmem:[%s8275 + $0x68] sm:$0xff]
      %v8290 = vld [vmem:[%s8275 + $0x70] sm:$0xff]
      %v8291 = vld [vmem:[%s8275 + $0x78] sm:$0xff]
      %v8292 = vld [vmem:[%s8275 + $0x80] sm:$0xff]
      %v8293 = vld [vmem:[%s8275 + $0x88] sm:$0xff]
      %v8294 = vld [vmem:[%s8275 + $0x90] sm:$0xff]
      %v8295 = vld [vmem:[%s8275 + $0x98] sm:$0xff]
      %v8296 = vld [vmem:[%s8275 + $0xa0] sm:$0xff]
      %v8297 = vld [vmem:[%s8275 + $0xa8] sm:$0xff]
      %v8298 = vld [vmem:[%s8275 + $0xb0] sm:$0xff]
      %v8299 = vld [vmem:[%s8275 + $0xb8] sm:$0xff]
      %v8300 = vld [vmem:[%s8275 + $0xc0] sm:$0xff]
      %v8301 = vld [vmem:[%s8275 + $0xc8] sm:$0xff]
      %v8302 = vld [vmem:[%s8275 + $0xd0] sm:$0xff]
      %v8303 = vld [vmem:[%s8275 + $0xd8] sm:$0xff]
      %v8304 = vld [vmem:[%s8275 + $0xe0] sm:$0xff]
      %v8305 = vld [vmem:[%s8275 + $0xe8] sm:$0xff]
      %v8306 = vld [vmem:[%s8275 + $0xf0] sm:$0xff]
      %v8307 = vld [vmem:[%s8275 + $0xf8] sm:$0xff]
      %v8308 = vld [vmem:[%s8275 + $0x100] sm:$0xff]
      %v8309 = vld [vmem:[%s8275 + $0x108] sm:$0xff]
      %v8310 = vld [vmem:[%s8275 + $0x110] sm:$0xff]
      %v8311 = vld [vmem:[%s8275 + $0x118] sm:$0xff]
      %v8312 = vld [vmem:[%s8275 + $0x120] sm:$0xff]
      %v8313 = vld [vmem:[%s8275 + $0x128] sm:$0xff]
      %v8314 = vld [vmem:[%s8275 + $0x130] sm:$0xff]
      %v8315 = vld [vmem:[%s8275 + $0x138] sm:$0xff]
      %v8316 = vld [vmem:[%s8275 + $0x140] sm:$0xff]
      %v8317 = vld [vmem:[%s8275 + $0x148] sm:$0xff]
      %v8318 = vld [vmem:[%s8275 + $0x150] sm:$0xff]
      %v8319 = vld [vmem:[%s8275 + $0x158] sm:$0xff]
      %v8320 = vld [vmem:[%s8275 + $0x160] sm:$0xff]
      %v8321 = vld [vmem:[%s8275 + $0x168] sm:$0xff]
      %v8322 = vld [vmem:[%s8275 + $0x170] sm:$0xff]
      %v8323 = vld [vmem:[%s8275 + $0x178] sm:$0xff]
      %8324 = vmatprep.subr.mxu0 0.0
      %8325 = vmatpush1.msra.mxu0 %v8291
      %8326 = vmatprep.subr.mxu0 0.0
      %8327 = vmatpush1.msra.mxu0 %v8290
      %8328 = vmatprep.subr.mxu0 0.0
      %8329 = vmatpush1.msra.mxu0 %v8289
      %8330 = vmatprep.subr.mxu0 0.0
      %8331 = vmatpush1.msra.mxu0 %v8288
      %8332 = vmatprep.subr.mxu0 0.0
      %8333 = vmatpush1.msra.mxu0 %v8287
      %8334 = vmatprep.subr.mxu0 0.0
      %8335 = vmatpush1.msra.mxu0 %v8286
      %8336 = vmatprep.subr.mxu0 0.0
      %8337 = vmatpush1.msra.mxu0 %v8285
      %8338 = vmatprep.subr.mxu0 0.0
      %8339 = vmatpush1.msra.mxu0 %v8284
      %8340 = vmatprep.subr.mxu0 0.0
      %8341 = vmatpush1.msra.mxu0 %v8283
      %8342 = vmatprep.subr.mxu0 0.0
      %8343 = vmatpush1.msra.mxu0 %v8282
      %8344 = vmatprep.subr.mxu0 0.0
      %8345 = vmatpush1.msra.mxu0 %v8281
      %8346 = vmatprep.subr.mxu0 0.0
      %8347 = vmatpush1.msra.mxu0 %v8280
      %8348 = vmatprep.subr.mxu0 0.0
      %8349 = vmatpush1.msra.mxu0 %v8279
      %8350 = vmatprep.subr.mxu0 0.0
      %8351 = vmatpush1.msra.mxu0 %v8278
      %8352 = vmatprep.subr.mxu0 0.0
      %8353 = vmatpush1.msra.mxu0 %v8277
      %8354 = vmatprep.subr.mxu0 0.0
      %8355 = vmatpush1.msra.mxu0 %v8276
      %8356 = vmatprep.subr.mxu0 0.0
      %8357 = vmatpush2.msra.mxu0 %v8307
      %8358 = vmatprep.subr.mxu0 0.0
      %8359 = vmatpush2.msra.mxu0 %v8306
      %8360 = vmatprep.subr.mxu0 0.0
      %8361 = vmatpush2.msra.mxu0 %v8305
      %8362 = vmatprep.subr.mxu0 0.0
      %8363 = vmatpush2.msra.mxu0 %v8304
      %8364 = vmatprep.subr.mxu0 0.0
      %8365 = vmatpush2.msra.mxu0 %v8303
      %8366 = vmatprep.subr.mxu0 0.0
      %8367 = vmatpush2.msra.mxu0 %v8302
      %8368 = vmatprep.subr.mxu0 0.0
      %8369 = vmatpush2.msra.mxu0 %v8301
      %8370 = vmatprep.subr.mxu0 0.0
      %8371 = vmatpush2.msra.mxu0 %v8300
      %8372 = vmatprep.subr.mxu0 0.0
      %8373 = vmatpush2.msra.mxu0 %v8299
      %8374 = vmatprep.subr.mxu0 0.0
      %8375 = vmatpush2.msra.mxu0 %v8298
      %8376 = vmatprep.subr.mxu0 0.0
      %8377 = vmatpush2.msra.mxu0 %v8297
      %8378 = vmatprep.subr.mxu0 0.0
      %8379 = vmatpush2.msra.mxu0 %v8296
      %8380 = vmatprep.subr.mxu0 0.0
      %8381 = vmatpush2.msra.mxu0 %v8295
      %8382 = vmatprep.subr.mxu0 0.0
      %8383 = vmatpush2.msra.mxu0 %v8294
      %8384 = vmatprep.subr.mxu0 0.0
      %8385 = vmatpush2.msra.mxu0 %v8293
      %8386 = vmatprep.subr.mxu0 0.0
      %8387 = vmatpush2.msra.mxu0 %v8292
      %8388 = vmatprep.mubr.f32.mxu0 %v8211
      %8389 = vmatmul.mubr.f32.gmra.mxu0 %v8179
      %v8390 = vpop.f32.mrf.mxu0
      %v8391 = vadd.f32 0.0, %v8390
      %v8392 = vpop.f32.mrf.mxu0
      %8393 = vmatprep.mubr.f32.mxu0 %v8212
      %8394 = vmatmul.mubr.f32.gmra.mxu0 %v8180
      %v8395 = vpop.f32.mrf.mxu0
      %v8396 = vadd.f32 0.0, %v8395
      %v8397 = vpop.f32.mrf.mxu0
      %8398 = vmatprep.mubr.f32.mxu0 %v8213
      %8399 = vmatmul.mubr.f32.gmra.mxu0 %v8181
      %v8400 = vpop.f32.mrf.mxu0
      %v8401 = vadd.f32 0.0, %v8400
      %v8402 = vpop.f32.mrf.mxu0
      %8403 = vmatprep.mubr.f32.mxu0 %v8214
      %8404 = vmatmul.mubr.f32.gmra.mxu0 %v8182
      %v8405 = vpop.f32.mrf.mxu0
      %v8406 = vadd.f32 0.0, %v8405
      %v8407 = vpop.f32.mrf.mxu0
      %8408 = vmatprep.mubr.f32.mxu0 %v8215
      %8409 = vmatmul.mubr.f32.gmra.mxu0 %v8183
      %v8410 = vpop.f32.mrf.mxu0
      %v8411 = vadd.f32 0.0, %v8410
      %v8412 = vpop.f32.mrf.mxu0
      %8413 = vmatprep.mubr.f32.mxu0 %v8216
      %8414 = vmatmul.mubr.f32.gmra.mxu0 %v8184
      %v8415 = vpop.f32.mrf.mxu0
      %v8416 = vadd.f32 0.0, %v8415
      %v8417 = vpop.f32.mrf.mxu0
      %8418 = vmatprep.mubr.f32.mxu0 %v8217
      %8419 = vmatmul.mubr.f32.gmra.mxu0 %v8185
      %v8420 = vpop.f32.mrf.mxu0
      %v8421 = vadd.f32 0.0, %v8420
      %v8422 = vpop.f32.mrf.mxu0
      %8423 = vmatprep.mubr.f32.mxu0 %v8218
      %8424 = vmatmul.mubr.f32.gmra.mxu0 %v8186
      %v8425 = vpop.f32.mrf.mxu0
      %v8426 = vadd.f32 0.0, %v8425
      %v8427 = vpop.f32.mrf.mxu0
      %8428 = vmatprep.mubr.f32.mxu0 %v8219
      %8429 = vmatmul.mubr.f32.gmra.mxu0 %v8187
      %v8430 = vpop.f32.mrf.mxu0
      %v8431 = vadd.f32 0.0, %v8430
      %v8432 = vpop.f32.mrf.mxu0
      %8433 = vmatprep.mubr.f32.mxu0 %v8220
      %8434 = vmatmul.mubr.f32.gmra.mxu0 %v8188
      %v8435 = vpop.f32.mrf.mxu0
      %v8436 = vadd.f32 0.0, %v8435
      %v8437 = vpop.f32.mrf.mxu0
      %8438 = vmatprep.mubr.f32.mxu0 %v8221
      %8439 = vmatmul.mubr.f32.gmra.mxu0 %v8189
      %v8440 = vpop.f32.mrf.mxu0
      %v8441 = vadd.f32 0.0, %v8440
      %v8442 = vpop.f32.mrf.mxu0
      %8443 = vmatprep.mubr.f32.mxu0 %v8222
      %8444 = vmatmul.mubr.f32.gmra.mxu0 %v8190
      %v8445 = vpop.f32.mrf.mxu0
      %v8446 = vadd.f32 0.0, %v8445
      %v8447 = vpop.f32.mrf.mxu0
      %8448 = vmatprep.mubr.f32.mxu0 %v8223
      %8449 = vmatmul.mubr.f32.gmra.mxu0 %v8191
      %v8450 = vpop.f32.mrf.mxu0
      %v8451 = vadd.f32 0.0, %v8450
      %v8452 = vpop.f32.mrf.mxu0
      %8453 = vmatprep.mubr.f32.mxu0 %v8224
      %8454 = vmatmul.mubr.f32.gmra.mxu0 %v8192
      %v8455 = vpop.f32.mrf.mxu0
      %v8456 = vadd.f32 0.0, %v8455
      %v8457 = vpop.f32.mrf.mxu0
      %8458 = vmatprep.mubr.f32.mxu0 %v8225
      %8459 = vmatmul.mubr.f32.gmra.mxu0 %v8193
      %v8460 = vpop.f32.mrf.mxu0
      %v8461 = vadd.f32 0.0, %v8460
      %v8462 = vpop.f32.mrf.mxu0
      %8463 = vmatprep.mubr.f32.mxu0 %v8226
      %8464 = vmatmul.mubr.f32.gmra.mxu0 %v8194
      %v8465 = vpop.f32.mrf.mxu0
      %v8466 = vadd.f32 0.0, %v8465
      %v8467 = vpop.f32.mrf.mxu0
      %8468 = vmatprep.mubr.f32.mxu0 %v8227
      %8469 = vmatmul.mubr.f32.gmra.mxu0 %v8195
      %v8470 = vpop.f32.mrf.mxu0
      %v8471 = vadd.f32 0.0, %v8470
      %v8472 = vpop.f32.mrf.mxu0
      %8473 = vmatprep.mubr.f32.mxu0 %v8228
      %8474 = vmatmul.mubr.f32.gmra.mxu0 %v8196
      %v8475 = vpop.f32.mrf.mxu0
      %v8476 = vadd.f32 0.0, %v8475
      %v8477 = vpop.f32.mrf.mxu0
      %8478 = vmatprep.mubr.f32.mxu0 %v8229
      %8479 = vmatmul.mubr.f32.gmra.mxu0 %v8197
      %v8480 = vpop.f32.mrf.mxu0
      %v8481 = vadd.f32 0.0, %v8480
      %v8482 = vpop.f32.mrf.mxu0
      %8483 = vmatprep.mubr.f32.mxu0 %v8230
      %8484 = vmatmul.mubr.f32.gmra.mxu0 %v8198
      %v8485 = vpop.f32.mrf.mxu0
      %v8486 = vadd.f32 0.0, %v8485
      %v8487 = vpop.f32.mrf.mxu0
      %8488 = vmatprep.mubr.f32.mxu0 %v8231
      %8489 = vmatmul.mubr.f32.gmra.mxu0 %v8199
      %v8490 = vpop.f32.mrf.mxu0
      %v8491 = vadd.f32 0.0, %v8490
      %v8492 = vpop.f32.mrf.mxu0
      %8493 = vmatprep.mubr.f32.mxu0 %v8232
      %8494 = vmatmul.mubr.f32.gmra.mxu0 %v8200
      %v8495 = vpop.f32.mrf.mxu0
      %v8496 = vadd.f32 0.0, %v8495
      %v8497 = vpop.f32.mrf.mxu0
      %8498 = vmatprep.mubr.f32.mxu0 %v8233
      %8499 = vmatmul.mubr.f32.gmra.mxu0 %v8201
      %v8500 = vpop.f32.mrf.mxu0
      %v8501 = vadd.f32 0.0, %v8500
      %v8502 = vpop.f32.mrf.mxu0
      %8503 = vmatprep.mubr.f32.mxu0 %v8234
      %8504 = vmatmul.mubr.f32.gmra.mxu0 %v8202
      %v8505 = vpop.f32.mrf.mxu0
      %v8506 = vadd.f32 0.0, %v8505
      %v8507 = vpop.f32.mrf.mxu0
      %8508 = vmatprep.mubr.f32.mxu0 %v8235
      %8509 = vmatmul.mubr.f32.gmra.mxu0 %v8203
      %v8510 = vpop.f32.mrf.mxu0
      %v8511 = vadd.f32 0.0, %v8510
      %v8512 = vpop.f32.mrf.mxu0
      %8513 = vmatprep.mubr.f32.mxu0 %v8236
      %8514 = vmatmul.mubr.f32.gmra.mxu0 %v8204
      %v8515 = vpop.f32.mrf.mxu0
      %v8516 = vadd.f32 0.0, %v8515
      %v8517 = vpop.f32.mrf.mxu0
      %8518 = vmatprep.mubr.f32.mxu0 %v8237
      %8519 = vmatmul.mubr.f32.gmra.mxu0 %v8205
      %v8520 = vpop.f32.mrf.mxu0
      %v8521 = vadd.f32 0.0, %v8520
      %v8522 = vpop.f32.mrf.mxu0
      %8523 = vmatprep.mubr.f32.mxu0 %v8238
      %8524 = vmatmul.mubr.f32.gmra.mxu0 %v8206
      %v8525 = vpop.f32.mrf.mxu0
      %v8526 = vadd.f32 0.0, %v8525
      %v8527 = vpop.f32.mrf.mxu0
      %8528 = vmatprep.mubr.f32.mxu0 %v8239
      %8529 = vmatmul.mubr.f32.gmra.mxu0 %v8207
      %v8530 = vpop.f32.mrf.mxu0
      %v8531 = vadd.f32 0.0, %v8530
      %v8532 = vpop.f32.mrf.mxu0
      %8533 = vmatprep.mubr.f32.mxu0 %v8240
      %8534 = vmatmul.mubr.f32.gmra.mxu0 %v8208
      %v8535 = vpop.f32.mrf.mxu0
      %v8536 = vadd.f32 0.0, %v8535
      %v8537 = vpop.f32.mrf.mxu0
      %8538 = vmatprep.mubr.f32.mxu0 %v8241
      %8539 = vmatmul.mubr.f32.gmra.mxu0 %v8209
      %v8540 = vpop.f32.mrf.mxu0
      %v8541 = vadd.f32 0.0, %v8540
      %v8542 = vpop.f32.mrf.mxu0
      %8543 = vmatprep.mubr.f32.mxu0 %v8242
      %8544 = vmatmul.mubr.f32.gmra.mxu0 %v8210
      %v8545 = vpop.f32.mrf.mxu0
      %v8546 = vadd.f32 0.0, %v8545
      %v8547 = vpop.f32.mrf.mxu0
      %8548 = vdwg.mxu0
      %8549 = vmatprep.subr.mxu0 0.0
      %8550 = vmatpush1.msra.mxu0 %v8323
      %8551 = vmatprep.subr.mxu0 0.0
      %8552 = vmatpush1.msra.mxu0 %v8322
      %8553 = vmatprep.subr.mxu0 0.0
      %8554 = vmatpush1.msra.mxu0 %v8321
      %8555 = vmatprep.subr.mxu0 0.0
      %8556 = vmatpush1.msra.mxu0 %v8320
      %8557 = vmatprep.subr.mxu0 0.0
      %8558 = vmatpush1.msra.mxu0 %v8319
      %8559 = vmatprep.subr.mxu0 0.0
      %8560 = vmatpush1.msra.mxu0 %v8318
      %8561 = vmatprep.subr.mxu0 0.0
      %8562 = vmatpush1.msra.mxu0 %v8317
      %8563 = vmatprep.subr.mxu0 0.0
      %8564 = vmatpush1.msra.mxu0 %v8316
      %8565 = vmatprep.subr.mxu0 0.0
      %8566 = vmatpush1.msra.mxu0 %v8315
      %8567 = vmatprep.subr.mxu0 0.0
      %8568 = vmatpush1.msra.mxu0 %v8314
      %8569 = vmatprep.subr.mxu0 0.0
      %8570 = vmatpush1.msra.mxu0 %v8313
      %8571 = vmatprep.subr.mxu0 0.0
      %8572 = vmatpush1.msra.mxu0 %v8312
      %8573 = vmatprep.subr.mxu0 0.0
      %8574 = vmatpush1.msra.mxu0 %v8311
      %8575 = vmatprep.subr.mxu0 0.0
      %8576 = vmatpush1.msra.mxu0 %v8310
      %8577 = vmatprep.subr.mxu0 0.0
      %8578 = vmatpush1.msra.mxu0 %v8309
      %8579 = vmatprep.subr.mxu0 0.0
      %8580 = vmatpush1.msra.mxu0 %v8308
      %8581 = vmatprep.subr.mxu0 0.0
      %8582 = vmatpush2.msra.mxu0 0.0
      %8583 = vmatprep.subr.mxu0 0.0
      %8584 = vmatpush2.msra.mxu0 0.0
      %8585 = vmatprep.subr.mxu0 0.0
      %8586 = vmatpush2.msra.mxu0 0.0
      %8587 = vmatprep.subr.mxu0 0.0
      %8588 = vmatpush2.msra.mxu0 0.0
      %8589 = vmatprep.subr.mxu0 0.0
      %8590 = vmatpush2.msra.mxu0 0.0
      %8591 = vmatprep.subr.mxu0 0.0
      %8592 = vmatpush2.msra.mxu0 0.0
      %8593 = vmatprep.subr.mxu0 0.0
      %8594 = vmatpush2.msra.mxu0 0.0
      %8595 = vmatprep.subr.mxu0 0.0
      %8596 = vmatpush2.msra.mxu0 0.0
      %8597 = vmatprep.subr.mxu0 0.0
      %8598 = vmatpush2.msra.mxu0 0.0
      %8599 = vmatprep.subr.mxu0 0.0
      %8600 = vmatpush2.msra.mxu0 0.0
      %8601 = vmatprep.subr.mxu0 0.0
      %8602 = vmatpush2.msra.mxu0 0.0
      %8603 = vmatprep.subr.mxu0 0.0
      %8604 = vmatpush2.msra.mxu0 0.0
      %8605 = vmatprep.subr.mxu0 0.0
      %8606 = vmatpush2.msra.mxu0 0.0
      %8607 = vmatprep.subr.mxu0 0.0
      %8608 = vmatpush2.msra.mxu0 0.0
      %8609 = vmatprep.subr.mxu0 0.0
      %8610 = vmatpush2.msra.mxu0 0.0
      %8611 = vmatprep.subr.mxu0 0.0
      %8612 = vmatpush2.msra.mxu0 0.0
      %8613 = vmatprep.mubr.f32.mxu0 0.0
      %8614 = vmatmul.mubr.f32.gmra.mxu0 %v8243
      %v8615 = vpop.f32.mrf.mxu0
      %v8616 = vadd.f32 %v8391, %v8615
      %v8617 = vpop.f32.mrf.mxu0
      %8618 = vmatprep.mubr.f32.mxu0 0.0
      %8619 = vmatmul.mubr.f32.gmra.mxu0 %v8244
      %v8620 = vpop.f32.mrf.mxu0
      %v8621 = vadd.f32 %v8396, %v8620
      %v8622 = vpop.f32.mrf.mxu0
      %8623 = vmatprep.mubr.f32.mxu0 0.0
      %8624 = vmatmul.mubr.f32.gmra.mxu0 %v8245
      %v8625 = vpop.f32.mrf.mxu0
      %v8626 = vadd.f32 %v8401, %v8625
      %v8627 = vpop.f32.mrf.mxu0
      %8628 = vmatprep.mubr.f32.mxu0 0.0
      %8629 = vmatmul.mubr.f32.gmra.mxu0 %v8246
      %v8630 = vpop.f32.mrf.mxu0
      %v8631 = vadd.f32 %v8406, %v8630
      %v8632 = vpop.f32.mrf.mxu0
      %8633 = vmatprep.mubr.f32.mxu0 0.0
      %8634 = vmatmul.mubr.f32.gmra.mxu0 %v8247
      %v8635 = vpop.f32.mrf.mxu0
      %v8636 = vadd.f32 %v8411, %v8635
      %v8637 = vpop.f32.mrf.mxu0
      %8638 = vmatprep.mubr.f32.mxu0 0.0
      %8639 = vmatmul.mubr.f32.gmra.mxu0 %v8248
      %v8640 = vpop.f32.mrf.mxu0
      %v8641 = vadd.f32 %v8416, %v8640
      %v8642 = vpop.f32.mrf.mxu0
      %8643 = vmatprep.mubr.f32.mxu0 0.0
      %8644 = vmatmul.mubr.f32.gmra.mxu0 %v8249
      %v8645 = vpop.f32.mrf.mxu0
      %v8646 = vadd.f32 %v8421, %v8645
      %v8647 = vpop.f32.mrf.mxu0
      %8648 = vmatprep.mubr.f32.mxu0 0.0
      %8649 = vmatmul.mubr.f32.gmra.mxu0 %v8250
      %v8650 = vpop.f32.mrf.mxu0
      %v8651 = vadd.f32 %v8426, %v8650
      %v8652 = vpop.f32.mrf.mxu0
      %8653 = vmatprep.mubr.f32.mxu0 0.0
      %8654 = vmatmul.mubr.f32.gmra.mxu0 %v8251
      %v8655 = vpop.f32.mrf.mxu0
      %v8656 = vadd.f32 %v8431, %v8655
      %v8657 = vpop.f32.mrf.mxu0
      %8658 = vmatprep.mubr.f32.mxu0 0.0
      %8659 = vmatmul.mubr.f32.gmra.mxu0 %v8252
      %v8660 = vpop.f32.mrf.mxu0
      %v8661 = vadd.f32 %v8436, %v8660
      %v8662 = vpop.f32.mrf.mxu0
      %8663 = vmatprep.mubr.f32.mxu0 0.0
      %8664 = vmatmul.mubr.f32.gmra.mxu0 %v8253
      %v8665 = vpop.f32.mrf.mxu0
      %v8666 = vadd.f32 %v8441, %v8665
      %v8667 = vpop.f32.mrf.mxu0
      %8668 = vmatprep.mubr.f32.mxu0 0.0
      %8669 = vmatmul.mubr.f32.gmra.mxu0 %v8254
      %v8670 = vpop.f32.mrf.mxu0
      %v8671 = vadd.f32 %v8446, %v8670
      %v8672 = vpop.f32.mrf.mxu0
      %8673 = vmatprep.mubr.f32.mxu0 0.0
      %8674 = vmatmul.mubr.f32.gmra.mxu0 %v8255
      %v8675 = vpop.f32.mrf.mxu0
      %v8676 = vadd.f32 %v8451, %v8675
      %v8677 = vpop.f32.mrf.mxu0
      %8678 = vmatprep.mubr.f32.mxu0 0.0
      %8679 = vmatmul.mubr.f32.gmra.mxu0 %v8256
      %v8680 = vpop.f32.mrf.mxu0
      %v8681 = vadd.f32 %v8456, %v8680
      %v8682 = vpop.f32.mrf.mxu0
      %8683 = vmatprep.mubr.f32.mxu0 0.0
      %8684 = vmatmul.mubr.f32.gmra.mxu0 %v8257
      %v8685 = vpop.f32.mrf.mxu0
      %v8686 = vadd.f32 %v8461, %v8685
      %v8687 = vpop.f32.mrf.mxu0
      %8688 = vmatprep.mubr.f32.mxu0 0.0
      %8689 = vmatmul.mubr.f32.gmra.mxu0 %v8258
      %v8690 = vpop.f32.mrf.mxu0
      %v8691 = vadd.f32 %v8466, %v8690
      %v8692 = vpop.f32.mrf.mxu0
      %8693 = vmatprep.mubr.f32.mxu0 0.0
      %8694 = vmatmul.mubr.f32.gmra.mxu0 %v8259
      %v8695 = vpop.f32.mrf.mxu0
      %v8696 = vadd.f32 %v8471, %v8695
      %v8697 = vpop.f32.mrf.mxu0
      %8698 = vmatprep.mubr.f32.mxu0 0.0
      %8699 = vmatmul.mubr.f32.gmra.mxu0 %v8260
      %v8700 = vpop.f32.mrf.mxu0
      %v8701 = vadd.f32 %v8476, %v8700
      %v8702 = vpop.f32.mrf.mxu0
      %8703 = vmatprep.mubr.f32.mxu0 0.0
      %8704 = vmatmul.mubr.f32.gmra.mxu0 %v8261
      %v8705 = vpop.f32.mrf.mxu0
      %v8706 = vadd.f32 %v8481, %v8705
      %v8707 = vpop.f32.mrf.mxu0
      %8708 = vmatprep.mubr.f32.mxu0 0.0
      %8709 = vmatmul.mubr.f32.gmra.mxu0 %v8262
      %v8710 = vpop.f32.mrf.mxu0
      %v8711 = vadd.f32 %v8486, %v8710
      %v8712 = vpop.f32.mrf.mxu0
      %8713 = vmatprep.mubr.f32.mxu0 0.0
      %8714 = vmatmul.mubr.f32.gmra.mxu0 %v8263
      %v8715 = vpop.f32.mrf.mxu0
      %v8716 = vadd.f32 %v8491, %v8715
      %v8717 = vpop.f32.mrf.mxu0
      %8718 = vmatprep.mubr.f32.mxu0 0.0
      %8719 = vmatmul.mubr.f32.gmra.mxu0 %v8264
      %v8720 = vpop.f32.mrf.mxu0
      %v8721 = vadd.f32 %v8496, %v8720
      %v8722 = vpop.f32.mrf.mxu0
      %8723 = vmatprep.mubr.f32.mxu0 0.0
      %8724 = vmatmul.mubr.f32.gmra.mxu0 %v8265
      %v8725 = vpop.f32.mrf.mxu0
      %v8726 = vadd.f32 %v8501, %v8725
      %v8727 = vpop.f32.mrf.mxu0
      %8728 = vmatprep.mubr.f32.mxu0 0.0
      %8729 = vmatmul.mubr.f32.gmra.mxu0 %v8266
      %v8730 = vpop.f32.mrf.mxu0
      %v8731 = vadd.f32 %v8506, %v8730
      %v8732 = vpop.f32.mrf.mxu0
      %8733 = vmatprep.mubr.f32.mxu0 0.0
      %8734 = vmatmul.mubr.f32.gmra.mxu0 %v8267
      %v8735 = vpop.f32.mrf.mxu0
      %v8736 = vadd.f32 %v8511, %v8735
      %v8737 = vpop.f32.mrf.mxu0
      %8738 = vmatprep.mubr.f32.mxu0 0.0
      %8739 = vmatmul.mubr.f32.gmra.mxu0 %v8268
      %v8740 = vpop.f32.mrf.mxu0
      %v8741 = vadd.f32 %v8516, %v8740
      %v8742 = vpop.f32.mrf.mxu0
      %8743 = vmatprep.mubr.f32.mxu0 0.0
      %8744 = vmatmul.mubr.f32.gmra.mxu0 %v8269
      %v8745 = vpop.f32.mrf.mxu0
      %v8746 = vadd.f32 %v8521, %v8745
      %v8747 = vpop.f32.mrf.mxu0
      %8748 = vmatprep.mubr.f32.mxu0 0.0
      %8749 = vmatmul.mubr.f32.gmra.mxu0 %v8270
      %v8750 = vpop.f32.mrf.mxu0
      %v8751 = vadd.f32 %v8526, %v8750
      %v8752 = vpop.f32.mrf.mxu0
      %8753 = vmatprep.mubr.f32.mxu0 0.0
      %8754 = vmatmul.mubr.f32.gmra.mxu0 %v8271
      %v8755 = vpop.f32.mrf.mxu0
      %v8756 = vadd.f32 %v8531, %v8755
      %v8757 = vpop.f32.mrf.mxu0
      %8758 = vmatprep.mubr.f32.mxu0 0.0
      %8759 = vmatmul.mubr.f32.gmra.mxu0 %v8272
      %v8760 = vpop.f32.mrf.mxu0
      %v8761 = vadd.f32 %v8536, %v8760
      %v8762 = vpop.f32.mrf.mxu0
      %8763 = vmatprep.mubr.f32.mxu0 0.0
      %8764 = vmatmul.mubr.f32.gmra.mxu0 %v8273
      %v8765 = vpop.f32.mrf.mxu0
      %v8766 = vadd.f32 %v8541, %v8765
      %v8767 = vpop.f32.mrf.mxu0
      %8768 = vmatprep.mubr.f32.mxu0 0.0
      %8769 = vmatmul.mubr.f32.gmra.mxu0 %v8274
      %v8770 = vpop.f32.mrf.mxu0
      %v8771 = vadd.f32 %v8546, %v8770
      %v8772 = vpop.f32.mrf.mxu0
      %8773 = vdwg.mxu0
      %v8774 = vld [vmem:[#allocation5] sm:$0xff]
      %v8775 = vld [vmem:[#allocation5 + $0x8] sm:$0xff]
      %v8776 = vld [vmem:[#allocation5 + $0x10] sm:$0xff]
      %v8777 = vld [vmem:[#allocation5 + $0x18] sm:$0xff]
      %v8778 = vld [vmem:[#allocation5 + $0x20] sm:$0xff]
      %v8779 = vld [vmem:[#allocation5 + $0x28] sm:$0xff]
      %v8780 = vld [vmem:[#allocation5 + $0x30] sm:$0xff]
      %v8781 = vld [vmem:[#allocation5 + $0x38] sm:$0xff]
      %v8782 = vld [vmem:[#allocation5 + $0x40] sm:$0xff]
      %v8783 = vld [vmem:[#allocation5 + $0x48] sm:$0xff]
      %v8784 = vld [vmem:[#allocation5 + $0x50] sm:$0xff]
      %v8785 = vld [vmem:[#allocation5 + $0x58] sm:$0xff]
      %v8786 = vld [vmem:[#allocation5 + $0x60] sm:$0xff]
      %v8787 = vld [vmem:[#allocation5 + $0x68] sm:$0xff]
      %v8788 = vld [vmem:[#allocation5 + $0x70] sm:$0xff]
      %v8789 = vld [vmem:[#allocation5 + $0x78] sm:$0xff]
      %v8790 = vld [vmem:[#allocation5 + $0x80] sm:$0xff]
      %v8791 = vld [vmem:[#allocation5 + $0x88] sm:$0xff]
      %v8792 = vld [vmem:[#allocation5 + $0x90] sm:$0xff]
      %v8793 = vld [vmem:[#allocation5 + $0x98] sm:$0xff]
      %v8794 = vld [vmem:[#allocation5 + $0xa0] sm:$0xff]
      %v8795 = vld [vmem:[#allocation5 + $0xa8] sm:$0xff]
      %v8796 = vld [vmem:[#allocation5 + $0xb0] sm:$0xff]
      %v8797 = vld [vmem:[#allocation5 + $0xb8] sm:$0xff]
      %v8798 = vld [vmem:[#allocation5 + $0xc0] sm:$0xff]
      %v8799 = vld [vmem:[#allocation5 + $0xc8] sm:$0xff]
      %v8800 = vld [vmem:[#allocation5 + $0xd0] sm:$0xff]
      %v8801 = vld [vmem:[#allocation5 + $0xd8] sm:$0xff]
      %v8802 = vld [vmem:[#allocation5 + $0xe0] sm:$0xff]
      %v8803 = vld [vmem:[#allocation5 + $0xe8] sm:$0xff]
      %v8804 = vld [vmem:[#allocation5 + $0xf0] sm:$0xff]
      %v8805 = vld [vmem:[#allocation5 + $0xf8] sm:$0xff]
      %v8806 = vadd.f32 %v8774, %v8616
      %v8807 = vadd.f32 %v8775, %v8621
      %v8808 = vadd.f32 %v8776, %v8626
      %v8809 = vadd.f32 %v8777, %v8631
      %v8810 = vadd.f32 %v8778, %v8636
      %v8811 = vadd.f32 %v8779, %v8641
      %v8812 = vadd.f32 %v8780, %v8646
      %v8813 = vadd.f32 %v8781, %v8651
      %v8814 = vadd.f32 %v8782, %v8656
      %v8815 = vadd.f32 %v8783, %v8661
      %v8816 = vadd.f32 %v8784, %v8666
      %v8817 = vadd.f32 %v8785, %v8671
      %v8818 = vadd.f32 %v8786, %v8676
      %v8819 = vadd.f32 %v8787, %v8681
      %v8820 = vadd.f32 %v8788, %v8686
      %v8821 = vadd.f32 %v8789, %v8691
      %v8822 = vadd.f32 %v8790, %v8696
      %v8823 = vadd.f32 %v8791, %v8701
      %v8824 = vadd.f32 %v8792, %v8706
      %v8825 = vadd.f32 %v8793, %v8711
      %v8826 = vadd.f32 %v8794, %v8716
      %v8827 = vadd.f32 %v8795, %v8721
      %v8828 = vadd.f32 %v8796, %v8726
      %v8829 = vadd.f32 %v8797, %v8731
      %v8830 = vadd.f32 %v8798, %v8736
      %v8831 = vadd.f32 %v8799, %v8741
      %v8832 = vadd.f32 %v8800, %v8746
      %v8833 = vadd.f32 %v8801, %v8751
      %v8834 = vadd.f32 %v8802, %v8756
      %v8835 = vadd.f32 %v8803, %v8761
      %v8836 = vadd.f32 %v8804, %v8766
      %v8837 = vadd.f32 %v8805, %v8771
      %8838 = vst [vmem:[#allocation5] sm:$0xff] %v8806
      %8839 = vst [vmem:[#allocation5 + $0x8] sm:$0xff] %v8807
      %8840 = vst [vmem:[#allocation5 + $0x10] sm:$0xff] %v8808
      %8841 = vst [vmem:[#allocation5 + $0x18] sm:$0xff] %v8809
      %8842 = vst [vmem:[#allocation5 + $0x20] sm:$0xff] %v8810
      %8843 = vst [vmem:[#allocation5 + $0x28] sm:$0xff] %v8811
      %8844 = vst [vmem:[#allocation5 + $0x30] sm:$0xff] %v8812
      %8845 = vst [vmem:[#allocation5 + $0x38] sm:$0xff] %v8813
      %8846 = vst [vmem:[#allocation5 + $0x40] sm:$0xff] %v8814
      %8847 = vst [vmem:[#allocation5 + $0x48] sm:$0xff] %v8815
      %8848 = vst [vmem:[#allocation5 + $0x50] sm:$0xff] %v8816
      %8849 = vst [vmem:[#allocation5 + $0x58] sm:$0xff] %v8817
      %8850 = vst [vmem:[#allocation5 + $0x60] sm:$0xff] %v8818
      %8851 = vst [vmem:[#allocation5 + $0x68] sm:$0xff] %v8819
      %8852 = vst [vmem:[#allocation5 + $0x70] sm:$0xff] %v8820
      %8853 = vst [vmem:[#allocation5 + $0x78] sm:$0xff] %v8821
      %8854 = vst [vmem:[#allocation5 + $0x80] sm:$0xff] %v8822
      %8855 = vst [vmem:[#allocation5 + $0x88] sm:$0xff] %v8823
      %8856 = vst [vmem:[#allocation5 + $0x90] sm:$0xff] %v8824
      %8857 = vst [vmem:[#allocation5 + $0x98] sm:$0xff] %v8825
      %8858 = vst [vmem:[#allocation5 + $0xa0] sm:$0xff] %v8826
      %8859 = vst [vmem:[#allocation5 + $0xa8] sm:$0xff] %v8827
      %8860 = vst [vmem:[#allocation5 + $0xb0] sm:$0xff] %v8828
      %8861 = vst [vmem:[#allocation5 + $0xb8] sm:$0xff] %v8829
      %8862 = vst [vmem:[#allocation5 + $0xc0] sm:$0xff] %v8830
      %8863 = vst [vmem:[#allocation5 + $0xc8] sm:$0xff] %v8831
      %8864 = vst [vmem:[#allocation5 + $0xd0] sm:$0xff] %v8832
      %8865 = vst [vmem:[#allocation5 + $0xd8] sm:$0xff] %v8833
      %8866 = vst [vmem:[#allocation5 + $0xe0] sm:$0xff] %v8834
      %8867 = vst [vmem:[#allocation5 + $0xe8] sm:$0xff] %v8835
      %8868 = vst [vmem:[#allocation5 + $0xf0] sm:$0xff] %v8836
      %8869 = vst [vmem:[#allocation5 + $0xf8] sm:$0xff] %v8837
      %v8870 = vld [vmem:[#allocation5] sm:$0xff]
      %v8871 = vld [vmem:[#allocation5 + $0x8] sm:$0xff]
      %v8872 = vld [vmem:[#allocation5 + $0x10] sm:$0xff]
      %v8873 = vld [vmem:[#allocation5 + $0x18] sm:$0xff]
      %v8874 = vld [vmem:[#allocation5 + $0x20] sm:$0xff]
      %v8875 = vld [vmem:[#allocation5 + $0x28] sm:$0xff]
      %v8876 = vld [vmem:[#allocation5 + $0x30] sm:$0xff]
      %v8877 = vld [vmem:[#allocation5 + $0x38] sm:$0xff]
      %v8878 = vld [vmem:[#allocation5 + $0x40] sm:$0xff]
      %v8879 = vld [vmem:[#allocation5 + $0x48] sm:$0xff]
      %v8880 = vld [vmem:[#allocation5 + $0x50] sm:$0xff]
      %v8881 = vld [vmem:[#allocation5 + $0x58] sm:$0xff]
      %v8882 = vld [vmem:[#allocation5 + $0x60] sm:$0xff]
      %v8883 = vld [vmem:[#allocation5 + $0x68] sm:$0xff]
      %v8884 = vld [vmem:[#allocation5 + $0x70] sm:$0xff]
      %v8885 = vld [vmem:[#allocation5 + $0x78] sm:$0xff]
      %v8886 = vld [vmem:[#allocation5 + $0x80] sm:$0xff]
      %v8887 = vld [vmem:[#allocation5 + $0x88] sm:$0xff]
      %v8888 = vld [vmem:[#allocation5 + $0x90] sm:$0xff]
      %v8889 = vld [vmem:[#allocation5 + $0x98] sm:$0xff]
      %v8890 = vld [vmem:[#allocation5 + $0xa0] sm:$0xff]
      %v8891 = vld [vmem:[#allocation5 + $0xa8] sm:$0xff]
      %v8892 = vld [vmem:[#allocation5 + $0xb0] sm:$0xff]
      %v8893 = vld [vmem:[#allocation5 + $0xb8] sm:$0xff]
      %v8894 = vld [vmem:[#allocation5 + $0xc0] sm:$0xff]
      %v8895 = vld [vmem:[#allocation5 + $0xc8] sm:$0xff]
      %v8896 = vld [vmem:[#allocation5 + $0xd0] sm:$0xff]
      %v8897 = vld [vmem:[#allocation5 + $0xd8] sm:$0xff]
      %v8898 = vld [vmem:[#allocation5 + $0xe0] sm:$0xff]
      %v8899 = vld [vmem:[#allocation5 + $0xe8] sm:$0xff]
      %v8900 = vld [vmem:[#allocation5 + $0xf0] sm:$0xff]
      %v8901 = vld [vmem:[#allocation5 + $0xf8] sm:$0xff]
      %8902 = vxpose.xlu0.b32.start [1/16] %v8870, 128
      %8903 = vxpose.xlu0.b32.cont [2/16] %v8871, 128
      %8904 = vxpose.xlu0.b32.cont [3/16] %v8872, 128
      %8905 = vxpose.xlu0.b32.cont [4/16] %v8873, 128
      %8906 = vxpose.xlu0.b32.cont [5/16] %v8874, 128
      %8907 = vxpose.xlu0.b32.cont [6/16] %v8875, 128
      %8908 = vxpose.xlu0.b32.cont [7/16] %v8876, 128
      %8909 = vxpose.xlu0.b32.cont [8/16] %v8877, 128
      %8910 = vxpose.xlu0.b32.cont [9/16] %v8878, 128
      %8911 = vxpose.xlu0.b32.cont [10/16] %v8879, 128
      %8912 = vxpose.xlu0.b32.cont [11/16] %v8880, 128
      %8913 = vxpose.xlu0.b32.cont [12/16] %v8881, 128
      %8914 = vxpose.xlu0.b32.cont [13/16] %v8882, 128
      %8915 = vxpose.xlu0.b32.cont [14/16] %v8883, 128
      %8916 = vxpose.xlu0.b32.cont [15/16] %v8884, 128
      %8917 = vxpose.xlu0.b32.end [16/16] %v8885, 128
      %v8918 = vpop.trf.xlu0
      %v8919 = vpop.trf.xlu0
      %v8920 = vpop.trf.xlu0
      %v8921 = vpop.trf.xlu0
      %v8922 = vpop.trf.xlu0
      %v8923 = vpop.trf.xlu0
      %v8924 = vpop.trf.xlu0
      %v8925 = vpop.trf.xlu0
      %v8926 = vpop.trf.xlu0
      %v8927 = vpop.trf.xlu0
      %v8928 = vpop.trf.xlu0
      %v8929 = vpop.trf.xlu0
      %v8930 = vpop.trf.xlu0
      %v8931 = vpop.trf.xlu0
      %v8932 = vpop.trf.xlu0
      %v8933 = vpop.trf.xlu0
      %8934 = vxpose.xlu0.b32.start [1/16] %v8886, 128
      %8935 = vxpose.xlu0.b32.cont [2/16] %v8887, 128
      %8936 = vxpose.xlu0.b32.cont [3/16] %v8888, 128
      %8937 = vxpose.xlu0.b32.cont [4/16] %v8889, 128
      %8938 = vxpose.xlu0.b32.cont [5/16] %v8890, 128
      %8939 = vxpose.xlu0.b32.cont [6/16] %v8891, 128
      %8940 = vxpose.xlu0.b32.cont [7/16] %v8892, 128
      %8941 = vxpose.xlu0.b32.cont [8/16] %v8893, 128
      %8942 = vxpose.xlu0.b32.cont [9/16] %v8894, 128
      %8943 = vxpose.xlu0.b32.cont [10/16] %v8895, 128
      %8944 = vxpose.xlu0.b32.cont [11/16] %v8896, 128
      %8945 = vxpose.xlu0.b32.cont [12/16] %v8897, 128
      %8946 = vxpose.xlu0.b32.cont [13/16] %v8898, 128
      %8947 = vxpose.xlu0.b32.cont [14/16] %v8899, 128
      %8948 = vxpose.xlu0.b32.cont [15/16] %v8900, 128
      %8949 = vxpose.xlu0.b32.end [16/16] %v8901, 128
      %v8950 = vpop.trf.xlu0
      %v8951 = vpop.trf.xlu0
      %v8952 = vpop.trf.xlu0
      %v8953 = vpop.trf.xlu0
      %v8954 = vpop.trf.xlu0
      %v8955 = vpop.trf.xlu0
      %v8956 = vpop.trf.xlu0
      %v8957 = vpop.trf.xlu0
      %v8958 = vpop.trf.xlu0
      %v8959 = vpop.trf.xlu0
      %v8960 = vpop.trf.xlu0
      %v8961 = vpop.trf.xlu0
      %v8962 = vpop.trf.xlu0
      %v8963 = vpop.trf.xlu0
      %v8964 = vpop.trf.xlu0
      %v8965 = vpop.trf.xlu0
      %v8966 = vld [vmem:[%s266] sm:$0x77]
      %v8968 = vcombine.high %v8966, %v8966
      %v8970 = vadd.f32 %v8918, %v8966
      %v8971 = vadd.f32 %v8950, %v8968
      %v8974 = vcombine.low %v8970, %v8971
      %8976 = vst [vmem:[%s271] sm:$0x77] %v8974
      %p8977 = scmp.lt.s32.totalorder %s17, 1
      %s8978 = scalar_select %p8977, %s17, 1
      %s8979 = smul.addr %s8978, 2
      %s8980 = smul.addr %s8979, 4
      %s8981 = scalar_lea.vmem %s6, %s8980
      // Predicated region
      $region52: #{drrn_forward.1} parent=43 // pred_check
        %p8982 = pneg %p171
      $region53: #{drrn_forward.1} parent=43 // pred_check_branch
        %8984 = sbr.rel (%p8982) target = $region55
      $region54: #{drrn_forward.1} parent=43 // pred_region
        _
      $region55: #{drrn_forward.1} parent=43 // pred_fallthru
        _
    $region44: #{drrn_forward.1} parent=5 // pred_fallthru
      _
    %p8985 = scmp.le.s32.totalorder 2, %s12
    // Predicated region
    $region56: #{drrn_forward.1} parent=5 // pred_check
      %p8986 = pneg %p8985
    $region57: #{drrn_forward.1} parent=5 // pred_check_branch
      %8988 = sbr.rel (%p8986) target = $region59
    $region58: #{drrn_forward.1} parent=5 // pred_region
      %s8989 = ssub.s32 %s12, 2
      // Predicated region
      $region60: #{drrn_forward.1} parent=58 // pred_check
        %p8990 = pneg %p177
      $region61: #{drrn_forward.1} parent=58 // pred_check_branch
        %8992 = sbr.rel (%p8990) target = $region63
      $region62: #{drrn_forward.1} parent=58 // pred_region
        %p8993 = scmp.lt.s32.totalorder %s18, 1
        %s8994 = scalar_select %p8993, %s18, 1
        %s8995 = smul.addr %s8994, 2
        %s8996 = smul.addr %s8995, 4
        %s8997 = scalar_lea.vmem %s6, %s8996
      $region63: #{drrn_forward.1} parent=58 // pred_fallthru
        _
    $region59: #{drrn_forward.1} parent=5 // pred_fallthru
      _
  $region6: #{drrn_forward.1} parent=0 // loop_footer
    %s16 = sadd.s32 1, %s12
  $region7: #{drrn_forward.1} parent=0 // loop_footer_branch
    %11 = sbr.rel target = $region3
  $region8: #{drrn_forward.1} parent=0 // loop_exit
    _

</llo_original>
